<compile_context>
chip_gen: v7x
topology: tpu7x:2x2x1
jax: 0.10.0
libtpu: 0.0.40
codegen_flags: <defaults>
</compile_context>

<pallas_src>
import functools
import math

import jax
import jax.numpy as jnp
import numpy as np
from jax.experimental import pallas as pl
from jax.experimental.pallas import tpu as pltpu


_LANES = 128


# ----------------------------- configuration --------------------------------
class Config:
    seq_len = 24
    pred_len = 8            # T = seq_len + pred_len = 32
    top_k = 3               # forward indexes period_list[0..2]
    cutpos = 1              # period_list = [2, 16, 26]
    cutnom = 0
    d_model = 8             # == N (feature dim of Season/Trend)
    d_ff = 16
    num_kernels = 2         # inception kernel sizes 1 and 3 -> merged K = 3
    input_size2 = 16        # = T // period_list[cutnom] = 32 // 2
    hidden_size = 32
    num_layers = 1
    num_heads = 2
    dropout = 0.0


# ------------------------------ in-kernel math -------------------------------
def _exact_gelu(x):
    # erf-based GELU (torch nn.GELU default); erf via Abramowitz-Stegun 7.1.26.
    # TODO(synk): exact lax.erf is not guaranteed to lower in Mosaic; this
    # polynomial matches it to ~1.5e-7 absolute.
    a1, a2, a3 = 0.254829592, -0.284496736, 1.421413741
    a4, a5, pp = -1.453152027, 1.061405429, 0.3275911
    z = x * 0.7071067811865476
    az = jnp.abs(z)
    t = 1.0 / (1.0 + pp * az)
    poly = ((((a5 * t + a4) * t + a3) * t + a2) * t + a1) * t
    e = 1.0 - poly * jnp.exp(-az * az)
    erf_z = jnp.where(z >= 0.0, e, -e)
    return 0.5 * x * (1.0 + erf_z)


# ------------------------- fused TimesBlock2 kernel ---------------------------
def _timesblock2_kernel(st_ref, conv_ref, shift1_ref, shift2_ref, place_ref,
                        enc_ref, flat_ref, out_ref, *,
                        T, N, d_ff, H, periods, lpads, lmax, pc,
                        n_tok, n_feat, num_heads, conv_off, enc_off, out_rows):
    f32 = jnp.float32
    c1 = 2 * d_ff                     # stacked hidden channels (season+trend)
    c2 = 2 * N                        # stacked model channels
    D = n_feat
    n2 = 2 * n_tok

    x_st = st_ref[0]                                           # (2N, T)

    W1 = conv_ref[conv_off["W1"]:conv_off["W1"] + 9 * c1, 0:c2]
    W2 = conv_ref[conv_off["W2"]:conv_off["W2"] + 9 * c2, 0:c1]
    b1 = conv_ref[conv_off["b1"]:conv_off["b1"] + c1, 0:1]
    b2 = conv_ref[conv_off["b2"]:conv_off["b2"] + c2, 0:1]

    # ---- three period branches: conv -> exact GELU -> conv (both streams) ---
    inv_k = 1.0 / float(len(periods))   # softmax of ones -> uniform weights
    agg = x_st                          # residual included from the start
    for pi, _p in enumerate(periods):
        L = lpads[pi]
        # stage 1.  wx1 is recomputed per period (2 extra tiny matmuls) to keep
        # peak vreg pressure low instead of keeping a (288, T) value live.
        wx1 = jnp.dot(W1, x_st, preferred_element_type=f32)     # (9*c1, T)
        h = jnp.zeros((c1, L), f32)
        for tap in range(9):
            r0 = (pi * 9 + tap) * T
            sel = shift1_ref[r0:r0 + T, 0:L]                    # (T, L) masked
            h = h + jnp.dot(wx1[tap * c1:(tap + 1) * c1, :], sel,
                            preferred_element_type=f32)
        h = _exact_gelu(h + b1)
        # stage 2
        wx2 = jnp.dot(W2, h, preferred_element_type=f32)        # (9*c2, L)
        y = jnp.zeros((c2, T), f32)
        for tap in range(9):
            r0 = (pi * 9 + tap) * lmax
            sel = shift2_ref[r0:r0 + L, 0:T]                    # (L, T) masked
            y = y + jnp.dot(wx2[tap * c2:(tap + 1) * c2, :], sel,
                            preferred_element_type=f32)
        agg = agg + inv_k * (y + b2)

    # ---- (2N, T) -> stacked token layout (2*n_tok, n_feat) ------------------
    q_both = jnp.zeros((n2, n_feat), f32)       # rows 0:n_tok season, rest trend
    for w in range(pc):
        rw = place_ref[w * n2:(w + 1) * n2, 0:c2]                       # (n2, 2N)
        pw = place_ref[pc * n2 + w * T:pc * n2 + (w + 1) * T, 0:n_feat]  # (T, nf)
        q_both = q_both + jnp.dot(
            rw, jnp.dot(agg, pw, preferred_element_type=f32),
            preferred_element_type=f32)

    # ---- both shared-weight cross-attention passes, merged into one ---------
    def w_at(name, nrows, ncols):
        r0 = enc_off[name]
        return enc_ref[r0:r0 + nrows, 0:ncols]

    wq = w_at("wq", D, D); wk = w_at("wk", D, D)
    wv = w_at("wv", D, D); wo = w_at("wo", D, D)
    w1f = w_at("w1", D, H); w2f = w_at("w2", H, D)
    bq = w_at("bq", 1, D); bk = w_at("bk", 1, D)
    bv = w_at("bv", 1, D); bo = w_at("bo", 1, D)
    b1f = w_at("b1", 1, H); b2f = w_at("b2", 1, D)
    g1 = w_at("g1", 1, D); be1 = w_at("be1", 1, D)
    g2 = w_at("g2", 1, D); be2 = w_at("be2", 1, D)
    swap = w_at("swap", n2, n2)      # permutation aligning values with keys
    amask = w_at("amask", n2, n2)    # 0 on cross blocks, -1e30 elsewhere

    def layernorm(x, gamma, beta, eps=1e-5):
        mu = jnp.mean(x, axis=-1, keepdims=True)
        xc = x - mu
        var = jnp.mean(xc * xc, axis=-1, keepdims=True)
        return xc * jax.lax.rsqrt(var + eps) * gamma + beta

    # TODO(synk): the exact TransformerEncoder class is not provided with the
    # module; standard cross-MHA + FFN + post-LN, dropout = identity, and only
    # layer 0 of encoder_season is fused (num_layers == 1), as before.
    # Pass 1 (queries = season rows) attends keys from trend rows and values
    # from season rows; pass 2 is the mirror -- expressed with amask + swap.
    qp = jnp.dot(q_both, wq, preferred_element_type=f32) + bq         # (n2, D)
    kp = jnp.dot(q_both, wk, preferred_element_type=f32) + bk
    vp = jnp.dot(q_both, wv, preferred_element_type=f32) + bv
    vx = jnp.dot(swap, vp, preferred_element_type=f32)
    hd = D // num_heads
    scale = 1.0 / math.sqrt(hd)
    ctx = jnp.zeros((n2, D), f32)
    for h_ in range(num_heads):
        hmask = enc_ref[enc_off["hm"] + h_:enc_off["hm"] + h_ + 1, 0:D]
        sc = jax.lax.dot_general(qp, kp * hmask, (((1,), (1,)), ((), ())),
                                 preferred_element_type=f32) * scale + amask
        sc = sc - jnp.max(sc, axis=-1, keepdims=True)
        pe = jnp.exp(sc)
        pe = pe * pl.reciprocal(jnp.sum(pe, axis=-1, keepdims=True),
                                approx=True)
        ctx = ctx + jnp.dot(pe, vx * hmask, preferred_element_type=f32)
    attn = jnp.dot(ctx, wo, preferred_element_type=f32) + bo
    x1 = layernorm(q_both + attn, g1, be1)
    hid = jnp.maximum(jnp.dot(x1, w1f, preferred_element_type=f32) + b1f, 0.0)
    y_both = layernorm(
        x1 + jnp.dot(hid, w2f, preferred_element_type=f32) + b2f, g2, be2)

    # ---- lane-dense flatten (n2, n_feat) -> (out_rows, 128), one store ------
    tile = flat_ref[0:n_feat, :]                                   # (nf, 128)
    fmask = flat_ref[n_feat:n_feat + n2, :]                        # (n2, 128)
    group = flat_ref[n_feat + n2:n_feat + n2 + out_rows, 0:n2]     # (rows, n2)
    wide = jnp.dot(y_both, tile, preferred_element_type=f32) * fmask
    out_ref[0] = jnp.dot(group, wide,
                         preferred_element_type=f32).astype(out_ref.dtype)


# --------------------------- host-side constant packs ------------------------
def _conv_offsets(N, d_ff):
    c1, c2 = 2 * d_ff, 2 * N
    off, r = {}, 0
    off["W1"] = r; r += 9 * c1
    off["W2"] = r; r += 9 * c2
    off["b1"] = r; r += c1
    off["b2"] = r; r += c2
    return off, r


def _stack_conv_pair(ps, pt):
    # Block-diagonal, tap-interleaved packing: rows [tap*2C : tap*2C+C] hold the
    # season tap (input cols 0:Cin), the next C rows hold the trend tap
    # (input cols Cin:2Cin).  Exact: zero off-diagonal blocks.
    ws, wt = ps["w"], pt["w"]                    # (3, 3, Cin, Cout)
    Cin, Cout = ws.shape[2], ws.shape[3]
    wsr = jnp.transpose(ws, (0, 1, 3, 2)).reshape(9, Cout, Cin)
    wtr = jnp.transpose(wt, (0, 1, 3, 2)).reshape(9, Cout, Cin)
    blk = jnp.zeros((9, 2 * Cout, 2 * Cin), jnp.float32)
    blk = blk.at[:, :Cout, :Cin].set(wsr)
    blk = blk.at[:, Cout:, Cin:].set(wtr)
    W = blk.reshape(9 * 2 * Cout, 2 * Cin)
    b = jnp.concatenate([ps["b"], pt["b"]]).reshape(2 * Cout, 1)
    return W, b


def _pack_conv(params, N, d_ff):
    off, rows = _conv_offsets(N, d_ff)
    W1, b1 = _stack_conv_pair(params["conv_s1"], params["conv_t1"])
    W2, b2 = _stack_conv_pair(params["conv_s2"], params["conv_t2"])
    width = max(2 * N, 2 * d_ff)
    pk = jnp.zeros((rows, width), jnp.float32)
    pk = pk.at[off["W1"]:off["W1"] + W1.shape[0], :W1.shape[1]].set(W1)
    pk = pk.at[off["W2"]:off["W2"] + W2.shape[0], :W2.shape[1]].set(W2)
    pk = pk.at[off["b1"]:off["b1"] + b1.shape[0], :1].set(b1)
    pk = pk.at[off["b2"]:off["b2"] + b2.shape[0], :1].set(b2)
    return pk, off


def _enc_offsets(D, H, num_heads, n2):
    off, r = {}, 0
    for nm, n in (("wq", D), ("wk", D), ("wv", D), ("wo", D),
                  ("w1", D), ("w2", H)):
        off[nm] = r; r += n
    for nm in ("bq", "bk", "bv", "bo", "b1", "b2", "g1", "be1", "g2", "be2"):
        off[nm] = r; r += 1
    off["hm"] = r; r += num_heads
    off["swap"] = r; r += n2
    off["amask"] = r; r += n2
    return off, r


def _pack_encoder(ep, D, H, num_heads, n_tok):
    n2 = 2 * n_tok
    off, rows = _enc_offsets(D, H, num_heads, n2)
    width = max(D, H, n2)
    pk = jnp.zeros((rows, width), jnp.float32)

    def put(buf, name, arr):
        a = jnp.asarray(arr, jnp.float32)
        return buf.at[off[name]:off[name] + a.shape[0], :a.shape[1]].set(a)

    for nm in ("wq", "wk", "wv", "wo", "w1", "w2", "bq", "bk", "bv", "bo",
               "b1", "b2", "g1", "be1", "g2", "be2"):
        pk = put(pk, nm, ep[nm])

    hd = D // num_heads
    hm = np.zeros((num_heads, D), np.float32)
    for h in range(num_heads):
        hm[h, h * hd:(h + 1) * hd] = 1.0
    pk = put(pk, "hm", hm)

    swap = np.zeros((n2, n2), np.float32)
    swap[np.arange(n2), (np.arange(n2) + n_tok) % n2] = 1.0
    pk = put(pk, "swap", swap)

    amask = np.full((n2, n2), -1e30, np.float32)
    amask[:n_tok, n_tok:] = 0.0
    amask[n_tok:, :n_tok] = 0.0
    pk = put(pk, "amask", amask)
    return pk, off


def _build_shift_packs(T, periods, lpads, lmax):
    # Shift/selection matrices for the 3x3 "same" conv on the flattened
    # (channels, time) layout; zero padding, truncation and the width-p column
    # boundary masks for the dx = +-1 taps are all folded in.
    nper = len(periods)
    s1 = np.zeros((nper * 9 * T, lmax), np.float32)
    s2 = np.zeros((nper * 9 * lmax, T), np.float32)
    for pi, (p, L) in enumerate(zip(periods, lpads)):
        tap = 0
        for dy in (-1, 0, 1):
            for dx in (-1, 0, 1):
                shift = dy * p + dx
                u = np.arange(T)[:, None]
                t = np.arange(L)[None, :]
                m = (u == t + shift).astype(np.float32)
                w = t % p
                if dx == -1:
                    m = m * (w >= 1)
                elif dx == 1:
                    m = m * (w <= p - 2)
                s1[(pi * 9 + tap) * T:(pi * 9 + tap + 1) * T, :L] = m

                u2 = np.arange(L)[:, None]
                t2 = np.arange(T)[None, :]
                m2 = (u2 == t2 + shift).astype(np.float32)
                w2 = t2 % p
                if dx == -1:
                    m2 = m2 * (w2 >= 1)
                elif dx == 1:
                    m2 = m2 * (w2 <= p - 2)
                r0 = (pi * 9 + tap) * lmax
                s2[r0:r0 + L, :] = m2
                tap += 1
    return jnp.asarray(s1), jnp.asarray(s2)


def _build_place_pack(T, N, pc):
    # (2N, T) channels-major -> (2*n_tok, n_feat) token layout, both streams.
    n_tok = pc * N
    n_feat = T // pc
    n2 = 2 * n_tok
    width = max(2 * N, n_feat)
    pk = np.zeros((pc * n2 + pc * T, width), np.float32)
    for w in range(pc):
        rw = np.zeros((n2, 2 * N), np.float32)
        for n in range(N):
            rw[w * N + n, n] = 1.0                  # season token rows
            rw[n_tok + w * N + n, N + n] = 1.0      # trend token rows
        pk[w * n2:(w + 1) * n2, :2 * N] = rw
        pwt = np.zeros((T, n_feat), np.float32)
        for f in range(n_feat):
            pwt[pc * f + w, f] = 1.0
        pk[pc * n2 + w * T:pc * n2 + (w + 1) * T, :n_feat] = pwt
    return jnp.asarray(pk)


def _build_flat_pack(n_rows, n_feat, lanes):
    # flat = Group @ ((Y @ Tile) * Mask)  ==  Y.reshape(out_rows, lanes)
    rep = lanes // n_feat
    out_rows = (n_rows * n_feat) // lanes
    fp = np.zeros((n_feat + n_rows + out_rows, lanes), np.float32)
    l = np.arange(lanes)
    for f in range(n_feat):
        fp[f, :] = (l % n_feat == f)
    for j in range(n_rows):
        fp[n_feat + j, :] = (l // n_feat == (j % rep))
    for r in range(out_rows):
        fp[n_feat + n_rows + r, :n_rows] = (np.arange(n_rows) // rep == r)
    return jnp.asarray(fp), out_rows


# ------------------------------ parameters ----------------------------------
def init_params(cfg, key):
    keys = iter(jax.random.split(key, 128))

    def dense(shape, scale=0.1):
        return jax.random.normal(next(keys), shape, jnp.float32) * scale

    def inception_params(cin, cout, num_kernels):
        # Inception_Block_V1: mean over num_kernels same-padded convs, merged
        # at init time into one conv with averaged zero-padded kernels (exact).
        K = 2 * num_kernels - 1
        w_sum = jnp.zeros((K, K, cin, cout), jnp.float32)
        b_sum = jnp.zeros((cout,), jnp.float32)
        for i in range(num_kernels):
            ks = 2 * i + 1
            wi = dense((ks, ks, cin, cout), scale=0.2)
            bi = dense((cout,), scale=0.1)
            pad = (K - ks) // 2
            w_sum = w_sum + jnp.pad(wi, ((pad, pad), (pad, pad), (0, 0), (0, 0)))
            b_sum = b_sum + bi
        return {"w": w_sum / num_kernels, "b": b_sum / num_kernels}

    def encoder_params(d, hdim):
        return {
            "wq": dense((d, d)), "bq": dense((1, d)),
            "wk": dense((d, d)), "bk": dense((1, d)),
            "wv": dense((d, d)), "bv": dense((1, d)),
            "wo": dense((d, d)), "bo": dense((1, d)),
            "g1": jnp.ones((1, d), jnp.float32),
            "be1": jnp.zeros((1, d), jnp.float32),
            "w1": dense((d, hdim)), "b1": dense((1, hdim)),
            "w2": dense((hdim, d)), "b2": dense((1, d)),
            "g2": jnp.ones((1, d), jnp.float32),
            "be2": jnp.zeros((1, d), jnp.float32),
        }

    return {
        "conv_s1": inception_params(cfg.d_model, cfg.d_ff, cfg.num_kernels),
        "conv_s2": inception_params(cfg.d_ff, cfg.d_model, cfg.num_kernels),
        "conv_t1": inception_params(cfg.d_model, cfg.d_ff, cfg.num_kernels),
        "conv_t2": inception_params(cfg.d_ff, cfg.d_model, cfg.num_kernels),
        "enc_season": [encoder_params(cfg.input_size2, cfg.hidden_size)
                       for _ in range(cfg.num_layers)],
        # kept for structural fidelity; never used in forward (as in reference)
        "enc_trend": [encoder_params(cfg.input_size2, cfg.hidden_size)
                      for _ in range(cfg.num_layers)],
    }


# ------------------------------ forward pass ---------------------------------
def timesblock2_forward(Season, Trend, params, cfg):
    B, T, N = Season.shape
    period_list = [cfg.cutpos + 1, cfg.cutpos + 15, cfg.cutpos + 25]
    periods = tuple(period_list[:cfg.top_k])
    lpads = tuple(((T + p - 1) // p) * p for p in periods)
    lmax = max(lpads)
    pc = periods[cfg.cutnom]
    # FFT_for_Period output is discarded by the reference forward (period list
    # and weights are immediately overwritten), so it is not computed here.
    # TODO(synk): the reference pads when T % pc != 0; with the configured
    # shapes T % pc == 0 so that branch is not generated here.
    assert T % pc == 0
    n_tok, n_feat = pc * N, T // pc
    assert n_feat == cfg.input_size2
    assert n_feat % cfg.num_heads == 0
    lanes = _LANES
    assert lanes % n_feat == 0 and (2 * n_tok * n_feat) % lanes == 0
    D, H = n_feat, cfg.hidden_size

    convpack, conv_off = _pack_conv(params, N, cfg.d_ff)
    # TODO(synk): only layer 0 of enc_season is fused (num_layers == 1).
    encpack, enc_off = _pack_encoder(params["enc_season"][0], D, H,
                                     cfg.num_heads, n_tok)
    shift1, shift2 = _build_shift_packs(T, periods, lpads, lmax)
    placepack = _build_place_pack(T, N, pc)
    flatpack, out_rows = _build_flat_pack(2 * n_tok, n_feat, lanes)

    # stacked channels-major input (B, 2N, T): rows [season N; trend N]
    st = jnp.concatenate(
        [jnp.transpose(Season, (0, 2, 1)), jnp.transpose(Trend, (0, 2, 1))],
        axis=1).astype(jnp.float32)

    kern = functools.partial(
        _timesblock2_kernel, T=T, N=N, d_ff=cfg.d_ff, H=H, periods=periods,
        lpads=lpads, lmax=lmax, pc=pc, n_tok=n_tok, n_feat=n_feat,
        num_heads=cfg.num_heads, conv_off=conv_off, enc_off=enc_off,
        out_rows=out_rows)

    def bcast(a):
        return pl.BlockSpec(a.shape, lambda b: (0, 0))

    out = pl.pallas_call(
        kern,
        out_shape=jax.ShapeDtypeStruct((B, out_rows, lanes), jnp.float32),
        grid=(B,),
        in_specs=[pl.BlockSpec((1, 2 * N, T), lambda b: (b, 0, 0)),
                  bcast(convpack), bcast(shift1), bcast(shift2),
                  bcast(placepack), bcast(encpack), bcast(flatpack)],
        out_specs=pl.BlockSpec((1, out_rows, lanes), lambda b: (b, 0, 0)),
        compiler_params=pltpu.CompilerParams(
            dimension_semantics=("parallel",)),
    )(st, convpack, shift1, shift2, placepack, encpack, flatpack)

    # tiny XLA-side layout ops: un-flatten the lane-dense slab and restore the
    # reference's permute/reshape back to (B, T, N).
    y = out.reshape(B, 2, n_tok, n_feat)
    season_out = jnp.transpose(y[:, 0], (0, 2, 1)).reshape(B, -1, N)[:, :T, :]
    trend_out = jnp.transpose(y[:, 1], (0, 2, 1)).reshape(B, -1, N)[:, :T, :]
    return season_out, trend_out


# ---------------------------------- main -------------------------------------
if __name__ == "__main__":
    cfg = Config()
    key = jax.random.PRNGKey(0)
    key_p, key_s, key_t = jax.random.split(key, 3)

    B = 2
    T = cfg.seq_len + cfg.pred_len
    N = cfg.d_model
    Season = jax.random.normal(key_s, (B, T, N), jnp.float32)
    Trend = jax.random.normal(key_t, (B, T, N), jnp.float32)

    params = init_params(cfg, key_p)
    fwd = jax.jit(lambda s, t: timesblock2_forward(s, t, params, cfg))
    season_out, trend_out = fwd(Season, Trend)
    jax.block_until_ready((season_out, trend_out))

    assert season_out.shape == (B, T, N), season_out.shape
    assert trend_out.shape == (B, T, N), trend_out.shape
    print("KERNEL_OK")
</pallas_src>

<mosaic_0001>
module attributes {stable_mosaic.version = 11 : i64} {
  func.func @_timesblock2_kernel(%arg0: i32, %arg1: memref<1x16x32xf32, #tpu.memory_space<vmem>>, %arg2: memref<480x32xf32, #tpu.memory_space<vmem>>, %arg3: memref<864x52xf32, #tpu.memory_space<vmem>>, %arg4: memref<1404x32xf32, #tpu.memory_space<vmem>>, %arg5: memref<128x16xf32, #tpu.memory_space<vmem>>, %arg6: memref<188x32xf32, #tpu.memory_space<vmem>>, %arg7: memref<52x128xf32, #tpu.memory_space<vmem>>, %arg8: memref<1x4x128xf32, #tpu.memory_space<vmem>>) attributes {dimension_semantics = [#tpu.dimension_semantics<parallel>], iteration_bounds = array<i64: 2>, scalar_prefetch = 0 : i64, scratch_operands = 0 : i64, tpu.core_type = #tpu.core_type<tc>, window_params = [{transform_indices = @transform_0, window_bounds = array<i64: 1, 16, 32>}, {pipeline_mode = #tpu.pipeline_mode<synchronous>, transform_indices = @transform_1, window_bounds = array<i64: 480, 32>}, {pipeline_mode = #tpu.pipeline_mode<synchronous>, transform_indices = @transform_2, window_bounds = array<i64: 864, 52>}, {pipeline_mode = #tpu.pipeline_mode<synchronous>, transform_indices = @transform_3, window_bounds = array<i64: 1404, 32>}, {pipeline_mode = #tpu.pipeline_mode<synchronous>, transform_indices = @transform_4, window_bounds = array<i64: 128, 16>}, {pipeline_mode = #tpu.pipeline_mode<synchronous>, transform_indices = @transform_5, window_bounds = array<i64: 188, 32>}, {pipeline_mode = #tpu.pipeline_mode<synchronous>, transform_indices = @transform_6, window_bounds = array<i64: 52, 128>}, {transform_indices = @transform_7, window_bounds = array<i64: 1, 4, 128>}]} {
    %c0 = arith.constant 0 : index
    %c0_0 = arith.constant 0 : index
    %c0_1 = arith.constant 0 : index
    %0 = vector.load %arg1[%c0, %c0_0, %c0_1] : memref<1x16x32xf32, #tpu.memory_space<vmem>>, vector<1x16x32xf32>
    %1 = vector.shape_cast %0 : vector<1x16x32xf32> to vector<16x32xf32>
    %c0_2 = arith.constant 0 : index
    %c0_3 = arith.constant 0 : index
    %2 = vector.load %arg2[%c0_2, %c0_3] : memref<480x32xf32, #tpu.memory_space<vmem>>, vector<288x16xf32>
    %c288 = arith.constant 288 : index
    %c0_4 = arith.constant 0 : index
    %3 = vector.load %arg2[%c288, %c0_4] : memref<480x32xf32, #tpu.memory_space<vmem>>, vector<144x32xf32>
    %c432 = arith.constant 432 : index
    %c0_5 = arith.constant 0 : index
    %4 = vector.load %arg2[%c432, %c0_5] : memref<480x32xf32, #tpu.memory_space<vmem>>, vector<32x1xf32>
    %c464 = arith.constant 464 : index
    %c0_6 = arith.constant 0 : index
    %5 = vector.load %arg2[%c464, %c0_6] : memref<480x32xf32, #tpu.memory_space<vmem>>, vector<16x1xf32>
    %cst = arith.constant dense<0.000000e+00> : vector<288x32xf32>
    %6 = tpu.matmul %2, %1, %cst {dimension_numbers = #tpu.dot_dimension_numbers<[1], [0], [0], [1], [0, 0, 1, 1], [], []>} : vector<288x16xf32>, vector<16x32xf32>, vector<288x32xf32> -> vector<288x32xf32>
    %cst_7 = arith.constant 0.000000e+00 : f32
    %7 = vector.broadcast %cst_7 : f32 to vector<32x32xf32>
    %c0_8 = arith.constant 0 : index
    %c0_9 = arith.constant 0 : index
    %8 = vector.load %arg3[%c0_8, %c0_9] : memref<864x52xf32, #tpu.memory_space<vmem>>, vector<32x32xf32>
    %9 = vector.extract_strided_slice %6 {offsets = [0, 0], sizes = [32, 32], strides = [1, 1]} : vector<288x32xf32> to vector<32x32xf32>
    %cst_10 = arith.constant dense<0.000000e+00> : vector<32x32xf32>
    %10 = tpu.matmul %9, %8, %cst_10 {dimension_numbers = #tpu.dot_dimension_numbers<[1], [0], [0], [1], [0, 0, 1, 1], [], []>} : vector<32x32xf32>, vector<32x32xf32>, vector<32x32xf32> -> vector<32x32xf32>
    %11 = arith.addf %7, %10 : vector<32x32xf32>
    %c32 = arith.constant 32 : index
    %c0_11 = arith.constant 0 : index
    %12 = vector.load %arg3[%c32, %c0_11] : memref<864x52xf32, #tpu.memory_space<vmem>>, vector<32x32xf32>
    %13 = vector.extract_strided_slice %6 {offsets = [32, 0], sizes = [32, 32], strides = [1, 1]} : vector<288x32xf32> to vector<32x32xf32>
    %cst_12 = arith.constant dense<0.000000e+00> : vector<32x32xf32>
    %14 = tpu.matmul %13, %12, %cst_12 {dimension_numbers = #tpu.dot_dimension_numbers<[1], [0], [0], [1], [0, 0, 1, 1], [], []>} : vector<32x32xf32>, vector<32x32xf32>, vector<32x32xf32> -> vector<32x32xf32>
    %15 = arith.addf %11, %14 : vector<32x32xf32>
    %c64 = arith.constant 64 : index
    %c0_13 = arith.constant 0 : index
    %16 = vector.load %arg3[%c64, %c0_13] : memref<864x52xf32, #tpu.memory_space<vmem>>, vector<32x32xf32>
    %17 = vector.extract_strided_slice %6 {offsets = [64, 0], sizes = [32, 32], strides = [1, 1]} : vector<288x32xf32> to vector<32x32xf32>
    %cst_14 = arith.constant dense<0.000000e+00> : vector<32x32xf32>
    %18 = tpu.matmul %17, %16, %cst_14 {dimension_numbers = #tpu.dot_dimension_numbers<[1], [0], [0], [1], [0, 0, 1, 1], [], []>} : vector<32x32xf32>, vector<32x32xf32>, vector<32x32xf32> -> vector<32x32xf32>
    %19 = arith.addf %15, %18 : vector<32x32xf32>
    %c96 = arith.constant 96 : index
    %c0_15 = arith.constant 0 : index
    %20 = vector.load %arg3[%c96, %c0_15] : memref<864x52xf32, #tpu.memory_space<vmem>>, vector<32x32xf32>
    %21 = vector.extract_strided_slice %6 {offsets = [96, 0], sizes = [32, 32], strides = [1, 1]} : vector<288x32xf32> to vector<32x32xf32>
    %cst_16 = arith.constant dense<0.000000e+00> : vector<32x32xf32>
    %22 = tpu.matmul %21, %20, %cst_16 {dimension_numbers = #tpu.dot_dimension_numbers<[1], [0], [0], [1], [0, 0, 1, 1], [], []>} : vector<32x32xf32>, vector<32x32xf32>, vector<32x32xf32> -> vector<32x32xf32>
    %23 = arith.addf %19, %22 : vector<32x32xf32>
    %c128 = arith.constant 128 : index
    %c0_17 = arith.constant 0 : index
    %24 = vector.load %arg3[%c128, %c0_17] : memref<864x52xf32, #tpu.memory_space<vmem>>, vector<32x32xf32>
    %25 = vector.extract_strided_slice %6 {offsets = [128, 0], sizes = [32, 32], strides = [1, 1]} : vector<288x32xf32> to vector<32x32xf32>
    %cst_18 = arith.constant dense<0.000000e+00> : vector<32x32xf32>
    %26 = tpu.matmul %25, %24, %cst_18 {dimension_numbers = #tpu.dot_dimension_numbers<[1], [0], [0], [1], [0, 0, 1, 1], [], []>} : vector<32x32xf32>, vector<32x32xf32>, vector<32x32xf32> -> vector<32x32xf32>
    %27 = arith.addf %23, %26 : vector<32x32xf32>
    %c160 = arith.constant 160 : index
    %c0_19 = arith.constant 0 : index
    %28 = vector.load %arg3[%c160, %c0_19] : memref<864x52xf32, #tpu.memory_space<vmem>>, vector<32x32xf32>
    %29 = vector.extract_strided_slice %6 {offsets = [160, 0], sizes = [32, 32], strides = [1, 1]} : vector<288x32xf32> to vector<32x32xf32>
    %cst_20 = arith.constant dense<0.000000e+00> : vector<32x32xf32>
    %30 = tpu.matmul %29, %28, %cst_20 {dimension_numbers = #tpu.dot_dimension_numbers<[1], [0], [0], [1], [0, 0, 1, 1], [], []>} : vector<32x32xf32>, vector<32x32xf32>, vector<32x32xf32> -> vector<32x32xf32>
    %31 = arith.addf %27, %30 : vector<32x32xf32>
    %c192 = arith.constant 192 : index
    %c0_21 = arith.constant 0 : index
    %32 = vector.load %arg3[%c192, %c0_21] : memref<864x52xf32, #tpu.memory_space<vmem>>, vector<32x32xf32>
    %33 = vector.extract_strided_slice %6 {offsets = [192, 0], sizes = [32, 32], strides = [1, 1]} : vector<288x32xf32> to vector<32x32xf32>
    %cst_22 = arith.constant dense<0.000000e+00> : vector<32x32xf32>
    %34 = tpu.matmul %33, %32, %cst_22 {dimension_numbers = #tpu.dot_dimension_numbers<[1], [0], [0], [1], [0, 0, 1, 1], [], []>} : vector<32x32xf32>, vector<32x32xf32>, vector<32x32xf32> -> vector<32x32xf32>
    %35 = arith.addf %31, %34 : vector<32x32xf32>
    %c224 = arith.constant 224 : index
    %c0_23 = arith.constant 0 : index
    %36 = vector.load %arg3[%c224, %c0_23] : memref<864x52xf32, #tpu.memory_space<vmem>>, vector<32x32xf32>
    %37 = vector.extract_strided_slice %6 {offsets = [224, 0], sizes = [32, 32], strides = [1, 1]} : vector<288x32xf32> to vector<32x32xf32>
    %cst_24 = arith.constant dense<0.000000e+00> : vector<32x32xf32>
    %38 = tpu.matmul %37, %36, %cst_24 {dimension_numbers = #tpu.dot_dimension_numbers<[1], [0], [0], [1], [0, 0, 1, 1], [], []>} : vector<32x32xf32>, vector<32x32xf32>, vector<32x32xf32> -> vector<32x32xf32>
    %39 = arith.addf %35, %38 : vector<32x32xf32>
    %c256 = arith.constant 256 : index
    %c0_25 = arith.constant 0 : index
    %40 = vector.load %arg3[%c256, %c0_25] : memref<864x52xf32, #tpu.memory_space<vmem>>, vector<32x32xf32>
    %41 = vector.extract_strided_slice %6 {offsets = [256, 0], sizes = [32, 32], strides = [1, 1]} : vector<288x32xf32> to vector<32x32xf32>
    %cst_26 = arith.constant dense<0.000000e+00> : vector<32x32xf32>
    %42 = tpu.matmul %41, %40, %cst_26 {dimension_numbers = #tpu.dot_dimension_numbers<[1], [0], [0], [1], [0, 0, 1, 1], [], []>} : vector<32x32xf32>, vector<32x32xf32>, vector<32x32xf32> -> vector<32x32xf32>
    %43 = arith.addf %39, %42 : vector<32x32xf32>
    %44 = vector.broadcast %4 : vector<32x1xf32> to vector<32x32xf32>
    %45 = arith.addf %43, %44 : vector<32x32xf32>
    %cst_27 = arith.constant 0.707106769 : f32
    %46 = vector.broadcast %cst_27 : f32 to vector<32x32xf32>
    %47 = arith.mulf %45, %46 : vector<32x32xf32>
    %48 = math.absf %47 : vector<32x32xf32>
    %cst_28 = arith.constant 0.327591091 : f32
    %49 = vector.broadcast %cst_28 : f32 to vector<32x32xf32>
    %50 = arith.mulf %49, %48 : vector<32x32xf32>
    %cst_29 = arith.constant 1.000000e+00 : f32
    %51 = vector.broadcast %cst_29 : f32 to vector<32x32xf32>
    %52 = arith.addf %51, %50 : vector<32x32xf32>
    %cst_30 = arith.constant 1.000000e+00 : f32
    %53 = vector.broadcast %cst_30 : f32 to vector<32x32xf32>
    %54 = arith.divf %53, %52 : vector<32x32xf32>
    %cst_31 = arith.constant 1.06140542 : f32
    %55 = vector.broadcast %cst_31 : f32 to vector<32x32xf32>
    %56 = arith.mulf %55, %54 : vector<32x32xf32>
    %cst_32 = arith.constant -1.45315206 : f32
    %57 = vector.broadcast %cst_32 : f32 to vector<32x32xf32>
    %58 = arith.addf %56, %57 : vector<32x32xf32>
    %59 = arith.mulf %58, %54 : vector<32x32xf32>
    %cst_33 = arith.constant 1.42141378 : f32
    %60 = vector.broadcast %cst_33 : f32 to vector<32x32xf32>
    %61 = arith.addf %59, %60 : vector<32x32xf32>
    %62 = arith.mulf %61, %54 : vector<32x32xf32>
    %cst_34 = arith.constant -0.284496725 : f32
    %63 = vector.broadcast %cst_34 : f32 to vector<32x32xf32>
    %64 = arith.addf %62, %63 : vector<32x32xf32>
    %65 = arith.mulf %64, %54 : vector<32x32xf32>
    %cst_35 = arith.constant 0.254829586 : f32
    %66 = vector.broadcast %cst_35 : f32 to vector<32x32xf32>
    %67 = arith.addf %65, %66 : vector<32x32xf32>
    %68 = arith.mulf %67, %54 : vector<32x32xf32>
    %cst_36 = arith.constant 0.000000e+00 : f32
    %69 = vector.broadcast %cst_36 : f32 to vector<32x32xf32>
    %70 = arith.subf %69, %48 : vector<32x32xf32>
    %71 = arith.mulf %70, %48 : vector<32x32xf32>
    %72 = math.exp %71 : vector<32x32xf32>
    %73 = arith.mulf %68, %72 : vector<32x32xf32>
    %cst_37 = arith.constant 1.000000e+00 : f32
    %74 = vector.broadcast %cst_37 : f32 to vector<32x32xf32>
    %75 = arith.subf %74, %73 : vector<32x32xf32>
    %cst_38 = arith.constant 0.000000e+00 : f32
    %76 = vector.broadcast %cst_38 : f32 to vector<32x32xf32>
    %77 = arith.cmpf oge, %47, %76 : vector<32x32xf32>
    %cst_39 = arith.constant 0.000000e+00 : f32
    %78 = vector.broadcast %cst_39 : f32 to vector<32x32xf32>
    %79 = arith.subf %78, %75 : vector<32x32xf32>
    %80 = arith.select %77, %75, %79 : vector<32x32xi1>, vector<32x32xf32>
    %cst_40 = arith.constant 5.000000e-01 : f32
    %81 = vector.broadcast %cst_40 : f32 to vector<32x32xf32>
    %82 = arith.mulf %81, %45 : vector<32x32xf32>
    %cst_41 = arith.constant 1.000000e+00 : f32
    %83 = vector.broadcast %cst_41 : f32 to vector<32x32xf32>
    %84 = arith.addf %83, %80 : vector<32x32xf32>
    %85 = arith.mulf %82, %84 : vector<32x32xf32>
    %cst_42 = arith.constant dense<0.000000e+00> : vector<144x32xf32>
    %86 = tpu.matmul %3, %85, %cst_42 {dimension_numbers = #tpu.dot_dimension_numbers<[1], [0], [0], [1], [0, 0, 1, 1], [], []>} : vector<144x32xf32>, vector<32x32xf32>, vector<144x32xf32> -> vector<144x32xf32>
    %cst_43 = arith.constant 0.000000e+00 : f32
    %87 = vector.broadcast %cst_43 : f32 to vector<16x32xf32>
    %c0_44 = arith.constant 0 : index
    %c0_45 = arith.constant 0 : index
    %88 = vector.load %arg4[%c0_44, %c0_45] : memref<1404x32xf32, #tpu.memory_space<vmem>>, vector<32x32xf32>
    %89 = vector.extract_strided_slice %86 {offsets = [0, 0], sizes = [16, 32], strides = [1, 1]} : vector<144x32xf32> to vector<16x32xf32>
    %cst_46 = arith.constant dense<0.000000e+00> : vector<16x32xf32>
    %90 = tpu.matmul %89, %88, %cst_46 {dimension_numbers = #tpu.dot_dimension_numbers<[1], [0], [0], [1], [0, 0, 1, 1], [], []>} : vector<16x32xf32>, vector<32x32xf32>, vector<16x32xf32> -> vector<16x32xf32>
    %91 = arith.addf %87, %90 : vector<16x32xf32>
    %c52 = arith.constant 52 : index
    %c0_47 = arith.constant 0 : index
    %92 = vector.load %arg4[%c52, %c0_47] : memref<1404x32xf32, #tpu.memory_space<vmem>>, vector<32x32xf32>
    %93 = vector.extract_strided_slice %86 {offsets = [16, 0], sizes = [16, 32], strides = [1, 1]} : vector<144x32xf32> to vector<16x32xf32>
    %cst_48 = arith.constant dense<0.000000e+00> : vector<16x32xf32>
    %94 = tpu.matmul %93, %92, %cst_48 {dimension_numbers = #tpu.dot_dimension_numbers<[1], [0], [0], [1], [0, 0, 1, 1], [], []>} : vector<16x32xf32>, vector<32x32xf32>, vector<16x32xf32> -> vector<16x32xf32>
    %95 = arith.addf %91, %94 : vector<16x32xf32>
    %c104 = arith.constant 104 : index
    %c0_49 = arith.constant 0 : index
    %96 = vector.load %arg4[%c104, %c0_49] : memref<1404x32xf32, #tpu.memory_space<vmem>>, vector<32x32xf32>
    %97 = vector.extract_strided_slice %86 {offsets = [32, 0], sizes = [16, 32], strides = [1, 1]} : vector<144x32xf32> to vector<16x32xf32>
    %cst_50 = arith.constant dense<0.000000e+00> : vector<16x32xf32>
    %98 = tpu.matmul %97, %96, %cst_50 {dimension_numbers = #tpu.dot_dimension_numbers<[1], [0], [0], [1], [0, 0, 1, 1], [], []>} : vector<16x32xf32>, vector<32x32xf32>, vector<16x32xf32> -> vector<16x32xf32>
    %99 = arith.addf %95, %98 : vector<16x32xf32>
    %c156 = arith.constant 156 : index
    %c0_51 = arith.constant 0 : index
    %100 = vector.load %arg4[%c156, %c0_51] : memref<1404x32xf32, #tpu.memory_space<vmem>>, vector<32x32xf32>
    %101 = vector.extract_strided_slice %86 {offsets = [48, 0], sizes = [16, 32], strides = [1, 1]} : vector<144x32xf32> to vector<16x32xf32>
    %cst_52 = arith.constant dense<0.000000e+00> : vector<16x32xf32>
    %102 = tpu.matmul %101, %100, %cst_52 {dimension_numbers = #tpu.dot_dimension_numbers<[1], [0], [0], [1], [0, 0, 1, 1], [], []>} : vector<16x32xf32>, vector<32x32xf32>, vector<16x32xf32> -> vector<16x32xf32>
    %103 = arith.addf %99, %102 : vector<16x32xf32>
    %c208 = arith.constant 208 : index
    %c0_53 = arith.constant 0 : index
    %104 = vector.load %arg4[%c208, %c0_53] : memref<1404x32xf32, #tpu.memory_space<vmem>>, vector<32x32xf32>
    %105 = vector.extract_strided_slice %86 {offsets = [64, 0], sizes = [16, 32], strides = [1, 1]} : vector<144x32xf32> to vector<16x32xf32>
    %cst_54 = arith.constant dense<0.000000e+00> : vector<16x32xf32>
    %106 = tpu.matmul %105, %104, %cst_54 {dimension_numbers = #tpu.dot_dimension_numbers<[1], [0], [0], [1], [0, 0, 1, 1], [], []>} : vector<16x32xf32>, vector<32x32xf32>, vector<16x32xf32> -> vector<16x32xf32>
    %107 = arith.addf %103, %106 : vector<16x32xf32>
    %c260 = arith.constant 260 : index
    %c0_55 = arith.constant 0 : index
    %108 = vector.load %arg4[%c260, %c0_55] : memref<1404x32xf32, #tpu.memory_space<vmem>>, vector<32x32xf32>
    %109 = vector.extract_strided_slice %86 {offsets = [80, 0], sizes = [16, 32], strides = [1, 1]} : vector<144x32xf32> to vector<16x32xf32>
    %cst_56 = arith.constant dense<0.000000e+00> : vector<16x32xf32>
    %110 = tpu.matmul %109, %108, %cst_56 {dimension_numbers = #tpu.dot_dimension_numbers<[1], [0], [0], [1], [0, 0, 1, 1], [], []>} : vector<16x32xf32>, vector<32x32xf32>, vector<16x32xf32> -> vector<16x32xf32>
    %111 = arith.addf %107, %110 : vector<16x32xf32>
    %c312 = arith.constant 312 : index
    %c0_57 = arith.constant 0 : index
    %112 = vector.load %arg4[%c312, %c0_57] : memref<1404x32xf32, #tpu.memory_space<vmem>>, vector<32x32xf32>
    %113 = vector.extract_strided_slice %86 {offsets = [96, 0], sizes = [16, 32], strides = [1, 1]} : vector<144x32xf32> to vector<16x32xf32>
    %cst_58 = arith.constant dense<0.000000e+00> : vector<16x32xf32>
    %114 = tpu.matmul %113, %112, %cst_58 {dimension_numbers = #tpu.dot_dimension_numbers<[1], [0], [0], [1], [0, 0, 1, 1], [], []>} : vector<16x32xf32>, vector<32x32xf32>, vector<16x32xf32> -> vector<16x32xf32>
    %115 = arith.addf %111, %114 : vector<16x32xf32>
    %c364 = arith.constant 364 : index
    %c0_59 = arith.constant 0 : index
    %116 = vector.load %arg4[%c364, %c0_59] : memref<1404x32xf32, #tpu.memory_space<vmem>>, vector<32x32xf32>
    %117 = vector.extract_strided_slice %86 {offsets = [112, 0], sizes = [16, 32], strides = [1, 1]} : vector<144x32xf32> to vector<16x32xf32>
    %cst_60 = arith.constant dense<0.000000e+00> : vector<16x32xf32>
    %118 = tpu.matmul %117, %116, %cst_60 {dimension_numbers = #tpu.dot_dimension_numbers<[1], [0], [0], [1], [0, 0, 1, 1], [], []>} : vector<16x32xf32>, vector<32x32xf32>, vector<16x32xf32> -> vector<16x32xf32>
    %119 = arith.addf %115, %118 : vector<16x32xf32>
    %c416 = arith.constant 416 : index
    %c0_61 = arith.constant 0 : index
    %120 = vector.load %arg4[%c416, %c0_61] : memref<1404x32xf32, #tpu.memory_space<vmem>>, vector<32x32xf32>
    %121 = vector.extract_strided_slice %86 {offsets = [128, 0], sizes = [16, 32], strides = [1, 1]} : vector<144x32xf32> to vector<16x32xf32>
    %cst_62 = arith.constant dense<0.000000e+00> : vector<16x32xf32>
    %122 = tpu.matmul %121, %120, %cst_62 {dimension_numbers = #tpu.dot_dimension_numbers<[1], [0], [0], [1], [0, 0, 1, 1], [], []>} : vector<16x32xf32>, vector<32x32xf32>, vector<16x32xf32> -> vector<16x32xf32>
    %123 = arith.addf %119, %122 : vector<16x32xf32>
    %124 = vector.broadcast %5 : vector<16x1xf32> to vector<16x32xf32>
    %125 = arith.addf %123, %124 : vector<16x32xf32>
    %cst_63 = arith.constant 0.333333343 : f32
    %126 = vector.broadcast %cst_63 : f32 to vector<16x32xf32>
    %127 = arith.mulf %126, %125 : vector<16x32xf32>
    %128 = arith.addf %1, %127 : vector<16x32xf32>
    %cst_64 = arith.constant dense<0.000000e+00> : vector<288x32xf32>
    %129 = tpu.matmul %2, %1, %cst_64 {dimension_numbers = #tpu.dot_dimension_numbers<[1], [0], [0], [1], [0, 0, 1, 1], [], []>} : vector<288x16xf32>, vector<16x32xf32>, vector<288x32xf32> -> vector<288x32xf32>
    %cst_65 = arith.constant 0.000000e+00 : f32
    %130 = vector.broadcast %cst_65 : f32 to vector<32x32xf32>
    %c288_66 = arith.constant 288 : index
    %c0_67 = arith.constant 0 : index
    %131 = vector.load %arg3[%c288_66, %c0_67] : memref<864x52xf32, #tpu.memory_space<vmem>>, vector<32x32xf32>
    %132 = vector.extract_strided_slice %129 {offsets = [0, 0], sizes = [32, 32], strides = [1, 1]} : vector<288x32xf32> to vector<32x32xf32>
    %cst_68 = arith.constant dense<0.000000e+00> : vector<32x32xf32>
    %133 = tpu.matmul %132, %131, %cst_68 {dimension_numbers = #tpu.dot_dimension_numbers<[1], [0], [0], [1], [0, 0, 1, 1], [], []>} : vector<32x32xf32>, vector<32x32xf32>, vector<32x32xf32> -> vector<32x32xf32>
    %134 = arith.addf %130, %133 : vector<32x32xf32>
    %c320 = arith.constant 320 : index
    %c0_69 = arith.constant 0 : index
    %135 = vector.load %arg3[%c320, %c0_69] : memref<864x52xf32, #tpu.memory_space<vmem>>, vector<32x32xf32>
    %136 = vector.extract_strided_slice %129 {offsets = [32, 0], sizes = [32, 32], strides = [1, 1]} : vector<288x32xf32> to vector<32x32xf32>
    %cst_70 = arith.constant dense<0.000000e+00> : vector<32x32xf32>
    %137 = tpu.matmul %136, %135, %cst_70 {dimension_numbers = #tpu.dot_dimension_numbers<[1], [0], [0], [1], [0, 0, 1, 1], [], []>} : vector<32x32xf32>, vector<32x32xf32>, vector<32x32xf32> -> vector<32x32xf32>
    %138 = arith.addf %134, %137 : vector<32x32xf32>
    %c352 = arith.constant 352 : index
    %c0_71 = arith.constant 0 : index
    %139 = vector.load %arg3[%c352, %c0_71] : memref<864x52xf32, #tpu.memory_space<vmem>>, vector<32x32xf32>
    %140 = vector.extract_strided_slice %129 {offsets = [64, 0], sizes = [32, 32], strides = [1, 1]} : vector<288x32xf32> to vector<32x32xf32>
    %cst_72 = arith.constant dense<0.000000e+00> : vector<32x32xf32>
    %141 = tpu.matmul %140, %139, %cst_72 {dimension_numbers = #tpu.dot_dimension_numbers<[1], [0], [0], [1], [0, 0, 1, 1], [], []>} : vector<32x32xf32>, vector<32x32xf32>, vector<32x32xf32> -> vector<32x32xf32>
    %142 = arith.addf %138, %141 : vector<32x32xf32>
    %c384 = arith.constant 384 : index
    %c0_73 = arith.constant 0 : index
    %143 = vector.load %arg3[%c384, %c0_73] : memref<864x52xf32, #tpu.memory_space<vmem>>, vector<32x32xf32>
    %144 = vector.extract_strided_slice %129 {offsets = [96, 0], sizes = [32, 32], strides = [1, 1]} : vector<288x32xf32> to vector<32x32xf32>
    %cst_74 = arith.constant dense<0.000000e+00> : vector<32x32xf32>
    %145 = tpu.matmul %144, %143, %cst_74 {dimension_numbers = #tpu.dot_dimension_numbers<[1], [0], [0], [1], [0, 0, 1, 1], [], []>} : vector<32x32xf32>, vector<32x32xf32>, vector<32x32xf32> -> vector<32x32xf32>
    %146 = arith.addf %142, %145 : vector<32x32xf32>
    %c416_75 = arith.constant 416 : index
    %c0_76 = arith.constant 0 : index
    %147 = vector.load %arg3[%c416_75, %c0_76] : memref<864x52xf32, #tpu.memory_space<vmem>>, vector<32x32xf32>
    %148 = vector.extract_strided_slice %129 {offsets = [128, 0], sizes = [32, 32], strides = [1, 1]} : vector<288x32xf32> to vector<32x32xf32>
    %cst_77 = arith.constant dense<0.000000e+00> : vector<32x32xf32>
    %149 = tpu.matmul %148, %147, %cst_77 {dimension_numbers = #tpu.dot_dimension_numbers<[1], [0], [0], [1], [0, 0, 1, 1], [], []>} : vector<32x32xf32>, vector<32x32xf32>, vector<32x32xf32> -> vector<32x32xf32>
    %150 = arith.addf %146, %149 : vector<32x32xf32>
    %c448 = arith.constant 448 : index
    %c0_78 = arith.constant 0 : index
    %151 = vector.load %arg3[%c448, %c0_78] : memref<864x52xf32, #tpu.memory_space<vmem>>, vector<32x32xf32>
    %152 = vector.extract_strided_slice %129 {offsets = [160, 0], sizes = [32, 32], strides = [1, 1]} : vector<288x32xf32> to vector<32x32xf32>
    %cst_79 = arith.constant dense<0.000000e+00> : vector<32x32xf32>
    %153 = tpu.matmul %152, %151, %cst_79 {dimension_numbers = #tpu.dot_dimension_numbers<[1], [0], [0], [1], [0, 0, 1, 1], [], []>} : vector<32x32xf32>, vector<32x32xf32>, vector<32x32xf32> -> vector<32x32xf32>
    %154 = arith.addf %150, %153 : vector<32x32xf32>
    %c480 = arith.constant 480 : index
    %c0_80 = arith.constant 0 : index
    %155 = vector.load %arg3[%c480, %c0_80] : memref<864x52xf32, #tpu.memory_space<vmem>>, vector<32x32xf32>
    %156 = vector.extract_strided_slice %129 {offsets = [192, 0], sizes = [32, 32], strides = [1, 1]} : vector<288x32xf32> to vector<32x32xf32>
    %cst_81 = arith.constant dense<0.000000e+00> : vector<32x32xf32>
    %157 = tpu.matmul %156, %155, %cst_81 {dimension_numbers = #tpu.dot_dimension_numbers<[1], [0], [0], [1], [0, 0, 1, 1], [], []>} : vector<32x32xf32>, vector<32x32xf32>, vector<32x32xf32> -> vector<32x32xf32>
    %158 = arith.addf %154, %157 : vector<32x32xf32>
    %c512 = arith.constant 512 : index
    %c0_82 = arith.constant 0 : index
    %159 = vector.load %arg3[%c512, %c0_82] : memref<864x52xf32, #tpu.memory_space<vmem>>, vector<32x32xf32>
    %160 = vector.extract_strided_slice %129 {offsets = [224, 0], sizes = [32, 32], strides = [1, 1]} : vector<288x32xf32> to vector<32x32xf32>
    %cst_83 = arith.constant dense<0.000000e+00> : vector<32x32xf32>
    %161 = tpu.matmul %160, %159, %cst_83 {dimension_numbers = #tpu.dot_dimension_numbers<[1], [0], [0], [1], [0, 0, 1, 1], [], []>} : vector<32x32xf32>, vector<32x32xf32>, vector<32x32xf32> -> vector<32x32xf32>
    %162 = arith.addf %158, %161 : vector<32x32xf32>
    %c544 = arith.constant 544 : index
    %c0_84 = arith.constant 0 : index
    %163 = vector.load %arg3[%c544, %c0_84] : memref<864x52xf32, #tpu.memory_space<vmem>>, vector<32x32xf32>
    %164 = vector.extract_strided_slice %129 {offsets = [256, 0], sizes = [32, 32], strides = [1, 1]} : vector<288x32xf32> to vector<32x32xf32>
    %cst_85 = arith.constant dense<0.000000e+00> : vector<32x32xf32>
    %165 = tpu.matmul %164, %163, %cst_85 {dimension_numbers = #tpu.dot_dimension_numbers<[1], [0], [0], [1], [0, 0, 1, 1], [], []>} : vector<32x32xf32>, vector<32x32xf32>, vector<32x32xf32> -> vector<32x32xf32>
    %166 = arith.addf %162, %165 : vector<32x32xf32>
    %167 = vector.broadcast %4 : vector<32x1xf32> to vector<32x32xf32>
    %168 = arith.addf %166, %167 : vector<32x32xf32>
    %cst_86 = arith.constant 0.707106769 : f32
    %169 = vector.broadcast %cst_86 : f32 to vector<32x32xf32>
    %170 = arith.mulf %168, %169 : vector<32x32xf32>
    %171 = math.absf %170 : vector<32x32xf32>
    %cst_87 = arith.constant 0.327591091 : f32
    %172 = vector.broadcast %cst_87 : f32 to vector<32x32xf32>
    %173 = arith.mulf %172, %171 : vector<32x32xf32>
    %cst_88 = arith.constant 1.000000e+00 : f32
    %174 = vector.broadcast %cst_88 : f32 to vector<32x32xf32>
    %175 = arith.addf %174, %173 : vector<32x32xf32>
    %cst_89 = arith.constant 1.000000e+00 : f32
    %176 = vector.broadcast %cst_89 : f32 to vector<32x32xf32>
    %177 = arith.divf %176, %175 : vector<32x32xf32>
    %cst_90 = arith.constant 1.06140542 : f32
    %178 = vector.broadcast %cst_90 : f32 to vector<32x32xf32>
    %179 = arith.mulf %178, %177 : vector<32x32xf32>
    %cst_91 = arith.constant -1.45315206 : f32
    %180 = vector.broadcast %cst_91 : f32 to vector<32x32xf32>
    %181 = arith.addf %179, %180 : vector<32x32xf32>
    %182 = arith.mulf %181, %177 : vector<32x32xf32>
    %cst_92 = arith.constant 1.42141378 : f32
    %183 = vector.broadcast %cst_92 : f32 to vector<32x32xf32>
    %184 = arith.addf %182, %183 : vector<32x32xf32>
    %185 = arith.mulf %184, %177 : vector<32x32xf32>
    %cst_93 = arith.constant -0.284496725 : f32
    %186 = vector.broadcast %cst_93 : f32 to vector<32x32xf32>
    %187 = arith.addf %185, %186 : vector<32x32xf32>
    %188 = arith.mulf %187, %177 : vector<32x32xf32>
    %cst_94 = arith.constant 0.254829586 : f32
    %189 = vector.broadcast %cst_94 : f32 to vector<32x32xf32>
    %190 = arith.addf %188, %189 : vector<32x32xf32>
    %191 = arith.mulf %190, %177 : vector<32x32xf32>
    %cst_95 = arith.constant 0.000000e+00 : f32
    %192 = vector.broadcast %cst_95 : f32 to vector<32x32xf32>
    %193 = arith.subf %192, %171 : vector<32x32xf32>
    %194 = arith.mulf %193, %171 : vector<32x32xf32>
    %195 = math.exp %194 : vector<32x32xf32>
    %196 = arith.mulf %191, %195 : vector<32x32xf32>
    %cst_96 = arith.constant 1.000000e+00 : f32
    %197 = vector.broadcast %cst_96 : f32 to vector<32x32xf32>
    %198 = arith.subf %197, %196 : vector<32x32xf32>
    %cst_97 = arith.constant 0.000000e+00 : f32
    %199 = vector.broadcast %cst_97 : f32 to vector<32x32xf32>
    %200 = arith.cmpf oge, %170, %199 : vector<32x32xf32>
    %cst_98 = arith.constant 0.000000e+00 : f32
    %201 = vector.broadcast %cst_98 : f32 to vector<32x32xf32>
    %202 = arith.subf %201, %198 : vector<32x32xf32>
    %203 = arith.select %200, %198, %202 : vector<32x32xi1>, vector<32x32xf32>
    %cst_99 = arith.constant 5.000000e-01 : f32
    %204 = vector.broadcast %cst_99 : f32 to vector<32x32xf32>
    %205 = arith.mulf %204, %168 : vector<32x32xf32>
    %cst_100 = arith.constant 1.000000e+00 : f32
    %206 = vector.broadcast %cst_100 : f32 to vector<32x32xf32>
    %207 = arith.addf %206, %203 : vector<32x32xf32>
    %208 = arith.mulf %205, %207 : vector<32x32xf32>
    %cst_101 = arith.constant dense<0.000000e+00> : vector<144x32xf32>
    %209 = tpu.matmul %3, %208, %cst_101 {dimension_numbers = #tpu.dot_dimension_numbers<[1], [0], [0], [1], [0, 0, 1, 1], [], []>} : vector<144x32xf32>, vector<32x32xf32>, vector<144x32xf32> -> vector<144x32xf32>
    %cst_102 = arith.constant 0.000000e+00 : f32
    %210 = vector.broadcast %cst_102 : f32 to vector<16x32xf32>
    %c468 = arith.constant 468 : index
    %c0_103 = arith.constant 0 : index
    %211 = vector.load %arg4[%c468, %c0_103] : memref<1404x32xf32, #tpu.memory_space<vmem>>, vector<32x32xf32>
    %212 = vector.extract_strided_slice %209 {offsets = [0, 0], sizes = [16, 32], strides = [1, 1]} : vector<144x32xf32> to vector<16x32xf32>
    %cst_104 = arith.constant dense<0.000000e+00> : vector<16x32xf32>
    %213 = tpu.matmul %212, %211, %cst_104 {dimension_numbers = #tpu.dot_dimension_numbers<[1], [0], [0], [1], [0, 0, 1, 1], [], []>} : vector<16x32xf32>, vector<32x32xf32>, vector<16x32xf32> -> vector<16x32xf32>
    %214 = arith.addf %210, %213 : vector<16x32xf32>
    %c520 = arith.constant 520 : index
    %c0_105 = arith.constant 0 : index
    %215 = vector.load %arg4[%c520, %c0_105] : memref<1404x32xf32, #tpu.memory_space<vmem>>, vector<32x32xf32>
    %216 = vector.extract_strided_slice %209 {offsets = [16, 0], sizes = [16, 32], strides = [1, 1]} : vector<144x32xf32> to vector<16x32xf32>
    %cst_106 = arith.constant dense<0.000000e+00> : vector<16x32xf32>
    %217 = tpu.matmul %216, %215, %cst_106 {dimension_numbers = #tpu.dot_dimension_numbers<[1], [0], [0], [1], [0, 0, 1, 1], [], []>} : vector<16x32xf32>, vector<32x32xf32>, vector<16x32xf32> -> vector<16x32xf32>
    %218 = arith.addf %214, %217 : vector<16x32xf32>
    %c572 = arith.constant 572 : index
    %c0_107 = arith.constant 0 : index
    %219 = vector.load %arg4[%c572, %c0_107] : memref<1404x32xf32, #tpu.memory_space<vmem>>, vector<32x32xf32>
    %220 = vector.extract_strided_slice %209 {offsets = [32, 0], sizes = [16, 32], strides = [1, 1]} : vector<144x32xf32> to vector<16x32xf32>
    %cst_108 = arith.constant dense<0.000000e+00> : vector<16x32xf32>
    %221 = tpu.matmul %220, %219, %cst_108 {dimension_numbers = #tpu.dot_dimension_numbers<[1], [0], [0], [1], [0, 0, 1, 1], [], []>} : vector<16x32xf32>, vector<32x32xf32>, vector<16x32xf32> -> vector<16x32xf32>
    %222 = arith.addf %218, %221 : vector<16x32xf32>
    %c624 = arith.constant 624 : index
    %c0_109 = arith.constant 0 : index
    %223 = vector.load %arg4[%c624, %c0_109] : memref<1404x32xf32, #tpu.memory_space<vmem>>, vector<32x32xf32>
    %224 = vector.extract_strided_slice %209 {offsets = [48, 0], sizes = [16, 32], strides = [1, 1]} : vector<144x32xf32> to vector<16x32xf32>
    %cst_110 = arith.constant dense<0.000000e+00> : vector<16x32xf32>
    %225 = tpu.matmul %224, %223, %cst_110 {dimension_numbers = #tpu.dot_dimension_numbers<[1], [0], [0], [1], [0, 0, 1, 1], [], []>} : vector<16x32xf32>, vector<32x32xf32>, vector<16x32xf32> -> vector<16x32xf32>
    %226 = arith.addf %222, %225 : vector<16x32xf32>
    %c676 = arith.constant 676 : index
    %c0_111 = arith.constant 0 : index
    %227 = vector.load %arg4[%c676, %c0_111] : memref<1404x32xf32, #tpu.memory_space<vmem>>, vector<32x32xf32>
    %228 = vector.extract_strided_slice %209 {offsets = [64, 0], sizes = [16, 32], strides = [1, 1]} : vector<144x32xf32> to vector<16x32xf32>
    %cst_112 = arith.constant dense<0.000000e+00> : vector<16x32xf32>
    %229 = tpu.matmul %228, %227, %cst_112 {dimension_numbers = #tpu.dot_dimension_numbers<[1], [0], [0], [1], [0, 0, 1, 1], [], []>} : vector<16x32xf32>, vector<32x32xf32>, vector<16x32xf32> -> vector<16x32xf32>
    %230 = arith.addf %226, %229 : vector<16x32xf32>
    %c728 = arith.constant 728 : index
    %c0_113 = arith.constant 0 : index
    %231 = vector.load %arg4[%c728, %c0_113] : memref<1404x32xf32, #tpu.memory_space<vmem>>, vector<32x32xf32>
    %232 = vector.extract_strided_slice %209 {offsets = [80, 0], sizes = [16, 32], strides = [1, 1]} : vector<144x32xf32> to vector<16x32xf32>
    %cst_114 = arith.constant dense<0.000000e+00> : vector<16x32xf32>
    %233 = tpu.matmul %232, %231, %cst_114 {dimension_numbers = #tpu.dot_dimension_numbers<[1], [0], [0], [1], [0, 0, 1, 1], [], []>} : vector<16x32xf32>, vector<32x32xf32>, vector<16x32xf32> -> vector<16x32xf32>
    %234 = arith.addf %230, %233 : vector<16x32xf32>
    %c780 = arith.constant 780 : index
    %c0_115 = arith.constant 0 : index
    %235 = vector.load %arg4[%c780, %c0_115] : memref<1404x32xf32, #tpu.memory_space<vmem>>, vector<32x32xf32>
    %236 = vector.extract_strided_slice %209 {offsets = [96, 0], sizes = [16, 32], strides = [1, 1]} : vector<144x32xf32> to vector<16x32xf32>
    %cst_116 = arith.constant dense<0.000000e+00> : vector<16x32xf32>
    %237 = tpu.matmul %236, %235, %cst_116 {dimension_numbers = #tpu.dot_dimension_numbers<[1], [0], [0], [1], [0, 0, 1, 1], [], []>} : vector<16x32xf32>, vector<32x32xf32>, vector<16x32xf32> -> vector<16x32xf32>
    %238 = arith.addf %234, %237 : vector<16x32xf32>
    %c832 = arith.constant 832 : index
    %c0_117 = arith.constant 0 : index
    %239 = vector.load %arg4[%c832, %c0_117] : memref<1404x32xf32, #tpu.memory_space<vmem>>, vector<32x32xf32>
    %240 = vector.extract_strided_slice %209 {offsets = [112, 0], sizes = [16, 32], strides = [1, 1]} : vector<144x32xf32> to vector<16x32xf32>
    %cst_118 = arith.constant dense<0.000000e+00> : vector<16x32xf32>
    %241 = tpu.matmul %240, %239, %cst_118 {dimension_numbers = #tpu.dot_dimension_numbers<[1], [0], [0], [1], [0, 0, 1, 1], [], []>} : vector<16x32xf32>, vector<32x32xf32>, vector<16x32xf32> -> vector<16x32xf32>
    %242 = arith.addf %238, %241 : vector<16x32xf32>
    %c884 = arith.constant 884 : index
    %c0_119 = arith.constant 0 : index
    %243 = vector.load %arg4[%c884, %c0_119] : memref<1404x32xf32, #tpu.memory_space<vmem>>, vector<32x32xf32>
    %244 = vector.extract_strided_slice %209 {offsets = [128, 0], sizes = [16, 32], strides = [1, 1]} : vector<144x32xf32> to vector<16x32xf32>
    %cst_120 = arith.constant dense<0.000000e+00> : vector<16x32xf32>
    %245 = tpu.matmul %244, %243, %cst_120 {dimension_numbers = #tpu.dot_dimension_numbers<[1], [0], [0], [1], [0, 0, 1, 1], [], []>} : vector<16x32xf32>, vector<32x32xf32>, vector<16x32xf32> -> vector<16x32xf32>
    %246 = arith.addf %242, %245 : vector<16x32xf32>
    %247 = vector.broadcast %5 : vector<16x1xf32> to vector<16x32xf32>
    %248 = arith.addf %246, %247 : vector<16x32xf32>
    %cst_121 = arith.constant 0.333333343 : f32
    %249 = vector.broadcast %cst_121 : f32 to vector<16x32xf32>
    %250 = arith.mulf %249, %248 : vector<16x32xf32>
    %251 = arith.addf %128, %250 : vector<16x32xf32>
    %cst_122 = arith.constant dense<0.000000e+00> : vector<288x32xf32>
    %252 = tpu.matmul %2, %1, %cst_122 {dimension_numbers = #tpu.dot_dimension_numbers<[1], [0], [0], [1], [0, 0, 1, 1], [], []>} : vector<288x16xf32>, vector<16x32xf32>, vector<288x32xf32> -> vector<288x32xf32>
    %cst_123 = arith.constant 0.000000e+00 : f32
    %253 = vector.broadcast %cst_123 : f32 to vector<32x52xf32>
    %c576 = arith.constant 576 : index
    %c0_124 = arith.constant 0 : index
    %254 = vector.load %arg3[%c576, %c0_124] : memref<864x52xf32, #tpu.memory_space<vmem>>, vector<32x52xf32>
    %255 = vector.extract_strided_slice %252 {offsets = [0, 0], sizes = [32, 32], strides = [1, 1]} : vector<288x32xf32> to vector<32x32xf32>
    %cst_125 = arith.constant dense<0.000000e+00> : vector<32x52xf32>
    %256 = tpu.matmul %255, %254, %cst_125 {dimension_numbers = #tpu.dot_dimension_numbers<[1], [0], [0], [1], [0, 0, 1, 1], [], []>} : vector<32x32xf32>, vector<32x52xf32>, vector<32x52xf32> -> vector<32x52xf32>
    %257 = arith.addf %253, %256 : vector<32x52xf32>
    %c608 = arith.constant 608 : index
    %c0_126 = arith.constant 0 : index
    %258 = vector.load %arg3[%c608, %c0_126] : memref<864x52xf32, #tpu.memory_space<vmem>>, vector<32x52xf32>
    %259 = vector.extract_strided_slice %252 {offsets = [32, 0], sizes = [32, 32], strides = [1, 1]} : vector<288x32xf32> to vector<32x32xf32>
    %cst_127 = arith.constant dense<0.000000e+00> : vector<32x52xf32>
    %260 = tpu.matmul %259, %258, %cst_127 {dimension_numbers = #tpu.dot_dimension_numbers<[1], [0], [0], [1], [0, 0, 1, 1], [], []>} : vector<32x32xf32>, vector<32x52xf32>, vector<32x52xf32> -> vector<32x52xf32>
    %261 = arith.addf %257, %260 : vector<32x52xf32>
    %c640 = arith.constant 640 : index
    %c0_128 = arith.constant 0 : index
    %262 = vector.load %arg3[%c640, %c0_128] : memref<864x52xf32, #tpu.memory_space<vmem>>, vector<32x52xf32>
    %263 = vector.extract_strided_slice %252 {offsets = [64, 0], sizes = [32, 32], strides = [1, 1]} : vector<288x32xf32> to vector<32x32xf32>
    %cst_129 = arith.constant dense<0.000000e+00> : vector<32x52xf32>
    %264 = tpu.matmul %263, %262, %cst_129 {dimension_numbers = #tpu.dot_dimension_numbers<[1], [0], [0], [1], [0, 0, 1, 1], [], []>} : vector<32x32xf32>, vector<32x52xf32>, vector<32x52xf32> -> vector<32x52xf32>
    %265 = arith.addf %261, %264 : vector<32x52xf32>
    %c672 = arith.constant 672 : index
    %c0_130 = arith.constant 0 : index
    %266 = vector.load %arg3[%c672, %c0_130] : memref<864x52xf32, #tpu.memory_space<vmem>>, vector<32x52xf32>
    %267 = vector.extract_strided_slice %252 {offsets = [96, 0], sizes = [32, 32], strides = [1, 1]} : vector<288x32xf32> to vector<32x32xf32>
    %cst_131 = arith.constant dense<0.000000e+00> : vector<32x52xf32>
    %268 = tpu.matmul %267, %266, %cst_131 {dimension_numbers = #tpu.dot_dimension_numbers<[1], [0], [0], [1], [0, 0, 1, 1], [], []>} : vector<32x32xf32>, vector<32x52xf32>, vector<32x52xf32> -> vector<32x52xf32>
    %269 = arith.addf %265, %268 : vector<32x52xf32>
    %c704 = arith.constant 704 : index
    %c0_132 = arith.constant 0 : index
    %270 = vector.load %arg3[%c704, %c0_132] : memref<864x52xf32, #tpu.memory_space<vmem>>, vector<32x52xf32>
    %271 = vector.extract_strided_slice %252 {offsets = [128, 0], sizes = [32, 32], strides = [1, 1]} : vector<288x32xf32> to vector<32x32xf32>
    %cst_133 = arith.constant dense<0.000000e+00> : vector<32x52xf32>
    %272 = tpu.matmul %271, %270, %cst_133 {dimension_numbers = #tpu.dot_dimension_numbers<[1], [0], [0], [1], [0, 0, 1, 1], [], []>} : vector<32x32xf32>, vector<32x52xf32>, vector<32x52xf32> -> vector<32x52xf32>
    %273 = arith.addf %269, %272 : vector<32x52xf32>
    %c736 = arith.constant 736 : index
    %c0_134 = arith.constant 0 : index
    %274 = vector.load %arg3[%c736, %c0_134] : memref<864x52xf32, #tpu.memory_space<vmem>>, vector<32x52xf32>
    %275 = vector.extract_strided_slice %252 {offsets = [160, 0], sizes = [32, 32], strides = [1, 1]} : vector<288x32xf32> to vector<32x32xf32>
    %cst_135 = arith.constant dense<0.000000e+00> : vector<32x52xf32>
    %276 = tpu.matmul %275, %274, %cst_135 {dimension_numbers = #tpu.dot_dimension_numbers<[1], [0], [0], [1], [0, 0, 1, 1], [], []>} : vector<32x32xf32>, vector<32x52xf32>, vector<32x52xf32> -> vector<32x52xf32>
    %277 = arith.addf %273, %276 : vector<32x52xf32>
    %c768 = arith.constant 768 : index
    %c0_136 = arith.constant 0 : index
    %278 = vector.load %arg3[%c768, %c0_136] : memref<864x52xf32, #tpu.memory_space<vmem>>, vector<32x52xf32>
    %279 = vector.extract_strided_slice %252 {offsets = [192, 0], sizes = [32, 32], strides = [1, 1]} : vector<288x32xf32> to vector<32x32xf32>
    %cst_137 = arith.constant dense<0.000000e+00> : vector<32x52xf32>
    %280 = tpu.matmul %279, %278, %cst_137 {dimension_numbers = #tpu.dot_dimension_numbers<[1], [0], [0], [1], [0, 0, 1, 1], [], []>} : vector<32x32xf32>, vector<32x52xf32>, vector<32x52xf32> -> vector<32x52xf32>
    %281 = arith.addf %277, %280 : vector<32x52xf32>
    %c800 = arith.constant 800 : index
    %c0_138 = arith.constant 0 : index
    %282 = vector.load %arg3[%c800, %c0_138] : memref<864x52xf32, #tpu.memory_space<vmem>>, vector<32x52xf32>
    %283 = vector.extract_strided_slice %252 {offsets = [224, 0], sizes = [32, 32], strides = [1, 1]} : vector<288x32xf32> to vector<32x32xf32>
    %cst_139 = arith.constant dense<0.000000e+00> : vector<32x52xf32>
    %284 = tpu.matmul %283, %282, %cst_139 {dimension_numbers = #tpu.dot_dimension_numbers<[1], [0], [0], [1], [0, 0, 1, 1], [], []>} : vector<32x32xf32>, vector<32x52xf32>, vector<32x52xf32> -> vector<32x52xf32>
    %285 = arith.addf %281, %284 : vector<32x52xf32>
    %c832_140 = arith.constant 832 : index
    %c0_141 = arith.constant 0 : index
    %286 = vector.load %arg3[%c832_140, %c0_141] : memref<864x52xf32, #tpu.memory_space<vmem>>, vector<32x52xf32>
    %287 = vector.extract_strided_slice %252 {offsets = [256, 0], sizes = [32, 32], strides = [1, 1]} : vector<288x32xf32> to vector<32x32xf32>
    %cst_142 = arith.constant dense<0.000000e+00> : vector<32x52xf32>
    %288 = tpu.matmul %287, %286, %cst_142 {dimension_numbers = #tpu.dot_dimension_numbers<[1], [0], [0], [1], [0, 0, 1, 1], [], []>} : vector<32x32xf32>, vector<32x52xf32>, vector<32x52xf32> -> vector<32x52xf32>
    %289 = arith.addf %285, %288 : vector<32x52xf32>
    %290 = vector.broadcast %4 : vector<32x1xf32> to vector<32x52xf32>
    %291 = arith.addf %289, %290 : vector<32x52xf32>
    %cst_143 = arith.constant 0.707106769 : f32
    %292 = vector.broadcast %cst_143 : f32 to vector<32x52xf32>
    %293 = arith.mulf %291, %292 : vector<32x52xf32>
    %294 = math.absf %293 : vector<32x52xf32>
    %cst_144 = arith.constant 0.327591091 : f32
    %295 = vector.broadcast %cst_144 : f32 to vector<32x52xf32>
    %296 = arith.mulf %295, %294 : vector<32x52xf32>
    %cst_145 = arith.constant 1.000000e+00 : f32
    %297 = vector.broadcast %cst_145 : f32 to vector<32x52xf32>
    %298 = arith.addf %297, %296 : vector<32x52xf32>
    %cst_146 = arith.constant 1.000000e+00 : f32
    %299 = vector.broadcast %cst_146 : f32 to vector<32x52xf32>
    %300 = arith.divf %299, %298 : vector<32x52xf32>
    %cst_147 = arith.constant 1.06140542 : f32
    %301 = vector.broadcast %cst_147 : f32 to vector<32x52xf32>
    %302 = arith.mulf %301, %300 : vector<32x52xf32>
    %cst_148 = arith.constant -1.45315206 : f32
    %303 = vector.broadcast %cst_148 : f32 to vector<32x52xf32>
    %304 = arith.addf %302, %303 : vector<32x52xf32>
    %305 = arith.mulf %304, %300 : vector<32x52xf32>
    %cst_149 = arith.constant 1.42141378 : f32
    %306 = vector.broadcast %cst_149 : f32 to vector<32x52xf32>
    %307 = arith.addf %305, %306 : vector<32x52xf32>
    %308 = arith.mulf %307, %300 : vector<32x52xf32>
    %cst_150 = arith.constant -0.284496725 : f32
    %309 = vector.broadcast %cst_150 : f32 to vector<32x52xf32>
    %310 = arith.addf %308, %309 : vector<32x52xf32>
    %311 = arith.mulf %310, %300 : vector<32x52xf32>
    %cst_151 = arith.constant 0.254829586 : f32
    %312 = vector.broadcast %cst_151 : f32 to vector<32x52xf32>
    %313 = arith.addf %311, %312 : vector<32x52xf32>
    %314 = arith.mulf %313, %300 : vector<32x52xf32>
    %cst_152 = arith.constant 0.000000e+00 : f32
    %315 = vector.broadcast %cst_152 : f32 to vector<32x52xf32>
    %316 = arith.subf %315, %294 : vector<32x52xf32>
    %317 = arith.mulf %316, %294 : vector<32x52xf32>
    %318 = math.exp %317 : vector<32x52xf32>
    %319 = arith.mulf %314, %318 : vector<32x52xf32>
    %cst_153 = arith.constant 1.000000e+00 : f32
    %320 = vector.broadcast %cst_153 : f32 to vector<32x52xf32>
    %321 = arith.subf %320, %319 : vector<32x52xf32>
    %cst_154 = arith.constant 0.000000e+00 : f32
    %322 = vector.broadcast %cst_154 : f32 to vector<32x52xf32>
    %323 = arith.cmpf oge, %293, %322 : vector<32x52xf32>
    %cst_155 = arith.constant 0.000000e+00 : f32
    %324 = vector.broadcast %cst_155 : f32 to vector<32x52xf32>
    %325 = arith.subf %324, %321 : vector<32x52xf32>
    %326 = arith.select %323, %321, %325 : vector<32x52xi1>, vector<32x52xf32>
    %cst_156 = arith.constant 5.000000e-01 : f32
    %327 = vector.broadcast %cst_156 : f32 to vector<32x52xf32>
    %328 = arith.mulf %327, %291 : vector<32x52xf32>
    %cst_157 = arith.constant 1.000000e+00 : f32
    %329 = vector.broadcast %cst_157 : f32 to vector<32x52xf32>
    %330 = arith.addf %329, %326 : vector<32x52xf32>
    %331 = arith.mulf %328, %330 : vector<32x52xf32>
    %cst_158 = arith.constant dense<0.000000e+00> : vector<144x52xf32>
    %332 = tpu.matmul %3, %331, %cst_158 {dimension_numbers = #tpu.dot_dimension_numbers<[1], [0], [0], [1], [0, 0, 1, 1], [], []>} : vector<144x32xf32>, vector<32x52xf32>, vector<144x52xf32> -> vector<144x52xf32>
    %cst_159 = arith.constant 0.000000e+00 : f32
    %333 = vector.broadcast %cst_159 : f32 to vector<16x32xf32>
    %c936 = arith.constant 936 : index
    %c0_160 = arith.constant 0 : index
    %334 = vector.load %arg4[%c936, %c0_160] : memref<1404x32xf32, #tpu.memory_space<vmem>>, vector<52x32xf32>
    %335 = vector.extract_strided_slice %332 {offsets = [0, 0], sizes = [16, 52], strides = [1, 1]} : vector<144x52xf32> to vector<16x52xf32>
    %cst_161 = arith.constant dense<0.000000e+00> : vector<16x32xf32>
    %336 = tpu.matmul %335, %334, %cst_161 {dimension_numbers = #tpu.dot_dimension_numbers<[1], [0], [0], [1], [0, 0, 1, 1], [], []>} : vector<16x52xf32>, vector<52x32xf32>, vector<16x32xf32> -> vector<16x32xf32>
    %337 = arith.addf %333, %336 : vector<16x32xf32>
    %c988 = arith.constant 988 : index
    %c0_162 = arith.constant 0 : index
    %338 = vector.load %arg4[%c988, %c0_162] : memref<1404x32xf32, #tpu.memory_space<vmem>>, vector<52x32xf32>
    %339 = vector.extract_strided_slice %332 {offsets = [16, 0], sizes = [16, 52], strides = [1, 1]} : vector<144x52xf32> to vector<16x52xf32>
    %cst_163 = arith.constant dense<0.000000e+00> : vector<16x32xf32>
    %340 = tpu.matmul %339, %338, %cst_163 {dimension_numbers = #tpu.dot_dimension_numbers<[1], [0], [0], [1], [0, 0, 1, 1], [], []>} : vector<16x52xf32>, vector<52x32xf32>, vector<16x32xf32> -> vector<16x32xf32>
    %341 = arith.addf %337, %340 : vector<16x32xf32>
    %c1040 = arith.constant 1040 : index
    %c0_164 = arith.constant 0 : index
    %342 = vector.load %arg4[%c1040, %c0_164] : memref<1404x32xf32, #tpu.memory_space<vmem>>, vector<52x32xf32>
    %343 = vector.extract_strided_slice %332 {offsets = [32, 0], sizes = [16, 52], strides = [1, 1]} : vector<144x52xf32> to vector<16x52xf32>
    %cst_165 = arith.constant dense<0.000000e+00> : vector<16x32xf32>
    %344 = tpu.matmul %343, %342, %cst_165 {dimension_numbers = #tpu.dot_dimension_numbers<[1], [0], [0], [1], [0, 0, 1, 1], [], []>} : vector<16x52xf32>, vector<52x32xf32>, vector<16x32xf32> -> vector<16x32xf32>
    %345 = arith.addf %341, %344 : vector<16x32xf32>
    %c1092 = arith.constant 1092 : index
    %c0_166 = arith.constant 0 : index
    %346 = vector.load %arg4[%c1092, %c0_166] : memref<1404x32xf32, #tpu.memory_space<vmem>>, vector<52x32xf32>
    %347 = vector.extract_strided_slice %332 {offsets = [48, 0], sizes = [16, 52], strides = [1, 1]} : vector<144x52xf32> to vector<16x52xf32>
    %cst_167 = arith.constant dense<0.000000e+00> : vector<16x32xf32>
    %348 = tpu.matmul %347, %346, %cst_167 {dimension_numbers = #tpu.dot_dimension_numbers<[1], [0], [0], [1], [0, 0, 1, 1], [], []>} : vector<16x52xf32>, vector<52x32xf32>, vector<16x32xf32> -> vector<16x32xf32>
    %349 = arith.addf %345, %348 : vector<16x32xf32>
    %c1144 = arith.constant 1144 : index
    %c0_168 = arith.constant 0 : index
    %350 = vector.load %arg4[%c1144, %c0_168] : memref<1404x32xf32, #tpu.memory_space<vmem>>, vector<52x32xf32>
    %351 = vector.extract_strided_slice %332 {offsets = [64, 0], sizes = [16, 52], strides = [1, 1]} : vector<144x52xf32> to vector<16x52xf32>
    %cst_169 = arith.constant dense<0.000000e+00> : vector<16x32xf32>
    %352 = tpu.matmul %351, %350, %cst_169 {dimension_numbers = #tpu.dot_dimension_numbers<[1], [0], [0], [1], [0, 0, 1, 1], [], []>} : vector<16x52xf32>, vector<52x32xf32>, vector<16x32xf32> -> vector<16x32xf32>
    %353 = arith.addf %349, %352 : vector<16x32xf32>
    %c1196 = arith.constant 1196 : index
    %c0_170 = arith.constant 0 : index
    %354 = vector.load %arg4[%c1196, %c0_170] : memref<1404x32xf32, #tpu.memory_space<vmem>>, vector<52x32xf32>
    %355 = vector.extract_strided_slice %332 {offsets = [80, 0], sizes = [16, 52], strides = [1, 1]} : vector<144x52xf32> to vector<16x52xf32>
    %cst_171 = arith.constant dense<0.000000e+00> : vector<16x32xf32>
    %356 = tpu.matmul %355, %354, %cst_171 {dimension_numbers = #tpu.dot_dimension_numbers<[1], [0], [0], [1], [0, 0, 1, 1], [], []>} : vector<16x52xf32>, vector<52x32xf32>, vector<16x32xf32> -> vector<16x32xf32>
    %357 = arith.addf %353, %356 : vector<16x32xf32>
    %c1248 = arith.constant 1248 : index
    %c0_172 = arith.constant 0 : index
    %358 = vector.load %arg4[%c1248, %c0_172] : memref<1404x32xf32, #tpu.memory_space<vmem>>, vector<52x32xf32>
    %359 = vector.extract_strided_slice %332 {offsets = [96, 0], sizes = [16, 52], strides = [1, 1]} : vector<144x52xf32> to vector<16x52xf32>
    %cst_173 = arith.constant dense<0.000000e+00> : vector<16x32xf32>
    %360 = tpu.matmul %359, %358, %cst_173 {dimension_numbers = #tpu.dot_dimension_numbers<[1], [0], [0], [1], [0, 0, 1, 1], [], []>} : vector<16x52xf32>, vector<52x32xf32>, vector<16x32xf32> -> vector<16x32xf32>
    %361 = arith.addf %357, %360 : vector<16x32xf32>
    %c1300 = arith.constant 1300 : index
    %c0_174 = arith.constant 0 : index
    %362 = vector.load %arg4[%c1300, %c0_174] : memref<1404x32xf32, #tpu.memory_space<vmem>>, vector<52x32xf32>
    %363 = vector.extract_strided_slice %332 {offsets = [112, 0], sizes = [16, 52], strides = [1, 1]} : vector<144x52xf32> to vector<16x52xf32>
    %cst_175 = arith.constant dense<0.000000e+00> : vector<16x32xf32>
    %364 = tpu.matmul %363, %362, %cst_175 {dimension_numbers = #tpu.dot_dimension_numbers<[1], [0], [0], [1], [0, 0, 1, 1], [], []>} : vector<16x52xf32>, vector<52x32xf32>, vector<16x32xf32> -> vector<16x32xf32>
    %365 = arith.addf %361, %364 : vector<16x32xf32>
    %c1352 = arith.constant 1352 : index
    %c0_176 = arith.constant 0 : index
    %366 = vector.load %arg4[%c1352, %c0_176] : memref<1404x32xf32, #tpu.memory_space<vmem>>, vector<52x32xf32>
    %367 = vector.extract_strided_slice %332 {offsets = [128, 0], sizes = [16, 52], strides = [1, 1]} : vector<144x52xf32> to vector<16x52xf32>
    %cst_177 = arith.constant dense<0.000000e+00> : vector<16x32xf32>
    %368 = tpu.matmul %367, %366, %cst_177 {dimension_numbers = #tpu.dot_dimension_numbers<[1], [0], [0], [1], [0, 0, 1, 1], [], []>} : vector<16x52xf32>, vector<52x32xf32>, vector<16x32xf32> -> vector<16x32xf32>
    %369 = arith.addf %365, %368 : vector<16x32xf32>
    %370 = vector.broadcast %5 : vector<16x1xf32> to vector<16x32xf32>
    %371 = arith.addf %369, %370 : vector<16x32xf32>
    %cst_178 = arith.constant 0.333333343 : f32
    %372 = vector.broadcast %cst_178 : f32 to vector<16x32xf32>
    %373 = arith.mulf %372, %371 : vector<16x32xf32>
    %374 = arith.addf %251, %373 : vector<16x32xf32>
    %cst_179 = arith.constant 0.000000e+00 : f32
    %375 = vector.broadcast %cst_179 : f32 to vector<32x16xf32>
    %c0_180 = arith.constant 0 : index
    %c0_181 = arith.constant 0 : index
    %376 = vector.load %arg5[%c0_180, %c0_181] : memref<128x16xf32, #tpu.memory_space<vmem>>, vector<32x16xf32>
    %c64_182 = arith.constant 64 : index
    %c0_183 = arith.constant 0 : index
    %377 = vector.load %arg5[%c64_182, %c0_183] : memref<128x16xf32, #tpu.memory_space<vmem>>, vector<32x16xf32>
    %cst_184 = arith.constant dense<0.000000e+00> : vector<16x16xf32>
    %378 = tpu.matmul %374, %377, %cst_184 {dimension_numbers = #tpu.dot_dimension_numbers<[1], [0], [0], [1], [0, 0, 1, 1], [], []>} : vector<16x32xf32>, vector<32x16xf32>, vector<16x16xf32> -> vector<16x16xf32>
    %cst_185 = arith.constant dense<0.000000e+00> : vector<32x16xf32>
    %379 = tpu.matmul %376, %378, %cst_185 {dimension_numbers = #tpu.dot_dimension_numbers<[1], [0], [0], [1], [0, 0, 1, 1], [], []>} : vector<32x16xf32>, vector<16x16xf32>, vector<32x16xf32> -> vector<32x16xf32>
    %380 = arith.addf %375, %379 : vector<32x16xf32>
    %c32_186 = arith.constant 32 : index
    %c0_187 = arith.constant 0 : index
    %381 = vector.load %arg5[%c32_186, %c0_187] : memref<128x16xf32, #tpu.memory_space<vmem>>, vector<32x16xf32>
    %c96_188 = arith.constant 96 : index
    %c0_189 = arith.constant 0 : index
    %382 = vector.load %arg5[%c96_188, %c0_189] : memref<128x16xf32, #tpu.memory_space<vmem>>, vector<32x16xf32>
    %cst_190 = arith.constant dense<0.000000e+00> : vector<16x16xf32>
    %383 = tpu.matmul %374, %382, %cst_190 {dimension_numbers = #tpu.dot_dimension_numbers<[1], [0], [0], [1], [0, 0, 1, 1], [], []>} : vector<16x32xf32>, vector<32x16xf32>, vector<16x16xf32> -> vector<16x16xf32>
    %cst_191 = arith.constant dense<0.000000e+00> : vector<32x16xf32>
    %384 = tpu.matmul %381, %383, %cst_191 {dimension_numbers = #tpu.dot_dimension_numbers<[1], [0], [0], [1], [0, 0, 1, 1], [], []>} : vector<32x16xf32>, vector<16x16xf32>, vector<32x16xf32> -> vector<32x16xf32>
    %385 = arith.addf %380, %384 : vector<32x16xf32>
    %c0_192 = arith.constant 0 : index
    %c0_193 = arith.constant 0 : index
    %386 = vector.load %arg6[%c0_192, %c0_193] : memref<188x32xf32, #tpu.memory_space<vmem>>, vector<16x16xf32>
    %c16 = arith.constant 16 : index
    %c0_194 = arith.constant 0 : index
    %387 = vector.load %arg6[%c16, %c0_194] : memref<188x32xf32, #tpu.memory_space<vmem>>, vector<16x16xf32>
    %c32_195 = arith.constant 32 : index
    %c0_196 = arith.constant 0 : index
    %388 = vector.load %arg6[%c32_195, %c0_196] : memref<188x32xf32, #tpu.memory_space<vmem>>, vector<16x16xf32>
    %c48 = arith.constant 48 : index
    %c0_197 = arith.constant 0 : index
    %389 = vector.load %arg6[%c48, %c0_197] : memref<188x32xf32, #tpu.memory_space<vmem>>, vector<16x16xf32>
    %c64_198 = arith.constant 64 : index
    %c0_199 = arith.constant 0 : index
    %390 = vector.load %arg6[%c64_198, %c0_199] : memref<188x32xf32, #tpu.memory_space<vmem>>, vector<16x32xf32>
    %c80 = arith.constant 80 : index
    %c0_200 = arith.constant 0 : index
    %391 = vector.load %arg6[%c80, %c0_200] : memref<188x32xf32, #tpu.memory_space<vmem>>, vector<32x16xf32>
    %c112 = arith.constant 112 : index
    %c0_201 = arith.constant 0 : index
    %392 = vector.load %arg6[%c112, %c0_201] : memref<188x32xf32, #tpu.memory_space<vmem>>, vector<1x16xf32>
    %c113 = arith.constant 113 : index
    %c0_202 = arith.constant 0 : index
    %393 = vector.load %arg6[%c113, %c0_202] : memref<188x32xf32, #tpu.memory_space<vmem>>, vector<1x16xf32>
    %c114 = arith.constant 114 : index
    %c0_203 = arith.constant 0 : index
    %394 = vector.load %arg6[%c114, %c0_203] : memref<188x32xf32, #tpu.memory_space<vmem>>, vector<1x16xf32>
    %c115 = arith.constant 115 : index
    %c0_204 = arith.constant 0 : index
    %395 = vector.load %arg6[%c115, %c0_204] : memref<188x32xf32, #tpu.memory_space<vmem>>, vector<1x16xf32>
    %c116 = arith.constant 116 : index
    %c0_205 = arith.constant 0 : index
    %396 = vector.load %arg6[%c116, %c0_205] : memref<188x32xf32, #tpu.memory_space<vmem>>, vector<1x32xf32>
    %c117 = arith.constant 117 : index
    %c0_206 = arith.constant 0 : index
    %397 = vector.load %arg6[%c117, %c0_206] : memref<188x32xf32, #tpu.memory_space<vmem>>, vector<1x16xf32>
    %c118 = arith.constant 118 : index
    %c0_207 = arith.constant 0 : index
    %398 = vector.load %arg6[%c118, %c0_207] : memref<188x32xf32, #tpu.memory_space<vmem>>, vector<1x16xf32>
    %c119 = arith.constant 119 : index
    %c0_208 = arith.constant 0 : index
    %399 = vector.load %arg6[%c119, %c0_208] : memref<188x32xf32, #tpu.memory_space<vmem>>, vector<1x16xf32>
    %c120 = arith.constant 120 : index
    %c0_209 = arith.constant 0 : index
    %400 = vector.load %arg6[%c120, %c0_209] : memref<188x32xf32, #tpu.memory_space<vmem>>, vector<1x16xf32>
    %c121 = arith.constant 121 : index
    %c0_210 = arith.constant 0 : index
    %401 = vector.load %arg6[%c121, %c0_210] : memref<188x32xf32, #tpu.memory_space<vmem>>, vector<1x16xf32>
    %c124 = arith.constant 124 : index
    %c0_211 = arith.constant 0 : index
    %402 = vector.load %arg6[%c124, %c0_211] : memref<188x32xf32, #tpu.memory_space<vmem>>, vector<32x32xf32>
    %c156_212 = arith.constant 156 : index
    %c0_213 = arith.constant 0 : index
    %403 = vector.load %arg6[%c156_212, %c0_213] : memref<188x32xf32, #tpu.memory_space<vmem>>, vector<32x32xf32>
    %cst_214 = arith.constant dense<0.000000e+00> : vector<32x16xf32>
    %404 = tpu.matmul %385, %386, %cst_214 {dimension_numbers = #tpu.dot_dimension_numbers<[1], [0], [0], [1], [0, 0, 1, 1], [], []>} : vector<32x16xf32>, vector<16x16xf32>, vector<32x16xf32> -> vector<32x16xf32>
    %405 = vector.broadcast %392 : vector<1x16xf32> to vector<32x16xf32>
    %406 = arith.addf %404, %405 : vector<32x16xf32>
    %cst_215 = arith.constant dense<0.000000e+00> : vector<32x16xf32>
    %407 = tpu.matmul %385, %387, %cst_215 {dimension_numbers = #tpu.dot_dimension_numbers<[1], [0], [0], [1], [0, 0, 1, 1], [], []>} : vector<32x16xf32>, vector<16x16xf32>, vector<32x16xf32> -> vector<32x16xf32>
    %408 = vector.broadcast %393 : vector<1x16xf32> to vector<32x16xf32>
    %409 = arith.addf %407, %408 : vector<32x16xf32>
    %cst_216 = arith.constant dense<0.000000e+00> : vector<32x16xf32>
    %410 = tpu.matmul %385, %388, %cst_216 {dimension_numbers = #tpu.dot_dimension_numbers<[1], [0], [0], [1], [0, 0, 1, 1], [], []>} : vector<32x16xf32>, vector<16x16xf32>, vector<32x16xf32> -> vector<32x16xf32>
    %411 = vector.broadcast %394 : vector<1x16xf32> to vector<32x16xf32>
    %412 = arith.addf %410, %411 : vector<32x16xf32>
    %cst_217 = arith.constant dense<0.000000e+00> : vector<32x16xf32>
    %413 = tpu.matmul %402, %412, %cst_217 {dimension_numbers = #tpu.dot_dimension_numbers<[1], [0], [0], [1], [0, 0, 1, 1], [], []>} : vector<32x32xf32>, vector<32x16xf32>, vector<32x16xf32> -> vector<32x16xf32>
    %cst_218 = arith.constant 0.000000e+00 : f32
    %414 = vector.broadcast %cst_218 : f32 to vector<32x16xf32>
    %c122 = arith.constant 122 : index
    %c0_219 = arith.constant 0 : index
    %415 = vector.load %arg6[%c122, %c0_219] : memref<188x32xf32, #tpu.memory_space<vmem>>, vector<1x16xf32>
    %416 = vector.broadcast %415 : vector<1x16xf32> to vector<32x16xf32>
    %417 = arith.mulf %409, %416 : vector<32x16xf32>
    %cst_220 = arith.constant dense<0.000000e+00> : vector<32x32xf32>
    %418 = tpu.matmul %406, %417, %cst_220 {dimension_numbers = #tpu.dot_dimension_numbers<[1], [1], [0], [0], [0, 0, 1, 0], [], []>} : vector<32x16xf32>, vector<32x16xf32>, vector<32x32xf32> -> vector<32x32xf32>
    %cst_221 = arith.constant 0.353553385 : f32
    %419 = vector.broadcast %cst_221 : f32 to vector<32x32xf32>
    %420 = arith.mulf %418, %419 : vector<32x32xf32>
    %421 = arith.addf %420, %403 : vector<32x32xf32>
    %cst_222 = arith.constant dense<0xFF800000> : vector<32xf32>
    %422 = vector.multi_reduction <maximumf>, %421, %cst_222 [1] : vector<32x32xf32> to vector<32xf32>
    %423 = vector.shape_cast %422 : vector<32xf32> to vector<32x1xf32>
    %424 = vector.broadcast %423 : vector<32x1xf32> to vector<32x32xf32>
    %425 = arith.subf %421, %424 : vector<32x32xf32>
    %426 = math.exp %425 : vector<32x32xf32>
    %cst_223 = arith.constant dense<0.000000e+00> : vector<32xf32>
    %427 = vector.multi_reduction <add>, %426, %cst_223 [1] : vector<32x32xf32> to vector<32xf32>
    %428 = vector.shape_cast %427 : vector<32xf32> to vector<32x1xf32>
    %429 = tpu.reciprocal %428 {approx = true} : vector<32x1xf32> -> vector<32x1xf32>
    %430 = vector.broadcast %429 : vector<32x1xf32> to vector<32x32xf32>
    %431 = arith.mulf %426, %430 : vector<32x32xf32>
    %432 = vector.broadcast %415 : vector<1x16xf32> to vector<32x16xf32>
    %433 = arith.mulf %413, %432 : vector<32x16xf32>
    %cst_224 = arith.constant dense<0.000000e+00> : vector<32x16xf32>
    %434 = tpu.matmul %431, %433, %cst_224 {dimension_numbers = #tpu.dot_dimension_numbers<[1], [0], [0], [1], [0, 0, 1, 1], [], []>} : vector<32x32xf32>, vector<32x16xf32>, vector<32x16xf32> -> vector<32x16xf32>
    %435 = arith.addf %414, %434 : vector<32x16xf32>
    %c123 = arith.constant 123 : index
    %c0_225 = arith.constant 0 : index
    %436 = vector.load %arg6[%c123, %c0_225] : memref<188x32xf32, #tpu.memory_space<vmem>>, vector<1x16xf32>
    %437 = vector.broadcast %436 : vector<1x16xf32> to vector<32x16xf32>
    %438 = arith.mulf %409, %437 : vector<32x16xf32>
    %cst_226 = arith.constant dense<0.000000e+00> : vector<32x32xf32>
    %439 = tpu.matmul %406, %438, %cst_226 {dimension_numbers = #tpu.dot_dimension_numbers<[1], [1], [0], [0], [0, 0, 1, 0], [], []>} : vector<32x16xf32>, vector<32x16xf32>, vector<32x32xf32> -> vector<32x32xf32>
    %cst_227 = arith.constant 0.353553385 : f32
    %440 = vector.broadcast %cst_227 : f32 to vector<32x32xf32>
    %441 = arith.mulf %439, %440 : vector<32x32xf32>
    %442 = arith.addf %441, %403 : vector<32x32xf32>
    %cst_228 = arith.constant dense<0xFF800000> : vector<32xf32>
    %443 = vector.multi_reduction <maximumf>, %442, %cst_228 [1] : vector<32x32xf32> to vector<32xf32>
    %444 = vector.shape_cast %443 : vector<32xf32> to vector<32x1xf32>
    %445 = vector.broadcast %444 : vector<32x1xf32> to vector<32x32xf32>
    %446 = arith.subf %442, %445 : vector<32x32xf32>
    %447 = math.exp %446 : vector<32x32xf32>
    %cst_229 = arith.constant dense<0.000000e+00> : vector<32xf32>
    %448 = vector.multi_reduction <add>, %447, %cst_229 [1] : vector<32x32xf32> to vector<32xf32>
    %449 = vector.shape_cast %448 : vector<32xf32> to vector<32x1xf32>
    %450 = tpu.reciprocal %449 {approx = true} : vector<32x1xf32> -> vector<32x1xf32>
    %451 = vector.broadcast %450 : vector<32x1xf32> to vector<32x32xf32>
    %452 = arith.mulf %447, %451 : vector<32x32xf32>
    %453 = vector.broadcast %436 : vector<1x16xf32> to vector<32x16xf32>
    %454 = arith.mulf %413, %453 : vector<32x16xf32>
    %cst_230 = arith.constant dense<0.000000e+00> : vector<32x16xf32>
    %455 = tpu.matmul %452, %454, %cst_230 {dimension_numbers = #tpu.dot_dimension_numbers<[1], [0], [0], [1], [0, 0, 1, 1], [], []>} : vector<32x32xf32>, vector<32x16xf32>, vector<32x16xf32> -> vector<32x16xf32>
    %456 = arith.addf %435, %455 : vector<32x16xf32>
    %cst_231 = arith.constant dense<0.000000e+00> : vector<32x16xf32>
    %457 = tpu.matmul %456, %389, %cst_231 {dimension_numbers = #tpu.dot_dimension_numbers<[1], [0], [0], [1], [0, 0, 1, 1], [], []>} : vector<32x16xf32>, vector<16x16xf32>, vector<32x16xf32> -> vector<32x16xf32>
    %458 = vector.broadcast %395 : vector<1x16xf32> to vector<32x16xf32>
    %459 = arith.addf %457, %458 : vector<32x16xf32>
    %460 = arith.addf %385, %459 : vector<32x16xf32>
    %cst_232 = arith.constant dense<0.000000e+00> : vector<32xf32>
    %461 = vector.multi_reduction <add>, %460, %cst_232 [1] : vector<32x16xf32> to vector<32xf32>
    %462 = vector.shape_cast %461 : vector<32xf32> to vector<32x1xf32>
    %cst_233 = arith.constant 1.600000e+01 : f32
    %463 = vector.broadcast %cst_233 : f32 to vector<32x1xf32>
    %464 = arith.divf %462, %463 : vector<32x1xf32>
    %465 = vector.broadcast %464 : vector<32x1xf32> to vector<32x16xf32>
    %466 = arith.subf %460, %465 : vector<32x16xf32>
    %467 = arith.mulf %466, %466 : vector<32x16xf32>
    %cst_234 = arith.constant dense<0.000000e+00> : vector<32xf32>
    %468 = vector.multi_reduction <add>, %467, %cst_234 [1] : vector<32x16xf32> to vector<32xf32>
    %469 = vector.shape_cast %468 : vector<32xf32> to vector<32x1xf32>
    %cst_235 = arith.constant 1.600000e+01 : f32
    %470 = vector.broadcast %cst_235 : f32 to vector<32x1xf32>
    %471 = arith.divf %469, %470 : vector<32x1xf32>
    %cst_236 = arith.constant 9.99999974E-6 : f32
    %472 = vector.broadcast %cst_236 : f32 to vector<32x1xf32>
    %473 = arith.addf %471, %472 : vector<32x1xf32>
    %474 = math.rsqrt %473 : vector<32x1xf32>
    %475 = vector.broadcast %474 : vector<32x1xf32> to vector<32x16xf32>
    %476 = arith.mulf %466, %475 : vector<32x16xf32>
    %477 = vector.broadcast %398 : vector<1x16xf32> to vector<32x16xf32>
    %478 = arith.mulf %476, %477 : vector<32x16xf32>
    %479 = vector.broadcast %399 : vector<1x16xf32> to vector<32x16xf32>
    %480 = arith.addf %478, %479 : vector<32x16xf32>
    %cst_237 = arith.constant dense<0.000000e+00> : vector<32x32xf32>
    %481 = tpu.matmul %480, %390, %cst_237 {dimension_numbers = #tpu.dot_dimension_numbers<[1], [0], [0], [1], [0, 0, 1, 1], [], []>} : vector<32x16xf32>, vector<16x32xf32>, vector<32x32xf32> -> vector<32x32xf32>
    %482 = vector.broadcast %396 : vector<1x32xf32> to vector<32x32xf32>
    %483 = arith.addf %481, %482 : vector<32x32xf32>
    %cst_238 = arith.constant 0.000000e+00 : f32
    %484 = vector.broadcast %cst_238 : f32 to vector<32x32xf32>
    %485 = arith.maximumf %483, %484 : vector<32x32xf32>
    %cst_239 = arith.constant dense<0.000000e+00> : vector<32x16xf32>
    %486 = tpu.matmul %485, %391, %cst_239 {dimension_numbers = #tpu.dot_dimension_numbers<[1], [0], [0], [1], [0, 0, 1, 1], [], []>} : vector<32x32xf32>, vector<32x16xf32>, vector<32x16xf32> -> vector<32x16xf32>
    %487 = arith.addf %480, %486 : vector<32x16xf32>
    %488 = vector.broadcast %397 : vector<1x16xf32> to vector<32x16xf32>
    %489 = arith.addf %487, %488 : vector<32x16xf32>
    %cst_240 = arith.constant dense<0.000000e+00> : vector<32xf32>
    %490 = vector.multi_reduction <add>, %489, %cst_240 [1] : vector<32x16xf32> to vector<32xf32>
    %491 = vector.shape_cast %490 : vector<32xf32> to vector<32x1xf32>
    %cst_241 = arith.constant 1.600000e+01 : f32
    %492 = vector.broadcast %cst_241 : f32 to vector<32x1xf32>
    %493 = arith.divf %491, %492 : vector<32x1xf32>
    %494 = vector.broadcast %493 : vector<32x1xf32> to vector<32x16xf32>
    %495 = arith.subf %489, %494 : vector<32x16xf32>
    %496 = arith.mulf %495, %495 : vector<32x16xf32>
    %cst_242 = arith.constant dense<0.000000e+00> : vector<32xf32>
    %497 = vector.multi_reduction <add>, %496, %cst_242 [1] : vector<32x16xf32> to vector<32xf32>
    %498 = vector.shape_cast %497 : vector<32xf32> to vector<32x1xf32>
    %cst_243 = arith.constant 1.600000e+01 : f32
    %499 = vector.broadcast %cst_243 : f32 to vector<32x1xf32>
    %500 = arith.divf %498, %499 : vector<32x1xf32>
    %cst_244 = arith.constant 9.99999974E-6 : f32
    %501 = vector.broadcast %cst_244 : f32 to vector<32x1xf32>
    %502 = arith.addf %500, %501 : vector<32x1xf32>
    %503 = math.rsqrt %502 : vector<32x1xf32>
    %504 = vector.broadcast %503 : vector<32x1xf32> to vector<32x16xf32>
    %505 = arith.mulf %495, %504 : vector<32x16xf32>
    %506 = vector.broadcast %400 : vector<1x16xf32> to vector<32x16xf32>
    %507 = arith.mulf %505, %506 : vector<32x16xf32>
    %508 = vector.broadcast %401 : vector<1x16xf32> to vector<32x16xf32>
    %509 = arith.addf %507, %508 : vector<32x16xf32>
    %c0_245 = arith.constant 0 : index
    %c0_246 = arith.constant 0 : index
    %510 = vector.load %arg7[%c0_245, %c0_246] : memref<52x128xf32, #tpu.memory_space<vmem>>, vector<16x128xf32>
    %c16_247 = arith.constant 16 : index
    %c0_248 = arith.constant 0 : index
    %511 = vector.load %arg7[%c16_247, %c0_248] : memref<52x128xf32, #tpu.memory_space<vmem>>, vector<32x128xf32>
    %c48_249 = arith.constant 48 : index
    %c0_250 = arith.constant 0 : index
    %512 = vector.load %arg7[%c48_249, %c0_250] : memref<52x128xf32, #tpu.memory_space<vmem>>, vector<4x32xf32>
    %cst_251 = arith.constant dense<0.000000e+00> : vector<32x128xf32>
    %513 = tpu.matmul %509, %510, %cst_251 {dimension_numbers = #tpu.dot_dimension_numbers<[1], [0], [0], [1], [0, 0, 1, 1], [], []>} : vector<32x16xf32>, vector<16x128xf32>, vector<32x128xf32> -> vector<32x128xf32>
    %514 = arith.mulf %513, %511 : vector<32x128xf32>
    %cst_252 = arith.constant dense<0.000000e+00> : vector<4x128xf32>
    %515 = tpu.matmul %512, %514, %cst_252 {dimension_numbers = #tpu.dot_dimension_numbers<[1], [0], [0], [1], [0, 0, 1, 1], [], []>} : vector<4x32xf32>, vector<32x128xf32>, vector<4x128xf32> -> vector<4x128xf32>
    %c0_253 = arith.constant 0 : index
    %c0_254 = arith.constant 0 : index
    %c0_255 = arith.constant 0 : index
    %516 = vector.load %arg8[%c0_253, %c0_254, %c0_255] : memref<1x4x128xf32, #tpu.memory_space<vmem>>, vector<1x4x128xf32>
    %517 = vector.shape_cast %516 : vector<1x4x128xf32> to vector<4x128xf32>
    %518 = vector.shape_cast %515 : vector<4x128xf32> to vector<1x4x128xf32>
    tpu.vector_store %arg8[%c0_253, %c0_254, %c0_255], %518 {strides = array<i32>} : memref<1x4x128xf32, #tpu.memory_space<vmem>>, vector<1x4x128xf32>,
    return
  }
  func.func @transform_0(%arg0: i32) -> (i32, i32, i32) {
    %c0_i32 = arith.constant 0 : i32
    %c0_i32_0 = arith.constant 0 : i32
    %c0_i32_1 = arith.constant 0 : i32
    return %arg0, %c0_i32, %c0_i32_0 : i32, i32, i32
  }
  func.func @transform_1(%arg0: i32) -> (i32, i32) {
    %c0_i32 = arith.constant 0 : i32
    %c0_i32_0 = arith.constant 0 : i32
    %c0_i32_1 = arith.constant 0 : i32
    return %c0_i32, %c0_i32_0 : i32, i32
  }
  func.func @transform_2(%arg0: i32) -> (i32, i32) {
    %c0_i32 = arith.constant 0 : i32
    %c0_i32_0 = arith.constant 0 : i32
    %c0_i32_1 = arith.constant 0 : i32
    return %c0_i32, %c0_i32_0 : i32, i32
  }
  func.func @transform_3(%arg0: i32) -> (i32, i32) {
    %c0_i32 = arith.constant 0 : i32
    %c0_i32_0 = arith.constant 0 : i32
    %c0_i32_1 = arith.constant 0 : i32
    return %c0_i32, %c0_i32_0 : i32, i32
  }
  func.func @transform_4(%arg0: i32) -> (i32, i32) {
    %c0_i32 = arith.constant 0 : i32
    %c0_i32_0 = arith.constant 0 : i32
    %c0_i32_1 = arith.constant 0 : i32
    return %c0_i32, %c0_i32_0 : i32, i32
  }
  func.func @transform_5(%arg0: i32) -> (i32, i32) {
    %c0_i32 = arith.constant 0 : i32
    %c0_i32_0 = arith.constant 0 : i32
    %c0_i32_1 = arith.constant 0 : i32
    return %c0_i32, %c0_i32_0 : i32, i32
  }
  func.func @transform_6(%arg0: i32) -> (i32, i32) {
    %c0_i32 = arith.constant 0 : i32
    %c0_i32_0 = arith.constant 0 : i32
    %c0_i32_1 = arith.constant 0 : i32
    return %c0_i32, %c0_i32_0 : i32, i32
  }
  func.func @transform_7(%arg0: i32) -> (i32, i32, i32) {
    %c0_i32 = arith.constant 0 : i32
    %c0_i32_0 = arith.constant 0 : i32
    %c0_i32_1 = arith.constant 0 : i32
    return %arg0, %c0_i32, %c0_i32_0 : i32, i32, i32
  }
}

</mosaic_0001>

<llo_original>
// kernel: _lambda_.1
$region0: #{_lambda_.1}
  #allocation0 [shape = 'u32[]', space=smem, size = 0x4, offset = 0x4, fixed_abs, tag = 'smem constant byte address 0x4 - core index']
  #allocation1 [shape = 'u32[144,128]{1,0:T(1,128)}', space=vmem, size = 0x12000, scoped, tag = 'internal scratch']
  %s0 = inlined_call_operand.vmem [shape: f32[2,16,32], index: 0, kind: input, shape index: {}]
  %s1 = inlined_call_operand.vmem [shape: f32[480,32], index: 1, kind: input, shape index: {}]
  %s2 = inlined_call_operand.vmem [shape: f32[864,52], index: 2, kind: input, shape index: {}]
  %s3 = inlined_call_operand.hbm [shape: f32[1404,32], index: 3, kind: input, shape index: {}]
  %s4 = inlined_call_operand.vmem [shape: f32[128,16], index: 4, kind: input, shape index: {}]
  %s5 = inlined_call_operand.vmem [shape: f32[188,32], index: 5, kind: input, shape index: {}]
  %s6 = inlined_call_operand.vmem [shape: f32[52,128], index: 6, kind: input, shape index: {}]
  %s7 = inlined_call_operand.vmem [shape: f32[2,4,128], index: 7, kind: output, shape index: {}]
  %s8 = sld [smem:[#allocation0]]
  $region65: #{_lambda_.1} parent=0
    _
  %s10 = ssub.s32 1, %s8
  %s11 = scalar_select 0, %s10, %s8
  $region1: #{_lambda_.1} parent=0
    #allocation2 [shape = 'u8[720896]{0}', space=vmem, size = 0xb0000, scoped, tag = 'input window, operand 3, single buffered']
    #allocation3 [shape = 's32[2]{0}', space=sflag, size = 0x8, scoped, tag = 'scoped memory for _lambda_.1']
    %12 = vsyncpa [#allocation3], 0
    loop: start=0, step=1, limit=4
    $region2: #{_lambda_.1} parent=1 // loop_pre_header
      _
    $region3: #{_lambda_.1} parent=1 // loop_header
      %s14 = sphi 0, %s18
      %p15 = scmp.ge.s32.totalorder %s14, 4
      %s24 = sphi 0, %s26
      %s27 = sphi 0, %s24
      %s28 = sphi 0, %s27
      %s44 = sphi 0, %s28
      %s48 = sphi 0, %s48
      %s50 = sphi 0, %s48
      %s51 = sphi 0, %s50
      %s65 = sphi 0, %s51
      %s69 = sphi 0, %s69
      %s71 = sphi 0, %s69
      %s72 = sphi 0, %s71
      %s86 = sphi 0, %s72
      %s90 = sphi 0, %s90
      %s92 = sphi 0, %s90
      %s93 = sphi 0, %s92
      %s107 = sphi 0, %s93
      %s111 = sphi 0, %s111
      %s113 = sphi 0, %s111
      %s114 = sphi 0, %s113
      %s128 = sphi 0, %s114
      %s132 = sphi 0, %s132
      %s134 = sphi 0, %s132
      %s135 = sphi 0, %s134
      %s149 = sphi 0, %s135
      %s153 = sphi 0, %s153
      %s155 = sphi 0, %s153
      %s156 = sphi 0, %s155
      %s170 = sphi 0, %s156
      %s176 = sphi 0, %s178
      %s179 = sphi 0, %s176
      %s180 = sphi 0, %s179
      %s196 = sphi 0, %s180
    $region4: #{_lambda_.1} parent=1 // loop_header_branch
      %17 = sbr.rel (%p15) target = $region8
    $region5: #{_lambda_.1} parent=1 // loop_body
      %s19 = ssub.s32 %s14, 1
      %s20 = ssub.s32 %s14, 2
      %s21 = sadd.s32 %s14, 1
      %s22 = ssub.s32 %s14, %s21
      %p23 = scmp.eq.s32.totalorder %s22, 0
      %s25 = sadd.s32 %s24, 1
      %s26 = scalar_select %p23, %s24, %s25
      %p29 = pneg %p23
      %p30 = scmp.eq.s32.totalorder %s14, 1
      %p31 = por %p29, %p30
      %p32 = scmp.ne.s32.totalorder %s24, %s27
      %p33 = scmp.eq.s32.totalorder %s14, 0
      %p34 = por %p32, %p33
      %p35 = scmp.ne.s32.totalorder %s24, %s27
      %p36 = scmp.eq.s32.totalorder %s19, 1
      %p37 = por %p35, %p36
      %p38 = scmp.ne.s32.totalorder %s27, %s28
      %p39 = scmp.eq.s32.totalorder %s19, 0
      %p40 = por %p38, %p39
      %p41 = scmp.ne.s32.totalorder %s27, %s28
      %p42 = scmp.eq.s32.totalorder %s20, 1
      %p43 = por %p41, %p42
      %p45 = scmp.ne.s32.totalorder %s28, %s44
      %p46 = scmp.eq.s32.totalorder %s20, 0
      %p47 = por %p45, %p46
      %s49 = sadd.s32 %s48, 1
      %p52 = scmp.eq.s32.totalorder %s14, 1
      %p53 = scmp.ne.s32.totalorder %s48, %s50
      %p54 = scmp.eq.s32.totalorder %s14, 0
      %p55 = por %p53, %p54
      %p56 = scmp.ne.s32.totalorder %s48, %s50
      %p57 = scmp.eq.s32.totalorder %s19, 1
      %p58 = por %p56, %p57
      %p59 = scmp.ne.s32.totalorder %s50, %s51
      %p60 = scmp.eq.s32.totalorder %s19, 0
      %p61 = por %p59, %p60
      %p62 = scmp.ne.s32.totalorder %s50, %s51
      %p63 = scmp.eq.s32.totalorder %s20, 1
      %p64 = por %p62, %p63
      %p66 = scmp.ne.s32.totalorder %s51, %s65
      %p67 = scmp.eq.s32.totalorder %s20, 0
      %p68 = por %p66, %p67
      %s70 = sadd.s32 %s69, 1
      %p73 = scmp.eq.s32.totalorder %s14, 1
      %p74 = scmp.ne.s32.totalorder %s69, %s71
      %p75 = scmp.eq.s32.totalorder %s14, 0
      %p76 = por %p74, %p75
      %p77 = scmp.ne.s32.totalorder %s69, %s71
      %p78 = scmp.eq.s32.totalorder %s19, 1
      %p79 = por %p77, %p78
      %p80 = scmp.ne.s32.totalorder %s71, %s72
      %p81 = scmp.eq.s32.totalorder %s19, 0
      %p82 = por %p80, %p81
      %p83 = scmp.ne.s32.totalorder %s71, %s72
      %p84 = scmp.eq.s32.totalorder %s20, 1
      %p85 = por %p83, %p84
      %p87 = scmp.ne.s32.totalorder %s72, %s86
      %p88 = scmp.eq.s32.totalorder %s20, 0
      %p89 = por %p87, %p88
      %s91 = sadd.s32 %s90, 1
      %p94 = scmp.eq.s32.totalorder %s14, 1
      %p95 = scmp.ne.s32.totalorder %s90, %s92
      %p96 = scmp.eq.s32.totalorder %s14, 0
      %p97 = por %p95, %p96
      %p98 = scmp.ne.s32.totalorder %s90, %s92
      %p99 = scmp.eq.s32.totalorder %s19, 1
      %p100 = por %p98, %p99
      %p101 = scmp.ne.s32.totalorder %s92, %s93
      %p102 = scmp.eq.s32.totalorder %s19, 0
      %p103 = por %p101, %p102
      %p104 = scmp.ne.s32.totalorder %s92, %s93
      %p105 = scmp.eq.s32.totalorder %s20, 1
      %p106 = por %p104, %p105
      %p108 = scmp.ne.s32.totalorder %s93, %s107
      %p109 = scmp.eq.s32.totalorder %s20, 0
      %p110 = por %p108, %p109
      %s112 = sadd.s32 %s111, 1
      %p115 = scmp.eq.s32.totalorder %s14, 1
      %p116 = scmp.ne.s32.totalorder %s111, %s113
      %p117 = scmp.eq.s32.totalorder %s14, 0
      %p118 = por %p116, %p117
      %p119 = scmp.ne.s32.totalorder %s111, %s113
      %p120 = scmp.eq.s32.totalorder %s19, 1
      %p121 = por %p119, %p120
      %p122 = scmp.ne.s32.totalorder %s113, %s114
      %p123 = scmp.eq.s32.totalorder %s19, 0
      %p124 = por %p122, %p123
      %p125 = scmp.ne.s32.totalorder %s113, %s114
      %p126 = scmp.eq.s32.totalorder %s20, 1
      %p127 = por %p125, %p126
      %p129 = scmp.ne.s32.totalorder %s114, %s128
      %p130 = scmp.eq.s32.totalorder %s20, 0
      %p131 = por %p129, %p130
      %s133 = sadd.s32 %s132, 1
      %p136 = scmp.eq.s32.totalorder %s14, 1
      %p137 = scmp.ne.s32.totalorder %s132, %s134
      %p138 = scmp.eq.s32.totalorder %s14, 0
      %p139 = por %p137, %p138
      %p140 = scmp.ne.s32.totalorder %s132, %s134
      %p141 = scmp.eq.s32.totalorder %s19, 1
      %p142 = por %p140, %p141
      %p143 = scmp.ne.s32.totalorder %s134, %s135
      %p144 = scmp.eq.s32.totalorder %s19, 0
      %p145 = por %p143, %p144
      %p146 = scmp.ne.s32.totalorder %s134, %s135
      %p147 = scmp.eq.s32.totalorder %s20, 1
      %p148 = por %p146, %p147
      %p150 = scmp.ne.s32.totalorder %s135, %s149
      %p151 = scmp.eq.s32.totalorder %s20, 0
      %p152 = por %p150, %p151
      %s154 = sadd.s32 %s153, 1
      %p157 = scmp.eq.s32.totalorder %s14, 1
      %p158 = scmp.ne.s32.totalorder %s153, %s155
      %p159 = scmp.eq.s32.totalorder %s14, 0
      %p160 = por %p158, %p159
      %p161 = scmp.ne.s32.totalorder %s153, %s155
      %p162 = scmp.eq.s32.totalorder %s19, 1
      %p163 = por %p161, %p162
      %p164 = scmp.ne.s32.totalorder %s155, %s156
      %p165 = scmp.eq.s32.totalorder %s19, 0
      %p166 = por %p164, %p165
      %p167 = scmp.ne.s32.totalorder %s155, %s156
      %p168 = scmp.eq.s32.totalorder %s20, 1
      %p169 = por %p167, %p168
      %p171 = scmp.ne.s32.totalorder %s156, %s170
      %p172 = scmp.eq.s32.totalorder %s20, 0
      %p173 = por %p171, %p172
      %s174 = ssub.s32 %s14, %s21
      %p175 = scmp.eq.s32.totalorder %s174, 0
      %s177 = sadd.s32 %s176, 1
      %s178 = scalar_select %p175, %s176, %s177
      %p181 = pneg %p175
      %p182 = scmp.eq.s32.totalorder %s14, 1
      %p183 = por %p181, %p182
      %p184 = scmp.ne.s32.totalorder %s176, %s179
      %p185 = scmp.eq.s32.totalorder %s14, 0
      %p186 = por %p184, %p185
      %p187 = scmp.ne.s32.totalorder %s176, %s179
      %p188 = scmp.eq.s32.totalorder %s19, 1
      %p189 = por %p187, %p188
      %p190 = scmp.ne.s32.totalorder %s179, %s180
      %p191 = scmp.eq.s32.totalorder %s19, 0
      %p192 = por %p190, %p191
      %p193 = scmp.ne.s32.totalorder %s179, %s180
      %p194 = scmp.eq.s32.totalorder %s20, 1
      %p195 = por %p193, %p194
      %p197 = scmp.ne.s32.totalorder %s180, %s196
      %p198 = scmp.eq.s32.totalorder %s20, 0
      %p199 = por %p197, %p198
      %p200 = scmp.le.s32.totalorder 1, %s14
      %p201 = scmp.lt.s32.totalorder %s14, 3
      %p202 = pnand %p200, %p201
      %p203 = pneg %p202
      // Predicated region
      $region9: #{_lambda_.1} parent=5 // pred_check
        _
      $region10: #{_lambda_.1} parent=5 // pred_check_branch
        %205 = sbr.rel (%p202) target = $region12
      $region11: #{_lambda_.1} parent=5 // pred_region
        %s206 = ssub.s32 %s14, 1
        // Predicated region
        $region13: #{_lambda_.1} parent=11 // pred_check
          %p207 = pneg %p61
        $region14: #{_lambda_.1} parent=11 // pred_check_branch
          %209 = sbr.rel (%p207) target = $region16
        $region15: #{_lambda_.1} parent=11 // pred_region
          _
        $region16: #{_lambda_.1} parent=11 // pred_fallthru
          _
        // Predicated region
        $region17: #{_lambda_.1} parent=11 // pred_check
          %p210 = pneg %p82
        $region18: #{_lambda_.1} parent=11 // pred_check_branch
          %212 = sbr.rel (%p210) target = $region20
        $region19: #{_lambda_.1} parent=11 // pred_region
          _
        $region20: #{_lambda_.1} parent=11 // pred_fallthru
          _
        // Predicated region
        $region21: #{_lambda_.1} parent=11 // pred_check
          %p213 = pneg %p103
        $region22: #{_lambda_.1} parent=11 // pred_check_branch
          %215 = sbr.rel (%p213) target = $region24
        $region23: #{_lambda_.1} parent=11 // pred_region
          %s217 = ssub.s32 22528, 22528
          %218 = vsyncadd [#allocation3], %s217
          %s219 = sshll.u32 [#allocation2], 4
          %s220 = int_to_ptr.vmem [resolvable:$true] %s219
          %225 = dma.hbm_to_vmem [thread:$0]  %s3, 22528, %s220, [#allocation3], 128, 128, 8
        $region24: #{_lambda_.1} parent=11 // pred_fallthru
          _
        // Predicated region
        $region25: #{_lambda_.1} parent=11 // pred_check
          %p226 = pneg %p124
        $region26: #{_lambda_.1} parent=11 // pred_check_branch
          %228 = sbr.rel (%p226) target = $region28
        $region27: #{_lambda_.1} parent=11 // pred_region
          _
        $region28: #{_lambda_.1} parent=11 // pred_fallthru
          _
        // Predicated region
        $region29: #{_lambda_.1} parent=11 // pred_check
          %p229 = pneg %p145
        $region30: #{_lambda_.1} parent=11 // pred_check_branch
          %231 = sbr.rel (%p229) target = $region32
        $region31: #{_lambda_.1} parent=11 // pred_region
          _
        $region32: #{_lambda_.1} parent=11 // pred_fallthru
          _
        // Predicated region
        $region33: #{_lambda_.1} parent=11 // pred_check
          %p232 = pneg %p166
        $region34: #{_lambda_.1} parent=11 // pred_check_branch
          %234 = sbr.rel (%p232) target = $region36
        $region35: #{_lambda_.1} parent=11 // pred_region
          _
        $region36: #{_lambda_.1} parent=11 // pred_fallthru
          _
      $region12: #{_lambda_.1} parent=5 // pred_fallthru
        _
      %p235 = scmp.lt.s32.totalorder %s14, 2
      // Predicated region
      $region37: #{_lambda_.1} parent=5 // pred_check
        %p236 = pneg %p235
      $region38: #{_lambda_.1} parent=5 // pred_check_branch
        %238 = sbr.rel (%p236) target = $region40
      $region39: #{_lambda_.1} parent=5 // pred_region
        // Predicated region
        $region41: #{_lambda_.1} parent=39 // pred_check
          %p239 = pneg %p34
        $region42: #{_lambda_.1} parent=39 // pred_check_branch
          %241 = sbr.rel (%p239) target = $region44
        $region43: #{_lambda_.1} parent=39 // pred_region
          %p242 = scmp.lt.s32.totalorder %s14, 1
          %s243 = scalar_select %p242, %s14, 1
          %s244 = smul.addr %s243, 2
          %s245 = smul.addr %s244, 8
          %s246 = scalar_lea.vmem %s0, %s245
        $region44: #{_lambda_.1} parent=39 // pred_fallthru
          _
      $region40: #{_lambda_.1} parent=5 // pred_fallthru
        _
      %p247 = scmp.le.s32.totalorder 1, %s14
      %p248 = scmp.lt.s32.totalorder %s14, 3
      %p249 = pnand %p247, %p248
      %p250 = pneg %p249
      // Predicated region
      $region45: #{_lambda_.1} parent=5 // pred_check
        _
      $region46: #{_lambda_.1} parent=5 // pred_check_branch
        %252 = sbr.rel (%p249) target = $region48
      $region47: #{_lambda_.1} parent=5 // pred_region
        %s253 = ssub.s32 %s14, 1
        // Predicated region
        $region49: #{_lambda_.1} parent=47 // pred_check
          %p254 = pneg %p103
        $region50: #{_lambda_.1} parent=47 // pred_check_branch
          %256 = sbr.rel (%p254) target = $region52
        $region51: #{_lambda_.1} parent=47 // pred_region
          %257 = dma.done [#allocation3], 22528
        $region52: #{_lambda_.1} parent=47 // pred_fallthru
          _
        %p258 = scmp.lt.s32.totalorder %s19, 1
        %s259 = scalar_select %p258, %s19, 1
        %s260 = smul.addr %s259, 2
        %s261 = smul.addr %s260, 8
        %s262 = scalar_lea.vmem %s0, %s261
        %p263 = pneg %p40
        %p264 = pneg %p37
        %p265 = pneg %p61
        %p266 = pneg %p58
        %p267 = pneg %p82
        %p268 = pneg %p79
        %p269 = pneg %p103
        %p270 = pneg %p100
        %p271 = pneg %p124
        %p272 = pneg %p121
        %p273 = pneg %p145
        %p274 = pneg %p142
        %p275 = pneg %p166
        %p276 = pneg %p163
        %p277 = pneg %p192
        %p278 = pneg %p189
        %p279 = scmp.lt.s32.totalorder %s19, 1
        %s280 = scalar_select %p279, %s19, 1
        %s281 = smul.addr %s280, 4
        %s282 = scalar_lea.vmem %s7, %s281
        %p283 = scmp.lt.s32.totalorder %s19, 1
        %s284 = scalar_select %p283, %s19, 1
        %s285 = smul.addr %s284, 2
        %s286 = smul.addr %s285, 8
        %s287 = scalar_lea.vmem %s0, %s286
        %p288 = scmp.lt.s32.totalorder %s19, 1
        %s289 = scalar_select %p288, %s19, 1
        %s290 = smul.addr %s289, 4
        %s291 = scalar_lea.vmem %s7, %s290
        %v292 = vld [vmem:[%s287] sm:$0xff]
        %v293 = vld [vmem:[%s287 + $0x8] sm:$0xff]
        %v294 = vld [vmem:[%s1] sm:$0xff]
        %v295 = vld [vmem:[%s1 + $0x8] sm:$0xff]
        %v296 = vld [vmem:[%s1 + $0x10] sm:$0xff]
        %v297 = vld [vmem:[%s1 + $0x18] sm:$0xff]
        %v298 = vld [vmem:[%s1 + $0x20] sm:$0xff]
        %v299 = vld [vmem:[%s1 + $0x28] sm:$0xff]
        %v300 = vld [vmem:[%s1 + $0x30] sm:$0xff]
        %v301 = vld [vmem:[%s1 + $0x38] sm:$0xff]
        %v302 = vld [vmem:[%s1 + $0x40] sm:$0xff]
        %v303 = vld [vmem:[%s1 + $0x48] sm:$0xff]
        %v304 = vld [vmem:[%s1 + $0x50] sm:$0xff]
        %v305 = vld [vmem:[%s1 + $0x58] sm:$0xff]
        %v306 = vld [vmem:[%s1 + $0x60] sm:$0xff]
        %v307 = vld [vmem:[%s1 + $0x68] sm:$0xff]
        %v308 = vld [vmem:[%s1 + $0x70] sm:$0xff]
        %v309 = vld [vmem:[%s1 + $0x78] sm:$0xff]
        %v310 = vld [vmem:[%s1 + $0x80] sm:$0xff]
        %v311 = vld [vmem:[%s1 + $0x88] sm:$0xff]
        %v312 = vld [vmem:[%s1 + $0x90] sm:$0xff]
        %v313 = vld [vmem:[%s1 + $0x98] sm:$0xff]
        %v314 = vld [vmem:[%s1 + $0xa0] sm:$0xff]
        %v315 = vld [vmem:[%s1 + $0xa8] sm:$0xff]
        %v316 = vld [vmem:[%s1 + $0xb0] sm:$0xff]
        %v317 = vld [vmem:[%s1 + $0xb8] sm:$0xff]
        %v318 = vld [vmem:[%s1 + $0xc0] sm:$0xff]
        %v319 = vld [vmem:[%s1 + $0xc8] sm:$0xff]
        %v320 = vld [vmem:[%s1 + $0xd0] sm:$0xff]
        %v321 = vld [vmem:[%s1 + $0xd8] sm:$0xff]
        %v322 = vld [vmem:[%s1 + $0xe0] sm:$0xff]
        %v323 = vld [vmem:[%s1 + $0xe8] sm:$0xff]
        %v324 = vld [vmem:[%s1 + $0xf0] sm:$0xff]
        %v325 = vld [vmem:[%s1 + $0xf8] sm:$0xff]
        %v326 = vld [vmem:[%s1 + $0x100] sm:$0xff]
        %v327 = vld [vmem:[%s1 + $0x108] sm:$0xff]
        %v328 = vld [vmem:[%s1 + $0x110] sm:$0xff]
        %v329 = vld [vmem:[%s1 + $0x118] sm:$0xff]
        %v330 = vld [vmem:[%s1 + $0x120] sm:$0xff]
        %v331 = vld [vmem:[%s1 + $0x128] sm:$0xff]
        %v332 = vld [vmem:[%s1 + $0x130] sm:$0xff]
        %v333 = vld [vmem:[%s1 + $0x138] sm:$0xff]
        %v334 = vld [vmem:[%s1 + $0x140] sm:$0xff]
        %v335 = vld [vmem:[%s1 + $0x148] sm:$0xff]
        %v336 = vld [vmem:[%s1 + $0x150] sm:$0xff]
        %v337 = vld [vmem:[%s1 + $0x158] sm:$0xff]
        %v338 = vld [vmem:[%s1 + $0x160] sm:$0xff]
        %v339 = vld [vmem:[%s1 + $0x168] sm:$0xff]
        %v340 = vld [vmem:[%s1 + $0x170] sm:$0xff]
        %v341 = vld [vmem:[%s1 + $0x178] sm:$0xff]
        %v342 = vld [vmem:[%s1 + $0x180] sm:$0xff]
        %v343 = vld [vmem:[%s1 + $0x188] sm:$0xff]
        %v344 = vld [vmem:[%s1 + $0x190] sm:$0xff]
        %v345 = vld [vmem:[%s1 + $0x198] sm:$0xff]
        %v346 = vld [vmem:[%s1 + $0x1a0] sm:$0xff]
        %v347 = vld [vmem:[%s1 + $0x1a8] sm:$0xff]
        %v348 = vld [vmem:[%s1 + $0x1b0] sm:$0xff]
        %v349 = vld [vmem:[%s1 + $0x1b8] sm:$0xff]
        %v350 = vld [vmem:[%s1 + $0x1c0] sm:$0xff]
        %v351 = vld [vmem:[%s1 + $0x1c8] sm:$0xff]
        %v352 = vld [vmem:[%s1 + $0x1d0] sm:$0xff]
        %v353 = vld [vmem:[%s1 + $0x1d8] sm:$0xff]
        %vm354 = vcmask 130048
        %v356 = vsel %vm354, %v294, 0
        %v359 = vsel %vm354, %v295, 0
        %v362 = vsel %vm354, %v296, 0
        %v365 = vsel %vm354, %v297, 0
        %v368 = vsel %vm354, %v298, 0
        %v371 = vsel %vm354, %v299, 0
        %v374 = vsel %vm354, %v300, 0
        %v377 = vsel %vm354, %v301, 0
        %v380 = vsel %vm354, %v302, 0
        %v383 = vsel %vm354, %v303, 0
        %v386 = vsel %vm354, %v304, 0
        %v389 = vsel %vm354, %v305, 0
        %v392 = vsel %vm354, %v306, 0
        %v395 = vsel %vm354, %v307, 0
        %v398 = vsel %vm354, %v308, 0
        %v401 = vsel %vm354, %v309, 0
        %v404 = vsel %vm354, %v310, 0
        %v407 = vsel %vm354, %v311, 0
        %v410 = vsel %vm354, %v312, 0
        %v413 = vsel %vm354, %v313, 0
        %v416 = vsel %vm354, %v314, 0
        %v419 = vsel %vm354, %v315, 0
        %v422 = vsel %vm354, %v316, 0
        %v425 = vsel %vm354, %v317, 0
        %v428 = vsel %vm354, %v318, 0
        %v431 = vsel %vm354, %v319, 0
        %v434 = vsel %vm354, %v320, 0
        %v437 = vsel %vm354, %v321, 0
        %v440 = vsel %vm354, %v322, 0
        %v443 = vsel %vm354, %v323, 0
        %v446 = vsel %vm354, %v324, 0
        %v449 = vsel %vm354, %v325, 0
        %v452 = vsel %vm354, %v326, 0
        %v455 = vsel %vm354, %v327, 0
        %v458 = vsel %vm354, %v328, 0
        %v461 = vsel %vm354, %v329, 0
        %463 = vmatprep.subr.mxu0 0.0
        %464 = vmatpush1.msra.mxu0 %v292
        %465 = vmatprep.subr.mxu0 0.0
        %466 = vmatpush1.msra.mxu0 %v293
        %467 = vmatprep.subr.mxu0 0.0
        %468 = vmatpush1.msra.mxu0 0.0
        %469 = vmatprep.subr.mxu0 0.0
        %470 = vmatpush1.msra.mxu0 0.0
        %471 = vmatprep.subr.mxu0 0.0
        %472 = vmatpush1.msra.mxu0 0.0
        %473 = vmatprep.subr.mxu0 0.0
        %474 = vmatpush1.msra.mxu0 0.0
        %475 = vmatprep.subr.mxu0 0.0
        %476 = vmatpush1.msra.mxu0 0.0
        %477 = vmatprep.subr.mxu0 0.0
        %478 = vmatpush1.msra.mxu0 0.0
        %479 = vmatprep.subr.mxu0 0.0
        %480 = vmatpush1.msra.mxu0 0.0
        %481 = vmatprep.subr.mxu0 0.0
        %482 = vmatpush1.msra.mxu0 0.0
        %483 = vmatprep.subr.mxu0 0.0
        %484 = vmatpush1.msra.mxu0 0.0
        %485 = vmatprep.subr.mxu0 0.0
        %486 = vmatpush1.msra.mxu0 0.0
        %487 = vmatprep.subr.mxu0 0.0
        %488 = vmatpush1.msra.mxu0 0.0
        %489 = vmatprep.subr.mxu0 0.0
        %490 = vmatpush1.msra.mxu0 0.0
        %491 = vmatprep.subr.mxu0 0.0
        %492 = vmatpush1.msra.mxu0 0.0
        %493 = vmatprep.subr.mxu0 0.0
        %494 = vmatpush1.msra.mxu0 0.0
        %495 = vmatprep.subr.mxu0 0.0
        %496 = vmatpush1.msra.mxu0 0.0
        %497 = vmatprep.subr.mxu0 0.0
        %498 = vmatpush1.msra.mxu0 0.0
        %499 = vmatprep.subr.mxu0 0.0
        %500 = vmatpush1.msra.mxu0 0.0
        %501 = vmatprep.subr.mxu0 0.0
        %502 = vmatpush1.msra.mxu0 0.0
        %503 = vmatprep.subr.mxu0 0.0
        %504 = vmatpush1.msra.mxu0 0.0
        %505 = vmatprep.subr.mxu0 0.0
        %506 = vmatpush1.msra.mxu0 0.0
        %507 = vmatprep.subr.mxu0 0.0
        %508 = vmatpush1.msra.mxu0 0.0
        %509 = vmatprep.subr.mxu0 0.0
        %510 = vmatpush1.msra.mxu0 0.0
        %511 = vmatprep.subr.mxu0 0.0
        %512 = vmatpush1.msra.mxu0 0.0
        %513 = vmatprep.subr.mxu0 0.0
        %514 = vmatpush1.msra.mxu0 0.0
        %515 = vmatprep.subr.mxu0 0.0
        %516 = vmatpush1.msra.mxu0 0.0
        %517 = vmatprep.subr.mxu0 0.0
        %518 = vmatpush1.msra.mxu0 0.0
        %519 = vmatprep.subr.mxu0 0.0
        %520 = vmatpush1.msra.mxu0 0.0
        %521 = vmatprep.subr.mxu0 0.0
        %522 = vmatpush1.msra.mxu0 0.0
        %523 = vmatprep.subr.mxu0 0.0
        %524 = vmatpush1.msra.mxu0 0.0
        %525 = vmatprep.subr.mxu0 0.0
        %526 = vmatpush1.msra.mxu0 0.0
        %527 = vmatprep.mubr.f32.mxu0 0.0
        %528 = vmatmul.mubr.f32.gmra.mrb[0].mxu0 %v356
        %v529 = vpop.f32.mrb[0].mxu0
        %v530 = vadd.f32 0.0, %v529
        %v531 = vpop.f32.mrb[0].mxu0
        %532 = vmatprep.mubr.f32.mxu0 0.0
        %533 = vmatmul.mubr.f32.gmra.mrb[0].mxu0 %v359
        %v534 = vpop.f32.mrb[0].mxu0
        %v535 = vadd.f32 0.0, %v534
        %v536 = vpop.f32.mrb[0].mxu0
        %537 = vmatprep.mubr.f32.mxu0 0.0
        %538 = vmatmul.mubr.f32.gmra.mrb[0].mxu0 %v362
        %v539 = vpop.f32.mrb[0].mxu0
        %v540 = vadd.f32 0.0, %v539
        %v541 = vpop.f32.mrb[0].mxu0
        %542 = vmatprep.mubr.f32.mxu0 0.0
        %543 = vmatmul.mubr.f32.gmra.mrb[0].mxu0 %v365
        %v544 = vpop.f32.mrb[0].mxu0
        %v545 = vadd.f32 0.0, %v544
        %v546 = vpop.f32.mrb[0].mxu0
        %547 = vmatprep.mubr.f32.mxu0 0.0
        %548 = vmatmul.mubr.f32.gmra.mrb[0].mxu0 %v368
        %v549 = vpop.f32.mrb[0].mxu0
        %v550 = vadd.f32 0.0, %v549
        %v551 = vpop.f32.mrb[0].mxu0
        %552 = vmatprep.mubr.f32.mxu0 0.0
        %553 = vmatmul.mubr.f32.gmra.mrb[0].mxu0 %v371
        %v554 = vpop.f32.mrb[0].mxu0
        %v555 = vadd.f32 0.0, %v554
        %v556 = vpop.f32.mrb[0].mxu0
        %557 = vmatprep.mubr.f32.mxu0 0.0
        %558 = vmatmul.mubr.f32.gmra.mrb[0].mxu0 %v374
        %v559 = vpop.f32.mrb[0].mxu0
        %v560 = vadd.f32 0.0, %v559
        %v561 = vpop.f32.mrb[0].mxu0
        %562 = vmatprep.mubr.f32.mxu0 0.0
        %563 = vmatmul.mubr.f32.gmra.mrb[0].mxu0 %v377
        %v564 = vpop.f32.mrb[0].mxu0
        %v565 = vadd.f32 0.0, %v564
        %v566 = vpop.f32.mrb[0].mxu0
        %567 = vmatprep.mubr.f32.mxu0 0.0
        %568 = vmatmul.mubr.f32.gmra.mrb[0].mxu0 %v380
        %v569 = vpop.f32.mrb[0].mxu0
        %v570 = vadd.f32 0.0, %v569
        %v571 = vpop.f32.mrb[0].mxu0
        %572 = vmatprep.mubr.f32.mxu0 0.0
        %573 = vmatmul.mubr.f32.gmra.mrb[0].mxu0 %v383
        %v574 = vpop.f32.mrb[0].mxu0
        %v575 = vadd.f32 0.0, %v574
        %v576 = vpop.f32.mrb[0].mxu0
        %577 = vmatprep.mubr.f32.mxu0 0.0
        %578 = vmatmul.mubr.f32.gmra.mrb[0].mxu0 %v386
        %v579 = vpop.f32.mrb[0].mxu0
        %v580 = vadd.f32 0.0, %v579
        %v581 = vpop.f32.mrb[0].mxu0
        %582 = vmatprep.mubr.f32.mxu0 0.0
        %583 = vmatmul.mubr.f32.gmra.mrb[0].mxu0 %v389
        %v584 = vpop.f32.mrb[0].mxu0
        %v585 = vadd.f32 0.0, %v584
        %v586 = vpop.f32.mrb[0].mxu0
        %587 = vmatprep.mubr.f32.mxu0 0.0
        %588 = vmatmul.mubr.f32.gmra.mrb[0].mxu0 %v392
        %v589 = vpop.f32.mrb[0].mxu0
        %v590 = vadd.f32 0.0, %v589
        %v591 = vpop.f32.mrb[0].mxu0
        %592 = vmatprep.mubr.f32.mxu0 0.0
        %593 = vmatmul.mubr.f32.gmra.mrb[0].mxu0 %v395
        %v594 = vpop.f32.mrb[0].mxu0
        %v595 = vadd.f32 0.0, %v594
        %v596 = vpop.f32.mrb[0].mxu0
        %597 = vmatprep.mubr.f32.mxu0 0.0
        %598 = vmatmul.mubr.f32.gmra.mrb[0].mxu0 %v398
        %v599 = vpop.f32.mrb[0].mxu0
        %v600 = vadd.f32 0.0, %v599
        %v601 = vpop.f32.mrb[0].mxu0
        %602 = vmatprep.mubr.f32.mxu0 0.0
        %603 = vmatmul.mubr.f32.gmra.mrb[0].mxu0 %v401
        %v604 = vpop.f32.mrb[0].mxu0
        %v605 = vadd.f32 0.0, %v604
        %v606 = vpop.f32.mrb[0].mxu0
        %607 = vmatprep.mubr.f32.mxu0 0.0
        %608 = vmatmul.mubr.f32.gmra.mrb[0].mxu0 %v404
        %v609 = vpop.f32.mrb[0].mxu0
        %v610 = vadd.f32 0.0, %v609
        %v611 = vpop.f32.mrb[0].mxu0
        %612 = vmatprep.mubr.f32.mxu0 0.0
        %613 = vmatmul.mubr.f32.gmra.mrb[0].mxu0 %v407
        %v614 = vpop.f32.mrb[0].mxu0
        %v615 = vadd.f32 0.0, %v614
        %v616 = vpop.f32.mrb[0].mxu0
        %617 = vmatprep.mubr.f32.mxu0 0.0
        %618 = vmatmul.mubr.f32.gmra.mrb[0].mxu0 %v410
        %v619 = vpop.f32.mrb[0].mxu0
        %v620 = vadd.f32 0.0, %v619
        %v621 = vpop.f32.mrb[0].mxu0
        %622 = vmatprep.mubr.f32.mxu0 0.0
        %623 = vmatmul.mubr.f32.gmra.mrb[0].mxu0 %v413
        %v624 = vpop.f32.mrb[0].mxu0
        %v625 = vadd.f32 0.0, %v624
        %v626 = vpop.f32.mrb[0].mxu0
        %627 = vmatprep.mubr.f32.mxu0 0.0
        %628 = vmatmul.mubr.f32.gmra.mrb[0].mxu0 %v416
        %v629 = vpop.f32.mrb[0].mxu0
        %v630 = vadd.f32 0.0, %v629
        %v631 = vpop.f32.mrb[0].mxu0
        %632 = vmatprep.mubr.f32.mxu0 0.0
        %633 = vmatmul.mubr.f32.gmra.mrb[0].mxu0 %v419
        %v634 = vpop.f32.mrb[0].mxu0
        %v635 = vadd.f32 0.0, %v634
        %v636 = vpop.f32.mrb[0].mxu0
        %637 = vmatprep.mubr.f32.mxu0 0.0
        %638 = vmatmul.mubr.f32.gmra.mrb[0].mxu0 %v422
        %v639 = vpop.f32.mrb[0].mxu0
        %v640 = vadd.f32 0.0, %v639
        %v641 = vpop.f32.mrb[0].mxu0
        %642 = vmatprep.mubr.f32.mxu0 0.0
        %643 = vmatmul.mubr.f32.gmra.mrb[0].mxu0 %v425
        %v644 = vpop.f32.mrb[0].mxu0
        %v645 = vadd.f32 0.0, %v644
        %v646 = vpop.f32.mrb[0].mxu0
        %647 = vmatprep.mubr.f32.mxu0 0.0
        %648 = vmatmul.mubr.f32.gmra.mrb[0].mxu0 %v428
        %v649 = vpop.f32.mrb[0].mxu0
        %v650 = vadd.f32 0.0, %v649
        %v651 = vpop.f32.mrb[0].mxu0
        %652 = vmatprep.mubr.f32.mxu0 0.0
        %653 = vmatmul.mubr.f32.gmra.mrb[0].mxu0 %v431
        %v654 = vpop.f32.mrb[0].mxu0
        %v655 = vadd.f32 0.0, %v654
        %v656 = vpop.f32.mrb[0].mxu0
        %657 = vmatprep.mubr.f32.mxu0 0.0
        %658 = vmatmul.mubr.f32.gmra.mrb[0].mxu0 %v434
        %v659 = vpop.f32.mrb[0].mxu0
        %v660 = vadd.f32 0.0, %v659
        %v661 = vpop.f32.mrb[0].mxu0
        %662 = vmatprep.mubr.f32.mxu0 0.0
        %663 = vmatmul.mubr.f32.gmra.mrb[0].mxu0 %v437
        %v664 = vpop.f32.mrb[0].mxu0
        %v665 = vadd.f32 0.0, %v664
        %v666 = vpop.f32.mrb[0].mxu0
        %667 = vmatprep.mubr.f32.mxu0 0.0
        %668 = vmatmul.mubr.f32.gmra.mrb[0].mxu0 %v440
        %v669 = vpop.f32.mrb[0].mxu0
        %v670 = vadd.f32 0.0, %v669
        %v671 = vpop.f32.mrb[0].mxu0
        %672 = vmatprep.mubr.f32.mxu0 0.0
        %673 = vmatmul.mubr.f32.gmra.mrb[0].mxu0 %v443
        %v674 = vpop.f32.mrb[0].mxu0
        %v675 = vadd.f32 0.0, %v674
        %v676 = vpop.f32.mrb[0].mxu0
        %677 = vmatprep.mubr.f32.mxu0 0.0
        %678 = vmatmul.mubr.f32.gmra.mrb[0].mxu0 %v446
        %v679 = vpop.f32.mrb[0].mxu0
        %v680 = vadd.f32 0.0, %v679
        %v681 = vpop.f32.mrb[0].mxu0
        %682 = vmatprep.mubr.f32.mxu0 0.0
        %683 = vmatmul.mubr.f32.gmra.mrb[0].mxu0 %v449
        %v684 = vpop.f32.mrb[0].mxu0
        %v685 = vadd.f32 0.0, %v684
        %v686 = vpop.f32.mrb[0].mxu0
        %687 = vmatprep.mubr.f32.mxu0 0.0
        %688 = vmatmul.mubr.f32.gmra.mrb[0].mxu0 %v452
        %v689 = vpop.f32.mrb[0].mxu0
        %v690 = vadd.f32 0.0, %v689
        %v691 = vpop.f32.mrb[0].mxu0
        %692 = vmatprep.mubr.f32.mxu0 0.0
        %693 = vmatmul.mubr.f32.gmra.mrb[0].mxu0 %v455
        %v694 = vpop.f32.mrb[0].mxu0
        %v695 = vadd.f32 0.0, %v694
        %v696 = vpop.f32.mrb[0].mxu0
        %697 = vmatprep.mubr.f32.mxu0 0.0
        %698 = vmatmul.mubr.f32.gmra.mrb[0].mxu0 %v458
        %v699 = vpop.f32.mrb[0].mxu0
        %v700 = vadd.f32 0.0, %v699
        %v701 = vpop.f32.mrb[0].mxu0
        %702 = vmatprep.mubr.f32.mxu0 0.0
        %703 = vmatmul.mubr.f32.gmra.mrb[0].mxu0 %v461
        %v704 = vpop.f32.mrb[0].mxu0
        %v705 = vadd.f32 0.0, %v704
        %v706 = vpop.f32.mrb[0].mxu0
        %707 = vdwg.mxu0
        %v708 = vld [vmem:[%s2] sm:$0xff]
        %v709 = vld [vmem:[%s2 + $0x8] sm:$0xff]
        %v710 = vld [vmem:[%s2 + $0x10] sm:$0xff]
        %v711 = vld [vmem:[%s2 + $0x18] sm:$0xff]
        %v712 = vld [vmem:[%s2 + $0x20] sm:$0xff]
        %v713 = vld [vmem:[%s2 + $0x28] sm:$0xff]
        %v714 = vld [vmem:[%s2 + $0x30] sm:$0xff]
        %v715 = vld [vmem:[%s2 + $0x38] sm:$0xff]
        %vm716 = vcmask 261120
        %v718 = vsel %vm716, %v550, 0
        %v721 = vsel %vm716, %v555, 0
        %v724 = vsel %vm716, %v560, 0
        %v727 = vsel %vm716, %v565, 0
        %729 = vmatprep.subr.mxu0 0.0
        %730 = vmatpush1.msra.mxu0 %v712
        %731 = vmatprep.subr.mxu0 0.0
        %732 = vmatpush1.msra.mxu0 %v713
        %733 = vmatprep.subr.mxu0 0.0
        %734 = vmatpush1.msra.mxu0 %v714
        %735 = vmatprep.subr.mxu0 0.0
        %736 = vmatpush1.msra.mxu0 %v715
        %737 = vmatprep.subr.mxu0 0.0
        %738 = vmatpush1.msra.mxu0 0.0
        %739 = vmatprep.subr.mxu0 0.0
        %740 = vmatpush1.msra.mxu0 0.0
        %741 = vmatprep.subr.mxu0 0.0
        %742 = vmatpush1.msra.mxu0 0.0
        %743 = vmatprep.subr.mxu0 0.0
        %744 = vmatpush1.msra.mxu0 0.0
        %745 = vmatprep.subr.mxu0 0.0
        %746 = vmatpush1.msra.mxu0 0.0
        %747 = vmatprep.subr.mxu0 0.0
        %748 = vmatpush1.msra.mxu0 0.0
        %749 = vmatprep.subr.mxu0 0.0
        %750 = vmatpush1.msra.mxu0 0.0
        %751 = vmatprep.subr.mxu0 0.0
        %752 = vmatpush1.msra.mxu0 0.0
        %753 = vmatprep.subr.mxu0 0.0
        %754 = vmatpush1.msra.mxu0 0.0
        %755 = vmatprep.subr.mxu0 0.0
        %756 = vmatpush1.msra.mxu0 0.0
        %757 = vmatprep.subr.mxu0 0.0
        %758 = vmatpush1.msra.mxu0 0.0
        %759 = vmatprep.subr.mxu0 0.0
        %760 = vmatpush1.msra.mxu0 0.0
        %761 = vmatprep.subr.mxu0 0.0
        %762 = vmatpush1.msra.mxu0 0.0
        %763 = vmatprep.subr.mxu0 0.0
        %764 = vmatpush1.msra.mxu0 0.0
        %765 = vmatprep.subr.mxu0 0.0
        %766 = vmatpush1.msra.mxu0 0.0
        %767 = vmatprep.subr.mxu0 0.0
        %768 = vmatpush1.msra.mxu0 0.0
        %769 = vmatprep.subr.mxu0 0.0
        %770 = vmatpush1.msra.mxu0 0.0
        %771 = vmatprep.subr.mxu0 0.0
        %772 = vmatpush1.msra.mxu0 0.0
        %773 = vmatprep.subr.mxu0 0.0
        %774 = vmatpush1.msra.mxu0 0.0
        %775 = vmatprep.subr.mxu0 0.0
        %776 = vmatpush1.msra.mxu0 0.0
        %777 = vmatprep.subr.mxu0 0.0
        %778 = vmatpush1.msra.mxu0 0.0
        %779 = vmatprep.subr.mxu0 0.0
        %780 = vmatpush1.msra.mxu0 0.0
        %781 = vmatprep.subr.mxu0 0.0
        %782 = vmatpush1.msra.mxu0 0.0
        %783 = vmatprep.subr.mxu0 0.0
        %784 = vmatpush1.msra.mxu0 0.0
        %785 = vmatprep.subr.mxu0 0.0
        %786 = vmatpush1.msra.mxu0 0.0
        %787 = vmatprep.subr.mxu0 0.0
        %788 = vmatpush1.msra.mxu0 0.0
        %789 = vmatprep.subr.mxu0 0.0
        %790 = vmatpush1.msra.mxu0 0.0
        %791 = vmatprep.subr.mxu0 0.0
        %792 = vmatpush1.msra.mxu0 0.0
        %793 = vmatprep.mubr.f32.mxu0 0.0
        %794 = vmatmul.mubr.f32.gmra.mrb[0].mxu0 %v718
        %v795 = vpop.f32.mrb[0].mxu0
        %v796 = vadd.f32 0.0, %v795
        %v797 = vpop.f32.mrb[0].mxu0
        %798 = vmatprep.mubr.f32.mxu0 0.0
        %799 = vmatmul.mubr.f32.gmra.mrb[0].mxu0 %v721
        %v800 = vpop.f32.mrb[0].mxu0
        %v801 = vadd.f32 0.0, %v800
        %v802 = vpop.f32.mrb[0].mxu0
        %803 = vmatprep.mubr.f32.mxu0 0.0
        %804 = vmatmul.mubr.f32.gmra.mrb[0].mxu0 %v724
        %v805 = vpop.f32.mrb[0].mxu0
        %v806 = vadd.f32 0.0, %v805
        %v807 = vpop.f32.mrb[0].mxu0
        %808 = vmatprep.mubr.f32.mxu0 0.0
        %809 = vmatmul.mubr.f32.gmra.mrb[0].mxu0 %v727
        %v810 = vpop.f32.mrb[0].mxu0
        %v811 = vadd.f32 0.0, %v810
        %v812 = vpop.f32.mrb[0].mxu0
        %813 = vdwg.mxu0
        %v815 = vsel %vm716, %v530, 0
        %v818 = vsel %vm716, %v535, 0
        %v821 = vsel %vm716, %v540, 0
        %v824 = vsel %vm716, %v545, 0
        %826 = vmatprep.subr.mxu0 0.0
        %827 = vmatpush1.msra.mxu0 %v708
        %828 = vmatprep.subr.mxu0 0.0
        %829 = vmatpush1.msra.mxu0 %v709
        %830 = vmatprep.subr.mxu0 0.0
        %831 = vmatpush1.msra.mxu0 %v710
        %832 = vmatprep.subr.mxu0 0.0
        %833 = vmatpush1.msra.mxu0 %v711
        %834 = vmatprep.subr.mxu0 0.0
        %835 = vmatpush1.msra.mxu0 0.0
        %836 = vmatprep.subr.mxu0 0.0
        %837 = vmatpush1.msra.mxu0 0.0
        %838 = vmatprep.subr.mxu0 0.0
        %839 = vmatpush1.msra.mxu0 0.0
        %840 = vmatprep.subr.mxu0 0.0
        %841 = vmatpush1.msra.mxu0 0.0
        %842 = vmatprep.subr.mxu0 0.0
        %843 = vmatpush1.msra.mxu0 0.0
        %844 = vmatprep.subr.mxu0 0.0
        %845 = vmatpush1.msra.mxu0 0.0
        %846 = vmatprep.subr.mxu0 0.0
        %847 = vmatpush1.msra.mxu0 0.0
        %848 = vmatprep.subr.mxu0 0.0
        %849 = vmatpush1.msra.mxu0 0.0
        %850 = vmatprep.subr.mxu0 0.0
        %851 = vmatpush1.msra.mxu0 0.0
        %852 = vmatprep.subr.mxu0 0.0
        %853 = vmatpush1.msra.mxu0 0.0
        %854 = vmatprep.subr.mxu0 0.0
        %855 = vmatpush1.msra.mxu0 0.0
        %856 = vmatprep.subr.mxu0 0.0
        %857 = vmatpush1.msra.mxu0 0.0
        %858 = vmatprep.subr.mxu0 0.0
        %859 = vmatpush1.msra.mxu0 0.0
        %860 = vmatprep.subr.mxu0 0.0
        %861 = vmatpush1.msra.mxu0 0.0
        %862 = vmatprep.subr.mxu0 0.0
        %863 = vmatpush1.msra.mxu0 0.0
        %864 = vmatprep.subr.mxu0 0.0
        %865 = vmatpush1.msra.mxu0 0.0
        %866 = vmatprep.subr.mxu0 0.0
        %867 = vmatpush1.msra.mxu0 0.0
        %868 = vmatprep.subr.mxu0 0.0
        %869 = vmatpush1.msra.mxu0 0.0
        %870 = vmatprep.subr.mxu0 0.0
        %871 = vmatpush1.msra.mxu0 0.0
        %872 = vmatprep.subr.mxu0 0.0
        %873 = vmatpush1.msra.mxu0 0.0
        %874 = vmatprep.subr.mxu0 0.0
        %875 = vmatpush1.msra.mxu0 0.0
        %876 = vmatprep.subr.mxu0 0.0
        %877 = vmatpush1.msra.mxu0 0.0
        %878 = vmatprep.subr.mxu0 0.0
        %879 = vmatpush1.msra.mxu0 0.0
        %880 = vmatprep.subr.mxu0 0.0
        %881 = vmatpush1.msra.mxu0 0.0
        %882 = vmatprep.subr.mxu0 0.0
        %883 = vmatpush1.msra.mxu0 0.0
        %884 = vmatprep.subr.mxu0 0.0
        %885 = vmatpush1.msra.mxu0 0.0
        %886 = vmatprep.subr.mxu0 0.0
        %887 = vmatpush1.msra.mxu0 0.0
        %888 = vmatprep.subr.mxu0 0.0
        %889 = vmatpush1.msra.mxu0 0.0
        %890 = vmatprep.mubr.f32.mxu0 0.0
        %891 = vmatmul.mubr.f32.gmra.mrb[0].mxu0 %v815
        %v892 = vpop.f32.mrb[0].mxu0
        %v893 = vadd.f32 %v796, %v892
        %v894 = vpop.f32.mrb[0].mxu0
        %895 = vmatprep.mubr.f32.mxu0 0.0
        %896 = vmatmul.mubr.f32.gmra.mrb[0].mxu0 %v818
        %v897 = vpop.f32.mrb[0].mxu0
        %v898 = vadd.f32 %v801, %v897
        %v899 = vpop.f32.mrb[0].mxu0
        %900 = vmatprep.mubr.f32.mxu0 0.0
        %901 = vmatmul.mubr.f32.gmra.mrb[0].mxu0 %v821
        %v902 = vpop.f32.mrb[0].mxu0
        %v903 = vadd.f32 %v806, %v902
        %v904 = vpop.f32.mrb[0].mxu0
        %905 = vmatprep.mubr.f32.mxu0 0.0
        %906 = vmatmul.mubr.f32.gmra.mrb[0].mxu0 %v824
        %v907 = vpop.f32.mrb[0].mxu0
        %v908 = vadd.f32 %v811, %v907
        %v909 = vpop.f32.mrb[0].mxu0
        %910 = vdwg.mxu0
        %v911 = vld [vmem:[%s2 + $0x40] sm:$0xff]
        %v912 = vld [vmem:[%s2 + $0x48] sm:$0xff]
        %v913 = vld [vmem:[%s2 + $0x50] sm:$0xff]
        %v914 = vld [vmem:[%s2 + $0x58] sm:$0xff]
        %v916 = vsel %vm716, %v570, 0
        %v919 = vsel %vm716, %v575, 0
        %v922 = vsel %vm716, %v580, 0
        %v925 = vsel %vm716, %v585, 0
        %927 = vmatprep.subr.mxu0 0.0
        %928 = vmatpush1.msra.mxu0 %v911
        %929 = vmatprep.subr.mxu0 0.0
        %930 = vmatpush1.msra.mxu0 %v912
        %931 = vmatprep.subr.mxu0 0.0
        %932 = vmatpush1.msra.mxu0 %v913
        %933 = vmatprep.subr.mxu0 0.0
        %934 = vmatpush1.msra.mxu0 %v914
        %935 = vmatprep.subr.mxu0 0.0
        %936 = vmatpush1.msra.mxu0 0.0
        %937 = vmatprep.subr.mxu0 0.0
        %938 = vmatpush1.msra.mxu0 0.0
        %939 = vmatprep.subr.mxu0 0.0
        %940 = vmatpush1.msra.mxu0 0.0
        %941 = vmatprep.subr.mxu0 0.0
        %942 = vmatpush1.msra.mxu0 0.0
        %943 = vmatprep.subr.mxu0 0.0
        %944 = vmatpush1.msra.mxu0 0.0
        %945 = vmatprep.subr.mxu0 0.0
        %946 = vmatpush1.msra.mxu0 0.0
        %947 = vmatprep.subr.mxu0 0.0
        %948 = vmatpush1.msra.mxu0 0.0
        %949 = vmatprep.subr.mxu0 0.0
        %950 = vmatpush1.msra.mxu0 0.0
        %951 = vmatprep.subr.mxu0 0.0
        %952 = vmatpush1.msra.mxu0 0.0
        %953 = vmatprep.subr.mxu0 0.0
        %954 = vmatpush1.msra.mxu0 0.0
        %955 = vmatprep.subr.mxu0 0.0
        %956 = vmatpush1.msra.mxu0 0.0
        %957 = vmatprep.subr.mxu0 0.0
        %958 = vmatpush1.msra.mxu0 0.0
        %959 = vmatprep.subr.mxu0 0.0
        %960 = vmatpush1.msra.mxu0 0.0
        %961 = vmatprep.subr.mxu0 0.0
        %962 = vmatpush1.msra.mxu0 0.0
        %963 = vmatprep.subr.mxu0 0.0
        %964 = vmatpush1.msra.mxu0 0.0
        %965 = vmatprep.subr.mxu0 0.0
        %966 = vmatpush1.msra.mxu0 0.0
        %967 = vmatprep.subr.mxu0 0.0
        %968 = vmatpush1.msra.mxu0 0.0
        %969 = vmatprep.subr.mxu0 0.0
        %970 = vmatpush1.msra.mxu0 0.0
        %971 = vmatprep.subr.mxu0 0.0
        %972 = vmatpush1.msra.mxu0 0.0
        %973 = vmatprep.subr.mxu0 0.0
        %974 = vmatpush1.msra.mxu0 0.0
        %975 = vmatprep.subr.mxu0 0.0
        %976 = vmatpush1.msra.mxu0 0.0
        %977 = vmatprep.subr.mxu0 0.0
        %978 = vmatpush1.msra.mxu0 0.0
        %979 = vmatprep.subr.mxu0 0.0
        %980 = vmatpush1.msra.mxu0 0.0
        %981 = vmatprep.subr.mxu0 0.0
        %982 = vmatpush1.msra.mxu0 0.0
        %983 = vmatprep.subr.mxu0 0.0
        %984 = vmatpush1.msra.mxu0 0.0
        %985 = vmatprep.subr.mxu0 0.0
        %986 = vmatpush1.msra.mxu0 0.0
        %987 = vmatprep.subr.mxu0 0.0
        %988 = vmatpush1.msra.mxu0 0.0
        %989 = vmatprep.subr.mxu0 0.0
        %990 = vmatpush1.msra.mxu0 0.0
        %991 = vmatprep.mubr.f32.mxu0 0.0
        %992 = vmatmul.mubr.f32.gmra.mrb[0].mxu0 %v916
        %v993 = vpop.f32.mrb[0].mxu0
        %v994 = vadd.f32 0.0, %v993
        %v995 = vpop.f32.mrb[0].mxu0
        %996 = vmatprep.mubr.f32.mxu0 0.0
        %997 = vmatmul.mubr.f32.gmra.mrb[0].mxu0 %v919
        %v998 = vpop.f32.mrb[0].mxu0
        %v999 = vadd.f32 0.0, %v998
        %v1000 = vpop.f32.mrb[0].mxu0
        %1001 = vmatprep.mubr.f32.mxu0 0.0
        %1002 = vmatmul.mubr.f32.gmra.mrb[0].mxu0 %v922
        %v1003 = vpop.f32.mrb[0].mxu0
        %v1004 = vadd.f32 0.0, %v1003
        %v1005 = vpop.f32.mrb[0].mxu0
        %1006 = vmatprep.mubr.f32.mxu0 0.0
        %1007 = vmatmul.mubr.f32.gmra.mrb[0].mxu0 %v925
        %v1008 = vpop.f32.mrb[0].mxu0
        %v1009 = vadd.f32 0.0, %v1008
        %v1010 = vpop.f32.mrb[0].mxu0
        %1011 = vdwg.mxu0
        %v1012 = vadd.f32 %v893, %v994
        %v1013 = vadd.f32 %v898, %v999
        %v1014 = vadd.f32 %v903, %v1004
        %v1015 = vadd.f32 %v908, %v1009
        %v1016 = vld [vmem:[%s2 + $0x60] sm:$0xff]
        %v1017 = vld [vmem:[%s2 + $0x68] sm:$0xff]
        %v1018 = vld [vmem:[%s2 + $0x70] sm:$0xff]
        %v1019 = vld [vmem:[%s2 + $0x78] sm:$0xff]
        %v1021 = vsel %vm716, %v590, 0
        %v1024 = vsel %vm716, %v595, 0
        %v1027 = vsel %vm716, %v600, 0
        %v1030 = vsel %vm716, %v605, 0
        %1032 = vmatprep.subr.mxu0 0.0
        %1033 = vmatpush1.msra.mxu0 %v1016
        %1034 = vmatprep.subr.mxu0 0.0
        %1035 = vmatpush1.msra.mxu0 %v1017
        %1036 = vmatprep.subr.mxu0 0.0
        %1037 = vmatpush1.msra.mxu0 %v1018
        %1038 = vmatprep.subr.mxu0 0.0
        %1039 = vmatpush1.msra.mxu0 %v1019
        %1040 = vmatprep.subr.mxu0 0.0
        %1041 = vmatpush1.msra.mxu0 0.0
        %1042 = vmatprep.subr.mxu0 0.0
        %1043 = vmatpush1.msra.mxu0 0.0
        %1044 = vmatprep.subr.mxu0 0.0
        %1045 = vmatpush1.msra.mxu0 0.0
        %1046 = vmatprep.subr.mxu0 0.0
        %1047 = vmatpush1.msra.mxu0 0.0
        %1048 = vmatprep.subr.mxu0 0.0
        %1049 = vmatpush1.msra.mxu0 0.0
        %1050 = vmatprep.subr.mxu0 0.0
        %1051 = vmatpush1.msra.mxu0 0.0
        %1052 = vmatprep.subr.mxu0 0.0
        %1053 = vmatpush1.msra.mxu0 0.0
        %1054 = vmatprep.subr.mxu0 0.0
        %1055 = vmatpush1.msra.mxu0 0.0
        %1056 = vmatprep.subr.mxu0 0.0
        %1057 = vmatpush1.msra.mxu0 0.0
        %1058 = vmatprep.subr.mxu0 0.0
        %1059 = vmatpush1.msra.mxu0 0.0
        %1060 = vmatprep.subr.mxu0 0.0
        %1061 = vmatpush1.msra.mxu0 0.0
        %1062 = vmatprep.subr.mxu0 0.0
        %1063 = vmatpush1.msra.mxu0 0.0
        %1064 = vmatprep.subr.mxu0 0.0
        %1065 = vmatpush1.msra.mxu0 0.0
        %1066 = vmatprep.subr.mxu0 0.0
        %1067 = vmatpush1.msra.mxu0 0.0
        %1068 = vmatprep.subr.mxu0 0.0
        %1069 = vmatpush1.msra.mxu0 0.0
        %1070 = vmatprep.subr.mxu0 0.0
        %1071 = vmatpush1.msra.mxu0 0.0
        %1072 = vmatprep.subr.mxu0 0.0
        %1073 = vmatpush1.msra.mxu0 0.0
        %1074 = vmatprep.subr.mxu0 0.0
        %1075 = vmatpush1.msra.mxu0 0.0
        %1076 = vmatprep.subr.mxu0 0.0
        %1077 = vmatpush1.msra.mxu0 0.0
        %1078 = vmatprep.subr.mxu0 0.0
        %1079 = vmatpush1.msra.mxu0 0.0
        %1080 = vmatprep.subr.mxu0 0.0
        %1081 = vmatpush1.msra.mxu0 0.0
        %1082 = vmatprep.subr.mxu0 0.0
        %1083 = vmatpush1.msra.mxu0 0.0
        %1084 = vmatprep.subr.mxu0 0.0
        %1085 = vmatpush1.msra.mxu0 0.0
        %1086 = vmatprep.subr.mxu0 0.0
        %1087 = vmatpush1.msra.mxu0 0.0
        %1088 = vmatprep.subr.mxu0 0.0
        %1089 = vmatpush1.msra.mxu0 0.0
        %1090 = vmatprep.subr.mxu0 0.0
        %1091 = vmatpush1.msra.mxu0 0.0
        %1092 = vmatprep.subr.mxu0 0.0
        %1093 = vmatpush1.msra.mxu0 0.0
        %1094 = vmatprep.subr.mxu0 0.0
        %1095 = vmatpush1.msra.mxu0 0.0
        %1096 = vmatprep.mubr.f32.mxu0 0.0
        %1097 = vmatmul.mubr.f32.gmra.mrb[0].mxu0 %v1021
        %v1098 = vpop.f32.mrb[0].mxu0
        %v1099 = vadd.f32 0.0, %v1098
        %v1100 = vpop.f32.mrb[0].mxu0
        %1101 = vmatprep.mubr.f32.mxu0 0.0
        %1102 = vmatmul.mubr.f32.gmra.mrb[0].mxu0 %v1024
        %v1103 = vpop.f32.mrb[0].mxu0
        %v1104 = vadd.f32 0.0, %v1103
        %v1105 = vpop.f32.mrb[0].mxu0
        %1106 = vmatprep.mubr.f32.mxu0 0.0
        %1107 = vmatmul.mubr.f32.gmra.mrb[0].mxu0 %v1027
        %v1108 = vpop.f32.mrb[0].mxu0
        %v1109 = vadd.f32 0.0, %v1108
        %v1110 = vpop.f32.mrb[0].mxu0
        %1111 = vmatprep.mubr.f32.mxu0 0.0
        %1112 = vmatmul.mubr.f32.gmra.mrb[0].mxu0 %v1030
        %v1113 = vpop.f32.mrb[0].mxu0
        %v1114 = vadd.f32 0.0, %v1113
        %v1115 = vpop.f32.mrb[0].mxu0
        %1116 = vdwg.mxu0
        %v1117 = vadd.f32 %v1012, %v1099
        %v1118 = vadd.f32 %v1013, %v1104
        %v1119 = vadd.f32 %v1014, %v1109
        %v1120 = vadd.f32 %v1015, %v1114
        %v1121 = vld [vmem:[%s2 + $0x80] sm:$0xff]
        %v1122 = vld [vmem:[%s2 + $0x88] sm:$0xff]
        %v1123 = vld [vmem:[%s2 + $0x90] sm:$0xff]
        %v1124 = vld [vmem:[%s2 + $0x98] sm:$0xff]
        %v1126 = vsel %vm716, %v610, 0
        %v1129 = vsel %vm716, %v615, 0
        %v1132 = vsel %vm716, %v620, 0
        %v1135 = vsel %vm716, %v625, 0
        %1137 = vmatprep.subr.mxu0 0.0
        %1138 = vmatpush1.msra.mxu0 %v1121
        %1139 = vmatprep.subr.mxu0 0.0
        %1140 = vmatpush1.msra.mxu0 %v1122
        %1141 = vmatprep.subr.mxu0 0.0
        %1142 = vmatpush1.msra.mxu0 %v1123
        %1143 = vmatprep.subr.mxu0 0.0
        %1144 = vmatpush1.msra.mxu0 %v1124
        %1145 = vmatprep.subr.mxu0 0.0
        %1146 = vmatpush1.msra.mxu0 0.0
        %1147 = vmatprep.subr.mxu0 0.0
        %1148 = vmatpush1.msra.mxu0 0.0
        %1149 = vmatprep.subr.mxu0 0.0
        %1150 = vmatpush1.msra.mxu0 0.0
        %1151 = vmatprep.subr.mxu0 0.0
        %1152 = vmatpush1.msra.mxu0 0.0
        %1153 = vmatprep.subr.mxu0 0.0
        %1154 = vmatpush1.msra.mxu0 0.0
        %1155 = vmatprep.subr.mxu0 0.0
        %1156 = vmatpush1.msra.mxu0 0.0
        %1157 = vmatprep.subr.mxu0 0.0
        %1158 = vmatpush1.msra.mxu0 0.0
        %1159 = vmatprep.subr.mxu0 0.0
        %1160 = vmatpush1.msra.mxu0 0.0
        %1161 = vmatprep.subr.mxu0 0.0
        %1162 = vmatpush1.msra.mxu0 0.0
        %1163 = vmatprep.subr.mxu0 0.0
        %1164 = vmatpush1.msra.mxu0 0.0
        %1165 = vmatprep.subr.mxu0 0.0
        %1166 = vmatpush1.msra.mxu0 0.0
        %1167 = vmatprep.subr.mxu0 0.0
        %1168 = vmatpush1.msra.mxu0 0.0
        %1169 = vmatprep.subr.mxu0 0.0
        %1170 = vmatpush1.msra.mxu0 0.0
        %1171 = vmatprep.subr.mxu0 0.0
        %1172 = vmatpush1.msra.mxu0 0.0
        %1173 = vmatprep.subr.mxu0 0.0
        %1174 = vmatpush1.msra.mxu0 0.0
        %1175 = vmatprep.subr.mxu0 0.0
        %1176 = vmatpush1.msra.mxu0 0.0
        %1177 = vmatprep.subr.mxu0 0.0
        %1178 = vmatpush1.msra.mxu0 0.0
        %1179 = vmatprep.subr.mxu0 0.0
        %1180 = vmatpush1.msra.mxu0 0.0
        %1181 = vmatprep.subr.mxu0 0.0
        %1182 = vmatpush1.msra.mxu0 0.0
        %1183 = vmatprep.subr.mxu0 0.0
        %1184 = vmatpush1.msra.mxu0 0.0
        %1185 = vmatprep.subr.mxu0 0.0
        %1186 = vmatpush1.msra.mxu0 0.0
        %1187 = vmatprep.subr.mxu0 0.0
        %1188 = vmatpush1.msra.mxu0 0.0
        %1189 = vmatprep.subr.mxu0 0.0
        %1190 = vmatpush1.msra.mxu0 0.0
        %1191 = vmatprep.subr.mxu0 0.0
        %1192 = vmatpush1.msra.mxu0 0.0
        %1193 = vmatprep.subr.mxu0 0.0
        %1194 = vmatpush1.msra.mxu0 0.0
        %1195 = vmatprep.subr.mxu0 0.0
        %1196 = vmatpush1.msra.mxu0 0.0
        %1197 = vmatprep.subr.mxu0 0.0
        %1198 = vmatpush1.msra.mxu0 0.0
        %1199 = vmatprep.subr.mxu0 0.0
        %1200 = vmatpush1.msra.mxu0 0.0
        %1201 = vmatprep.mubr.f32.mxu0 0.0
        %1202 = vmatmul.mubr.f32.gmra.mrb[0].mxu0 %v1126
        %v1203 = vpop.f32.mrb[0].mxu0
        %v1204 = vadd.f32 0.0, %v1203
        %v1205 = vpop.f32.mrb[0].mxu0
        %1206 = vmatprep.mubr.f32.mxu0 0.0
        %1207 = vmatmul.mubr.f32.gmra.mrb[0].mxu0 %v1129
        %v1208 = vpop.f32.mrb[0].mxu0
        %v1209 = vadd.f32 0.0, %v1208
        %v1210 = vpop.f32.mrb[0].mxu0
        %1211 = vmatprep.mubr.f32.mxu0 0.0
        %1212 = vmatmul.mubr.f32.gmra.mrb[0].mxu0 %v1132
        %v1213 = vpop.f32.mrb[0].mxu0
        %v1214 = vadd.f32 0.0, %v1213
        %v1215 = vpop.f32.mrb[0].mxu0
        %1216 = vmatprep.mubr.f32.mxu0 0.0
        %1217 = vmatmul.mubr.f32.gmra.mrb[0].mxu0 %v1135
        %v1218 = vpop.f32.mrb[0].mxu0
        %v1219 = vadd.f32 0.0, %v1218
        %v1220 = vpop.f32.mrb[0].mxu0
        %1221 = vdwg.mxu0
        %v1222 = vadd.f32 %v1117, %v1204
        %v1223 = vadd.f32 %v1118, %v1209
        %v1224 = vadd.f32 %v1119, %v1214
        %v1225 = vadd.f32 %v1120, %v1219
        %v1226 = vld [vmem:[%s2 + $0xa0] sm:$0xff]
        %v1227 = vld [vmem:[%s2 + $0xa8] sm:$0xff]
        %v1228 = vld [vmem:[%s2 + $0xb0] sm:$0xff]
        %v1229 = vld [vmem:[%s2 + $0xb8] sm:$0xff]
        %v1231 = vsel %vm716, %v630, 0
        %v1234 = vsel %vm716, %v635, 0
        %v1237 = vsel %vm716, %v640, 0
        %v1240 = vsel %vm716, %v645, 0
        %1242 = vmatprep.subr.mxu0 0.0
        %1243 = vmatpush1.msra.mxu0 %v1226
        %1244 = vmatprep.subr.mxu0 0.0
        %1245 = vmatpush1.msra.mxu0 %v1227
        %1246 = vmatprep.subr.mxu0 0.0
        %1247 = vmatpush1.msra.mxu0 %v1228
        %1248 = vmatprep.subr.mxu0 0.0
        %1249 = vmatpush1.msra.mxu0 %v1229
        %1250 = vmatprep.subr.mxu0 0.0
        %1251 = vmatpush1.msra.mxu0 0.0
        %1252 = vmatprep.subr.mxu0 0.0
        %1253 = vmatpush1.msra.mxu0 0.0
        %1254 = vmatprep.subr.mxu0 0.0
        %1255 = vmatpush1.msra.mxu0 0.0
        %1256 = vmatprep.subr.mxu0 0.0
        %1257 = vmatpush1.msra.mxu0 0.0
        %1258 = vmatprep.subr.mxu0 0.0
        %1259 = vmatpush1.msra.mxu0 0.0
        %1260 = vmatprep.subr.mxu0 0.0
        %1261 = vmatpush1.msra.mxu0 0.0
        %1262 = vmatprep.subr.mxu0 0.0
        %1263 = vmatpush1.msra.mxu0 0.0
        %1264 = vmatprep.subr.mxu0 0.0
        %1265 = vmatpush1.msra.mxu0 0.0
        %1266 = vmatprep.subr.mxu0 0.0
        %1267 = vmatpush1.msra.mxu0 0.0
        %1268 = vmatprep.subr.mxu0 0.0
        %1269 = vmatpush1.msra.mxu0 0.0
        %1270 = vmatprep.subr.mxu0 0.0
        %1271 = vmatpush1.msra.mxu0 0.0
        %1272 = vmatprep.subr.mxu0 0.0
        %1273 = vmatpush1.msra.mxu0 0.0
        %1274 = vmatprep.subr.mxu0 0.0
        %1275 = vmatpush1.msra.mxu0 0.0
        %1276 = vmatprep.subr.mxu0 0.0
        %1277 = vmatpush1.msra.mxu0 0.0
        %1278 = vmatprep.subr.mxu0 0.0
        %1279 = vmatpush1.msra.mxu0 0.0
        %1280 = vmatprep.subr.mxu0 0.0
        %1281 = vmatpush1.msra.mxu0 0.0
        %1282 = vmatprep.subr.mxu0 0.0
        %1283 = vmatpush1.msra.mxu0 0.0
        %1284 = vmatprep.subr.mxu0 0.0
        %1285 = vmatpush1.msra.mxu0 0.0
        %1286 = vmatprep.subr.mxu0 0.0
        %1287 = vmatpush1.msra.mxu0 0.0
        %1288 = vmatprep.subr.mxu0 0.0
        %1289 = vmatpush1.msra.mxu0 0.0
        %1290 = vmatprep.subr.mxu0 0.0
        %1291 = vmatpush1.msra.mxu0 0.0
        %1292 = vmatprep.subr.mxu0 0.0
        %1293 = vmatpush1.msra.mxu0 0.0
        %1294 = vmatprep.subr.mxu0 0.0
        %1295 = vmatpush1.msra.mxu0 0.0
        %1296 = vmatprep.subr.mxu0 0.0
        %1297 = vmatpush1.msra.mxu0 0.0
        %1298 = vmatprep.subr.mxu0 0.0
        %1299 = vmatpush1.msra.mxu0 0.0
        %1300 = vmatprep.subr.mxu0 0.0
        %1301 = vmatpush1.msra.mxu0 0.0
        %1302 = vmatprep.subr.mxu0 0.0
        %1303 = vmatpush1.msra.mxu0 0.0
        %1304 = vmatprep.subr.mxu0 0.0
        %1305 = vmatpush1.msra.mxu0 0.0
        %1306 = vmatprep.mubr.f32.mxu0 0.0
        %1307 = vmatmul.mubr.f32.gmra.mrb[0].mxu0 %v1231
        %v1308 = vpop.f32.mrb[0].mxu0
        %v1309 = vadd.f32 0.0, %v1308
        %v1310 = vpop.f32.mrb[0].mxu0
        %1311 = vmatprep.mubr.f32.mxu0 0.0
        %1312 = vmatmul.mubr.f32.gmra.mrb[0].mxu0 %v1234
        %v1313 = vpop.f32.mrb[0].mxu0
        %v1314 = vadd.f32 0.0, %v1313
        %v1315 = vpop.f32.mrb[0].mxu0
        %1316 = vmatprep.mubr.f32.mxu0 0.0
        %1317 = vmatmul.mubr.f32.gmra.mrb[0].mxu0 %v1237
        %v1318 = vpop.f32.mrb[0].mxu0
        %v1319 = vadd.f32 0.0, %v1318
        %v1320 = vpop.f32.mrb[0].mxu0
        %1321 = vmatprep.mubr.f32.mxu0 0.0
        %1322 = vmatmul.mubr.f32.gmra.mrb[0].mxu0 %v1240
        %v1323 = vpop.f32.mrb[0].mxu0
        %v1324 = vadd.f32 0.0, %v1323
        %v1325 = vpop.f32.mrb[0].mxu0
        %1326 = vdwg.mxu0
        %v1327 = vadd.f32 %v1222, %v1309
        %v1328 = vadd.f32 %v1223, %v1314
        %v1329 = vadd.f32 %v1224, %v1319
        %v1330 = vadd.f32 %v1225, %v1324
        %v1331 = vld [vmem:[%s2 + $0xc0] sm:$0xff]
        %v1332 = vld [vmem:[%s2 + $0xc8] sm:$0xff]
        %v1333 = vld [vmem:[%s2 + $0xd0] sm:$0xff]
        %v1334 = vld [vmem:[%s2 + $0xd8] sm:$0xff]
        %v1336 = vsel %vm716, %v650, 0
        %v1339 = vsel %vm716, %v655, 0
        %v1342 = vsel %vm716, %v660, 0
        %v1345 = vsel %vm716, %v665, 0
        %1347 = vmatprep.subr.mxu0 0.0
        %1348 = vmatpush1.msra.mxu0 %v1331
        %1349 = vmatprep.subr.mxu0 0.0
        %1350 = vmatpush1.msra.mxu0 %v1332
        %1351 = vmatprep.subr.mxu0 0.0
        %1352 = vmatpush1.msra.mxu0 %v1333
        %1353 = vmatprep.subr.mxu0 0.0
        %1354 = vmatpush1.msra.mxu0 %v1334
        %1355 = vmatprep.subr.mxu0 0.0
        %1356 = vmatpush1.msra.mxu0 0.0
        %1357 = vmatprep.subr.mxu0 0.0
        %1358 = vmatpush1.msra.mxu0 0.0
        %1359 = vmatprep.subr.mxu0 0.0
        %1360 = vmatpush1.msra.mxu0 0.0
        %1361 = vmatprep.subr.mxu0 0.0
        %1362 = vmatpush1.msra.mxu0 0.0
        %1363 = vmatprep.subr.mxu0 0.0
        %1364 = vmatpush1.msra.mxu0 0.0
        %1365 = vmatprep.subr.mxu0 0.0
        %1366 = vmatpush1.msra.mxu0 0.0
        %1367 = vmatprep.subr.mxu0 0.0
        %1368 = vmatpush1.msra.mxu0 0.0
        %1369 = vmatprep.subr.mxu0 0.0
        %1370 = vmatpush1.msra.mxu0 0.0
        %1371 = vmatprep.subr.mxu0 0.0
        %1372 = vmatpush1.msra.mxu0 0.0
        %1373 = vmatprep.subr.mxu0 0.0
        %1374 = vmatpush1.msra.mxu0 0.0
        %1375 = vmatprep.subr.mxu0 0.0
        %1376 = vmatpush1.msra.mxu0 0.0
        %1377 = vmatprep.subr.mxu0 0.0
        %1378 = vmatpush1.msra.mxu0 0.0
        %1379 = vmatprep.subr.mxu0 0.0
        %1380 = vmatpush1.msra.mxu0 0.0
        %1381 = vmatprep.subr.mxu0 0.0
        %1382 = vmatpush1.msra.mxu0 0.0
        %1383 = vmatprep.subr.mxu0 0.0
        %1384 = vmatpush1.msra.mxu0 0.0
        %1385 = vmatprep.subr.mxu0 0.0
        %1386 = vmatpush1.msra.mxu0 0.0
        %1387 = vmatprep.subr.mxu0 0.0
        %1388 = vmatpush1.msra.mxu0 0.0
        %1389 = vmatprep.subr.mxu0 0.0
        %1390 = vmatpush1.msra.mxu0 0.0
        %1391 = vmatprep.subr.mxu0 0.0
        %1392 = vmatpush1.msra.mxu0 0.0
        %1393 = vmatprep.subr.mxu0 0.0
        %1394 = vmatpush1.msra.mxu0 0.0
        %1395 = vmatprep.subr.mxu0 0.0
        %1396 = vmatpush1.msra.mxu0 0.0
        %1397 = vmatprep.subr.mxu0 0.0
        %1398 = vmatpush1.msra.mxu0 0.0
        %1399 = vmatprep.subr.mxu0 0.0
        %1400 = vmatpush1.msra.mxu0 0.0
        %1401 = vmatprep.subr.mxu0 0.0
        %1402 = vmatpush1.msra.mxu0 0.0
        %1403 = vmatprep.subr.mxu0 0.0
        %1404 = vmatpush1.msra.mxu0 0.0
        %1405 = vmatprep.subr.mxu0 0.0
        %1406 = vmatpush1.msra.mxu0 0.0
        %1407 = vmatprep.subr.mxu0 0.0
        %1408 = vmatpush1.msra.mxu0 0.0
        %1409 = vmatprep.subr.mxu0 0.0
        %1410 = vmatpush1.msra.mxu0 0.0
        %1411 = vmatprep.mubr.f32.mxu0 0.0
        %1412 = vmatmul.mubr.f32.gmra.mrb[0].mxu0 %v1336
        %v1413 = vpop.f32.mrb[0].mxu0
        %v1414 = vadd.f32 0.0, %v1413
        %v1415 = vpop.f32.mrb[0].mxu0
        %1416 = vmatprep.mubr.f32.mxu0 0.0
        %1417 = vmatmul.mubr.f32.gmra.mrb[0].mxu0 %v1339
        %v1418 = vpop.f32.mrb[0].mxu0
        %v1419 = vadd.f32 0.0, %v1418
        %v1420 = vpop.f32.mrb[0].mxu0
        %1421 = vmatprep.mubr.f32.mxu0 0.0
        %1422 = vmatmul.mubr.f32.gmra.mrb[0].mxu0 %v1342
        %v1423 = vpop.f32.mrb[0].mxu0
        %v1424 = vadd.f32 0.0, %v1423
        %v1425 = vpop.f32.mrb[0].mxu0
        %1426 = vmatprep.mubr.f32.mxu0 0.0
        %1427 = vmatmul.mubr.f32.gmra.mrb[0].mxu0 %v1345
        %v1428 = vpop.f32.mrb[0].mxu0
        %v1429 = vadd.f32 0.0, %v1428
        %v1430 = vpop.f32.mrb[0].mxu0
        %1431 = vdwg.mxu0
        %v1432 = vadd.f32 %v1327, %v1414
        %v1433 = vadd.f32 %v1328, %v1419
        %v1434 = vadd.f32 %v1329, %v1424
        %v1435 = vadd.f32 %v1330, %v1429
        %v1436 = vld [vmem:[%s2 + $0xe0] sm:$0xff]
        %v1437 = vld [vmem:[%s2 + $0xe8] sm:$0xff]
        %v1438 = vld [vmem:[%s2 + $0xf0] sm:$0xff]
        %v1439 = vld [vmem:[%s2 + $0xf8] sm:$0xff]
        %v1441 = vsel %vm716, %v670, 0
        %v1444 = vsel %vm716, %v675, 0
        %v1447 = vsel %vm716, %v680, 0
        %v1450 = vsel %vm716, %v685, 0
        %1452 = vmatprep.subr.mxu0 0.0
        %1453 = vmatpush1.msra.mxu0 %v1436
        %1454 = vmatprep.subr.mxu0 0.0
        %1455 = vmatpush1.msra.mxu0 %v1437
        %1456 = vmatprep.subr.mxu0 0.0
        %1457 = vmatpush1.msra.mxu0 %v1438
        %1458 = vmatprep.subr.mxu0 0.0
        %1459 = vmatpush1.msra.mxu0 %v1439
        %1460 = vmatprep.subr.mxu0 0.0
        %1461 = vmatpush1.msra.mxu0 0.0
        %1462 = vmatprep.subr.mxu0 0.0
        %1463 = vmatpush1.msra.mxu0 0.0
        %1464 = vmatprep.subr.mxu0 0.0
        %1465 = vmatpush1.msra.mxu0 0.0
        %1466 = vmatprep.subr.mxu0 0.0
        %1467 = vmatpush1.msra.mxu0 0.0
        %1468 = vmatprep.subr.mxu0 0.0
        %1469 = vmatpush1.msra.mxu0 0.0
        %1470 = vmatprep.subr.mxu0 0.0
        %1471 = vmatpush1.msra.mxu0 0.0
        %1472 = vmatprep.subr.mxu0 0.0
        %1473 = vmatpush1.msra.mxu0 0.0
        %1474 = vmatprep.subr.mxu0 0.0
        %1475 = vmatpush1.msra.mxu0 0.0
        %1476 = vmatprep.subr.mxu0 0.0
        %1477 = vmatpush1.msra.mxu0 0.0
        %1478 = vmatprep.subr.mxu0 0.0
        %1479 = vmatpush1.msra.mxu0 0.0
        %1480 = vmatprep.subr.mxu0 0.0
        %1481 = vmatpush1.msra.mxu0 0.0
        %1482 = vmatprep.subr.mxu0 0.0
        %1483 = vmatpush1.msra.mxu0 0.0
        %1484 = vmatprep.subr.mxu0 0.0
        %1485 = vmatpush1.msra.mxu0 0.0
        %1486 = vmatprep.subr.mxu0 0.0
        %1487 = vmatpush1.msra.mxu0 0.0
        %1488 = vmatprep.subr.mxu0 0.0
        %1489 = vmatpush1.msra.mxu0 0.0
        %1490 = vmatprep.subr.mxu0 0.0
        %1491 = vmatpush1.msra.mxu0 0.0
        %1492 = vmatprep.subr.mxu0 0.0
        %1493 = vmatpush1.msra.mxu0 0.0
        %1494 = vmatprep.subr.mxu0 0.0
        %1495 = vmatpush1.msra.mxu0 0.0
        %1496 = vmatprep.subr.mxu0 0.0
        %1497 = vmatpush1.msra.mxu0 0.0
        %1498 = vmatprep.subr.mxu0 0.0
        %1499 = vmatpush1.msra.mxu0 0.0
        %1500 = vmatprep.subr.mxu0 0.0
        %1501 = vmatpush1.msra.mxu0 0.0
        %1502 = vmatprep.subr.mxu0 0.0
        %1503 = vmatpush1.msra.mxu0 0.0
        %1504 = vmatprep.subr.mxu0 0.0
        %1505 = vmatpush1.msra.mxu0 0.0
        %1506 = vmatprep.subr.mxu0 0.0
        %1507 = vmatpush1.msra.mxu0 0.0
        %1508 = vmatprep.subr.mxu0 0.0
        %1509 = vmatpush1.msra.mxu0 0.0
        %1510 = vmatprep.subr.mxu0 0.0
        %1511 = vmatpush1.msra.mxu0 0.0
        %1512 = vmatprep.subr.mxu0 0.0
        %1513 = vmatpush1.msra.mxu0 0.0
        %1514 = vmatprep.subr.mxu0 0.0
        %1515 = vmatpush1.msra.mxu0 0.0
        %1516 = vmatprep.mubr.f32.mxu0 0.0
        %1517 = vmatmul.mubr.f32.gmra.mrb[0].mxu0 %v1441
        %v1518 = vpop.f32.mrb[0].mxu0
        %v1519 = vadd.f32 0.0, %v1518
        %v1520 = vpop.f32.mrb[0].mxu0
        %1521 = vmatprep.mubr.f32.mxu0 0.0
        %1522 = vmatmul.mubr.f32.gmra.mrb[0].mxu0 %v1444
        %v1523 = vpop.f32.mrb[0].mxu0
        %v1524 = vadd.f32 0.0, %v1523
        %v1525 = vpop.f32.mrb[0].mxu0
        %1526 = vmatprep.mubr.f32.mxu0 0.0
        %1527 = vmatmul.mubr.f32.gmra.mrb[0].mxu0 %v1447
        %v1528 = vpop.f32.mrb[0].mxu0
        %v1529 = vadd.f32 0.0, %v1528
        %v1530 = vpop.f32.mrb[0].mxu0
        %1531 = vmatprep.mubr.f32.mxu0 0.0
        %1532 = vmatmul.mubr.f32.gmra.mrb[0].mxu0 %v1450
        %v1533 = vpop.f32.mrb[0].mxu0
        %v1534 = vadd.f32 0.0, %v1533
        %v1535 = vpop.f32.mrb[0].mxu0
        %1536 = vdwg.mxu0
        %v1537 = vadd.f32 %v1432, %v1519
        %v1538 = vadd.f32 %v1433, %v1524
        %v1539 = vadd.f32 %v1434, %v1529
        %v1540 = vadd.f32 %v1435, %v1534
        %v1541 = vld [vmem:[%s2 + $0x100] sm:$0xff]
        %v1542 = vld [vmem:[%s2 + $0x108] sm:$0xff]
        %v1543 = vld [vmem:[%s2 + $0x110] sm:$0xff]
        %v1544 = vld [vmem:[%s2 + $0x118] sm:$0xff]
        %v1546 = vsel %vm716, %v690, 0
        %v1549 = vsel %vm716, %v695, 0
        %v1552 = vsel %vm716, %v700, 0
        %v1555 = vsel %vm716, %v705, 0
        %1557 = vmatprep.subr.mxu0 0.0
        %1558 = vmatpush1.msra.mxu0 %v1541
        %1559 = vmatprep.subr.mxu0 0.0
        %1560 = vmatpush1.msra.mxu0 %v1542
        %1561 = vmatprep.subr.mxu0 0.0
        %1562 = vmatpush1.msra.mxu0 %v1543
        %1563 = vmatprep.subr.mxu0 0.0
        %1564 = vmatpush1.msra.mxu0 %v1544
        %1565 = vmatprep.subr.mxu0 0.0
        %1566 = vmatpush1.msra.mxu0 0.0
        %1567 = vmatprep.subr.mxu0 0.0
        %1568 = vmatpush1.msra.mxu0 0.0
        %1569 = vmatprep.subr.mxu0 0.0
        %1570 = vmatpush1.msra.mxu0 0.0
        %1571 = vmatprep.subr.mxu0 0.0
        %1572 = vmatpush1.msra.mxu0 0.0
        %1573 = vmatprep.subr.mxu0 0.0
        %1574 = vmatpush1.msra.mxu0 0.0
        %1575 = vmatprep.subr.mxu0 0.0
        %1576 = vmatpush1.msra.mxu0 0.0
        %1577 = vmatprep.subr.mxu0 0.0
        %1578 = vmatpush1.msra.mxu0 0.0
        %1579 = vmatprep.subr.mxu0 0.0
        %1580 = vmatpush1.msra.mxu0 0.0
        %1581 = vmatprep.subr.mxu0 0.0
        %1582 = vmatpush1.msra.mxu0 0.0
        %1583 = vmatprep.subr.mxu0 0.0
        %1584 = vmatpush1.msra.mxu0 0.0
        %1585 = vmatprep.subr.mxu0 0.0
        %1586 = vmatpush1.msra.mxu0 0.0
        %1587 = vmatprep.subr.mxu0 0.0
        %1588 = vmatpush1.msra.mxu0 0.0
        %1589 = vmatprep.subr.mxu0 0.0
        %1590 = vmatpush1.msra.mxu0 0.0
        %1591 = vmatprep.subr.mxu0 0.0
        %1592 = vmatpush1.msra.mxu0 0.0
        %1593 = vmatprep.subr.mxu0 0.0
        %1594 = vmatpush1.msra.mxu0 0.0
        %1595 = vmatprep.subr.mxu0 0.0
        %1596 = vmatpush1.msra.mxu0 0.0
        %1597 = vmatprep.subr.mxu0 0.0
        %1598 = vmatpush1.msra.mxu0 0.0
        %1599 = vmatprep.subr.mxu0 0.0
        %1600 = vmatpush1.msra.mxu0 0.0
        %1601 = vmatprep.subr.mxu0 0.0
        %1602 = vmatpush1.msra.mxu0 0.0
        %1603 = vmatprep.subr.mxu0 0.0
        %1604 = vmatpush1.msra.mxu0 0.0
        %1605 = vmatprep.subr.mxu0 0.0
        %1606 = vmatpush1.msra.mxu0 0.0
        %1607 = vmatprep.subr.mxu0 0.0
        %1608 = vmatpush1.msra.mxu0 0.0
        %1609 = vmatprep.subr.mxu0 0.0
        %1610 = vmatpush1.msra.mxu0 0.0
        %1611 = vmatprep.subr.mxu0 0.0
        %1612 = vmatpush1.msra.mxu0 0.0
        %1613 = vmatprep.subr.mxu0 0.0
        %1614 = vmatpush1.msra.mxu0 0.0
        %1615 = vmatprep.subr.mxu0 0.0
        %1616 = vmatpush1.msra.mxu0 0.0
        %1617 = vmatprep.subr.mxu0 0.0
        %1618 = vmatpush1.msra.mxu0 0.0
        %1619 = vmatprep.subr.mxu0 0.0
        %1620 = vmatpush1.msra.mxu0 0.0
        %1621 = vmatprep.mubr.f32.mxu0 0.0
        %1622 = vmatmul.mubr.f32.gmra.mrb[0].mxu0 %v1546
        %v1623 = vpop.f32.mrb[0].mxu0
        %v1624 = vadd.f32 0.0, %v1623
        %v1625 = vpop.f32.mrb[0].mxu0
        %1626 = vmatprep.mubr.f32.mxu0 0.0
        %1627 = vmatmul.mubr.f32.gmra.mrb[0].mxu0 %v1549
        %v1628 = vpop.f32.mrb[0].mxu0
        %v1629 = vadd.f32 0.0, %v1628
        %v1630 = vpop.f32.mrb[0].mxu0
        %1631 = vmatprep.mubr.f32.mxu0 0.0
        %1632 = vmatmul.mubr.f32.gmra.mrb[0].mxu0 %v1552
        %v1633 = vpop.f32.mrb[0].mxu0
        %v1634 = vadd.f32 0.0, %v1633
        %v1635 = vpop.f32.mrb[0].mxu0
        %1636 = vmatprep.mubr.f32.mxu0 0.0
        %1637 = vmatmul.mubr.f32.gmra.mrb[0].mxu0 %v1555
        %v1638 = vpop.f32.mrb[0].mxu0
        %v1639 = vadd.f32 0.0, %v1638
        %v1640 = vpop.f32.mrb[0].mxu0
        %1641 = vdwg.mxu0
        %v1642 = vadd.f32 %v1537, %v1624
        %v1643 = vadd.f32 %v1538, %v1629
        %v1644 = vadd.f32 %v1539, %v1634
        %v1645 = vadd.f32 %v1540, %v1639
        %1647 = vset.pattern.permute.xlu0 0
        %1648 = vperm.xlu0 %1647, %v348
        %v1649 = vpop.permute.xlu0 %1648
        %1652 = vset.pattern.permute.xlu0 0
        %1653 = vperm.xlu0 %1652, %v349
        %v1654 = vpop.permute.xlu0 %1653
        %1657 = vset.pattern.permute.xlu0 0
        %1658 = vperm.xlu0 %1657, %v350
        %v1659 = vpop.permute.xlu0 %1658
        %1662 = vset.pattern.permute.xlu0 0
        %1663 = vperm.xlu0 %1662, %v351
        %v1664 = vpop.permute.xlu0 %1663
        %v1666 = vadd.f32 %v1642, %v1649
        %v1667 = vadd.f32 %v1643, %v1654
        %v1668 = vadd.f32 %v1644, %v1659
        %v1669 = vadd.f32 %v1645, %v1664
        %v1670 = vmul.f32 %v1666, 0.70710677
        %v1671 = vmul.f32 %v1667, 0.70710677
        %v1672 = vmul.f32 %v1668, 0.70710677
        %v1673 = vmul.f32 %v1669, 0.70710677
        %v1674 = vand.u32 2147483647, %v1670
        %v1675 = vand.u32 2147483647, %v1671
        %v1676 = vand.u32 2147483647, %v1672
        %v1677 = vand.u32 2147483647, %v1673
        %v1678 = vmul.f32 %v1674, 0.3275911
        %v1679 = vmul.f32 %v1675, 0.3275911
        %v1680 = vmul.f32 %v1676, 0.3275911
        %v1681 = vmul.f32 %v1677, 0.3275911
        %v1682 = vadd.f32 %v1678, 1.0
        %v1683 = vadd.f32 %v1679, 1.0
        %v1684 = vadd.f32 %v1680, 1.0
        %v1685 = vadd.f32 %v1681, 1.0
        %v1686 = vrcp.pop %v1682
        %v1687 = vmul.f32 1.0, %v1686
        %v1688 = vrcp.pop %v1683
        %v1689 = vmul.f32 1.0, %v1688
        %v1690 = vrcp.pop %v1684
        %v1691 = vmul.f32 1.0, %v1690
        %v1692 = vrcp.pop %v1685
        %v1693 = vmul.f32 1.0, %v1692
        %v1694 = vmul.f32 %v1687, 1.0614054
        %v1695 = vmul.f32 %v1689, 1.0614054
        %v1696 = vmul.f32 %v1691, 1.0614054
        %v1697 = vmul.f32 %v1693, 1.0614054
        %v1698 = vadd.f32 %v1694, -1.4531521
        %v1699 = vadd.f32 %v1695, -1.4531521
        %v1700 = vadd.f32 %v1696, -1.4531521
        %v1701 = vadd.f32 %v1697, -1.4531521
        %v1702 = vmul.f32 %v1698, %v1687
        %v1703 = vmul.f32 %v1699, %v1689
        %v1704 = vmul.f32 %v1700, %v1691
        %v1705 = vmul.f32 %v1701, %v1693
        %v1706 = vadd.f32 %v1702, 1.4214138
        %v1707 = vadd.f32 %v1703, 1.4214138
        %v1708 = vadd.f32 %v1704, 1.4214138
        %v1709 = vadd.f32 %v1705, 1.4214138
        %v1710 = vmul.f32 %v1706, %v1687
        %v1711 = vmul.f32 %v1707, %v1689
        %v1712 = vmul.f32 %v1708, %v1691
        %v1713 = vmul.f32 %v1709, %v1693
        %v1714 = vadd.f32 %v1710, -0.28449672
        %v1715 = vadd.f32 %v1711, -0.28449672
        %v1716 = vadd.f32 %v1712, -0.28449672
        %v1717 = vadd.f32 %v1713, -0.28449672
        %v1718 = vmul.f32 %v1714, %v1687
        %v1719 = vmul.f32 %v1715, %v1689
        %v1720 = vmul.f32 %v1716, %v1691
        %v1721 = vmul.f32 %v1717, %v1693
        %v1722 = vadd.f32 %v1718, 0.2548296
        %v1723 = vadd.f32 %v1719, 0.2548296
        %v1724 = vadd.f32 %v1720, 0.2548296
        %v1725 = vadd.f32 %v1721, 0.2548296
        %v1726 = vmul.f32 %v1722, %v1687
        %v1727 = vmul.f32 %v1723, %v1689
        %v1728 = vmul.f32 %v1724, %v1691
        %v1729 = vmul.f32 %v1725, %v1693
        %v1730 = vsub.f32 0.0, %v1674
        %v1731 = vsub.f32 0.0, %v1675
        %v1732 = vsub.f32 0.0, %v1676
        %v1733 = vsub.f32 0.0, %v1677
        %v1734 = vmul.f32 %v1730, %v1674
        %v1735 = vmul.f32 %v1731, %v1675
        %v1736 = vmul.f32 %v1732, %v1676
        %v1737 = vmul.f32 %v1733, %v1677
        %v1738 = vmul.f32 %v1734, 1.442695
        %v1739 = vpow.pop %v1738
        %v1740 = vmul.f32 %v1735, 1.442695
        %v1741 = vpow.pop %v1740
        %v1742 = vmul.f32 %v1736, 1.442695
        %v1743 = vpow.pop %v1742
        %v1744 = vmul.f32 %v1737, 1.442695
        %v1745 = vpow.pop %v1744
        %v1746 = vmul.f32 %v1726, %v1739
        %v1747 = vmul.f32 %v1727, %v1741
        %v1748 = vmul.f32 %v1728, %v1743
        %v1749 = vmul.f32 %v1729, %v1745
        %v1750 = vsub.f32 1.0, %v1746
        %v1751 = vsub.f32 1.0, %v1747
        %v1752 = vsub.f32 1.0, %v1748
        %v1753 = vsub.f32 1.0, %v1749
        %vm1754 = vcmp.ge.f32.partialorder %v1670, 0.0
        %vm1755 = vcmp.ge.f32.partialorder %v1671, 0.0
        %vm1756 = vcmp.ge.f32.partialorder %v1672, 0.0
        %vm1757 = vcmp.ge.f32.partialorder %v1673, 0.0
        %v1758 = vsub.f32 0.0, %v1750
        %v1759 = vsub.f32 0.0, %v1751
        %v1760 = vsub.f32 0.0, %v1752
        %v1761 = vsub.f32 0.0, %v1753
        %v1762 = vsel %vm1754, %v1750, %v1758
        %v1763 = vsel %vm1755, %v1751, %v1759
        %v1764 = vsel %vm1756, %v1752, %v1760
        %v1765 = vsel %vm1757, %v1753, %v1761
        %v1766 = vmul.f32 %v1666, 0.5
        %v1767 = vmul.f32 %v1667, 0.5
        %v1768 = vmul.f32 %v1668, 0.5
        %v1769 = vmul.f32 %v1669, 0.5
        %v1770 = vadd.f32 %v1762, 1.0
        %v1771 = vadd.f32 %v1763, 1.0
        %v1772 = vadd.f32 %v1764, 1.0
        %v1773 = vadd.f32 %v1765, 1.0
        %v1774 = vmul.f32 %v1766, %v1770
        %v1775 = vmul.f32 %v1767, %v1771
        %v1776 = vmul.f32 %v1768, %v1772
        %v1777 = vmul.f32 %v1769, %v1773
        %v1779 = vsel %vm716, %v330, 0
        %v1782 = vsel %vm716, %v331, 0
        %v1785 = vsel %vm716, %v332, 0
        %v1788 = vsel %vm716, %v333, 0
        %v1791 = vsel %vm716, %v334, 0
        %v1794 = vsel %vm716, %v335, 0
        %v1797 = vsel %vm716, %v336, 0
        %v1800 = vsel %vm716, %v337, 0
        %v1803 = vsel %vm716, %v338, 0
        %v1806 = vsel %vm716, %v339, 0
        %v1809 = vsel %vm716, %v340, 0
        %v1812 = vsel %vm716, %v341, 0
        %v1815 = vsel %vm716, %v342, 0
        %v1818 = vsel %vm716, %v343, 0
        %v1821 = vsel %vm716, %v344, 0
        %v1824 = vsel %vm716, %v345, 0
        %v1827 = vsel %vm716, %v346, 0
        %v1830 = vsel %vm716, %v347, 0
        %1832 = vmatprep.subr.mxu0 0.0
        %1833 = vmatpush1.msra.mxu0 %v1774
        %1834 = vmatprep.subr.mxu0 0.0
        %1835 = vmatpush1.msra.mxu0 %v1775
        %1836 = vmatprep.subr.mxu0 0.0
        %1837 = vmatpush1.msra.mxu0 %v1776
        %1838 = vmatprep.subr.mxu0 0.0
        %1839 = vmatpush1.msra.mxu0 %v1777
        %1840 = vmatprep.subr.mxu0 0.0
        %1841 = vmatpush1.msra.mxu0 0.0
        %1842 = vmatprep.subr.mxu0 0.0
        %1843 = vmatpush1.msra.mxu0 0.0
        %1844 = vmatprep.subr.mxu0 0.0
        %1845 = vmatpush1.msra.mxu0 0.0
        %1846 = vmatprep.subr.mxu0 0.0
        %1847 = vmatpush1.msra.mxu0 0.0
        %1848 = vmatprep.subr.mxu0 0.0
        %1849 = vmatpush1.msra.mxu0 0.0
        %1850 = vmatprep.subr.mxu0 0.0
        %1851 = vmatpush1.msra.mxu0 0.0
        %1852 = vmatprep.subr.mxu0 0.0
        %1853 = vmatpush1.msra.mxu0 0.0
        %1854 = vmatprep.subr.mxu0 0.0
        %1855 = vmatpush1.msra.mxu0 0.0
        %1856 = vmatprep.subr.mxu0 0.0
        %1857 = vmatpush1.msra.mxu0 0.0
        %1858 = vmatprep.subr.mxu0 0.0
        %1859 = vmatpush1.msra.mxu0 0.0
        %1860 = vmatprep.subr.mxu0 0.0
        %1861 = vmatpush1.msra.mxu0 0.0
        %1862 = vmatprep.subr.mxu0 0.0
        %1863 = vmatpush1.msra.mxu0 0.0
        %1864 = vmatprep.subr.mxu0 0.0
        %1865 = vmatpush1.msra.mxu0 0.0
        %1866 = vmatprep.subr.mxu0 0.0
        %1867 = vmatpush1.msra.mxu0 0.0
        %1868 = vmatprep.subr.mxu0 0.0
        %1869 = vmatpush1.msra.mxu0 0.0
        %1870 = vmatprep.subr.mxu0 0.0
        %1871 = vmatpush1.msra.mxu0 0.0
        %1872 = vmatprep.subr.mxu0 0.0
        %1873 = vmatpush1.msra.mxu0 0.0
        %1874 = vmatprep.subr.mxu0 0.0
        %1875 = vmatpush1.msra.mxu0 0.0
        %1876 = vmatprep.subr.mxu0 0.0
        %1877 = vmatpush1.msra.mxu0 0.0
        %1878 = vmatprep.subr.mxu0 0.0
        %1879 = vmatpush1.msra.mxu0 0.0
        %1880 = vmatprep.subr.mxu0 0.0
        %1881 = vmatpush1.msra.mxu0 0.0
        %1882 = vmatprep.subr.mxu0 0.0
        %1883 = vmatpush1.msra.mxu0 0.0
        %1884 = vmatprep.subr.mxu0 0.0
        %1885 = vmatpush1.msra.mxu0 0.0
        %1886 = vmatprep.subr.mxu0 0.0
        %1887 = vmatpush1.msra.mxu0 0.0
        %1888 = vmatprep.subr.mxu0 0.0
        %1889 = vmatpush1.msra.mxu0 0.0
        %1890 = vmatprep.subr.mxu0 0.0
        %1891 = vmatpush1.msra.mxu0 0.0
        %1892 = vmatprep.subr.mxu0 0.0
        %1893 = vmatpush1.msra.mxu0 0.0
        %1894 = vmatprep.subr.mxu0 0.0
        %1895 = vmatpush1.msra.mxu0 0.0
        %1896 = vmatprep.mubr.f32.mxu0 0.0
        %1897 = vmatmul.mubr.f32.gmra.mrb[0].mxu0 %v1779
        %v1898 = vpop.f32.mrb[0].mxu0
        %v1899 = vadd.f32 0.0, %v1898
        %v1900 = vpop.f32.mrb[0].mxu0
        %1901 = vmatprep.mubr.f32.mxu0 0.0
        %1902 = vmatmul.mubr.f32.gmra.mrb[0].mxu0 %v1782
        %v1903 = vpop.f32.mrb[0].mxu0
        %v1904 = vadd.f32 0.0, %v1903
        %v1905 = vpop.f32.mrb[0].mxu0
        %1906 = vmatprep.mubr.f32.mxu0 0.0
        %1907 = vmatmul.mubr.f32.gmra.mrb[0].mxu0 %v1785
        %v1908 = vpop.f32.mrb[0].mxu0
        %v1909 = vadd.f32 0.0, %v1908
        %v1910 = vpop.f32.mrb[0].mxu0
        %1911 = vmatprep.mubr.f32.mxu0 0.0
        %1912 = vmatmul.mubr.f32.gmra.mrb[0].mxu0 %v1788
        %v1913 = vpop.f32.mrb[0].mxu0
        %v1914 = vadd.f32 0.0, %v1913
        %v1915 = vpop.f32.mrb[0].mxu0
        %1916 = vmatprep.mubr.f32.mxu0 0.0
        %1917 = vmatmul.mubr.f32.gmra.mrb[0].mxu0 %v1791
        %v1918 = vpop.f32.mrb[0].mxu0
        %v1919 = vadd.f32 0.0, %v1918
        %v1920 = vpop.f32.mrb[0].mxu0
        %1921 = vmatprep.mubr.f32.mxu0 0.0
        %1922 = vmatmul.mubr.f32.gmra.mrb[0].mxu0 %v1794
        %v1923 = vpop.f32.mrb[0].mxu0
        %v1924 = vadd.f32 0.0, %v1923
        %v1925 = vpop.f32.mrb[0].mxu0
        %1926 = vmatprep.mubr.f32.mxu0 0.0
        %1927 = vmatmul.mubr.f32.gmra.mrb[0].mxu0 %v1797
        %v1928 = vpop.f32.mrb[0].mxu0
        %v1929 = vadd.f32 0.0, %v1928
        %v1930 = vpop.f32.mrb[0].mxu0
        %1931 = vmatprep.mubr.f32.mxu0 0.0
        %1932 = vmatmul.mubr.f32.gmra.mrb[0].mxu0 %v1800
        %v1933 = vpop.f32.mrb[0].mxu0
        %v1934 = vadd.f32 0.0, %v1933
        %v1935 = vpop.f32.mrb[0].mxu0
        %1936 = vmatprep.mubr.f32.mxu0 0.0
        %1937 = vmatmul.mubr.f32.gmra.mrb[0].mxu0 %v1803
        %v1938 = vpop.f32.mrb[0].mxu0
        %v1939 = vadd.f32 0.0, %v1938
        %v1940 = vpop.f32.mrb[0].mxu0
        %1941 = vmatprep.mubr.f32.mxu0 0.0
        %1942 = vmatmul.mubr.f32.gmra.mrb[0].mxu0 %v1806
        %v1943 = vpop.f32.mrb[0].mxu0
        %v1944 = vadd.f32 0.0, %v1943
        %v1945 = vpop.f32.mrb[0].mxu0
        %1946 = vmatprep.mubr.f32.mxu0 0.0
        %1947 = vmatmul.mubr.f32.gmra.mrb[0].mxu0 %v1809
        %v1948 = vpop.f32.mrb[0].mxu0
        %v1949 = vadd.f32 0.0, %v1948
        %v1950 = vpop.f32.mrb[0].mxu0
        %1951 = vmatprep.mubr.f32.mxu0 0.0
        %1952 = vmatmul.mubr.f32.gmra.mrb[0].mxu0 %v1812
        %v1953 = vpop.f32.mrb[0].mxu0
        %v1954 = vadd.f32 0.0, %v1953
        %v1955 = vpop.f32.mrb[0].mxu0
        %1956 = vmatprep.mubr.f32.mxu0 0.0
        %1957 = vmatmul.mubr.f32.gmra.mrb[0].mxu0 %v1815
        %v1958 = vpop.f32.mrb[0].mxu0
        %v1959 = vadd.f32 0.0, %v1958
        %v1960 = vpop.f32.mrb[0].mxu0
        %1961 = vmatprep.mubr.f32.mxu0 0.0
        %1962 = vmatmul.mubr.f32.gmra.mrb[0].mxu0 %v1818
        %v1963 = vpop.f32.mrb[0].mxu0
        %v1964 = vadd.f32 0.0, %v1963
        %v1965 = vpop.f32.mrb[0].mxu0
        %1966 = vmatprep.mubr.f32.mxu0 0.0
        %1967 = vmatmul.mubr.f32.gmra.mrb[0].mxu0 %v1821
        %v1968 = vpop.f32.mrb[0].mxu0
        %v1969 = vadd.f32 0.0, %v1968
        %v1970 = vpop.f32.mrb[0].mxu0
        %1971 = vmatprep.mubr.f32.mxu0 0.0
        %1972 = vmatmul.mubr.f32.gmra.mrb[0].mxu0 %v1824
        %v1973 = vpop.f32.mrb[0].mxu0
        %v1974 = vadd.f32 0.0, %v1973
        %v1975 = vpop.f32.mrb[0].mxu0
        %1976 = vmatprep.mubr.f32.mxu0 0.0
        %1977 = vmatmul.mubr.f32.gmra.mrb[0].mxu0 %v1827
        %v1978 = vpop.f32.mrb[0].mxu0
        %v1979 = vadd.f32 0.0, %v1978
        %v1980 = vpop.f32.mrb[0].mxu0
        %1981 = vmatprep.mubr.f32.mxu0 0.0
        %1982 = vmatmul.mubr.f32.gmra.mrb[0].mxu0 %v1830
        %v1983 = vpop.f32.mrb[0].mxu0
        %v1984 = vadd.f32 0.0, %v1983
        %v1985 = vpop.f32.mrb[0].mxu0
        %1986 = vdwg.mxu0
        %v1987 = vld [vmem:[#allocation2] sm:$0xff]
        %v1988 = vld [vmem:[#allocation2 + $0x8] sm:$0xff]
        %v1989 = vld [vmem:[#allocation2 + $0x10] sm:$0xff]
        %v1990 = vld [vmem:[#allocation2 + $0x18] sm:$0xff]
        %v1991 = vld [vmem:[#allocation2 + $0x34] sm:$0xff]
        %v1992 = vld [vmem:[#allocation2 + $0x3c] sm:$0xff]
        %v1993 = vld [vmem:[#allocation2 + $0x44] sm:$0xff]
        %v1994 = vld [vmem:[#allocation2 + $0x4c] sm:$0xff]
        %v1996 = vsel %vm716, %v1909, 0
        %v1999 = vsel %vm716, %v1914, 0
        %2001 = vmatprep.subr.mxu0 0.0
        %2002 = vmatpush1.msra.mxu0 %v1991
        %2003 = vmatprep.subr.mxu0 0.0
        %2004 = vmatpush1.msra.mxu0 %v1992
        %2005 = vmatprep.subr.mxu0 0.0
        %2006 = vmatpush1.msra.mxu0 %v1993
        %2007 = vmatprep.subr.mxu0 0.0
        %2008 = vmatpush1.msra.mxu0 %v1994
        %2009 = vmatprep.subr.mxu0 0.0
        %2010 = vmatpush1.msra.mxu0 0.0
        %2011 = vmatprep.subr.mxu0 0.0
        %2012 = vmatpush1.msra.mxu0 0.0
        %2013 = vmatprep.subr.mxu0 0.0
        %2014 = vmatpush1.msra.mxu0 0.0
        %2015 = vmatprep.subr.mxu0 0.0
        %2016 = vmatpush1.msra.mxu0 0.0
        %2017 = vmatprep.subr.mxu0 0.0
        %2018 = vmatpush1.msra.mxu0 0.0
        %2019 = vmatprep.subr.mxu0 0.0
        %2020 = vmatpush1.msra.mxu0 0.0
        %2021 = vmatprep.subr.mxu0 0.0
        %2022 = vmatpush1.msra.mxu0 0.0
        %2023 = vmatprep.subr.mxu0 0.0
        %2024 = vmatpush1.msra.mxu0 0.0
        %2025 = vmatprep.subr.mxu0 0.0
        %2026 = vmatpush1.msra.mxu0 0.0
        %2027 = vmatprep.subr.mxu0 0.0
        %2028 = vmatpush1.msra.mxu0 0.0
        %2029 = vmatprep.subr.mxu0 0.0
        %2030 = vmatpush1.msra.mxu0 0.0
        %2031 = vmatprep.subr.mxu0 0.0
        %2032 = vmatpush1.msra.mxu0 0.0
        %2033 = vmatprep.subr.mxu0 0.0
        %2034 = vmatpush1.msra.mxu0 0.0
        %2035 = vmatprep.subr.mxu0 0.0
        %2036 = vmatpush1.msra.mxu0 0.0
        %2037 = vmatprep.subr.mxu0 0.0
        %2038 = vmatpush1.msra.mxu0 0.0
        %2039 = vmatprep.subr.mxu0 0.0
        %2040 = vmatpush1.msra.mxu0 0.0
        %2041 = vmatprep.subr.mxu0 0.0
        %2042 = vmatpush1.msra.mxu0 0.0
        %2043 = vmatprep.subr.mxu0 0.0
        %2044 = vmatpush1.msra.mxu0 0.0
        %2045 = vmatprep.subr.mxu0 0.0
        %2046 = vmatpush1.msra.mxu0 0.0
        %2047 = vmatprep.subr.mxu0 0.0
        %2048 = vmatpush1.msra.mxu0 0.0
        %2049 = vmatprep.subr.mxu0 0.0
        %2050 = vmatpush1.msra.mxu0 0.0
        %2051 = vmatprep.subr.mxu0 0.0
        %2052 = vmatpush1.msra.mxu0 0.0
        %2053 = vmatprep.subr.mxu0 0.0
        %2054 = vmatpush1.msra.mxu0 0.0
        %2055 = vmatprep.subr.mxu0 0.0
        %2056 = vmatpush1.msra.mxu0 0.0
        %2057 = vmatprep.subr.mxu0 0.0
        %2058 = vmatpush1.msra.mxu0 0.0
        %2059 = vmatprep.subr.mxu0 0.0
        %2060 = vmatpush1.msra.mxu0 0.0
        %2061 = vmatprep.subr.mxu0 0.0
        %2062 = vmatpush1.msra.mxu0 0.0
        %2063 = vmatprep.subr.mxu0 0.0
        %2064 = vmatpush1.msra.mxu0 0.0
        %2065 = vmatprep.mubr.f32.mxu0 0.0
        %2066 = vmatmul.mubr.f32.gmra.mrb[0].mxu0 %v1996
        %v2067 = vpop.f32.mrb[0].mxu0
        %v2068 = vadd.f32 0.0, %v2067
        %v2069 = vpop.f32.mrb[0].mxu0
        %2070 = vmatprep.mubr.f32.mxu0 0.0
        %2071 = vmatmul.mubr.f32.gmra.mrb[0].mxu0 %v1999
        %v2072 = vpop.f32.mrb[0].mxu0
        %v2073 = vadd.f32 0.0, %v2072
        %v2074 = vpop.f32.mrb[0].mxu0
        %2075 = vdwg.mxu0
        %v2077 = vsel %vm716, %v1899, 0
        %v2080 = vsel %vm716, %v1904, 0
        %2082 = vmatprep.subr.mxu0 0.0
        %2083 = vmatpush1.msra.mxu0 %v1987
        %2084 = vmatprep.subr.mxu0 0.0
        %2085 = vmatpush1.msra.mxu0 %v1988
        %2086 = vmatprep.subr.mxu0 0.0
        %2087 = vmatpush1.msra.mxu0 %v1989
        %2088 = vmatprep.subr.mxu0 0.0
        %2089 = vmatpush1.msra.mxu0 %v1990
        %2090 = vmatprep.subr.mxu0 0.0
        %2091 = vmatpush1.msra.mxu0 0.0
        %2092 = vmatprep.subr.mxu0 0.0
        %2093 = vmatpush1.msra.mxu0 0.0
        %2094 = vmatprep.subr.mxu0 0.0
        %2095 = vmatpush1.msra.mxu0 0.0
        %2096 = vmatprep.subr.mxu0 0.0
        %2097 = vmatpush1.msra.mxu0 0.0
        %2098 = vmatprep.subr.mxu0 0.0
        %2099 = vmatpush1.msra.mxu0 0.0
        %2100 = vmatprep.subr.mxu0 0.0
        %2101 = vmatpush1.msra.mxu0 0.0
        %2102 = vmatprep.subr.mxu0 0.0
        %2103 = vmatpush1.msra.mxu0 0.0
        %2104 = vmatprep.subr.mxu0 0.0
        %2105 = vmatpush1.msra.mxu0 0.0
        %2106 = vmatprep.subr.mxu0 0.0
        %2107 = vmatpush1.msra.mxu0 0.0
        %2108 = vmatprep.subr.mxu0 0.0
        %2109 = vmatpush1.msra.mxu0 0.0
        %2110 = vmatprep.subr.mxu0 0.0
        %2111 = vmatpush1.msra.mxu0 0.0
        %2112 = vmatprep.subr.mxu0 0.0
        %2113 = vmatpush1.msra.mxu0 0.0
        %2114 = vmatprep.subr.mxu0 0.0
        %2115 = vmatpush1.msra.mxu0 0.0
        %2116 = vmatprep.subr.mxu0 0.0
        %2117 = vmatpush1.msra.mxu0 0.0
        %2118 = vmatprep.subr.mxu0 0.0
        %2119 = vmatpush1.msra.mxu0 0.0
        %2120 = vmatprep.subr.mxu0 0.0
        %2121 = vmatpush1.msra.mxu0 0.0
        %2122 = vmatprep.subr.mxu0 0.0
        %2123 = vmatpush1.msra.mxu0 0.0
        %2124 = vmatprep.subr.mxu0 0.0
        %2125 = vmatpush1.msra.mxu0 0.0
        %2126 = vmatprep.subr.mxu0 0.0
        %2127 = vmatpush1.msra.mxu0 0.0
        %2128 = vmatprep.subr.mxu0 0.0
        %2129 = vmatpush1.msra.mxu0 0.0
        %2130 = vmatprep.subr.mxu0 0.0
        %2131 = vmatpush1.msra.mxu0 0.0
        %2132 = vmatprep.subr.mxu0 0.0
        %2133 = vmatpush1.msra.mxu0 0.0
        %2134 = vmatprep.subr.mxu0 0.0
        %2135 = vmatpush1.msra.mxu0 0.0
        %2136 = vmatprep.subr.mxu0 0.0
        %2137 = vmatpush1.msra.mxu0 0.0
        %2138 = vmatprep.subr.mxu0 0.0
        %2139 = vmatpush1.msra.mxu0 0.0
        %2140 = vmatprep.subr.mxu0 0.0
        %2141 = vmatpush1.msra.mxu0 0.0
        %2142 = vmatprep.subr.mxu0 0.0
        %2143 = vmatpush1.msra.mxu0 0.0
        %2144 = vmatprep.subr.mxu0 0.0
        %2145 = vmatpush1.msra.mxu0 0.0
        %2146 = vmatprep.mubr.f32.mxu0 0.0
        %2147 = vmatmul.mubr.f32.gmra.mrb[0].mxu0 %v2077
        %v2148 = vpop.f32.mrb[0].mxu0
        %v2149 = vadd.f32 %v2068, %v2148
        %v2150 = vpop.f32.mrb[0].mxu0
        %2151 = vmatprep.mubr.f32.mxu0 0.0
        %2152 = vmatmul.mubr.f32.gmra.mrb[0].mxu0 %v2080
        %v2153 = vpop.f32.mrb[0].mxu0
        %v2154 = vadd.f32 %v2073, %v2153
        %v2155 = vpop.f32.mrb[0].mxu0
        %2156 = vdwg.mxu0
        %v2157 = vld [vmem:[#allocation2 + $0x68] sm:$0xff]
        %v2158 = vld [vmem:[#allocation2 + $0x70] sm:$0xff]
        %v2159 = vld [vmem:[#allocation2 + $0x78] sm:$0xff]
        %v2160 = vld [vmem:[#allocation2 + $0x80] sm:$0xff]
        %v2162 = vsel %vm716, %v1919, 0
        %v2165 = vsel %vm716, %v1924, 0
        %2167 = vmatprep.subr.mxu0 0.0
        %2168 = vmatpush1.msra.mxu0 %v2157
        %2169 = vmatprep.subr.mxu0 0.0
        %2170 = vmatpush1.msra.mxu0 %v2158
        %2171 = vmatprep.subr.mxu0 0.0
        %2172 = vmatpush1.msra.mxu0 %v2159
        %2173 = vmatprep.subr.mxu0 0.0
        %2174 = vmatpush1.msra.mxu0 %v2160
        %2175 = vmatprep.subr.mxu0 0.0
        %2176 = vmatpush1.msra.mxu0 0.0
        %2177 = vmatprep.subr.mxu0 0.0
        %2178 = vmatpush1.msra.mxu0 0.0
        %2179 = vmatprep.subr.mxu0 0.0
        %2180 = vmatpush1.msra.mxu0 0.0
        %2181 = vmatprep.subr.mxu0 0.0
        %2182 = vmatpush1.msra.mxu0 0.0
        %2183 = vmatprep.subr.mxu0 0.0
        %2184 = vmatpush1.msra.mxu0 0.0
        %2185 = vmatprep.subr.mxu0 0.0
        %2186 = vmatpush1.msra.mxu0 0.0
        %2187 = vmatprep.subr.mxu0 0.0
        %2188 = vmatpush1.msra.mxu0 0.0
        %2189 = vmatprep.subr.mxu0 0.0
        %2190 = vmatpush1.msra.mxu0 0.0
        %2191 = vmatprep.subr.mxu0 0.0
        %2192 = vmatpush1.msra.mxu0 0.0
        %2193 = vmatprep.subr.mxu0 0.0
        %2194 = vmatpush1.msra.mxu0 0.0
        %2195 = vmatprep.subr.mxu0 0.0
        %2196 = vmatpush1.msra.mxu0 0.0
        %2197 = vmatprep.subr.mxu0 0.0
        %2198 = vmatpush1.msra.mxu0 0.0
        %2199 = vmatprep.subr.mxu0 0.0
        %2200 = vmatpush1.msra.mxu0 0.0
        %2201 = vmatprep.subr.mxu0 0.0
        %2202 = vmatpush1.msra.mxu0 0.0
        %2203 = vmatprep.subr.mxu0 0.0
        %2204 = vmatpush1.msra.mxu0 0.0
        %2205 = vmatprep.subr.mxu0 0.0
        %2206 = vmatpush1.msra.mxu0 0.0
        %2207 = vmatprep.subr.mxu0 0.0
        %2208 = vmatpush1.msra.mxu0 0.0
        %2209 = vmatprep.subr.mxu0 0.0
        %2210 = vmatpush1.msra.mxu0 0.0
        %2211 = vmatprep.subr.mxu0 0.0
        %2212 = vmatpush1.msra.mxu0 0.0
        %2213 = vmatprep.subr.mxu0 0.0
        %2214 = vmatpush1.msra.mxu0 0.0
        %2215 = vmatprep.subr.mxu0 0.0
        %2216 = vmatpush1.msra.mxu0 0.0
        %2217 = vmatprep.subr.mxu0 0.0
        %2218 = vmatpush1.msra.mxu0 0.0
        %2219 = vmatprep.subr.mxu0 0.0
        %2220 = vmatpush1.msra.mxu0 0.0
        %2221 = vmatprep.subr.mxu0 0.0
        %2222 = vmatpush1.msra.mxu0 0.0
        %2223 = vmatprep.subr.mxu0 0.0
        %2224 = vmatpush1.msra.mxu0 0.0
        %2225 = vmatprep.subr.mxu0 0.0
        %2226 = vmatpush1.msra.mxu0 0.0
        %2227 = vmatprep.subr.mxu0 0.0
        %2228 = vmatpush1.msra.mxu0 0.0
        %2229 = vmatprep.subr.mxu0 0.0
        %2230 = vmatpush1.msra.mxu0 0.0
        %2231 = vmatprep.mubr.f32.mxu0 0.0
        %2232 = vmatmul.mubr.f32.gmra.mrb[0].mxu0 %v2162
        %v2233 = vpop.f32.mrb[0].mxu0
        %v2234 = vadd.f32 0.0, %v2233
        %v2235 = vpop.f32.mrb[0].mxu0
        %2236 = vmatprep.mubr.f32.mxu0 0.0
        %2237 = vmatmul.mubr.f32.gmra.mrb[0].mxu0 %v2165
        %v2238 = vpop.f32.mrb[0].mxu0
        %v2239 = vadd.f32 0.0, %v2238
        %v2240 = vpop.f32.mrb[0].mxu0
        %2241 = vdwg.mxu0
        %v2242 = vadd.f32 %v2149, %v2234
        %v2243 = vadd.f32 %v2154, %v2239
        %v2244 = vld [vmem:[#allocation2 + $0x9c] sm:$0xff]
        %v2245 = vld [vmem:[#allocation2 + $0xa4] sm:$0xff]
        %v2246 = vld [vmem:[#allocation2 + $0xac] sm:$0xff]
        %v2247 = vld [vmem:[#allocation2 + $0xb4] sm:$0xff]
        %v2249 = vsel %vm716, %v1929, 0
        %v2252 = vsel %vm716, %v1934, 0
        %2254 = vmatprep.subr.mxu0 0.0
        %2255 = vmatpush1.msra.mxu0 %v2244
        %2256 = vmatprep.subr.mxu0 0.0
        %2257 = vmatpush1.msra.mxu0 %v2245
        %2258 = vmatprep.subr.mxu0 0.0
        %2259 = vmatpush1.msra.mxu0 %v2246
        %2260 = vmatprep.subr.mxu0 0.0
        %2261 = vmatpush1.msra.mxu0 %v2247
        %2262 = vmatprep.subr.mxu0 0.0
        %2263 = vmatpush1.msra.mxu0 0.0
        %2264 = vmatprep.subr.mxu0 0.0
        %2265 = vmatpush1.msra.mxu0 0.0
        %2266 = vmatprep.subr.mxu0 0.0
        %2267 = vmatpush1.msra.mxu0 0.0
        %2268 = vmatprep.subr.mxu0 0.0
        %2269 = vmatpush1.msra.mxu0 0.0
        %2270 = vmatprep.subr.mxu0 0.0
        %2271 = vmatpush1.msra.mxu0 0.0
        %2272 = vmatprep.subr.mxu0 0.0
        %2273 = vmatpush1.msra.mxu0 0.0
        %2274 = vmatprep.subr.mxu0 0.0
        %2275 = vmatpush1.msra.mxu0 0.0
        %2276 = vmatprep.subr.mxu0 0.0
        %2277 = vmatpush1.msra.mxu0 0.0
        %2278 = vmatprep.subr.mxu0 0.0
        %2279 = vmatpush1.msra.mxu0 0.0
        %2280 = vmatprep.subr.mxu0 0.0
        %2281 = vmatpush1.msra.mxu0 0.0
        %2282 = vmatprep.subr.mxu0 0.0
        %2283 = vmatpush1.msra.mxu0 0.0
        %2284 = vmatprep.subr.mxu0 0.0
        %2285 = vmatpush1.msra.mxu0 0.0
        %2286 = vmatprep.subr.mxu0 0.0
        %2287 = vmatpush1.msra.mxu0 0.0
        %2288 = vmatprep.subr.mxu0 0.0
        %2289 = vmatpush1.msra.mxu0 0.0
        %2290 = vmatprep.subr.mxu0 0.0
        %2291 = vmatpush1.msra.mxu0 0.0
        %2292 = vmatprep.subr.mxu0 0.0
        %2293 = vmatpush1.msra.mxu0 0.0
        %2294 = vmatprep.subr.mxu0 0.0
        %2295 = vmatpush1.msra.mxu0 0.0
        %2296 = vmatprep.subr.mxu0 0.0
        %2297 = vmatpush1.msra.mxu0 0.0
        %2298 = vmatprep.subr.mxu0 0.0
        %2299 = vmatpush1.msra.mxu0 0.0
        %2300 = vmatprep.subr.mxu0 0.0
        %2301 = vmatpush1.msra.mxu0 0.0
        %2302 = vmatprep.subr.mxu0 0.0
        %2303 = vmatpush1.msra.mxu0 0.0
        %2304 = vmatprep.subr.mxu0 0.0
        %2305 = vmatpush1.msra.mxu0 0.0
        %2306 = vmatprep.subr.mxu0 0.0
        %2307 = vmatpush1.msra.mxu0 0.0
        %2308 = vmatprep.subr.mxu0 0.0
        %2309 = vmatpush1.msra.mxu0 0.0
        %2310 = vmatprep.subr.mxu0 0.0
        %2311 = vmatpush1.msra.mxu0 0.0
        %2312 = vmatprep.subr.mxu0 0.0
        %2313 = vmatpush1.msra.mxu0 0.0
        %2314 = vmatprep.subr.mxu0 0.0
        %2315 = vmatpush1.msra.mxu0 0.0
        %2316 = vmatprep.subr.mxu0 0.0
        %2317 = vmatpush1.msra.mxu0 0.0
        %2318 = vmatprep.mubr.f32.mxu0 0.0
        %2319 = vmatmul.mubr.f32.gmra.mrb[0].mxu0 %v2249
        %v2320 = vpop.f32.mrb[0].mxu0
        %v2321 = vadd.f32 0.0, %v2320
        %v2322 = vpop.f32.mrb[0].mxu0
        %2323 = vmatprep.mubr.f32.mxu0 0.0
        %2324 = vmatmul.mubr.f32.gmra.mrb[0].mxu0 %v2252
        %v2325 = vpop.f32.mrb[0].mxu0
        %v2326 = vadd.f32 0.0, %v2325
        %v2327 = vpop.f32.mrb[0].mxu0
        %2328 = vdwg.mxu0
        %v2329 = vadd.f32 %v2242, %v2321
        %v2330 = vadd.f32 %v2243, %v2326
        %v2331 = vld [vmem:[#allocation2 + $0xd0] sm:$0xff]
        %v2332 = vld [vmem:[#allocation2 + $0xd8] sm:$0xff]
        %v2333 = vld [vmem:[#allocation2 + $0xe0] sm:$0xff]
        %v2334 = vld [vmem:[#allocation2 + $0xe8] sm:$0xff]
        %v2336 = vsel %vm716, %v1939, 0
        %v2339 = vsel %vm716, %v1944, 0
        %2341 = vmatprep.subr.mxu0 0.0
        %2342 = vmatpush1.msra.mxu0 %v2331
        %2343 = vmatprep.subr.mxu0 0.0
        %2344 = vmatpush1.msra.mxu0 %v2332
        %2345 = vmatprep.subr.mxu0 0.0
        %2346 = vmatpush1.msra.mxu0 %v2333
        %2347 = vmatprep.subr.mxu0 0.0
        %2348 = vmatpush1.msra.mxu0 %v2334
        %2349 = vmatprep.subr.mxu0 0.0
        %2350 = vmatpush1.msra.mxu0 0.0
        %2351 = vmatprep.subr.mxu0 0.0
        %2352 = vmatpush1.msra.mxu0 0.0
        %2353 = vmatprep.subr.mxu0 0.0
        %2354 = vmatpush1.msra.mxu0 0.0
        %2355 = vmatprep.subr.mxu0 0.0
        %2356 = vmatpush1.msra.mxu0 0.0
        %2357 = vmatprep.subr.mxu0 0.0
        %2358 = vmatpush1.msra.mxu0 0.0
        %2359 = vmatprep.subr.mxu0 0.0
        %2360 = vmatpush1.msra.mxu0 0.0
        %2361 = vmatprep.subr.mxu0 0.0
        %2362 = vmatpush1.msra.mxu0 0.0
        %2363 = vmatprep.subr.mxu0 0.0
        %2364 = vmatpush1.msra.mxu0 0.0
        %2365 = vmatprep.subr.mxu0 0.0
        %2366 = vmatpush1.msra.mxu0 0.0
        %2367 = vmatprep.subr.mxu0 0.0
        %2368 = vmatpush1.msra.mxu0 0.0
        %2369 = vmatprep.subr.mxu0 0.0
        %2370 = vmatpush1.msra.mxu0 0.0
        %2371 = vmatprep.subr.mxu0 0.0
        %2372 = vmatpush1.msra.mxu0 0.0
        %2373 = vmatprep.subr.mxu0 0.0
        %2374 = vmatpush1.msra.mxu0 0.0
        %2375 = vmatprep.subr.mxu0 0.0
        %2376 = vmatpush1.msra.mxu0 0.0
        %2377 = vmatprep.subr.mxu0 0.0
        %2378 = vmatpush1.msra.mxu0 0.0
        %2379 = vmatprep.subr.mxu0 0.0
        %2380 = vmatpush1.msra.mxu0 0.0
        %2381 = vmatprep.subr.mxu0 0.0
        %2382 = vmatpush1.msra.mxu0 0.0
        %2383 = vmatprep.subr.mxu0 0.0
        %2384 = vmatpush1.msra.mxu0 0.0
        %2385 = vmatprep.subr.mxu0 0.0
        %2386 = vmatpush1.msra.mxu0 0.0
        %2387 = vmatprep.subr.mxu0 0.0
        %2388 = vmatpush1.msra.mxu0 0.0
        %2389 = vmatprep.subr.mxu0 0.0
        %2390 = vmatpush1.msra.mxu0 0.0
        %2391 = vmatprep.subr.mxu0 0.0
        %2392 = vmatpush1.msra.mxu0 0.0
        %2393 = vmatprep.subr.mxu0 0.0
        %2394 = vmatpush1.msra.mxu0 0.0
        %2395 = vmatprep.subr.mxu0 0.0
        %2396 = vmatpush1.msra.mxu0 0.0
        %2397 = vmatprep.subr.mxu0 0.0
        %2398 = vmatpush1.msra.mxu0 0.0
        %2399 = vmatprep.subr.mxu0 0.0
        %2400 = vmatpush1.msra.mxu0 0.0
        %2401 = vmatprep.subr.mxu0 0.0
        %2402 = vmatpush1.msra.mxu0 0.0
        %2403 = vmatprep.subr.mxu0 0.0
        %2404 = vmatpush1.msra.mxu0 0.0
        %2405 = vmatprep.mubr.f32.mxu0 0.0
        %2406 = vmatmul.mubr.f32.gmra.mrb[0].mxu0 %v2336
        %v2407 = vpop.f32.mrb[0].mxu0
        %v2408 = vadd.f32 0.0, %v2407
        %v2409 = vpop.f32.mrb[0].mxu0
        %2410 = vmatprep.mubr.f32.mxu0 0.0
        %2411 = vmatmul.mubr.f32.gmra.mrb[0].mxu0 %v2339
        %v2412 = vpop.f32.mrb[0].mxu0
        %v2413 = vadd.f32 0.0, %v2412
        %v2414 = vpop.f32.mrb[0].mxu0
        %2415 = vdwg.mxu0
        %v2416 = vadd.f32 %v2329, %v2408
        %v2417 = vadd.f32 %v2330, %v2413
        %v2418 = vld [vmem:[#allocation2 + $0x104] sm:$0xff]
        %v2419 = vld [vmem:[#allocation2 + $0x10c] sm:$0xff]
        %v2420 = vld [vmem:[#allocation2 + $0x114] sm:$0xff]
        %v2421 = vld [vmem:[#allocation2 + $0x11c] sm:$0xff]
        %v2423 = vsel %vm716, %v1949, 0
        %v2426 = vsel %vm716, %v1954, 0
        %2428 = vmatprep.subr.mxu0 0.0
        %2429 = vmatpush1.msra.mxu0 %v2418
        %2430 = vmatprep.subr.mxu0 0.0
        %2431 = vmatpush1.msra.mxu0 %v2419
        %2432 = vmatprep.subr.mxu0 0.0
        %2433 = vmatpush1.msra.mxu0 %v2420
        %2434 = vmatprep.subr.mxu0 0.0
        %2435 = vmatpush1.msra.mxu0 %v2421
        %2436 = vmatprep.subr.mxu0 0.0
        %2437 = vmatpush1.msra.mxu0 0.0
        %2438 = vmatprep.subr.mxu0 0.0
        %2439 = vmatpush1.msra.mxu0 0.0
        %2440 = vmatprep.subr.mxu0 0.0
        %2441 = vmatpush1.msra.mxu0 0.0
        %2442 = vmatprep.subr.mxu0 0.0
        %2443 = vmatpush1.msra.mxu0 0.0
        %2444 = vmatprep.subr.mxu0 0.0
        %2445 = vmatpush1.msra.mxu0 0.0
        %2446 = vmatprep.subr.mxu0 0.0
        %2447 = vmatpush1.msra.mxu0 0.0
        %2448 = vmatprep.subr.mxu0 0.0
        %2449 = vmatpush1.msra.mxu0 0.0
        %2450 = vmatprep.subr.mxu0 0.0
        %2451 = vmatpush1.msra.mxu0 0.0
        %2452 = vmatprep.subr.mxu0 0.0
        %2453 = vmatpush1.msra.mxu0 0.0
        %2454 = vmatprep.subr.mxu0 0.0
        %2455 = vmatpush1.msra.mxu0 0.0
        %2456 = vmatprep.subr.mxu0 0.0
        %2457 = vmatpush1.msra.mxu0 0.0
        %2458 = vmatprep.subr.mxu0 0.0
        %2459 = vmatpush1.msra.mxu0 0.0
        %2460 = vmatprep.subr.mxu0 0.0
        %2461 = vmatpush1.msra.mxu0 0.0
        %2462 = vmatprep.subr.mxu0 0.0
        %2463 = vmatpush1.msra.mxu0 0.0
        %2464 = vmatprep.subr.mxu0 0.0
        %2465 = vmatpush1.msra.mxu0 0.0
        %2466 = vmatprep.subr.mxu0 0.0
        %2467 = vmatpush1.msra.mxu0 0.0
        %2468 = vmatprep.subr.mxu0 0.0
        %2469 = vmatpush1.msra.mxu0 0.0
        %2470 = vmatprep.subr.mxu0 0.0
        %2471 = vmatpush1.msra.mxu0 0.0
        %2472 = vmatprep.subr.mxu0 0.0
        %2473 = vmatpush1.msra.mxu0 0.0
        %2474 = vmatprep.subr.mxu0 0.0
        %2475 = vmatpush1.msra.mxu0 0.0
        %2476 = vmatprep.subr.mxu0 0.0
        %2477 = vmatpush1.msra.mxu0 0.0
        %2478 = vmatprep.subr.mxu0 0.0
        %2479 = vmatpush1.msra.mxu0 0.0
        %2480 = vmatprep.subr.mxu0 0.0
        %2481 = vmatpush1.msra.mxu0 0.0
        %2482 = vmatprep.subr.mxu0 0.0
        %2483 = vmatpush1.msra.mxu0 0.0
        %2484 = vmatprep.subr.mxu0 0.0
        %2485 = vmatpush1.msra.mxu0 0.0
        %2486 = vmatprep.subr.mxu0 0.0
        %2487 = vmatpush1.msra.mxu0 0.0
        %2488 = vmatprep.subr.mxu0 0.0
        %2489 = vmatpush1.msra.mxu0 0.0
        %2490 = vmatprep.subr.mxu0 0.0
        %2491 = vmatpush1.msra.mxu0 0.0
        %2492 = vmatprep.mubr.f32.mxu0 0.0
        %2493 = vmatmul.mubr.f32.gmra.mrb[0].mxu0 %v2423
        %v2494 = vpop.f32.mrb[0].mxu0
        %v2495 = vadd.f32 0.0, %v2494
        %v2496 = vpop.f32.mrb[0].mxu0
        %2497 = vmatprep.mubr.f32.mxu0 0.0
        %2498 = vmatmul.mubr.f32.gmra.mrb[0].mxu0 %v2426
        %v2499 = vpop.f32.mrb[0].mxu0
        %v2500 = vadd.f32 0.0, %v2499
        %v2501 = vpop.f32.mrb[0].mxu0
        %2502 = vdwg.mxu0
        %v2503 = vadd.f32 %v2416, %v2495
        %v2504 = vadd.f32 %v2417, %v2500
        %v2505 = vld [vmem:[#allocation2 + $0x138] sm:$0xff]
        %v2506 = vld [vmem:[#allocation2 + $0x140] sm:$0xff]
        %v2507 = vld [vmem:[#allocation2 + $0x148] sm:$0xff]
        %v2508 = vld [vmem:[#allocation2 + $0x150] sm:$0xff]
        %v2510 = vsel %vm716, %v1959, 0
        %v2513 = vsel %vm716, %v1964, 0
        %2515 = vmatprep.subr.mxu0 0.0
        %2516 = vmatpush1.msra.mxu0 %v2505
        %2517 = vmatprep.subr.mxu0 0.0
        %2518 = vmatpush1.msra.mxu0 %v2506
        %2519 = vmatprep.subr.mxu0 0.0
        %2520 = vmatpush1.msra.mxu0 %v2507
        %2521 = vmatprep.subr.mxu0 0.0
        %2522 = vmatpush1.msra.mxu0 %v2508
        %2523 = vmatprep.subr.mxu0 0.0
        %2524 = vmatpush1.msra.mxu0 0.0
        %2525 = vmatprep.subr.mxu0 0.0
        %2526 = vmatpush1.msra.mxu0 0.0
        %2527 = vmatprep.subr.mxu0 0.0
        %2528 = vmatpush1.msra.mxu0 0.0
        %2529 = vmatprep.subr.mxu0 0.0
        %2530 = vmatpush1.msra.mxu0 0.0
        %2531 = vmatprep.subr.mxu0 0.0
        %2532 = vmatpush1.msra.mxu0 0.0
        %2533 = vmatprep.subr.mxu0 0.0
        %2534 = vmatpush1.msra.mxu0 0.0
        %2535 = vmatprep.subr.mxu0 0.0
        %2536 = vmatpush1.msra.mxu0 0.0
        %2537 = vmatprep.subr.mxu0 0.0
        %2538 = vmatpush1.msra.mxu0 0.0
        %2539 = vmatprep.subr.mxu0 0.0
        %2540 = vmatpush1.msra.mxu0 0.0
        %2541 = vmatprep.subr.mxu0 0.0
        %2542 = vmatpush1.msra.mxu0 0.0
        %2543 = vmatprep.subr.mxu0 0.0
        %2544 = vmatpush1.msra.mxu0 0.0
        %2545 = vmatprep.subr.mxu0 0.0
        %2546 = vmatpush1.msra.mxu0 0.0
        %2547 = vmatprep.subr.mxu0 0.0
        %2548 = vmatpush1.msra.mxu0 0.0
        %2549 = vmatprep.subr.mxu0 0.0
        %2550 = vmatpush1.msra.mxu0 0.0
        %2551 = vmatprep.subr.mxu0 0.0
        %2552 = vmatpush1.msra.mxu0 0.0
        %2553 = vmatprep.subr.mxu0 0.0
        %2554 = vmatpush1.msra.mxu0 0.0
        %2555 = vmatprep.subr.mxu0 0.0
        %2556 = vmatpush1.msra.mxu0 0.0
        %2557 = vmatprep.subr.mxu0 0.0
        %2558 = vmatpush1.msra.mxu0 0.0
        %2559 = vmatprep.subr.mxu0 0.0
        %2560 = vmatpush1.msra.mxu0 0.0
        %2561 = vmatprep.subr.mxu0 0.0
        %2562 = vmatpush1.msra.mxu0 0.0
        %2563 = vmatprep.subr.mxu0 0.0
        %2564 = vmatpush1.msra.mxu0 0.0
        %2565 = vmatprep.subr.mxu0 0.0
        %2566 = vmatpush1.msra.mxu0 0.0
        %2567 = vmatprep.subr.mxu0 0.0
        %2568 = vmatpush1.msra.mxu0 0.0
        %2569 = vmatprep.subr.mxu0 0.0
        %2570 = vmatpush1.msra.mxu0 0.0
        %2571 = vmatprep.subr.mxu0 0.0
        %2572 = vmatpush1.msra.mxu0 0.0
        %2573 = vmatprep.subr.mxu0 0.0
        %2574 = vmatpush1.msra.mxu0 0.0
        %2575 = vmatprep.subr.mxu0 0.0
        %2576 = vmatpush1.msra.mxu0 0.0
        %2577 = vmatprep.subr.mxu0 0.0
        %2578 = vmatpush1.msra.mxu0 0.0
        %2579 = vmatprep.mubr.f32.mxu0 0.0
        %2580 = vmatmul.mubr.f32.gmra.mrb[0].mxu0 %v2510
        %v2581 = vpop.f32.mrb[0].mxu0
        %v2582 = vadd.f32 0.0, %v2581
        %v2583 = vpop.f32.mrb[0].mxu0
        %2584 = vmatprep.mubr.f32.mxu0 0.0
        %2585 = vmatmul.mubr.f32.gmra.mrb[0].mxu0 %v2513
        %v2586 = vpop.f32.mrb[0].mxu0
        %v2587 = vadd.f32 0.0, %v2586
        %v2588 = vpop.f32.mrb[0].mxu0
        %2589 = vdwg.mxu0
        %v2590 = vadd.f32 %v2503, %v2582
        %v2591 = vadd.f32 %v2504, %v2587
        %v2592 = vld [vmem:[#allocation2 + $0x16c] sm:$0xff]
        %v2593 = vld [vmem:[#allocation2 + $0x174] sm:$0xff]
        %v2594 = vld [vmem:[#allocation2 + $0x17c] sm:$0xff]
        %v2595 = vld [vmem:[#allocation2 + $0x184] sm:$0xff]
        %v2597 = vsel %vm716, %v1969, 0
        %v2600 = vsel %vm716, %v1974, 0
        %2602 = vmatprep.subr.mxu0 0.0
        %2603 = vmatpush1.msra.mxu0 %v2592
        %2604 = vmatprep.subr.mxu0 0.0
        %2605 = vmatpush1.msra.mxu0 %v2593
        %2606 = vmatprep.subr.mxu0 0.0
        %2607 = vmatpush1.msra.mxu0 %v2594
        %2608 = vmatprep.subr.mxu0 0.0
        %2609 = vmatpush1.msra.mxu0 %v2595
        %2610 = vmatprep.subr.mxu0 0.0
        %2611 = vmatpush1.msra.mxu0 0.0
        %2612 = vmatprep.subr.mxu0 0.0
        %2613 = vmatpush1.msra.mxu0 0.0
        %2614 = vmatprep.subr.mxu0 0.0
        %2615 = vmatpush1.msra.mxu0 0.0
        %2616 = vmatprep.subr.mxu0 0.0
        %2617 = vmatpush1.msra.mxu0 0.0
        %2618 = vmatprep.subr.mxu0 0.0
        %2619 = vmatpush1.msra.mxu0 0.0
        %2620 = vmatprep.subr.mxu0 0.0
        %2621 = vmatpush1.msra.mxu0 0.0
        %2622 = vmatprep.subr.mxu0 0.0
        %2623 = vmatpush1.msra.mxu0 0.0
        %2624 = vmatprep.subr.mxu0 0.0
        %2625 = vmatpush1.msra.mxu0 0.0
        %2626 = vmatprep.subr.mxu0 0.0
        %2627 = vmatpush1.msra.mxu0 0.0
        %2628 = vmatprep.subr.mxu0 0.0
        %2629 = vmatpush1.msra.mxu0 0.0
        %2630 = vmatprep.subr.mxu0 0.0
        %2631 = vmatpush1.msra.mxu0 0.0
        %2632 = vmatprep.subr.mxu0 0.0
        %2633 = vmatpush1.msra.mxu0 0.0
        %2634 = vmatprep.subr.mxu0 0.0
        %2635 = vmatpush1.msra.mxu0 0.0
        %2636 = vmatprep.subr.mxu0 0.0
        %2637 = vmatpush1.msra.mxu0 0.0
        %2638 = vmatprep.subr.mxu0 0.0
        %2639 = vmatpush1.msra.mxu0 0.0
        %2640 = vmatprep.subr.mxu0 0.0
        %2641 = vmatpush1.msra.mxu0 0.0
        %2642 = vmatprep.subr.mxu0 0.0
        %2643 = vmatpush1.msra.mxu0 0.0
        %2644 = vmatprep.subr.mxu0 0.0
        %2645 = vmatpush1.msra.mxu0 0.0
        %2646 = vmatprep.subr.mxu0 0.0
        %2647 = vmatpush1.msra.mxu0 0.0
        %2648 = vmatprep.subr.mxu0 0.0
        %2649 = vmatpush1.msra.mxu0 0.0
        %2650 = vmatprep.subr.mxu0 0.0
        %2651 = vmatpush1.msra.mxu0 0.0
        %2652 = vmatprep.subr.mxu0 0.0
        %2653 = vmatpush1.msra.mxu0 0.0
        %2654 = vmatprep.subr.mxu0 0.0
        %2655 = vmatpush1.msra.mxu0 0.0
        %2656 = vmatprep.subr.mxu0 0.0
        %2657 = vmatpush1.msra.mxu0 0.0
        %2658 = vmatprep.subr.mxu0 0.0
        %2659 = vmatpush1.msra.mxu0 0.0
        %2660 = vmatprep.subr.mxu0 0.0
        %2661 = vmatpush1.msra.mxu0 0.0
        %2662 = vmatprep.subr.mxu0 0.0
        %2663 = vmatpush1.msra.mxu0 0.0
        %2664 = vmatprep.subr.mxu0 0.0
        %2665 = vmatpush1.msra.mxu0 0.0
        %2666 = vmatprep.mubr.f32.mxu0 0.0
        %2667 = vmatmul.mubr.f32.gmra.mrb[0].mxu0 %v2597
        %v2668 = vpop.f32.mrb[0].mxu0
        %v2669 = vadd.f32 0.0, %v2668
        %v2670 = vpop.f32.mrb[0].mxu0
        %2671 = vmatprep.mubr.f32.mxu0 0.0
        %2672 = vmatmul.mubr.f32.gmra.mrb[0].mxu0 %v2600
        %v2673 = vpop.f32.mrb[0].mxu0
        %v2674 = vadd.f32 0.0, %v2673
        %v2675 = vpop.f32.mrb[0].mxu0
        %2676 = vdwg.mxu0
        %v2677 = vadd.f32 %v2590, %v2669
        %v2678 = vadd.f32 %v2591, %v2674
        %v2679 = vld [vmem:[#allocation2 + $0x1a0] sm:$0xff]
        %v2680 = vld [vmem:[#allocation2 + $0x1a8] sm:$0xff]
        %v2681 = vld [vmem:[#allocation2 + $0x1b0] sm:$0xff]
        %v2682 = vld [vmem:[#allocation2 + $0x1b8] sm:$0xff]
        %v2684 = vsel %vm716, %v1979, 0
        %v2687 = vsel %vm716, %v1984, 0
        %2689 = vmatprep.subr.mxu0 0.0
        %2690 = vmatpush1.msra.mxu0 %v2679
        %2691 = vmatprep.subr.mxu0 0.0
        %2692 = vmatpush1.msra.mxu0 %v2680
        %2693 = vmatprep.subr.mxu0 0.0
        %2694 = vmatpush1.msra.mxu0 %v2681
        %2695 = vmatprep.subr.mxu0 0.0
        %2696 = vmatpush1.msra.mxu0 %v2682
        %2697 = vmatprep.subr.mxu0 0.0
        %2698 = vmatpush1.msra.mxu0 0.0
        %2699 = vmatprep.subr.mxu0 0.0
        %2700 = vmatpush1.msra.mxu0 0.0
        %2701 = vmatprep.subr.mxu0 0.0
        %2702 = vmatpush1.msra.mxu0 0.0
        %2703 = vmatprep.subr.mxu0 0.0
        %2704 = vmatpush1.msra.mxu0 0.0
        %2705 = vmatprep.subr.mxu0 0.0
        %2706 = vmatpush1.msra.mxu0 0.0
        %2707 = vmatprep.subr.mxu0 0.0
        %2708 = vmatpush1.msra.mxu0 0.0
        %2709 = vmatprep.subr.mxu0 0.0
        %2710 = vmatpush1.msra.mxu0 0.0
        %2711 = vmatprep.subr.mxu0 0.0
        %2712 = vmatpush1.msra.mxu0 0.0
        %2713 = vmatprep.subr.mxu0 0.0
        %2714 = vmatpush1.msra.mxu0 0.0
        %2715 = vmatprep.subr.mxu0 0.0
        %2716 = vmatpush1.msra.mxu0 0.0
        %2717 = vmatprep.subr.mxu0 0.0
        %2718 = vmatpush1.msra.mxu0 0.0
        %2719 = vmatprep.subr.mxu0 0.0
        %2720 = vmatpush1.msra.mxu0 0.0
        %2721 = vmatprep.subr.mxu0 0.0
        %2722 = vmatpush1.msra.mxu0 0.0
        %2723 = vmatprep.subr.mxu0 0.0
        %2724 = vmatpush1.msra.mxu0 0.0
        %2725 = vmatprep.subr.mxu0 0.0
        %2726 = vmatpush1.msra.mxu0 0.0
        %2727 = vmatprep.subr.mxu0 0.0
        %2728 = vmatpush1.msra.mxu0 0.0
        %2729 = vmatprep.subr.mxu0 0.0
        %2730 = vmatpush1.msra.mxu0 0.0
        %2731 = vmatprep.subr.mxu0 0.0
        %2732 = vmatpush1.msra.mxu0 0.0
        %2733 = vmatprep.subr.mxu0 0.0
        %2734 = vmatpush1.msra.mxu0 0.0
        %2735 = vmatprep.subr.mxu0 0.0
        %2736 = vmatpush1.msra.mxu0 0.0
        %2737 = vmatprep.subr.mxu0 0.0
        %2738 = vmatpush1.msra.mxu0 0.0
        %2739 = vmatprep.subr.mxu0 0.0
        %2740 = vmatpush1.msra.mxu0 0.0
        %2741 = vmatprep.subr.mxu0 0.0
        %2742 = vmatpush1.msra.mxu0 0.0
        %2743 = vmatprep.subr.mxu0 0.0
        %2744 = vmatpush1.msra.mxu0 0.0
        %2745 = vmatprep.subr.mxu0 0.0
        %2746 = vmatpush1.msra.mxu0 0.0
        %2747 = vmatprep.subr.mxu0 0.0
        %2748 = vmatpush1.msra.mxu0 0.0
        %2749 = vmatprep.subr.mxu0 0.0
        %2750 = vmatpush1.msra.mxu0 0.0
        %2751 = vmatprep.subr.mxu0 0.0
        %2752 = vmatpush1.msra.mxu0 0.0
        %2753 = vmatprep.mubr.f32.mxu0 0.0
        %2754 = vmatmul.mubr.f32.gmra.mrb[0].mxu0 %v2684
        %v2755 = vpop.f32.mrb[0].mxu0
        %v2756 = vadd.f32 0.0, %v2755
        %v2757 = vpop.f32.mrb[0].mxu0
        %2758 = vmatprep.mubr.f32.mxu0 0.0
        %2759 = vmatmul.mubr.f32.gmra.mrb[0].mxu0 %v2687
        %v2760 = vpop.f32.mrb[0].mxu0
        %v2761 = vadd.f32 0.0, %v2760
        %v2762 = vpop.f32.mrb[0].mxu0
        %2763 = vdwg.mxu0
        %v2764 = vadd.f32 %v2677, %v2756
        %v2765 = vadd.f32 %v2678, %v2761
        %2767 = vset.pattern.permute.xlu0 0
        %2768 = vperm.xlu0 %2767, %v352
        %v2769 = vpop.permute.xlu0 %2768
        %2772 = vset.pattern.permute.xlu0 0
        %2773 = vperm.xlu0 %2772, %v353
        %v2774 = vpop.permute.xlu0 %2773
        %v2776 = vadd.f32 %v2764, %v2769
        %v2777 = vadd.f32 %v2765, %v2774
        %v2778 = vmul.f32 %v2776, 0.33333334
        %v2779 = vmul.f32 %v2777, 0.33333334
        %v2780 = vadd.f32 %v292, %v2778
        %v2781 = vadd.f32 %v293, %v2779
        %v2782 = vld [vmem:[%s2 + $0x120] sm:$0xff]
        %v2783 = vld [vmem:[%s2 + $0x128] sm:$0xff]
        %v2784 = vld [vmem:[%s2 + $0x130] sm:$0xff]
        %v2785 = vld [vmem:[%s2 + $0x138] sm:$0xff]
        %v2786 = vld [vmem:[%s2 + $0x140] sm:$0xff]
        %v2787 = vld [vmem:[%s2 + $0x148] sm:$0xff]
        %v2788 = vld [vmem:[%s2 + $0x150] sm:$0xff]
        %v2789 = vld [vmem:[%s2 + $0x158] sm:$0xff]
        %2790 = vmatprep.subr.mxu0 0.0
        %2791 = vmatpush1.msra.mxu0 %v2786
        %2792 = vmatprep.subr.mxu0 0.0
        %2793 = vmatpush1.msra.mxu0 %v2787
        %2794 = vmatprep.subr.mxu0 0.0
        %2795 = vmatpush1.msra.mxu0 %v2788
        %2796 = vmatprep.subr.mxu0 0.0
        %2797 = vmatpush1.msra.mxu0 %v2789
        %2798 = vmatprep.subr.mxu0 0.0
        %2799 = vmatpush1.msra.mxu0 0.0
        %2800 = vmatprep.subr.mxu0 0.0
        %2801 = vmatpush1.msra.mxu0 0.0
        %2802 = vmatprep.subr.mxu0 0.0
        %2803 = vmatpush1.msra.mxu0 0.0
        %2804 = vmatprep.subr.mxu0 0.0
        %2805 = vmatpush1.msra.mxu0 0.0
        %2806 = vmatprep.subr.mxu0 0.0
        %2807 = vmatpush1.msra.mxu0 0.0
        %2808 = vmatprep.subr.mxu0 0.0
        %2809 = vmatpush1.msra.mxu0 0.0
        %2810 = vmatprep.subr.mxu0 0.0
        %2811 = vmatpush1.msra.mxu0 0.0
        %2812 = vmatprep.subr.mxu0 0.0
        %2813 = vmatpush1.msra.mxu0 0.0
        %2814 = vmatprep.subr.mxu0 0.0
        %2815 = vmatpush1.msra.mxu0 0.0
        %2816 = vmatprep.subr.mxu0 0.0
        %2817 = vmatpush1.msra.mxu0 0.0
        %2818 = vmatprep.subr.mxu0 0.0
        %2819 = vmatpush1.msra.mxu0 0.0
        %2820 = vmatprep.subr.mxu0 0.0
        %2821 = vmatpush1.msra.mxu0 0.0
        %2822 = vmatprep.subr.mxu0 0.0
        %2823 = vmatpush1.msra.mxu0 0.0
        %2824 = vmatprep.subr.mxu0 0.0
        %2825 = vmatpush1.msra.mxu0 0.0
        %2826 = vmatprep.subr.mxu0 0.0
        %2827 = vmatpush1.msra.mxu0 0.0
        %2828 = vmatprep.subr.mxu0 0.0
        %2829 = vmatpush1.msra.mxu0 0.0
        %2830 = vmatprep.subr.mxu0 0.0
        %2831 = vmatpush1.msra.mxu0 0.0
        %2832 = vmatprep.subr.mxu0 0.0
        %2833 = vmatpush1.msra.mxu0 0.0
        %2834 = vmatprep.subr.mxu0 0.0
        %2835 = vmatpush1.msra.mxu0 0.0
        %2836 = vmatprep.subr.mxu0 0.0
        %2837 = vmatpush1.msra.mxu0 0.0
        %2838 = vmatprep.subr.mxu0 0.0
        %2839 = vmatpush1.msra.mxu0 0.0
        %2840 = vmatprep.subr.mxu0 0.0
        %2841 = vmatpush1.msra.mxu0 0.0
        %2842 = vmatprep.subr.mxu0 0.0
        %2843 = vmatpush1.msra.mxu0 0.0
        %2844 = vmatprep.subr.mxu0 0.0
        %2845 = vmatpush1.msra.mxu0 0.0
        %2846 = vmatprep.subr.mxu0 0.0
        %2847 = vmatpush1.msra.mxu0 0.0
        %2848 = vmatprep.subr.mxu0 0.0
        %2849 = vmatpush1.msra.mxu0 0.0
        %2850 = vmatprep.subr.mxu0 0.0
        %2851 = vmatpush1.msra.mxu0 0.0
        %2852 = vmatprep.subr.mxu0 0.0
        %2853 = vmatpush1.msra.mxu0 0.0
        %2854 = vmatprep.mubr.f32.mxu0 0.0
        %2855 = vmatmul.mubr.f32.gmra.mrb[0].mxu0 %v718
        %v2856 = vpop.f32.mrb[0].mxu0
        %v2857 = vadd.f32 0.0, %v2856
        %v2858 = vpop.f32.mrb[0].mxu0
        %2859 = vmatprep.mubr.f32.mxu0 0.0
        %2860 = vmatmul.mubr.f32.gmra.mrb[0].mxu0 %v721
        %v2861 = vpop.f32.mrb[0].mxu0
        %v2862 = vadd.f32 0.0, %v2861
        %v2863 = vpop.f32.mrb[0].mxu0
        %2864 = vmatprep.mubr.f32.mxu0 0.0
        %2865 = vmatmul.mubr.f32.gmra.mrb[0].mxu0 %v724
        %v2866 = vpop.f32.mrb[0].mxu0
        %v2867 = vadd.f32 0.0, %v2866
        %v2868 = vpop.f32.mrb[0].mxu0
        %2869 = vmatprep.mubr.f32.mxu0 0.0
        %2870 = vmatmul.mubr.f32.gmra.mrb[0].mxu0 %v727
        %v2871 = vpop.f32.mrb[0].mxu0
        %v2872 = vadd.f32 0.0, %v2871
        %v2873 = vpop.f32.mrb[0].mxu0
        %2874 = vdwg.mxu0
        %2875 = vmatprep.subr.mxu0 0.0
        %2876 = vmatpush1.msra.mxu0 %v2782
        %2877 = vmatprep.subr.mxu0 0.0
        %2878 = vmatpush1.msra.mxu0 %v2783
        %2879 = vmatprep.subr.mxu0 0.0
        %2880 = vmatpush1.msra.mxu0 %v2784
        %2881 = vmatprep.subr.mxu0 0.0
        %2882 = vmatpush1.msra.mxu0 %v2785
        %2883 = vmatprep.subr.mxu0 0.0
        %2884 = vmatpush1.msra.mxu0 0.0
        %2885 = vmatprep.subr.mxu0 0.0
        %2886 = vmatpush1.msra.mxu0 0.0
        %2887 = vmatprep.subr.mxu0 0.0
        %2888 = vmatpush1.msra.mxu0 0.0
        %2889 = vmatprep.subr.mxu0 0.0
        %2890 = vmatpush1.msra.mxu0 0.0
        %2891 = vmatprep.subr.mxu0 0.0
        %2892 = vmatpush1.msra.mxu0 0.0
        %2893 = vmatprep.subr.mxu0 0.0
        %2894 = vmatpush1.msra.mxu0 0.0
        %2895 = vmatprep.subr.mxu0 0.0
        %2896 = vmatpush1.msra.mxu0 0.0
        %2897 = vmatprep.subr.mxu0 0.0
        %2898 = vmatpush1.msra.mxu0 0.0
        %2899 = vmatprep.subr.mxu0 0.0
        %2900 = vmatpush1.msra.mxu0 0.0
        %2901 = vmatprep.subr.mxu0 0.0
        %2902 = vmatpush1.msra.mxu0 0.0
        %2903 = vmatprep.subr.mxu0 0.0
        %2904 = vmatpush1.msra.mxu0 0.0
        %2905 = vmatprep.subr.mxu0 0.0
        %2906 = vmatpush1.msra.mxu0 0.0
        %2907 = vmatprep.subr.mxu0 0.0
        %2908 = vmatpush1.msra.mxu0 0.0
        %2909 = vmatprep.subr.mxu0 0.0
        %2910 = vmatpush1.msra.mxu0 0.0
        %2911 = vmatprep.subr.mxu0 0.0
        %2912 = vmatpush1.msra.mxu0 0.0
        %2913 = vmatprep.subr.mxu0 0.0
        %2914 = vmatpush1.msra.mxu0 0.0
        %2915 = vmatprep.subr.mxu0 0.0
        %2916 = vmatpush1.msra.mxu0 0.0
        %2917 = vmatprep.subr.mxu0 0.0
        %2918 = vmatpush1.msra.mxu0 0.0
        %2919 = vmatprep.subr.mxu0 0.0
        %2920 = vmatpush1.msra.mxu0 0.0
        %2921 = vmatprep.subr.mxu0 0.0
        %2922 = vmatpush1.msra.mxu0 0.0
        %2923 = vmatprep.subr.mxu0 0.0
        %2924 = vmatpush1.msra.mxu0 0.0
        %2925 = vmatprep.subr.mxu0 0.0
        %2926 = vmatpush1.msra.mxu0 0.0
        %2927 = vmatprep.subr.mxu0 0.0
        %2928 = vmatpush1.msra.mxu0 0.0
        %2929 = vmatprep.subr.mxu0 0.0
        %2930 = vmatpush1.msra.mxu0 0.0
        %2931 = vmatprep.subr.mxu0 0.0
        %2932 = vmatpush1.msra.mxu0 0.0
        %2933 = vmatprep.subr.mxu0 0.0
        %2934 = vmatpush1.msra.mxu0 0.0
        %2935 = vmatprep.subr.mxu0 0.0
        %2936 = vmatpush1.msra.mxu0 0.0
        %2937 = vmatprep.subr.mxu0 0.0
        %2938 = vmatpush1.msra.mxu0 0.0
        %2939 = vmatprep.mubr.f32.mxu0 0.0
        %2940 = vmatmul.mubr.f32.gmra.mrb[0].mxu0 %v815
        %v2941 = vpop.f32.mrb[0].mxu0
        %v2942 = vadd.f32 %v2857, %v2941
        %v2943 = vpop.f32.mrb[0].mxu0
        %2944 = vmatprep.mubr.f32.mxu0 0.0
        %2945 = vmatmul.mubr.f32.gmra.mrb[0].mxu0 %v818
        %v2946 = vpop.f32.mrb[0].mxu0
        %v2947 = vadd.f32 %v2862, %v2946
        %v2948 = vpop.f32.mrb[0].mxu0
        %2949 = vmatprep.mubr.f32.mxu0 0.0
        %2950 = vmatmul.mubr.f32.gmra.mrb[0].mxu0 %v821
        %v2951 = vpop.f32.mrb[0].mxu0
        %v2952 = vadd.f32 %v2867, %v2951
        %v2953 = vpop.f32.mrb[0].mxu0
        %2954 = vmatprep.mubr.f32.mxu0 0.0
        %2955 = vmatmul.mubr.f32.gmra.mrb[0].mxu0 %v824
        %v2956 = vpop.f32.mrb[0].mxu0
        %v2957 = vadd.f32 %v2872, %v2956
        %v2958 = vpop.f32.mrb[0].mxu0
        %2959 = vdwg.mxu0
        %v2960 = vld [vmem:[%s2 + $0x160] sm:$0xff]
        %v2961 = vld [vmem:[%s2 + $0x168] sm:$0xff]
        %v2962 = vld [vmem:[%s2 + $0x170] sm:$0xff]
        %v2963 = vld [vmem:[%s2 + $0x178] sm:$0xff]
        %2964 = vmatprep.subr.mxu0 0.0
        %2965 = vmatpush1.msra.mxu0 %v2960
        %2966 = vmatprep.subr.mxu0 0.0
        %2967 = vmatpush1.msra.mxu0 %v2961
        %2968 = vmatprep.subr.mxu0 0.0
        %2969 = vmatpush1.msra.mxu0 %v2962
        %2970 = vmatprep.subr.mxu0 0.0
        %2971 = vmatpush1.msra.mxu0 %v2963
        %2972 = vmatprep.subr.mxu0 0.0
        %2973 = vmatpush1.msra.mxu0 0.0
        %2974 = vmatprep.subr.mxu0 0.0
        %2975 = vmatpush1.msra.mxu0 0.0
        %2976 = vmatprep.subr.mxu0 0.0
        %2977 = vmatpush1.msra.mxu0 0.0
        %2978 = vmatprep.subr.mxu0 0.0
        %2979 = vmatpush1.msra.mxu0 0.0
        %2980 = vmatprep.subr.mxu0 0.0
        %2981 = vmatpush1.msra.mxu0 0.0
        %2982 = vmatprep.subr.mxu0 0.0
        %2983 = vmatpush1.msra.mxu0 0.0
        %2984 = vmatprep.subr.mxu0 0.0
        %2985 = vmatpush1.msra.mxu0 0.0
        %2986 = vmatprep.subr.mxu0 0.0
        %2987 = vmatpush1.msra.mxu0 0.0
        %2988 = vmatprep.subr.mxu0 0.0
        %2989 = vmatpush1.msra.mxu0 0.0
        %2990 = vmatprep.subr.mxu0 0.0
        %2991 = vmatpush1.msra.mxu0 0.0
        %2992 = vmatprep.subr.mxu0 0.0
        %2993 = vmatpush1.msra.mxu0 0.0
        %2994 = vmatprep.subr.mxu0 0.0
        %2995 = vmatpush1.msra.mxu0 0.0
        %2996 = vmatprep.subr.mxu0 0.0
        %2997 = vmatpush1.msra.mxu0 0.0
        %2998 = vmatprep.subr.mxu0 0.0
        %2999 = vmatpush1.msra.mxu0 0.0
        %3000 = vmatprep.subr.mxu0 0.0
        %3001 = vmatpush1.msra.mxu0 0.0
        %3002 = vmatprep.subr.mxu0 0.0
        %3003 = vmatpush1.msra.mxu0 0.0
        %3004 = vmatprep.subr.mxu0 0.0
        %3005 = vmatpush1.msra.mxu0 0.0
        %3006 = vmatprep.subr.mxu0 0.0
        %3007 = vmatpush1.msra.mxu0 0.0
        %3008 = vmatprep.subr.mxu0 0.0
        %3009 = vmatpush1.msra.mxu0 0.0
        %3010 = vmatprep.subr.mxu0 0.0
        %3011 = vmatpush1.msra.mxu0 0.0
        %3012 = vmatprep.subr.mxu0 0.0
        %3013 = vmatpush1.msra.mxu0 0.0
        %3014 = vmatprep.subr.mxu0 0.0
        %3015 = vmatpush1.msra.mxu0 0.0
        %3016 = vmatprep.subr.mxu0 0.0
        %3017 = vmatpush1.msra.mxu0 0.0
        %3018 = vmatprep.subr.mxu0 0.0
        %3019 = vmatpush1.msra.mxu0 0.0
        %3020 = vmatprep.subr.mxu0 0.0
        %3021 = vmatpush1.msra.mxu0 0.0
        %3022 = vmatprep.subr.mxu0 0.0
        %3023 = vmatpush1.msra.mxu0 0.0
        %3024 = vmatprep.subr.mxu0 0.0
        %3025 = vmatpush1.msra.mxu0 0.0
        %3026 = vmatprep.subr.mxu0 0.0
        %3027 = vmatpush1.msra.mxu0 0.0
        %3028 = vmatprep.mubr.f32.mxu0 0.0
        %3029 = vmatmul.mubr.f32.gmra.mrb[0].mxu0 %v916
        %v3030 = vpop.f32.mrb[0].mxu0
        %v3031 = vadd.f32 0.0, %v3030
        %v3032 = vpop.f32.mrb[0].mxu0
        %3033 = vmatprep.mubr.f32.mxu0 0.0
        %3034 = vmatmul.mubr.f32.gmra.mrb[0].mxu0 %v919
        %v3035 = vpop.f32.mrb[0].mxu0
        %v3036 = vadd.f32 0.0, %v3035
        %v3037 = vpop.f32.mrb[0].mxu0
        %3038 = vmatprep.mubr.f32.mxu0 0.0
        %3039 = vmatmul.mubr.f32.gmra.mrb[0].mxu0 %v922
        %v3040 = vpop.f32.mrb[0].mxu0
        %v3041 = vadd.f32 0.0, %v3040
        %v3042 = vpop.f32.mrb[0].mxu0
        %3043 = vmatprep.mubr.f32.mxu0 0.0
        %3044 = vmatmul.mubr.f32.gmra.mrb[0].mxu0 %v925
        %v3045 = vpop.f32.mrb[0].mxu0
        %v3046 = vadd.f32 0.0, %v3045
        %v3047 = vpop.f32.mrb[0].mxu0
        %3048 = vdwg.mxu0
        %v3049 = vadd.f32 %v2942, %v3031
        %v3050 = vadd.f32 %v2947, %v3036
        %v3051 = vadd.f32 %v2952, %v3041
        %v3052 = vadd.f32 %v2957, %v3046
        %v3053 = vld [vmem:[%s2 + $0x180] sm:$0xff]
        %v3054 = vld [vmem:[%s2 + $0x188] sm:$0xff]
        %v3055 = vld [vmem:[%s2 + $0x190] sm:$0xff]
        %v3056 = vld [vmem:[%s2 + $0x198] sm:$0xff]
        %3057 = vmatprep.subr.mxu0 0.0
        %3058 = vmatpush1.msra.mxu0 %v3053
        %3059 = vmatprep.subr.mxu0 0.0
        %3060 = vmatpush1.msra.mxu0 %v3054
        %3061 = vmatprep.subr.mxu0 0.0
        %3062 = vmatpush1.msra.mxu0 %v3055
        %3063 = vmatprep.subr.mxu0 0.0
        %3064 = vmatpush1.msra.mxu0 %v3056
        %3065 = vmatprep.subr.mxu0 0.0
        %3066 = vmatpush1.msra.mxu0 0.0
        %3067 = vmatprep.subr.mxu0 0.0
        %3068 = vmatpush1.msra.mxu0 0.0
        %3069 = vmatprep.subr.mxu0 0.0
        %3070 = vmatpush1.msra.mxu0 0.0
        %3071 = vmatprep.subr.mxu0 0.0
        %3072 = vmatpush1.msra.mxu0 0.0
        %3073 = vmatprep.subr.mxu0 0.0
        %3074 = vmatpush1.msra.mxu0 0.0
        %3075 = vmatprep.subr.mxu0 0.0
        %3076 = vmatpush1.msra.mxu0 0.0
        %3077 = vmatprep.subr.mxu0 0.0
        %3078 = vmatpush1.msra.mxu0 0.0
        %3079 = vmatprep.subr.mxu0 0.0
        %3080 = vmatpush1.msra.mxu0 0.0
        %3081 = vmatprep.subr.mxu0 0.0
        %3082 = vmatpush1.msra.mxu0 0.0
        %3083 = vmatprep.subr.mxu0 0.0
        %3084 = vmatpush1.msra.mxu0 0.0
        %3085 = vmatprep.subr.mxu0 0.0
        %3086 = vmatpush1.msra.mxu0 0.0
        %3087 = vmatprep.subr.mxu0 0.0
        %3088 = vmatpush1.msra.mxu0 0.0
        %3089 = vmatprep.subr.mxu0 0.0
        %3090 = vmatpush1.msra.mxu0 0.0
        %3091 = vmatprep.subr.mxu0 0.0
        %3092 = vmatpush1.msra.mxu0 0.0
        %3093 = vmatprep.subr.mxu0 0.0
        %3094 = vmatpush1.msra.mxu0 0.0
        %3095 = vmatprep.subr.mxu0 0.0
        %3096 = vmatpush1.msra.mxu0 0.0
        %3097 = vmatprep.subr.mxu0 0.0
        %3098 = vmatpush1.msra.mxu0 0.0
        %3099 = vmatprep.subr.mxu0 0.0
        %3100 = vmatpush1.msra.mxu0 0.0
        %3101 = vmatprep.subr.mxu0 0.0
        %3102 = vmatpush1.msra.mxu0 0.0
        %3103 = vmatprep.subr.mxu0 0.0
        %3104 = vmatpush1.msra.mxu0 0.0
        %3105 = vmatprep.subr.mxu0 0.0
        %3106 = vmatpush1.msra.mxu0 0.0
        %3107 = vmatprep.subr.mxu0 0.0
        %3108 = vmatpush1.msra.mxu0 0.0
        %3109 = vmatprep.subr.mxu0 0.0
        %3110 = vmatpush1.msra.mxu0 0.0
        %3111 = vmatprep.subr.mxu0 0.0
        %3112 = vmatpush1.msra.mxu0 0.0
        %3113 = vmatprep.subr.mxu0 0.0
        %3114 = vmatpush1.msra.mxu0 0.0
        %3115 = vmatprep.subr.mxu0 0.0
        %3116 = vmatpush1.msra.mxu0 0.0
        %3117 = vmatprep.subr.mxu0 0.0
        %3118 = vmatpush1.msra.mxu0 0.0
        %3119 = vmatprep.subr.mxu0 0.0
        %3120 = vmatpush1.msra.mxu0 0.0
        %3121 = vmatprep.mubr.f32.mxu0 0.0
        %3122 = vmatmul.mubr.f32.gmra.mrb[0].mxu0 %v1021
        %v3123 = vpop.f32.mrb[0].mxu0
        %v3124 = vadd.f32 0.0, %v3123
        %v3125 = vpop.f32.mrb[0].mxu0
        %3126 = vmatprep.mubr.f32.mxu0 0.0
        %3127 = vmatmul.mubr.f32.gmra.mrb[0].mxu0 %v1024
        %v3128 = vpop.f32.mrb[0].mxu0
        %v3129 = vadd.f32 0.0, %v3128
        %v3130 = vpop.f32.mrb[0].mxu0
        %3131 = vmatprep.mubr.f32.mxu0 0.0
        %3132 = vmatmul.mubr.f32.gmra.mrb[0].mxu0 %v1027
        %v3133 = vpop.f32.mrb[0].mxu0
        %v3134 = vadd.f32 0.0, %v3133
        %v3135 = vpop.f32.mrb[0].mxu0
        %3136 = vmatprep.mubr.f32.mxu0 0.0
        %3137 = vmatmul.mubr.f32.gmra.mrb[0].mxu0 %v1030
        %v3138 = vpop.f32.mrb[0].mxu0
        %v3139 = vadd.f32 0.0, %v3138
        %v3140 = vpop.f32.mrb[0].mxu0
        %3141 = vdwg.mxu0
        %v3142 = vadd.f32 %v3049, %v3124
        %v3143 = vadd.f32 %v3050, %v3129
        %v3144 = vadd.f32 %v3051, %v3134
        %v3145 = vadd.f32 %v3052, %v3139
        %v3146 = vld [vmem:[%s2 + $0x1a0] sm:$0xff]
        %v3147 = vld [vmem:[%s2 + $0x1a8] sm:$0xff]
        %v3148 = vld [vmem:[%s2 + $0x1b0] sm:$0xff]
        %v3149 = vld [vmem:[%s2 + $0x1b8] sm:$0xff]
        %3150 = vmatprep.subr.mxu0 0.0
        %3151 = vmatpush1.msra.mxu0 %v3146
        %3152 = vmatprep.subr.mxu0 0.0
        %3153 = vmatpush1.msra.mxu0 %v3147
        %3154 = vmatprep.subr.mxu0 0.0
        %3155 = vmatpush1.msra.mxu0 %v3148
        %3156 = vmatprep.subr.mxu0 0.0
        %3157 = vmatpush1.msra.mxu0 %v3149
        %3158 = vmatprep.subr.mxu0 0.0
        %3159 = vmatpush1.msra.mxu0 0.0
        %3160 = vmatprep.subr.mxu0 0.0
        %3161 = vmatpush1.msra.mxu0 0.0
        %3162 = vmatprep.subr.mxu0 0.0
        %3163 = vmatpush1.msra.mxu0 0.0
        %3164 = vmatprep.subr.mxu0 0.0
        %3165 = vmatpush1.msra.mxu0 0.0
        %3166 = vmatprep.subr.mxu0 0.0
        %3167 = vmatpush1.msra.mxu0 0.0
        %3168 = vmatprep.subr.mxu0 0.0
        %3169 = vmatpush1.msra.mxu0 0.0
        %3170 = vmatprep.subr.mxu0 0.0
        %3171 = vmatpush1.msra.mxu0 0.0
        %3172 = vmatprep.subr.mxu0 0.0
        %3173 = vmatpush1.msra.mxu0 0.0
        %3174 = vmatprep.subr.mxu0 0.0
        %3175 = vmatpush1.msra.mxu0 0.0
        %3176 = vmatprep.subr.mxu0 0.0
        %3177 = vmatpush1.msra.mxu0 0.0
        %3178 = vmatprep.subr.mxu0 0.0
        %3179 = vmatpush1.msra.mxu0 0.0
        %3180 = vmatprep.subr.mxu0 0.0
        %3181 = vmatpush1.msra.mxu0 0.0
        %3182 = vmatprep.subr.mxu0 0.0
        %3183 = vmatpush1.msra.mxu0 0.0
        %3184 = vmatprep.subr.mxu0 0.0
        %3185 = vmatpush1.msra.mxu0 0.0
        %3186 = vmatprep.subr.mxu0 0.0
        %3187 = vmatpush1.msra.mxu0 0.0
        %3188 = vmatprep.subr.mxu0 0.0
        %3189 = vmatpush1.msra.mxu0 0.0
        %3190 = vmatprep.subr.mxu0 0.0
        %3191 = vmatpush1.msra.mxu0 0.0
        %3192 = vmatprep.subr.mxu0 0.0
        %3193 = vmatpush1.msra.mxu0 0.0
        %3194 = vmatprep.subr.mxu0 0.0
        %3195 = vmatpush1.msra.mxu0 0.0
        %3196 = vmatprep.subr.mxu0 0.0
        %3197 = vmatpush1.msra.mxu0 0.0
        %3198 = vmatprep.subr.mxu0 0.0
        %3199 = vmatpush1.msra.mxu0 0.0
        %3200 = vmatprep.subr.mxu0 0.0
        %3201 = vmatpush1.msra.mxu0 0.0
        %3202 = vmatprep.subr.mxu0 0.0
        %3203 = vmatpush1.msra.mxu0 0.0
        %3204 = vmatprep.subr.mxu0 0.0
        %3205 = vmatpush1.msra.mxu0 0.0
        %3206 = vmatprep.subr.mxu0 0.0
        %3207 = vmatpush1.msra.mxu0 0.0
        %3208 = vmatprep.subr.mxu0 0.0
        %3209 = vmatpush1.msra.mxu0 0.0
        %3210 = vmatprep.subr.mxu0 0.0
        %3211 = vmatpush1.msra.mxu0 0.0
        %3212 = vmatprep.subr.mxu0 0.0
        %3213 = vmatpush1.msra.mxu0 0.0
        %3214 = vmatprep.mubr.f32.mxu0 0.0
        %3215 = vmatmul.mubr.f32.gmra.mrb[0].mxu0 %v1126
        %v3216 = vpop.f32.mrb[0].mxu0
        %v3217 = vadd.f32 0.0, %v3216
        %v3218 = vpop.f32.mrb[0].mxu0
        %3219 = vmatprep.mubr.f32.mxu0 0.0
        %3220 = vmatmul.mubr.f32.gmra.mrb[0].mxu0 %v1129
        %v3221 = vpop.f32.mrb[0].mxu0
        %v3222 = vadd.f32 0.0, %v3221
        %v3223 = vpop.f32.mrb[0].mxu0
        %3224 = vmatprep.mubr.f32.mxu0 0.0
        %3225 = vmatmul.mubr.f32.gmra.mrb[0].mxu0 %v1132
        %v3226 = vpop.f32.mrb[0].mxu0
        %v3227 = vadd.f32 0.0, %v3226
        %v3228 = vpop.f32.mrb[0].mxu0
        %3229 = vmatprep.mubr.f32.mxu0 0.0
        %3230 = vmatmul.mubr.f32.gmra.mrb[0].mxu0 %v1135
        %v3231 = vpop.f32.mrb[0].mxu0
        %v3232 = vadd.f32 0.0, %v3231
        %v3233 = vpop.f32.mrb[0].mxu0
        %3234 = vdwg.mxu0
        %v3235 = vadd.f32 %v3142, %v3217
        %v3236 = vadd.f32 %v3143, %v3222
        %v3237 = vadd.f32 %v3144, %v3227
        %v3238 = vadd.f32 %v3145, %v3232
        %v3239 = vld [vmem:[%s2 + $0x1c0] sm:$0xff]
        %v3240 = vld [vmem:[%s2 + $0x1c8] sm:$0xff]
        %v3241 = vld [vmem:[%s2 + $0x1d0] sm:$0xff]
        %v3242 = vld [vmem:[%s2 + $0x1d8] sm:$0xff]
        %3243 = vmatprep.subr.mxu0 0.0
        %3244 = vmatpush1.msra.mxu0 %v3239
        %3245 = vmatprep.subr.mxu0 0.0
        %3246 = vmatpush1.msra.mxu0 %v3240
        %3247 = vmatprep.subr.mxu0 0.0
        %3248 = vmatpush1.msra.mxu0 %v3241
        %3249 = vmatprep.subr.mxu0 0.0
        %3250 = vmatpush1.msra.mxu0 %v3242
        %3251 = vmatprep.subr.mxu0 0.0
        %3252 = vmatpush1.msra.mxu0 0.0
        %3253 = vmatprep.subr.mxu0 0.0
        %3254 = vmatpush1.msra.mxu0 0.0
        %3255 = vmatprep.subr.mxu0 0.0
        %3256 = vmatpush1.msra.mxu0 0.0
        %3257 = vmatprep.subr.mxu0 0.0
        %3258 = vmatpush1.msra.mxu0 0.0
        %3259 = vmatprep.subr.mxu0 0.0
        %3260 = vmatpush1.msra.mxu0 0.0
        %3261 = vmatprep.subr.mxu0 0.0
        %3262 = vmatpush1.msra.mxu0 0.0
        %3263 = vmatprep.subr.mxu0 0.0
        %3264 = vmatpush1.msra.mxu0 0.0
        %3265 = vmatprep.subr.mxu0 0.0
        %3266 = vmatpush1.msra.mxu0 0.0
        %3267 = vmatprep.subr.mxu0 0.0
        %3268 = vmatpush1.msra.mxu0 0.0
        %3269 = vmatprep.subr.mxu0 0.0
        %3270 = vmatpush1.msra.mxu0 0.0
        %3271 = vmatprep.subr.mxu0 0.0
        %3272 = vmatpush1.msra.mxu0 0.0
        %3273 = vmatprep.subr.mxu0 0.0
        %3274 = vmatpush1.msra.mxu0 0.0
        %3275 = vmatprep.subr.mxu0 0.0
        %3276 = vmatpush1.msra.mxu0 0.0
        %3277 = vmatprep.subr.mxu0 0.0
        %3278 = vmatpush1.msra.mxu0 0.0
        %3279 = vmatprep.subr.mxu0 0.0
        %3280 = vmatpush1.msra.mxu0 0.0
        %3281 = vmatprep.subr.mxu0 0.0
        %3282 = vmatpush1.msra.mxu0 0.0
        %3283 = vmatprep.subr.mxu0 0.0
        %3284 = vmatpush1.msra.mxu0 0.0
        %3285 = vmatprep.subr.mxu0 0.0
        %3286 = vmatpush1.msra.mxu0 0.0
        %3287 = vmatprep.subr.mxu0 0.0
        %3288 = vmatpush1.msra.mxu0 0.0
        %3289 = vmatprep.subr.mxu0 0.0
        %3290 = vmatpush1.msra.mxu0 0.0
        %3291 = vmatprep.subr.mxu0 0.0
        %3292 = vmatpush1.msra.mxu0 0.0
        %3293 = vmatprep.subr.mxu0 0.0
        %3294 = vmatpush1.msra.mxu0 0.0
        %3295 = vmatprep.subr.mxu0 0.0
        %3296 = vmatpush1.msra.mxu0 0.0
        %3297 = vmatprep.subr.mxu0 0.0
        %3298 = vmatpush1.msra.mxu0 0.0
        %3299 = vmatprep.subr.mxu0 0.0
        %3300 = vmatpush1.msra.mxu0 0.0
        %3301 = vmatprep.subr.mxu0 0.0
        %3302 = vmatpush1.msra.mxu0 0.0
        %3303 = vmatprep.subr.mxu0 0.0
        %3304 = vmatpush1.msra.mxu0 0.0
        %3305 = vmatprep.subr.mxu0 0.0
        %3306 = vmatpush1.msra.mxu0 0.0
        %3307 = vmatprep.mubr.f32.mxu0 0.0
        %3308 = vmatmul.mubr.f32.gmra.mrb[0].mxu0 %v1231
        %v3309 = vpop.f32.mrb[0].mxu0
        %v3310 = vadd.f32 0.0, %v3309
        %v3311 = vpop.f32.mrb[0].mxu0
        %3312 = vmatprep.mubr.f32.mxu0 0.0
        %3313 = vmatmul.mubr.f32.gmra.mrb[0].mxu0 %v1234
        %v3314 = vpop.f32.mrb[0].mxu0
        %v3315 = vadd.f32 0.0, %v3314
        %v3316 = vpop.f32.mrb[0].mxu0
        %3317 = vmatprep.mubr.f32.mxu0 0.0
        %3318 = vmatmul.mubr.f32.gmra.mrb[0].mxu0 %v1237
        %v3319 = vpop.f32.mrb[0].mxu0
        %v3320 = vadd.f32 0.0, %v3319
        %v3321 = vpop.f32.mrb[0].mxu0
        %3322 = vmatprep.mubr.f32.mxu0 0.0
        %3323 = vmatmul.mubr.f32.gmra.mrb[0].mxu0 %v1240
        %v3324 = vpop.f32.mrb[0].mxu0
        %v3325 = vadd.f32 0.0, %v3324
        %v3326 = vpop.f32.mrb[0].mxu0
        %3327 = vdwg.mxu0
        %v3328 = vadd.f32 %v3235, %v3310
        %v3329 = vadd.f32 %v3236, %v3315
        %v3330 = vadd.f32 %v3237, %v3320
        %v3331 = vadd.f32 %v3238, %v3325
        %v3332 = vld [vmem:[%s2 + $0x1e0] sm:$0xff]
        %v3333 = vld [vmem:[%s2 + $0x1e8] sm:$0xff]
        %v3334 = vld [vmem:[%s2 + $0x1f0] sm:$0xff]
        %v3335 = vld [vmem:[%s2 + $0x1f8] sm:$0xff]
        %3336 = vmatprep.subr.mxu0 0.0
        %3337 = vmatpush1.msra.mxu0 %v3332
        %3338 = vmatprep.subr.mxu0 0.0
        %3339 = vmatpush1.msra.mxu0 %v3333
        %3340 = vmatprep.subr.mxu0 0.0
        %3341 = vmatpush1.msra.mxu0 %v3334
        %3342 = vmatprep.subr.mxu0 0.0
        %3343 = vmatpush1.msra.mxu0 %v3335
        %3344 = vmatprep.subr.mxu0 0.0
        %3345 = vmatpush1.msra.mxu0 0.0
        %3346 = vmatprep.subr.mxu0 0.0
        %3347 = vmatpush1.msra.mxu0 0.0
        %3348 = vmatprep.subr.mxu0 0.0
        %3349 = vmatpush1.msra.mxu0 0.0
        %3350 = vmatprep.subr.mxu0 0.0
        %3351 = vmatpush1.msra.mxu0 0.0
        %3352 = vmatprep.subr.mxu0 0.0
        %3353 = vmatpush1.msra.mxu0 0.0
        %3354 = vmatprep.subr.mxu0 0.0
        %3355 = vmatpush1.msra.mxu0 0.0
        %3356 = vmatprep.subr.mxu0 0.0
        %3357 = vmatpush1.msra.mxu0 0.0
        %3358 = vmatprep.subr.mxu0 0.0
        %3359 = vmatpush1.msra.mxu0 0.0
        %3360 = vmatprep.subr.mxu0 0.0
        %3361 = vmatpush1.msra.mxu0 0.0
        %3362 = vmatprep.subr.mxu0 0.0
        %3363 = vmatpush1.msra.mxu0 0.0
        %3364 = vmatprep.subr.mxu0 0.0
        %3365 = vmatpush1.msra.mxu0 0.0
        %3366 = vmatprep.subr.mxu0 0.0
        %3367 = vmatpush1.msra.mxu0 0.0
        %3368 = vmatprep.subr.mxu0 0.0
        %3369 = vmatpush1.msra.mxu0 0.0
        %3370 = vmatprep.subr.mxu0 0.0
        %3371 = vmatpush1.msra.mxu0 0.0
        %3372 = vmatprep.subr.mxu0 0.0
        %3373 = vmatpush1.msra.mxu0 0.0
        %3374 = vmatprep.subr.mxu0 0.0
        %3375 = vmatpush1.msra.mxu0 0.0
        %3376 = vmatprep.subr.mxu0 0.0
        %3377 = vmatpush1.msra.mxu0 0.0
        %3378 = vmatprep.subr.mxu0 0.0
        %3379 = vmatpush1.msra.mxu0 0.0
        %3380 = vmatprep.subr.mxu0 0.0
        %3381 = vmatpush1.msra.mxu0 0.0
        %3382 = vmatprep.subr.mxu0 0.0
        %3383 = vmatpush1.msra.mxu0 0.0
        %3384 = vmatprep.subr.mxu0 0.0
        %3385 = vmatpush1.msra.mxu0 0.0
        %3386 = vmatprep.subr.mxu0 0.0
        %3387 = vmatpush1.msra.mxu0 0.0
        %3388 = vmatprep.subr.mxu0 0.0
        %3389 = vmatpush1.msra.mxu0 0.0
        %3390 = vmatprep.subr.mxu0 0.0
        %3391 = vmatpush1.msra.mxu0 0.0
        %3392 = vmatprep.subr.mxu0 0.0
        %3393 = vmatpush1.msra.mxu0 0.0
        %3394 = vmatprep.subr.mxu0 0.0
        %3395 = vmatpush1.msra.mxu0 0.0
        %3396 = vmatprep.subr.mxu0 0.0
        %3397 = vmatpush1.msra.mxu0 0.0
        %3398 = vmatprep.subr.mxu0 0.0
        %3399 = vmatpush1.msra.mxu0 0.0
        %3400 = vmatprep.mubr.f32.mxu0 0.0
        %3401 = vmatmul.mubr.f32.gmra.mrb[0].mxu0 %v1336
        %v3402 = vpop.f32.mrb[0].mxu0
        %v3403 = vadd.f32 0.0, %v3402
        %v3404 = vpop.f32.mrb[0].mxu0
        %3405 = vmatprep.mubr.f32.mxu0 0.0
        %3406 = vmatmul.mubr.f32.gmra.mrb[0].mxu0 %v1339
        %v3407 = vpop.f32.mrb[0].mxu0
        %v3408 = vadd.f32 0.0, %v3407
        %v3409 = vpop.f32.mrb[0].mxu0
        %3410 = vmatprep.mubr.f32.mxu0 0.0
        %3411 = vmatmul.mubr.f32.gmra.mrb[0].mxu0 %v1342
        %v3412 = vpop.f32.mrb[0].mxu0
        %v3413 = vadd.f32 0.0, %v3412
        %v3414 = vpop.f32.mrb[0].mxu0
        %3415 = vmatprep.mubr.f32.mxu0 0.0
        %3416 = vmatmul.mubr.f32.gmra.mrb[0].mxu0 %v1345
        %v3417 = vpop.f32.mrb[0].mxu0
        %v3418 = vadd.f32 0.0, %v3417
        %v3419 = vpop.f32.mrb[0].mxu0
        %3420 = vdwg.mxu0
        %v3421 = vadd.f32 %v3328, %v3403
        %v3422 = vadd.f32 %v3329, %v3408
        %v3423 = vadd.f32 %v3330, %v3413
        %v3424 = vadd.f32 %v3331, %v3418
        %v3425 = vld [vmem:[%s2 + $0x200] sm:$0xff]
        %v3426 = vld [vmem:[%s2 + $0x208] sm:$0xff]
        %v3427 = vld [vmem:[%s2 + $0x210] sm:$0xff]
        %v3428 = vld [vmem:[%s2 + $0x218] sm:$0xff]
        %3429 = vmatprep.subr.mxu0 0.0
        %3430 = vmatpush1.msra.mxu0 %v3425
        %3431 = vmatprep.subr.mxu0 0.0
        %3432 = vmatpush1.msra.mxu0 %v3426
        %3433 = vmatprep.subr.mxu0 0.0
        %3434 = vmatpush1.msra.mxu0 %v3427
        %3435 = vmatprep.subr.mxu0 0.0
        %3436 = vmatpush1.msra.mxu0 %v3428
        %3437 = vmatprep.subr.mxu0 0.0
        %3438 = vmatpush1.msra.mxu0 0.0
        %3439 = vmatprep.subr.mxu0 0.0
        %3440 = vmatpush1.msra.mxu0 0.0
        %3441 = vmatprep.subr.mxu0 0.0
        %3442 = vmatpush1.msra.mxu0 0.0
        %3443 = vmatprep.subr.mxu0 0.0
        %3444 = vmatpush1.msra.mxu0 0.0
        %3445 = vmatprep.subr.mxu0 0.0
        %3446 = vmatpush1.msra.mxu0 0.0
        %3447 = vmatprep.subr.mxu0 0.0
        %3448 = vmatpush1.msra.mxu0 0.0
        %3449 = vmatprep.subr.mxu0 0.0
        %3450 = vmatpush1.msra.mxu0 0.0
        %3451 = vmatprep.subr.mxu0 0.0
        %3452 = vmatpush1.msra.mxu0 0.0
        %3453 = vmatprep.subr.mxu0 0.0
        %3454 = vmatpush1.msra.mxu0 0.0
        %3455 = vmatprep.subr.mxu0 0.0
        %3456 = vmatpush1.msra.mxu0 0.0
        %3457 = vmatprep.subr.mxu0 0.0
        %3458 = vmatpush1.msra.mxu0 0.0
        %3459 = vmatprep.subr.mxu0 0.0
        %3460 = vmatpush1.msra.mxu0 0.0
        %3461 = vmatprep.subr.mxu0 0.0
        %3462 = vmatpush1.msra.mxu0 0.0
        %3463 = vmatprep.subr.mxu0 0.0
        %3464 = vmatpush1.msra.mxu0 0.0
        %3465 = vmatprep.subr.mxu0 0.0
        %3466 = vmatpush1.msra.mxu0 0.0
        %3467 = vmatprep.subr.mxu0 0.0
        %3468 = vmatpush1.msra.mxu0 0.0
        %3469 = vmatprep.subr.mxu0 0.0
        %3470 = vmatpush1.msra.mxu0 0.0
        %3471 = vmatprep.subr.mxu0 0.0
        %3472 = vmatpush1.msra.mxu0 0.0
        %3473 = vmatprep.subr.mxu0 0.0
        %3474 = vmatpush1.msra.mxu0 0.0
        %3475 = vmatprep.subr.mxu0 0.0
        %3476 = vmatpush1.msra.mxu0 0.0
        %3477 = vmatprep.subr.mxu0 0.0
        %3478 = vmatpush1.msra.mxu0 0.0
        %3479 = vmatprep.subr.mxu0 0.0
        %3480 = vmatpush1.msra.mxu0 0.0
        %3481 = vmatprep.subr.mxu0 0.0
        %3482 = vmatpush1.msra.mxu0 0.0
        %3483 = vmatprep.subr.mxu0 0.0
        %3484 = vmatpush1.msra.mxu0 0.0
        %3485 = vmatprep.subr.mxu0 0.0
        %3486 = vmatpush1.msra.mxu0 0.0
        %3487 = vmatprep.subr.mxu0 0.0
        %3488 = vmatpush1.msra.mxu0 0.0
        %3489 = vmatprep.subr.mxu0 0.0
        %3490 = vmatpush1.msra.mxu0 0.0
        %3491 = vmatprep.subr.mxu0 0.0
        %3492 = vmatpush1.msra.mxu0 0.0
        %3493 = vmatprep.mubr.f32.mxu0 0.0
        %3494 = vmatmul.mubr.f32.gmra.mrb[0].mxu0 %v1441
        %v3495 = vpop.f32.mrb[0].mxu0
        %v3496 = vadd.f32 0.0, %v3495
        %v3497 = vpop.f32.mrb[0].mxu0
        %3498 = vmatprep.mubr.f32.mxu0 0.0
        %3499 = vmatmul.mubr.f32.gmra.mrb[0].mxu0 %v1444
        %v3500 = vpop.f32.mrb[0].mxu0
        %v3501 = vadd.f32 0.0, %v3500
        %v3502 = vpop.f32.mrb[0].mxu0
        %3503 = vmatprep.mubr.f32.mxu0 0.0
        %3504 = vmatmul.mubr.f32.gmra.mrb[0].mxu0 %v1447
        %v3505 = vpop.f32.mrb[0].mxu0
        %v3506 = vadd.f32 0.0, %v3505
        %v3507 = vpop.f32.mrb[0].mxu0
        %3508 = vmatprep.mubr.f32.mxu0 0.0
        %3509 = vmatmul.mubr.f32.gmra.mrb[0].mxu0 %v1450
        %v3510 = vpop.f32.mrb[0].mxu0
        %v3511 = vadd.f32 0.0, %v3510
        %v3512 = vpop.f32.mrb[0].mxu0
        %3513 = vdwg.mxu0
        %v3514 = vadd.f32 %v3421, %v3496
        %v3515 = vadd.f32 %v3422, %v3501
        %v3516 = vadd.f32 %v3423, %v3506
        %v3517 = vadd.f32 %v3424, %v3511
        %v3518 = vld [vmem:[%s2 + $0x220] sm:$0xff]
        %v3519 = vld [vmem:[%s2 + $0x228] sm:$0xff]
        %v3520 = vld [vmem:[%s2 + $0x230] sm:$0xff]
        %v3521 = vld [vmem:[%s2 + $0x238] sm:$0xff]
        %3522 = vmatprep.subr.mxu0 0.0
        %3523 = vmatpush1.msra.mxu0 %v3518
        %3524 = vmatprep.subr.mxu0 0.0
        %3525 = vmatpush1.msra.mxu0 %v3519
        %3526 = vmatprep.subr.mxu0 0.0
        %3527 = vmatpush1.msra.mxu0 %v3520
        %3528 = vmatprep.subr.mxu0 0.0
        %3529 = vmatpush1.msra.mxu0 %v3521
        %3530 = vmatprep.subr.mxu0 0.0
        %3531 = vmatpush1.msra.mxu0 0.0
        %3532 = vmatprep.subr.mxu0 0.0
        %3533 = vmatpush1.msra.mxu0 0.0
        %3534 = vmatprep.subr.mxu0 0.0
        %3535 = vmatpush1.msra.mxu0 0.0
        %3536 = vmatprep.subr.mxu0 0.0
        %3537 = vmatpush1.msra.mxu0 0.0
        %3538 = vmatprep.subr.mxu0 0.0
        %3539 = vmatpush1.msra.mxu0 0.0
        %3540 = vmatprep.subr.mxu0 0.0
        %3541 = vmatpush1.msra.mxu0 0.0
        %3542 = vmatprep.subr.mxu0 0.0
        %3543 = vmatpush1.msra.mxu0 0.0
        %3544 = vmatprep.subr.mxu0 0.0
        %3545 = vmatpush1.msra.mxu0 0.0
        %3546 = vmatprep.subr.mxu0 0.0
        %3547 = vmatpush1.msra.mxu0 0.0
        %3548 = vmatprep.subr.mxu0 0.0
        %3549 = vmatpush1.msra.mxu0 0.0
        %3550 = vmatprep.subr.mxu0 0.0
        %3551 = vmatpush1.msra.mxu0 0.0
        %3552 = vmatprep.subr.mxu0 0.0
        %3553 = vmatpush1.msra.mxu0 0.0
        %3554 = vmatprep.subr.mxu0 0.0
        %3555 = vmatpush1.msra.mxu0 0.0
        %3556 = vmatprep.subr.mxu0 0.0
        %3557 = vmatpush1.msra.mxu0 0.0
        %3558 = vmatprep.subr.mxu0 0.0
        %3559 = vmatpush1.msra.mxu0 0.0
        %3560 = vmatprep.subr.mxu0 0.0
        %3561 = vmatpush1.msra.mxu0 0.0
        %3562 = vmatprep.subr.mxu0 0.0
        %3563 = vmatpush1.msra.mxu0 0.0
        %3564 = vmatprep.subr.mxu0 0.0
        %3565 = vmatpush1.msra.mxu0 0.0
        %3566 = vmatprep.subr.mxu0 0.0
        %3567 = vmatpush1.msra.mxu0 0.0
        %3568 = vmatprep.subr.mxu0 0.0
        %3569 = vmatpush1.msra.mxu0 0.0
        %3570 = vmatprep.subr.mxu0 0.0
        %3571 = vmatpush1.msra.mxu0 0.0
        %3572 = vmatprep.subr.mxu0 0.0
        %3573 = vmatpush1.msra.mxu0 0.0
        %3574 = vmatprep.subr.mxu0 0.0
        %3575 = vmatpush1.msra.mxu0 0.0
        %3576 = vmatprep.subr.mxu0 0.0
        %3577 = vmatpush1.msra.mxu0 0.0
        %3578 = vmatprep.subr.mxu0 0.0
        %3579 = vmatpush1.msra.mxu0 0.0
        %3580 = vmatprep.subr.mxu0 0.0
        %3581 = vmatpush1.msra.mxu0 0.0
        %3582 = vmatprep.subr.mxu0 0.0
        %3583 = vmatpush1.msra.mxu0 0.0
        %3584 = vmatprep.subr.mxu0 0.0
        %3585 = vmatpush1.msra.mxu0 0.0
        %3586 = vmatprep.mubr.f32.mxu0 0.0
        %3587 = vmatmul.mubr.f32.gmra.mrb[0].mxu0 %v1546
        %v3588 = vpop.f32.mrb[0].mxu0
        %v3589 = vadd.f32 0.0, %v3588
        %v3590 = vpop.f32.mrb[0].mxu0
        %3591 = vmatprep.mubr.f32.mxu0 0.0
        %3592 = vmatmul.mubr.f32.gmra.mrb[0].mxu0 %v1549
        %v3593 = vpop.f32.mrb[0].mxu0
        %v3594 = vadd.f32 0.0, %v3593
        %v3595 = vpop.f32.mrb[0].mxu0
        %3596 = vmatprep.mubr.f32.mxu0 0.0
        %3597 = vmatmul.mubr.f32.gmra.mrb[0].mxu0 %v1552
        %v3598 = vpop.f32.mrb[0].mxu0
        %v3599 = vadd.f32 0.0, %v3598
        %v3600 = vpop.f32.mrb[0].mxu0
        %3601 = vmatprep.mubr.f32.mxu0 0.0
        %3602 = vmatmul.mubr.f32.gmra.mrb[0].mxu0 %v1555
        %v3603 = vpop.f32.mrb[0].mxu0
        %v3604 = vadd.f32 0.0, %v3603
        %v3605 = vpop.f32.mrb[0].mxu0
        %3606 = vdwg.mxu0
        %v3607 = vadd.f32 %v3514, %v3589
        %v3608 = vadd.f32 %v3515, %v3594
        %v3609 = vadd.f32 %v3516, %v3599
        %v3610 = vadd.f32 %v3517, %v3604
        %v3611 = vadd.f32 %v3607, %v1649
        %v3612 = vadd.f32 %v3608, %v1654
        %v3613 = vadd.f32 %v3609, %v1659
        %v3614 = vadd.f32 %v3610, %v1664
        %v3615 = vmul.f32 %v3611, 0.70710677
        %v3616 = vmul.f32 %v3612, 0.70710677
        %v3617 = vmul.f32 %v3613, 0.70710677
        %v3618 = vmul.f32 %v3614, 0.70710677
        %v3619 = vand.u32 2147483647, %v3615
        %v3620 = vand.u32 2147483647, %v3616
        %v3621 = vand.u32 2147483647, %v3617
        %v3622 = vand.u32 2147483647, %v3618
        %v3623 = vmul.f32 %v3619, 0.3275911
        %v3624 = vmul.f32 %v3620, 0.3275911
        %v3625 = vmul.f32 %v3621, 0.3275911
        %v3626 = vmul.f32 %v3622, 0.3275911
        %v3627 = vadd.f32 %v3623, 1.0
        %v3628 = vadd.f32 %v3624, 1.0
        %v3629 = vadd.f32 %v3625, 1.0
        %v3630 = vadd.f32 %v3626, 1.0
        %v3631 = vrcp.pop %v3627
        %v3632 = vmul.f32 1.0, %v3631
        %v3633 = vrcp.pop %v3628
        %v3634 = vmul.f32 1.0, %v3633
        %v3635 = vrcp.pop %v3629
        %v3636 = vmul.f32 1.0, %v3635
        %v3637 = vrcp.pop %v3630
        %v3638 = vmul.f32 1.0, %v3637
        %v3639 = vmul.f32 %v3632, 1.0614054
        %v3640 = vmul.f32 %v3634, 1.0614054
        %v3641 = vmul.f32 %v3636, 1.0614054
        %v3642 = vmul.f32 %v3638, 1.0614054
        %v3643 = vadd.f32 %v3639, -1.4531521
        %v3644 = vadd.f32 %v3640, -1.4531521
        %v3645 = vadd.f32 %v3641, -1.4531521
        %v3646 = vadd.f32 %v3642, -1.4531521
        %v3647 = vmul.f32 %v3643, %v3632
        %v3648 = vmul.f32 %v3644, %v3634
        %v3649 = vmul.f32 %v3645, %v3636
        %v3650 = vmul.f32 %v3646, %v3638
        %v3651 = vadd.f32 %v3647, 1.4214138
        %v3652 = vadd.f32 %v3648, 1.4214138
        %v3653 = vadd.f32 %v3649, 1.4214138
        %v3654 = vadd.f32 %v3650, 1.4214138
        %v3655 = vmul.f32 %v3651, %v3632
        %v3656 = vmul.f32 %v3652, %v3634
        %v3657 = vmul.f32 %v3653, %v3636
        %v3658 = vmul.f32 %v3654, %v3638
        %v3659 = vadd.f32 %v3655, -0.28449672
        %v3660 = vadd.f32 %v3656, -0.28449672
        %v3661 = vadd.f32 %v3657, -0.28449672
        %v3662 = vadd.f32 %v3658, -0.28449672
        %v3663 = vmul.f32 %v3659, %v3632
        %v3664 = vmul.f32 %v3660, %v3634
        %v3665 = vmul.f32 %v3661, %v3636
        %v3666 = vmul.f32 %v3662, %v3638
        %v3667 = vadd.f32 %v3663, 0.2548296
        %v3668 = vadd.f32 %v3664, 0.2548296
        %v3669 = vadd.f32 %v3665, 0.2548296
        %v3670 = vadd.f32 %v3666, 0.2548296
        %v3671 = vmul.f32 %v3667, %v3632
        %v3672 = vmul.f32 %v3668, %v3634
        %v3673 = vmul.f32 %v3669, %v3636
        %v3674 = vmul.f32 %v3670, %v3638
        %v3675 = vsub.f32 0.0, %v3619
        %v3676 = vsub.f32 0.0, %v3620
        %v3677 = vsub.f32 0.0, %v3621
        %v3678 = vsub.f32 0.0, %v3622
        %v3679 = vmul.f32 %v3675, %v3619
        %v3680 = vmul.f32 %v3676, %v3620
        %v3681 = vmul.f32 %v3677, %v3621
        %v3682 = vmul.f32 %v3678, %v3622
        %v3683 = vmul.f32 %v3679, 1.442695
        %v3684 = vpow.pop %v3683
        %v3685 = vmul.f32 %v3680, 1.442695
        %v3686 = vpow.pop %v3685
        %v3687 = vmul.f32 %v3681, 1.442695
        %v3688 = vpow.pop %v3687
        %v3689 = vmul.f32 %v3682, 1.442695
        %v3690 = vpow.pop %v3689
        %v3691 = vmul.f32 %v3671, %v3684
        %v3692 = vmul.f32 %v3672, %v3686
        %v3693 = vmul.f32 %v3673, %v3688
        %v3694 = vmul.f32 %v3674, %v3690
        %v3695 = vsub.f32 1.0, %v3691
        %v3696 = vsub.f32 1.0, %v3692
        %v3697 = vsub.f32 1.0, %v3693
        %v3698 = vsub.f32 1.0, %v3694
        %vm3699 = vcmp.ge.f32.partialorder %v3615, 0.0
        %vm3700 = vcmp.ge.f32.partialorder %v3616, 0.0
        %vm3701 = vcmp.ge.f32.partialorder %v3617, 0.0
        %vm3702 = vcmp.ge.f32.partialorder %v3618, 0.0
        %v3703 = vsub.f32 0.0, %v3695
        %v3704 = vsub.f32 0.0, %v3696
        %v3705 = vsub.f32 0.0, %v3697
        %v3706 = vsub.f32 0.0, %v3698
        %v3707 = vsel %vm3699, %v3695, %v3703
        %v3708 = vsel %vm3700, %v3696, %v3704
        %v3709 = vsel %vm3701, %v3697, %v3705
        %v3710 = vsel %vm3702, %v3698, %v3706
        %v3711 = vmul.f32 %v3611, 0.5
        %v3712 = vmul.f32 %v3612, 0.5
        %v3713 = vmul.f32 %v3613, 0.5
        %v3714 = vmul.f32 %v3614, 0.5
        %v3715 = vadd.f32 %v3707, 1.0
        %v3716 = vadd.f32 %v3708, 1.0
        %v3717 = vadd.f32 %v3709, 1.0
        %v3718 = vadd.f32 %v3710, 1.0
        %v3719 = vmul.f32 %v3711, %v3715
        %v3720 = vmul.f32 %v3712, %v3716
        %v3721 = vmul.f32 %v3713, %v3717
        %v3722 = vmul.f32 %v3714, %v3718
        %3723 = vmatprep.subr.mxu0 0.0
        %3724 = vmatpush1.msra.mxu0 %v3719
        %3725 = vmatprep.subr.mxu0 0.0
        %3726 = vmatpush1.msra.mxu0 %v3720
        %3727 = vmatprep.subr.mxu0 0.0
        %3728 = vmatpush1.msra.mxu0 %v3721
        %3729 = vmatprep.subr.mxu0 0.0
        %3730 = vmatpush1.msra.mxu0 %v3722
        %3731 = vmatprep.subr.mxu0 0.0
        %3732 = vmatpush1.msra.mxu0 0.0
        %3733 = vmatprep.subr.mxu0 0.0
        %3734 = vmatpush1.msra.mxu0 0.0
        %3735 = vmatprep.subr.mxu0 0.0
        %3736 = vmatpush1.msra.mxu0 0.0
        %3737 = vmatprep.subr.mxu0 0.0
        %3738 = vmatpush1.msra.mxu0 0.0
        %3739 = vmatprep.subr.mxu0 0.0
        %3740 = vmatpush1.msra.mxu0 0.0
        %3741 = vmatprep.subr.mxu0 0.0
        %3742 = vmatpush1.msra.mxu0 0.0
        %3743 = vmatprep.subr.mxu0 0.0
        %3744 = vmatpush1.msra.mxu0 0.0
        %3745 = vmatprep.subr.mxu0 0.0
        %3746 = vmatpush1.msra.mxu0 0.0
        %3747 = vmatprep.subr.mxu0 0.0
        %3748 = vmatpush1.msra.mxu0 0.0
        %3749 = vmatprep.subr.mxu0 0.0
        %3750 = vmatpush1.msra.mxu0 0.0
        %3751 = vmatprep.subr.mxu0 0.0
        %3752 = vmatpush1.msra.mxu0 0.0
        %3753 = vmatprep.subr.mxu0 0.0
        %3754 = vmatpush1.msra.mxu0 0.0
        %3755 = vmatprep.subr.mxu0 0.0
        %3756 = vmatpush1.msra.mxu0 0.0
        %3757 = vmatprep.subr.mxu0 0.0
        %3758 = vmatpush1.msra.mxu0 0.0
        %3759 = vmatprep.subr.mxu0 0.0
        %3760 = vmatpush1.msra.mxu0 0.0
        %3761 = vmatprep.subr.mxu0 0.0
        %3762 = vmatpush1.msra.mxu0 0.0
        %3763 = vmatprep.subr.mxu0 0.0
        %3764 = vmatpush1.msra.mxu0 0.0
        %3765 = vmatprep.subr.mxu0 0.0
        %3766 = vmatpush1.msra.mxu0 0.0
        %3767 = vmatprep.subr.mxu0 0.0
        %3768 = vmatpush1.msra.mxu0 0.0
        %3769 = vmatprep.subr.mxu0 0.0
        %3770 = vmatpush1.msra.mxu0 0.0
        %3771 = vmatprep.subr.mxu0 0.0
        %3772 = vmatpush1.msra.mxu0 0.0
        %3773 = vmatprep.subr.mxu0 0.0
        %3774 = vmatpush1.msra.mxu0 0.0
        %3775 = vmatprep.subr.mxu0 0.0
        %3776 = vmatpush1.msra.mxu0 0.0
        %3777 = vmatprep.subr.mxu0 0.0
        %3778 = vmatpush1.msra.mxu0 0.0
        %3779 = vmatprep.subr.mxu0 0.0
        %3780 = vmatpush1.msra.mxu0 0.0
        %3781 = vmatprep.subr.mxu0 0.0
        %3782 = vmatpush1.msra.mxu0 0.0
        %3783 = vmatprep.subr.mxu0 0.0
        %3784 = vmatpush1.msra.mxu0 0.0
        %3785 = vmatprep.subr.mxu0 0.0
        %3786 = vmatpush1.msra.mxu0 0.0
        %3787 = vmatprep.mubr.f32.mxu0 0.0
        %3788 = vmatmul.mubr.f32.gmra.mrb[0].mxu0 %v1779
        %v3789 = vpop.f32.mrb[0].mxu0
        %v3790 = vadd.f32 0.0, %v3789
        %v3791 = vpop.f32.mrb[0].mxu0
        %3792 = vmatprep.mubr.f32.mxu0 0.0
        %3793 = vmatmul.mubr.f32.gmra.mrb[0].mxu0 %v1782
        %v3794 = vpop.f32.mrb[0].mxu0
        %v3795 = vadd.f32 0.0, %v3794
        %v3796 = vpop.f32.mrb[0].mxu0
        %3797 = vmatprep.mubr.f32.mxu0 0.0
        %3798 = vmatmul.mubr.f32.gmra.mrb[0].mxu0 %v1785
        %v3799 = vpop.f32.mrb[0].mxu0
        %v3800 = vadd.f32 0.0, %v3799
        %v3801 = vpop.f32.mrb[0].mxu0
        %3802 = vmatprep.mubr.f32.mxu0 0.0
        %3803 = vmatmul.mubr.f32.gmra.mrb[0].mxu0 %v1788
        %v3804 = vpop.f32.mrb[0].mxu0
        %v3805 = vadd.f32 0.0, %v3804
        %v3806 = vpop.f32.mrb[0].mxu0
        %3807 = vmatprep.mubr.f32.mxu0 0.0
        %3808 = vmatmul.mubr.f32.gmra.mrb[0].mxu0 %v1791
        %v3809 = vpop.f32.mrb[0].mxu0
        %v3810 = vadd.f32 0.0, %v3809
        %v3811 = vpop.f32.mrb[0].mxu0
        %3812 = vmatprep.mubr.f32.mxu0 0.0
        %3813 = vmatmul.mubr.f32.gmra.mrb[0].mxu0 %v1794
        %v3814 = vpop.f32.mrb[0].mxu0
        %v3815 = vadd.f32 0.0, %v3814
        %v3816 = vpop.f32.mrb[0].mxu0
        %3817 = vmatprep.mubr.f32.mxu0 0.0
        %3818 = vmatmul.mubr.f32.gmra.mrb[0].mxu0 %v1797
        %v3819 = vpop.f32.mrb[0].mxu0
        %v3820 = vadd.f32 0.0, %v3819
        %v3821 = vpop.f32.mrb[0].mxu0
        %3822 = vmatprep.mubr.f32.mxu0 0.0
        %3823 = vmatmul.mubr.f32.gmra.mrb[0].mxu0 %v1800
        %v3824 = vpop.f32.mrb[0].mxu0
        %v3825 = vadd.f32 0.0, %v3824
        %v3826 = vpop.f32.mrb[0].mxu0
        %3827 = vmatprep.mubr.f32.mxu0 0.0
        %3828 = vmatmul.mubr.f32.gmra.mrb[0].mxu0 %v1803
        %v3829 = vpop.f32.mrb[0].mxu0
        %v3830 = vadd.f32 0.0, %v3829
        %v3831 = vpop.f32.mrb[0].mxu0
        %3832 = vmatprep.mubr.f32.mxu0 0.0
        %3833 = vmatmul.mubr.f32.gmra.mrb[0].mxu0 %v1806
        %v3834 = vpop.f32.mrb[0].mxu0
        %v3835 = vadd.f32 0.0, %v3834
        %v3836 = vpop.f32.mrb[0].mxu0
        %3837 = vmatprep.mubr.f32.mxu0 0.0
        %3838 = vmatmul.mubr.f32.gmra.mrb[0].mxu0 %v1809
        %v3839 = vpop.f32.mrb[0].mxu0
        %v3840 = vadd.f32 0.0, %v3839
        %v3841 = vpop.f32.mrb[0].mxu0
        %3842 = vmatprep.mubr.f32.mxu0 0.0
        %3843 = vmatmul.mubr.f32.gmra.mrb[0].mxu0 %v1812
        %v3844 = vpop.f32.mrb[0].mxu0
        %v3845 = vadd.f32 0.0, %v3844
        %v3846 = vpop.f32.mrb[0].mxu0
        %3847 = vmatprep.mubr.f32.mxu0 0.0
        %3848 = vmatmul.mubr.f32.gmra.mrb[0].mxu0 %v1815
        %v3849 = vpop.f32.mrb[0].mxu0
        %v3850 = vadd.f32 0.0, %v3849
        %v3851 = vpop.f32.mrb[0].mxu0
        %3852 = vmatprep.mubr.f32.mxu0 0.0
        %3853 = vmatmul.mubr.f32.gmra.mrb[0].mxu0 %v1818
        %v3854 = vpop.f32.mrb[0].mxu0
        %v3855 = vadd.f32 0.0, %v3854
        %v3856 = vpop.f32.mrb[0].mxu0
        %3857 = vmatprep.mubr.f32.mxu0 0.0
        %3858 = vmatmul.mubr.f32.gmra.mrb[0].mxu0 %v1821
        %v3859 = vpop.f32.mrb[0].mxu0
        %v3860 = vadd.f32 0.0, %v3859
        %v3861 = vpop.f32.mrb[0].mxu0
        %3862 = vmatprep.mubr.f32.mxu0 0.0
        %3863 = vmatmul.mubr.f32.gmra.mrb[0].mxu0 %v1824
        %v3864 = vpop.f32.mrb[0].mxu0
        %v3865 = vadd.f32 0.0, %v3864
        %v3866 = vpop.f32.mrb[0].mxu0
        %3867 = vmatprep.mubr.f32.mxu0 0.0
        %3868 = vmatmul.mubr.f32.gmra.mrb[0].mxu0 %v1827
        %v3869 = vpop.f32.mrb[0].mxu0
        %v3870 = vadd.f32 0.0, %v3869
        %v3871 = vpop.f32.mrb[0].mxu0
        %3872 = vmatprep.mubr.f32.mxu0 0.0
        %3873 = vmatmul.mubr.f32.gmra.mrb[0].mxu0 %v1830
        %v3874 = vpop.f32.mrb[0].mxu0
        %v3875 = vadd.f32 0.0, %v3874
        %v3876 = vpop.f32.mrb[0].mxu0
        %3877 = vdwg.mxu0
        %v3878 = vld [vmem:[#allocation2 + $0x1d4] sm:$0xff]
        %v3879 = vld [vmem:[#allocation2 + $0x1dc] sm:$0xff]
        %v3880 = vld [vmem:[#allocation2 + $0x1e4] sm:$0xff]
        %v3881 = vld [vmem:[#allocation2 + $0x1ec] sm:$0xff]
        %v3882 = vld [vmem:[#allocation2 + $0x208] sm:$0xff]
        %v3883 = vld [vmem:[#allocation2 + $0x210] sm:$0xff]
        %v3884 = vld [vmem:[#allocation2 + $0x218] sm:$0xff]
        %v3885 = vld [vmem:[#allocation2 + $0x220] sm:$0xff]
        %v3887 = vsel %vm716, %v3800, 0
        %v3890 = vsel %vm716, %v3805, 0
        %3892 = vmatprep.subr.mxu0 0.0
        %3893 = vmatpush1.msra.mxu0 %v3882
        %3894 = vmatprep.subr.mxu0 0.0
        %3895 = vmatpush1.msra.mxu0 %v3883
        %3896 = vmatprep.subr.mxu0 0.0
        %3897 = vmatpush1.msra.mxu0 %v3884
        %3898 = vmatprep.subr.mxu0 0.0
        %3899 = vmatpush1.msra.mxu0 %v3885
        %3900 = vmatprep.subr.mxu0 0.0
        %3901 = vmatpush1.msra.mxu0 0.0
        %3902 = vmatprep.subr.mxu0 0.0
        %3903 = vmatpush1.msra.mxu0 0.0
        %3904 = vmatprep.subr.mxu0 0.0
        %3905 = vmatpush1.msra.mxu0 0.0
        %3906 = vmatprep.subr.mxu0 0.0
        %3907 = vmatpush1.msra.mxu0 0.0
        %3908 = vmatprep.subr.mxu0 0.0
        %3909 = vmatpush1.msra.mxu0 0.0
        %3910 = vmatprep.subr.mxu0 0.0
        %3911 = vmatpush1.msra.mxu0 0.0
        %3912 = vmatprep.subr.mxu0 0.0
        %3913 = vmatpush1.msra.mxu0 0.0
        %3914 = vmatprep.subr.mxu0 0.0
        %3915 = vmatpush1.msra.mxu0 0.0
        %3916 = vmatprep.subr.mxu0 0.0
        %3917 = vmatpush1.msra.mxu0 0.0
        %3918 = vmatprep.subr.mxu0 0.0
        %3919 = vmatpush1.msra.mxu0 0.0
        %3920 = vmatprep.subr.mxu0 0.0
        %3921 = vmatpush1.msra.mxu0 0.0
        %3922 = vmatprep.subr.mxu0 0.0
        %3923 = vmatpush1.msra.mxu0 0.0
        %3924 = vmatprep.subr.mxu0 0.0
        %3925 = vmatpush1.msra.mxu0 0.0
        %3926 = vmatprep.subr.mxu0 0.0
        %3927 = vmatpush1.msra.mxu0 0.0
        %3928 = vmatprep.subr.mxu0 0.0
        %3929 = vmatpush1.msra.mxu0 0.0
        %3930 = vmatprep.subr.mxu0 0.0
        %3931 = vmatpush1.msra.mxu0 0.0
        %3932 = vmatprep.subr.mxu0 0.0
        %3933 = vmatpush1.msra.mxu0 0.0
        %3934 = vmatprep.subr.mxu0 0.0
        %3935 = vmatpush1.msra.mxu0 0.0
        %3936 = vmatprep.subr.mxu0 0.0
        %3937 = vmatpush1.msra.mxu0 0.0
        %3938 = vmatprep.subr.mxu0 0.0
        %3939 = vmatpush1.msra.mxu0 0.0
        %3940 = vmatprep.subr.mxu0 0.0
        %3941 = vmatpush1.msra.mxu0 0.0
        %3942 = vmatprep.subr.mxu0 0.0
        %3943 = vmatpush1.msra.mxu0 0.0
        %3944 = vmatprep.subr.mxu0 0.0
        %3945 = vmatpush1.msra.mxu0 0.0
        %3946 = vmatprep.subr.mxu0 0.0
        %3947 = vmatpush1.msra.mxu0 0.0
        %3948 = vmatprep.subr.mxu0 0.0
        %3949 = vmatpush1.msra.mxu0 0.0
        %3950 = vmatprep.subr.mxu0 0.0
        %3951 = vmatpush1.msra.mxu0 0.0
        %3952 = vmatprep.subr.mxu0 0.0
        %3953 = vmatpush1.msra.mxu0 0.0
        %3954 = vmatprep.subr.mxu0 0.0
        %3955 = vmatpush1.msra.mxu0 0.0
        %3956 = vmatprep.mubr.f32.mxu0 0.0
        %3957 = vmatmul.mubr.f32.gmra.mrb[0].mxu0 %v3887
        %v3958 = vpop.f32.mrb[0].mxu0
        %v3959 = vadd.f32 0.0, %v3958
        %v3960 = vpop.f32.mrb[0].mxu0
        %3961 = vmatprep.mubr.f32.mxu0 0.0
        %3962 = vmatmul.mubr.f32.gmra.mrb[0].mxu0 %v3890
        %v3963 = vpop.f32.mrb[0].mxu0
        %v3964 = vadd.f32 0.0, %v3963
        %v3965 = vpop.f32.mrb[0].mxu0
        %3966 = vdwg.mxu0
        %v3968 = vsel %vm716, %v3790, 0
        %v3971 = vsel %vm716, %v3795, 0
        %3973 = vmatprep.subr.mxu0 0.0
        %3974 = vmatpush1.msra.mxu0 %v3878
        %3975 = vmatprep.subr.mxu0 0.0
        %3976 = vmatpush1.msra.mxu0 %v3879
        %3977 = vmatprep.subr.mxu0 0.0
        %3978 = vmatpush1.msra.mxu0 %v3880
        %3979 = vmatprep.subr.mxu0 0.0
        %3980 = vmatpush1.msra.mxu0 %v3881
        %3981 = vmatprep.subr.mxu0 0.0
        %3982 = vmatpush1.msra.mxu0 0.0
        %3983 = vmatprep.subr.mxu0 0.0
        %3984 = vmatpush1.msra.mxu0 0.0
        %3985 = vmatprep.subr.mxu0 0.0
        %3986 = vmatpush1.msra.mxu0 0.0
        %3987 = vmatprep.subr.mxu0 0.0
        %3988 = vmatpush1.msra.mxu0 0.0
        %3989 = vmatprep.subr.mxu0 0.0
        %3990 = vmatpush1.msra.mxu0 0.0
        %3991 = vmatprep.subr.mxu0 0.0
        %3992 = vmatpush1.msra.mxu0 0.0
        %3993 = vmatprep.subr.mxu0 0.0
        %3994 = vmatpush1.msra.mxu0 0.0
        %3995 = vmatprep.subr.mxu0 0.0
        %3996 = vmatpush1.msra.mxu0 0.0
        %3997 = vmatprep.subr.mxu0 0.0
        %3998 = vmatpush1.msra.mxu0 0.0
        %3999 = vmatprep.subr.mxu0 0.0
        %4000 = vmatpush1.msra.mxu0 0.0
        %4001 = vmatprep.subr.mxu0 0.0
        %4002 = vmatpush1.msra.mxu0 0.0
        %4003 = vmatprep.subr.mxu0 0.0
        %4004 = vmatpush1.msra.mxu0 0.0
        %4005 = vmatprep.subr.mxu0 0.0
        %4006 = vmatpush1.msra.mxu0 0.0
        %4007 = vmatprep.subr.mxu0 0.0
        %4008 = vmatpush1.msra.mxu0 0.0
        %4009 = vmatprep.subr.mxu0 0.0
        %4010 = vmatpush1.msra.mxu0 0.0
        %4011 = vmatprep.subr.mxu0 0.0
        %4012 = vmatpush1.msra.mxu0 0.0
        %4013 = vmatprep.subr.mxu0 0.0
        %4014 = vmatpush1.msra.mxu0 0.0
        %4015 = vmatprep.subr.mxu0 0.0
        %4016 = vmatpush1.msra.mxu0 0.0
        %4017 = vmatprep.subr.mxu0 0.0
        %4018 = vmatpush1.msra.mxu0 0.0
        %4019 = vmatprep.subr.mxu0 0.0
        %4020 = vmatpush1.msra.mxu0 0.0
        %4021 = vmatprep.subr.mxu0 0.0
        %4022 = vmatpush1.msra.mxu0 0.0
        %4023 = vmatprep.subr.mxu0 0.0
        %4024 = vmatpush1.msra.mxu0 0.0
        %4025 = vmatprep.subr.mxu0 0.0
        %4026 = vmatpush1.msra.mxu0 0.0
        %4027 = vmatprep.subr.mxu0 0.0
        %4028 = vmatpush1.msra.mxu0 0.0
        %4029 = vmatprep.subr.mxu0 0.0
        %4030 = vmatpush1.msra.mxu0 0.0
        %4031 = vmatprep.subr.mxu0 0.0
        %4032 = vmatpush1.msra.mxu0 0.0
        %4033 = vmatprep.subr.mxu0 0.0
        %4034 = vmatpush1.msra.mxu0 0.0
        %4035 = vmatprep.subr.mxu0 0.0
        %4036 = vmatpush1.msra.mxu0 0.0
        %4037 = vmatprep.mubr.f32.mxu0 0.0
        %4038 = vmatmul.mubr.f32.gmra.mrb[0].mxu0 %v3968
        %v4039 = vpop.f32.mrb[0].mxu0
        %v4040 = vadd.f32 %v3959, %v4039
        %v4041 = vpop.f32.mrb[0].mxu0
        %4042 = vmatprep.mubr.f32.mxu0 0.0
        %4043 = vmatmul.mubr.f32.gmra.mrb[0].mxu0 %v3971
        %v4044 = vpop.f32.mrb[0].mxu0
        %v4045 = vadd.f32 %v3964, %v4044
        %v4046 = vpop.f32.mrb[0].mxu0
        %4047 = vdwg.mxu0
        %v4048 = vld [vmem:[#allocation2 + $0x23c] sm:$0xff]
        %v4049 = vld [vmem:[#allocation2 + $0x244] sm:$0xff]
        %v4050 = vld [vmem:[#allocation2 + $0x24c] sm:$0xff]
        %v4051 = vld [vmem:[#allocation2 + $0x254] sm:$0xff]
        %v4053 = vsel %vm716, %v3810, 0
        %v4056 = vsel %vm716, %v3815, 0
        %4058 = vmatprep.subr.mxu0 0.0
        %4059 = vmatpush1.msra.mxu0 %v4048
        %4060 = vmatprep.subr.mxu0 0.0
        %4061 = vmatpush1.msra.mxu0 %v4049
        %4062 = vmatprep.subr.mxu0 0.0
        %4063 = vmatpush1.msra.mxu0 %v4050
        %4064 = vmatprep.subr.mxu0 0.0
        %4065 = vmatpush1.msra.mxu0 %v4051
        %4066 = vmatprep.subr.mxu0 0.0
        %4067 = vmatpush1.msra.mxu0 0.0
        %4068 = vmatprep.subr.mxu0 0.0
        %4069 = vmatpush1.msra.mxu0 0.0
        %4070 = vmatprep.subr.mxu0 0.0
        %4071 = vmatpush1.msra.mxu0 0.0
        %4072 = vmatprep.subr.mxu0 0.0
        %4073 = vmatpush1.msra.mxu0 0.0
        %4074 = vmatprep.subr.mxu0 0.0
        %4075 = vmatpush1.msra.mxu0 0.0
        %4076 = vmatprep.subr.mxu0 0.0
        %4077 = vmatpush1.msra.mxu0 0.0
        %4078 = vmatprep.subr.mxu0 0.0
        %4079 = vmatpush1.msra.mxu0 0.0
        %4080 = vmatprep.subr.mxu0 0.0
        %4081 = vmatpush1.msra.mxu0 0.0
        %4082 = vmatprep.subr.mxu0 0.0
        %4083 = vmatpush1.msra.mxu0 0.0
        %4084 = vmatprep.subr.mxu0 0.0
        %4085 = vmatpush1.msra.mxu0 0.0
        %4086 = vmatprep.subr.mxu0 0.0
        %4087 = vmatpush1.msra.mxu0 0.0
        %4088 = vmatprep.subr.mxu0 0.0
        %4089 = vmatpush1.msra.mxu0 0.0
        %4090 = vmatprep.subr.mxu0 0.0
        %4091 = vmatpush1.msra.mxu0 0.0
        %4092 = vmatprep.subr.mxu0 0.0
        %4093 = vmatpush1.msra.mxu0 0.0
        %4094 = vmatprep.subr.mxu0 0.0
        %4095 = vmatpush1.msra.mxu0 0.0
        %4096 = vmatprep.subr.mxu0 0.0
        %4097 = vmatpush1.msra.mxu0 0.0
        %4098 = vmatprep.subr.mxu0 0.0
        %4099 = vmatpush1.msra.mxu0 0.0
        %4100 = vmatprep.subr.mxu0 0.0
        %4101 = vmatpush1.msra.mxu0 0.0
        %4102 = vmatprep.subr.mxu0 0.0
        %4103 = vmatpush1.msra.mxu0 0.0
        %4104 = vmatprep.subr.mxu0 0.0
        %4105 = vmatpush1.msra.mxu0 0.0
        %4106 = vmatprep.subr.mxu0 0.0
        %4107 = vmatpush1.msra.mxu0 0.0
        %4108 = vmatprep.subr.mxu0 0.0
        %4109 = vmatpush1.msra.mxu0 0.0
        %4110 = vmatprep.subr.mxu0 0.0
        %4111 = vmatpush1.msra.mxu0 0.0
        %4112 = vmatprep.subr.mxu0 0.0
        %4113 = vmatpush1.msra.mxu0 0.0
        %4114 = vmatprep.subr.mxu0 0.0
        %4115 = vmatpush1.msra.mxu0 0.0
        %4116 = vmatprep.subr.mxu0 0.0
        %4117 = vmatpush1.msra.mxu0 0.0
        %4118 = vmatprep.subr.mxu0 0.0
        %4119 = vmatpush1.msra.mxu0 0.0
        %4120 = vmatprep.subr.mxu0 0.0
        %4121 = vmatpush1.msra.mxu0 0.0
        %4122 = vmatprep.mubr.f32.mxu0 0.0
        %4123 = vmatmul.mubr.f32.gmra.mrb[0].mxu0 %v4053
        %v4124 = vpop.f32.mrb[0].mxu0
        %v4125 = vadd.f32 0.0, %v4124
        %v4126 = vpop.f32.mrb[0].mxu0
        %4127 = vmatprep.mubr.f32.mxu0 0.0
        %4128 = vmatmul.mubr.f32.gmra.mrb[0].mxu0 %v4056
        %v4129 = vpop.f32.mrb[0].mxu0
        %v4130 = vadd.f32 0.0, %v4129
        %v4131 = vpop.f32.mrb[0].mxu0
        %4132 = vdwg.mxu0
        %v4133 = vadd.f32 %v4040, %v4125
        %v4134 = vadd.f32 %v4045, %v4130
        %v4135 = vld [vmem:[#allocation2 + $0x270] sm:$0xff]
        %v4136 = vld [vmem:[#allocation2 + $0x278] sm:$0xff]
        %v4137 = vld [vmem:[#allocation2 + $0x280] sm:$0xff]
        %v4138 = vld [vmem:[#allocation2 + $0x288] sm:$0xff]
        %v4140 = vsel %vm716, %v3820, 0
        %v4143 = vsel %vm716, %v3825, 0
        %4145 = vmatprep.subr.mxu0 0.0
        %4146 = vmatpush1.msra.mxu0 %v4135
        %4147 = vmatprep.subr.mxu0 0.0
        %4148 = vmatpush1.msra.mxu0 %v4136
        %4149 = vmatprep.subr.mxu0 0.0
        %4150 = vmatpush1.msra.mxu0 %v4137
        %4151 = vmatprep.subr.mxu0 0.0
        %4152 = vmatpush1.msra.mxu0 %v4138
        %4153 = vmatprep.subr.mxu0 0.0
        %4154 = vmatpush1.msra.mxu0 0.0
        %4155 = vmatprep.subr.mxu0 0.0
        %4156 = vmatpush1.msra.mxu0 0.0
        %4157 = vmatprep.subr.mxu0 0.0
        %4158 = vmatpush1.msra.mxu0 0.0
        %4159 = vmatprep.subr.mxu0 0.0
        %4160 = vmatpush1.msra.mxu0 0.0
        %4161 = vmatprep.subr.mxu0 0.0
        %4162 = vmatpush1.msra.mxu0 0.0
        %4163 = vmatprep.subr.mxu0 0.0
        %4164 = vmatpush1.msra.mxu0 0.0
        %4165 = vmatprep.subr.mxu0 0.0
        %4166 = vmatpush1.msra.mxu0 0.0
        %4167 = vmatprep.subr.mxu0 0.0
        %4168 = vmatpush1.msra.mxu0 0.0
        %4169 = vmatprep.subr.mxu0 0.0
        %4170 = vmatpush1.msra.mxu0 0.0
        %4171 = vmatprep.subr.mxu0 0.0
        %4172 = vmatpush1.msra.mxu0 0.0
        %4173 = vmatprep.subr.mxu0 0.0
        %4174 = vmatpush1.msra.mxu0 0.0
        %4175 = vmatprep.subr.mxu0 0.0
        %4176 = vmatpush1.msra.mxu0 0.0
        %4177 = vmatprep.subr.mxu0 0.0
        %4178 = vmatpush1.msra.mxu0 0.0
        %4179 = vmatprep.subr.mxu0 0.0
        %4180 = vmatpush1.msra.mxu0 0.0
        %4181 = vmatprep.subr.mxu0 0.0
        %4182 = vmatpush1.msra.mxu0 0.0
        %4183 = vmatprep.subr.mxu0 0.0
        %4184 = vmatpush1.msra.mxu0 0.0
        %4185 = vmatprep.subr.mxu0 0.0
        %4186 = vmatpush1.msra.mxu0 0.0
        %4187 = vmatprep.subr.mxu0 0.0
        %4188 = vmatpush1.msra.mxu0 0.0
        %4189 = vmatprep.subr.mxu0 0.0
        %4190 = vmatpush1.msra.mxu0 0.0
        %4191 = vmatprep.subr.mxu0 0.0
        %4192 = vmatpush1.msra.mxu0 0.0
        %4193 = vmatprep.subr.mxu0 0.0
        %4194 = vmatpush1.msra.mxu0 0.0
        %4195 = vmatprep.subr.mxu0 0.0
        %4196 = vmatpush1.msra.mxu0 0.0
        %4197 = vmatprep.subr.mxu0 0.0
        %4198 = vmatpush1.msra.mxu0 0.0
        %4199 = vmatprep.subr.mxu0 0.0
        %4200 = vmatpush1.msra.mxu0 0.0
        %4201 = vmatprep.subr.mxu0 0.0
        %4202 = vmatpush1.msra.mxu0 0.0
        %4203 = vmatprep.subr.mxu0 0.0
        %4204 = vmatpush1.msra.mxu0 0.0
        %4205 = vmatprep.subr.mxu0 0.0
        %4206 = vmatpush1.msra.mxu0 0.0
        %4207 = vmatprep.subr.mxu0 0.0
        %4208 = vmatpush1.msra.mxu0 0.0
        %4209 = vmatprep.mubr.f32.mxu0 0.0
        %4210 = vmatmul.mubr.f32.gmra.mrb[0].mxu0 %v4140
        %v4211 = vpop.f32.mrb[0].mxu0
        %v4212 = vadd.f32 0.0, %v4211
        %v4213 = vpop.f32.mrb[0].mxu0
        %4214 = vmatprep.mubr.f32.mxu0 0.0
        %4215 = vmatmul.mubr.f32.gmra.mrb[0].mxu0 %v4143
        %v4216 = vpop.f32.mrb[0].mxu0
        %v4217 = vadd.f32 0.0, %v4216
        %v4218 = vpop.f32.mrb[0].mxu0
        %4219 = vdwg.mxu0
        %v4220 = vadd.f32 %v4133, %v4212
        %v4221 = vadd.f32 %v4134, %v4217
        %v4222 = vld [vmem:[#allocation2 + $0x2a4] sm:$0xff]
        %v4223 = vld [vmem:[#allocation2 + $0x2ac] sm:$0xff]
        %v4224 = vld [vmem:[#allocation2 + $0x2b4] sm:$0xff]
        %v4225 = vld [vmem:[#allocation2 + $0x2bc] sm:$0xff]
        %v4227 = vsel %vm716, %v3830, 0
        %v4230 = vsel %vm716, %v3835, 0
        %4232 = vmatprep.subr.mxu0 0.0
        %4233 = vmatpush1.msra.mxu0 %v4222
        %4234 = vmatprep.subr.mxu0 0.0
        %4235 = vmatpush1.msra.mxu0 %v4223
        %4236 = vmatprep.subr.mxu0 0.0
        %4237 = vmatpush1.msra.mxu0 %v4224
        %4238 = vmatprep.subr.mxu0 0.0
        %4239 = vmatpush1.msra.mxu0 %v4225
        %4240 = vmatprep.subr.mxu0 0.0
        %4241 = vmatpush1.msra.mxu0 0.0
        %4242 = vmatprep.subr.mxu0 0.0
        %4243 = vmatpush1.msra.mxu0 0.0
        %4244 = vmatprep.subr.mxu0 0.0
        %4245 = vmatpush1.msra.mxu0 0.0
        %4246 = vmatprep.subr.mxu0 0.0
        %4247 = vmatpush1.msra.mxu0 0.0
        %4248 = vmatprep.subr.mxu0 0.0
        %4249 = vmatpush1.msra.mxu0 0.0
        %4250 = vmatprep.subr.mxu0 0.0
        %4251 = vmatpush1.msra.mxu0 0.0
        %4252 = vmatprep.subr.mxu0 0.0
        %4253 = vmatpush1.msra.mxu0 0.0
        %4254 = vmatprep.subr.mxu0 0.0
        %4255 = vmatpush1.msra.mxu0 0.0
        %4256 = vmatprep.subr.mxu0 0.0
        %4257 = vmatpush1.msra.mxu0 0.0
        %4258 = vmatprep.subr.mxu0 0.0
        %4259 = vmatpush1.msra.mxu0 0.0
        %4260 = vmatprep.subr.mxu0 0.0
        %4261 = vmatpush1.msra.mxu0 0.0
        %4262 = vmatprep.subr.mxu0 0.0
        %4263 = vmatpush1.msra.mxu0 0.0
        %4264 = vmatprep.subr.mxu0 0.0
        %4265 = vmatpush1.msra.mxu0 0.0
        %4266 = vmatprep.subr.mxu0 0.0
        %4267 = vmatpush1.msra.mxu0 0.0
        %4268 = vmatprep.subr.mxu0 0.0
        %4269 = vmatpush1.msra.mxu0 0.0
        %4270 = vmatprep.subr.mxu0 0.0
        %4271 = vmatpush1.msra.mxu0 0.0
        %4272 = vmatprep.subr.mxu0 0.0
        %4273 = vmatpush1.msra.mxu0 0.0
        %4274 = vmatprep.subr.mxu0 0.0
        %4275 = vmatpush1.msra.mxu0 0.0
        %4276 = vmatprep.subr.mxu0 0.0
        %4277 = vmatpush1.msra.mxu0 0.0
        %4278 = vmatprep.subr.mxu0 0.0
        %4279 = vmatpush1.msra.mxu0 0.0
        %4280 = vmatprep.subr.mxu0 0.0
        %4281 = vmatpush1.msra.mxu0 0.0
        %4282 = vmatprep.subr.mxu0 0.0
        %4283 = vmatpush1.msra.mxu0 0.0
        %4284 = vmatprep.subr.mxu0 0.0
        %4285 = vmatpush1.msra.mxu0 0.0
        %4286 = vmatprep.subr.mxu0 0.0
        %4287 = vmatpush1.msra.mxu0 0.0
        %4288 = vmatprep.subr.mxu0 0.0
        %4289 = vmatpush1.msra.mxu0 0.0
        %4290 = vmatprep.subr.mxu0 0.0
        %4291 = vmatpush1.msra.mxu0 0.0
        %4292 = vmatprep.subr.mxu0 0.0
        %4293 = vmatpush1.msra.mxu0 0.0
        %4294 = vmatprep.subr.mxu0 0.0
        %4295 = vmatpush1.msra.mxu0 0.0
        %4296 = vmatprep.mubr.f32.mxu0 0.0
        %4297 = vmatmul.mubr.f32.gmra.mrb[0].mxu0 %v4227
        %v4298 = vpop.f32.mrb[0].mxu0
        %v4299 = vadd.f32 0.0, %v4298
        %v4300 = vpop.f32.mrb[0].mxu0
        %4301 = vmatprep.mubr.f32.mxu0 0.0
        %4302 = vmatmul.mubr.f32.gmra.mrb[0].mxu0 %v4230
        %v4303 = vpop.f32.mrb[0].mxu0
        %v4304 = vadd.f32 0.0, %v4303
        %v4305 = vpop.f32.mrb[0].mxu0
        %4306 = vdwg.mxu0
        %v4307 = vadd.f32 %v4220, %v4299
        %v4308 = vadd.f32 %v4221, %v4304
        %v4309 = vld [vmem:[#allocation2 + $0x2d8] sm:$0xff]
        %v4310 = vld [vmem:[#allocation2 + $0x2e0] sm:$0xff]
        %v4311 = vld [vmem:[#allocation2 + $0x2e8] sm:$0xff]
        %v4312 = vld [vmem:[#allocation2 + $0x2f0] sm:$0xff]
        %v4314 = vsel %vm716, %v3840, 0
        %v4317 = vsel %vm716, %v3845, 0
        %4319 = vmatprep.subr.mxu0 0.0
        %4320 = vmatpush1.msra.mxu0 %v4309
        %4321 = vmatprep.subr.mxu0 0.0
        %4322 = vmatpush1.msra.mxu0 %v4310
        %4323 = vmatprep.subr.mxu0 0.0
        %4324 = vmatpush1.msra.mxu0 %v4311
        %4325 = vmatprep.subr.mxu0 0.0
        %4326 = vmatpush1.msra.mxu0 %v4312
        %4327 = vmatprep.subr.mxu0 0.0
        %4328 = vmatpush1.msra.mxu0 0.0
        %4329 = vmatprep.subr.mxu0 0.0
        %4330 = vmatpush1.msra.mxu0 0.0
        %4331 = vmatprep.subr.mxu0 0.0
        %4332 = vmatpush1.msra.mxu0 0.0
        %4333 = vmatprep.subr.mxu0 0.0
        %4334 = vmatpush1.msra.mxu0 0.0
        %4335 = vmatprep.subr.mxu0 0.0
        %4336 = vmatpush1.msra.mxu0 0.0
        %4337 = vmatprep.subr.mxu0 0.0
        %4338 = vmatpush1.msra.mxu0 0.0
        %4339 = vmatprep.subr.mxu0 0.0
        %4340 = vmatpush1.msra.mxu0 0.0
        %4341 = vmatprep.subr.mxu0 0.0
        %4342 = vmatpush1.msra.mxu0 0.0
        %4343 = vmatprep.subr.mxu0 0.0
        %4344 = vmatpush1.msra.mxu0 0.0
        %4345 = vmatprep.subr.mxu0 0.0
        %4346 = vmatpush1.msra.mxu0 0.0
        %4347 = vmatprep.subr.mxu0 0.0
        %4348 = vmatpush1.msra.mxu0 0.0
        %4349 = vmatprep.subr.mxu0 0.0
        %4350 = vmatpush1.msra.mxu0 0.0
        %4351 = vmatprep.subr.mxu0 0.0
        %4352 = vmatpush1.msra.mxu0 0.0
        %4353 = vmatprep.subr.mxu0 0.0
        %4354 = vmatpush1.msra.mxu0 0.0
        %4355 = vmatprep.subr.mxu0 0.0
        %4356 = vmatpush1.msra.mxu0 0.0
        %4357 = vmatprep.subr.mxu0 0.0
        %4358 = vmatpush1.msra.mxu0 0.0
        %4359 = vmatprep.subr.mxu0 0.0
        %4360 = vmatpush1.msra.mxu0 0.0
        %4361 = vmatprep.subr.mxu0 0.0
        %4362 = vmatpush1.msra.mxu0 0.0
        %4363 = vmatprep.subr.mxu0 0.0
        %4364 = vmatpush1.msra.mxu0 0.0
        %4365 = vmatprep.subr.mxu0 0.0
        %4366 = vmatpush1.msra.mxu0 0.0
        %4367 = vmatprep.subr.mxu0 0.0
        %4368 = vmatpush1.msra.mxu0 0.0
        %4369 = vmatprep.subr.mxu0 0.0
        %4370 = vmatpush1.msra.mxu0 0.0
        %4371 = vmatprep.subr.mxu0 0.0
        %4372 = vmatpush1.msra.mxu0 0.0
        %4373 = vmatprep.subr.mxu0 0.0
        %4374 = vmatpush1.msra.mxu0 0.0
        %4375 = vmatprep.subr.mxu0 0.0
        %4376 = vmatpush1.msra.mxu0 0.0
        %4377 = vmatprep.subr.mxu0 0.0
        %4378 = vmatpush1.msra.mxu0 0.0
        %4379 = vmatprep.subr.mxu0 0.0
        %4380 = vmatpush1.msra.mxu0 0.0
        %4381 = vmatprep.subr.mxu0 0.0
        %4382 = vmatpush1.msra.mxu0 0.0
        %4383 = vmatprep.mubr.f32.mxu0 0.0
        %4384 = vmatmul.mubr.f32.gmra.mrb[0].mxu0 %v4314
        %v4385 = vpop.f32.mrb[0].mxu0
        %v4386 = vadd.f32 0.0, %v4385
        %v4387 = vpop.f32.mrb[0].mxu0
        %4388 = vmatprep.mubr.f32.mxu0 0.0
        %4389 = vmatmul.mubr.f32.gmra.mrb[0].mxu0 %v4317
        %v4390 = vpop.f32.mrb[0].mxu0
        %v4391 = vadd.f32 0.0, %v4390
        %v4392 = vpop.f32.mrb[0].mxu0
        %4393 = vdwg.mxu0
        %v4394 = vadd.f32 %v4307, %v4386
        %v4395 = vadd.f32 %v4308, %v4391
        %v4396 = vld [vmem:[#allocation2 + $0x30c] sm:$0xff]
        %v4397 = vld [vmem:[#allocation2 + $0x314] sm:$0xff]
        %v4398 = vld [vmem:[#allocation2 + $0x31c] sm:$0xff]
        %v4399 = vld [vmem:[#allocation2 + $0x324] sm:$0xff]
        %v4401 = vsel %vm716, %v3850, 0
        %v4404 = vsel %vm716, %v3855, 0
        %4406 = vmatprep.subr.mxu0 0.0
        %4407 = vmatpush1.msra.mxu0 %v4396
        %4408 = vmatprep.subr.mxu0 0.0
        %4409 = vmatpush1.msra.mxu0 %v4397
        %4410 = vmatprep.subr.mxu0 0.0
        %4411 = vmatpush1.msra.mxu0 %v4398
        %4412 = vmatprep.subr.mxu0 0.0
        %4413 = vmatpush1.msra.mxu0 %v4399
        %4414 = vmatprep.subr.mxu0 0.0
        %4415 = vmatpush1.msra.mxu0 0.0
        %4416 = vmatprep.subr.mxu0 0.0
        %4417 = vmatpush1.msra.mxu0 0.0
        %4418 = vmatprep.subr.mxu0 0.0
        %4419 = vmatpush1.msra.mxu0 0.0
        %4420 = vmatprep.subr.mxu0 0.0
        %4421 = vmatpush1.msra.mxu0 0.0
        %4422 = vmatprep.subr.mxu0 0.0
        %4423 = vmatpush1.msra.mxu0 0.0
        %4424 = vmatprep.subr.mxu0 0.0
        %4425 = vmatpush1.msra.mxu0 0.0
        %4426 = vmatprep.subr.mxu0 0.0
        %4427 = vmatpush1.msra.mxu0 0.0
        %4428 = vmatprep.subr.mxu0 0.0
        %4429 = vmatpush1.msra.mxu0 0.0
        %4430 = vmatprep.subr.mxu0 0.0
        %4431 = vmatpush1.msra.mxu0 0.0
        %4432 = vmatprep.subr.mxu0 0.0
        %4433 = vmatpush1.msra.mxu0 0.0
        %4434 = vmatprep.subr.mxu0 0.0
        %4435 = vmatpush1.msra.mxu0 0.0
        %4436 = vmatprep.subr.mxu0 0.0
        %4437 = vmatpush1.msra.mxu0 0.0
        %4438 = vmatprep.subr.mxu0 0.0
        %4439 = vmatpush1.msra.mxu0 0.0
        %4440 = vmatprep.subr.mxu0 0.0
        %4441 = vmatpush1.msra.mxu0 0.0
        %4442 = vmatprep.subr.mxu0 0.0
        %4443 = vmatpush1.msra.mxu0 0.0
        %4444 = vmatprep.subr.mxu0 0.0
        %4445 = vmatpush1.msra.mxu0 0.0
        %4446 = vmatprep.subr.mxu0 0.0
        %4447 = vmatpush1.msra.mxu0 0.0
        %4448 = vmatprep.subr.mxu0 0.0
        %4449 = vmatpush1.msra.mxu0 0.0
        %4450 = vmatprep.subr.mxu0 0.0
        %4451 = vmatpush1.msra.mxu0 0.0
        %4452 = vmatprep.subr.mxu0 0.0
        %4453 = vmatpush1.msra.mxu0 0.0
        %4454 = vmatprep.subr.mxu0 0.0
        %4455 = vmatpush1.msra.mxu0 0.0
        %4456 = vmatprep.subr.mxu0 0.0
        %4457 = vmatpush1.msra.mxu0 0.0
        %4458 = vmatprep.subr.mxu0 0.0
        %4459 = vmatpush1.msra.mxu0 0.0
        %4460 = vmatprep.subr.mxu0 0.0
        %4461 = vmatpush1.msra.mxu0 0.0
        %4462 = vmatprep.subr.mxu0 0.0
        %4463 = vmatpush1.msra.mxu0 0.0
        %4464 = vmatprep.subr.mxu0 0.0
        %4465 = vmatpush1.msra.mxu0 0.0
        %4466 = vmatprep.subr.mxu0 0.0
        %4467 = vmatpush1.msra.mxu0 0.0
        %4468 = vmatprep.subr.mxu0 0.0
        %4469 = vmatpush1.msra.mxu0 0.0
        %4470 = vmatprep.mubr.f32.mxu0 0.0
        %4471 = vmatmul.mubr.f32.gmra.mrb[0].mxu0 %v4401
        %v4472 = vpop.f32.mrb[0].mxu0
        %v4473 = vadd.f32 0.0, %v4472
        %v4474 = vpop.f32.mrb[0].mxu0
        %4475 = vmatprep.mubr.f32.mxu0 0.0
        %4476 = vmatmul.mubr.f32.gmra.mrb[0].mxu0 %v4404
        %v4477 = vpop.f32.mrb[0].mxu0
        %v4478 = vadd.f32 0.0, %v4477
        %v4479 = vpop.f32.mrb[0].mxu0
        %4480 = vdwg.mxu0
        %v4481 = vadd.f32 %v4394, %v4473
        %v4482 = vadd.f32 %v4395, %v4478
        %v4483 = vld [vmem:[#allocation2 + $0x340] sm:$0xff]
        %v4484 = vld [vmem:[#allocation2 + $0x348] sm:$0xff]
        %v4485 = vld [vmem:[#allocation2 + $0x350] sm:$0xff]
        %v4486 = vld [vmem:[#allocation2 + $0x358] sm:$0xff]
        %v4488 = vsel %vm716, %v3860, 0
        %v4491 = vsel %vm716, %v3865, 0
        %4493 = vmatprep.subr.mxu0 0.0
        %4494 = vmatpush1.msra.mxu0 %v4483
        %4495 = vmatprep.subr.mxu0 0.0
        %4496 = vmatpush1.msra.mxu0 %v4484
        %4497 = vmatprep.subr.mxu0 0.0
        %4498 = vmatpush1.msra.mxu0 %v4485
        %4499 = vmatprep.subr.mxu0 0.0
        %4500 = vmatpush1.msra.mxu0 %v4486
        %4501 = vmatprep.subr.mxu0 0.0
        %4502 = vmatpush1.msra.mxu0 0.0
        %4503 = vmatprep.subr.mxu0 0.0
        %4504 = vmatpush1.msra.mxu0 0.0
        %4505 = vmatprep.subr.mxu0 0.0
        %4506 = vmatpush1.msra.mxu0 0.0
        %4507 = vmatprep.subr.mxu0 0.0
        %4508 = vmatpush1.msra.mxu0 0.0
        %4509 = vmatprep.subr.mxu0 0.0
        %4510 = vmatpush1.msra.mxu0 0.0
        %4511 = vmatprep.subr.mxu0 0.0
        %4512 = vmatpush1.msra.mxu0 0.0
        %4513 = vmatprep.subr.mxu0 0.0
        %4514 = vmatpush1.msra.mxu0 0.0
        %4515 = vmatprep.subr.mxu0 0.0
        %4516 = vmatpush1.msra.mxu0 0.0
        %4517 = vmatprep.subr.mxu0 0.0
        %4518 = vmatpush1.msra.mxu0 0.0
        %4519 = vmatprep.subr.mxu0 0.0
        %4520 = vmatpush1.msra.mxu0 0.0
        %4521 = vmatprep.subr.mxu0 0.0
        %4522 = vmatpush1.msra.mxu0 0.0
        %4523 = vmatprep.subr.mxu0 0.0
        %4524 = vmatpush1.msra.mxu0 0.0
        %4525 = vmatprep.subr.mxu0 0.0
        %4526 = vmatpush1.msra.mxu0 0.0
        %4527 = vmatprep.subr.mxu0 0.0
        %4528 = vmatpush1.msra.mxu0 0.0
        %4529 = vmatprep.subr.mxu0 0.0
        %4530 = vmatpush1.msra.mxu0 0.0
        %4531 = vmatprep.subr.mxu0 0.0
        %4532 = vmatpush1.msra.mxu0 0.0
        %4533 = vmatprep.subr.mxu0 0.0
        %4534 = vmatpush1.msra.mxu0 0.0
        %4535 = vmatprep.subr.mxu0 0.0
        %4536 = vmatpush1.msra.mxu0 0.0
        %4537 = vmatprep.subr.mxu0 0.0
        %4538 = vmatpush1.msra.mxu0 0.0
        %4539 = vmatprep.subr.mxu0 0.0
        %4540 = vmatpush1.msra.mxu0 0.0
        %4541 = vmatprep.subr.mxu0 0.0
        %4542 = vmatpush1.msra.mxu0 0.0
        %4543 = vmatprep.subr.mxu0 0.0
        %4544 = vmatpush1.msra.mxu0 0.0
        %4545 = vmatprep.subr.mxu0 0.0
        %4546 = vmatpush1.msra.mxu0 0.0
        %4547 = vmatprep.subr.mxu0 0.0
        %4548 = vmatpush1.msra.mxu0 0.0
        %4549 = vmatprep.subr.mxu0 0.0
        %4550 = vmatpush1.msra.mxu0 0.0
        %4551 = vmatprep.subr.mxu0 0.0
        %4552 = vmatpush1.msra.mxu0 0.0
        %4553 = vmatprep.subr.mxu0 0.0
        %4554 = vmatpush1.msra.mxu0 0.0
        %4555 = vmatprep.subr.mxu0 0.0
        %4556 = vmatpush1.msra.mxu0 0.0
        %4557 = vmatprep.mubr.f32.mxu0 0.0
        %4558 = vmatmul.mubr.f32.gmra.mrb[0].mxu0 %v4488
        %v4559 = vpop.f32.mrb[0].mxu0
        %v4560 = vadd.f32 0.0, %v4559
        %v4561 = vpop.f32.mrb[0].mxu0
        %4562 = vmatprep.mubr.f32.mxu0 0.0
        %4563 = vmatmul.mubr.f32.gmra.mrb[0].mxu0 %v4491
        %v4564 = vpop.f32.mrb[0].mxu0
        %v4565 = vadd.f32 0.0, %v4564
        %v4566 = vpop.f32.mrb[0].mxu0
        %4567 = vdwg.mxu0
        %v4568 = vadd.f32 %v4481, %v4560
        %v4569 = vadd.f32 %v4482, %v4565
        %v4570 = vld [vmem:[#allocation2 + $0x374] sm:$0xff]
        %v4571 = vld [vmem:[#allocation2 + $0x37c] sm:$0xff]
        %v4572 = vld [vmem:[#allocation2 + $0x384] sm:$0xff]
        %v4573 = vld [vmem:[#allocation2 + $0x38c] sm:$0xff]
        %v4575 = vsel %vm716, %v3870, 0
        %v4578 = vsel %vm716, %v3875, 0
        %4580 = vmatprep.subr.mxu0 0.0
        %4581 = vmatpush1.msra.mxu0 %v4570
        %4582 = vmatprep.subr.mxu0 0.0
        %4583 = vmatpush1.msra.mxu0 %v4571
        %4584 = vmatprep.subr.mxu0 0.0
        %4585 = vmatpush1.msra.mxu0 %v4572
        %4586 = vmatprep.subr.mxu0 0.0
        %4587 = vmatpush1.msra.mxu0 %v4573
        %4588 = vmatprep.subr.mxu0 0.0
        %4589 = vmatpush1.msra.mxu0 0.0
        %4590 = vmatprep.subr.mxu0 0.0
        %4591 = vmatpush1.msra.mxu0 0.0
        %4592 = vmatprep.subr.mxu0 0.0
        %4593 = vmatpush1.msra.mxu0 0.0
        %4594 = vmatprep.subr.mxu0 0.0
        %4595 = vmatpush1.msra.mxu0 0.0
        %4596 = vmatprep.subr.mxu0 0.0
        %4597 = vmatpush1.msra.mxu0 0.0
        %4598 = vmatprep.subr.mxu0 0.0
        %4599 = vmatpush1.msra.mxu0 0.0
        %4600 = vmatprep.subr.mxu0 0.0
        %4601 = vmatpush1.msra.mxu0 0.0
        %4602 = vmatprep.subr.mxu0 0.0
        %4603 = vmatpush1.msra.mxu0 0.0
        %4604 = vmatprep.subr.mxu0 0.0
        %4605 = vmatpush1.msra.mxu0 0.0
        %4606 = vmatprep.subr.mxu0 0.0
        %4607 = vmatpush1.msra.mxu0 0.0
        %4608 = vmatprep.subr.mxu0 0.0
        %4609 = vmatpush1.msra.mxu0 0.0
        %4610 = vmatprep.subr.mxu0 0.0
        %4611 = vmatpush1.msra.mxu0 0.0
        %4612 = vmatprep.subr.mxu0 0.0
        %4613 = vmatpush1.msra.mxu0 0.0
        %4614 = vmatprep.subr.mxu0 0.0
        %4615 = vmatpush1.msra.mxu0 0.0
        %4616 = vmatprep.subr.mxu0 0.0
        %4617 = vmatpush1.msra.mxu0 0.0
        %4618 = vmatprep.subr.mxu0 0.0
        %4619 = vmatpush1.msra.mxu0 0.0
        %4620 = vmatprep.subr.mxu0 0.0
        %4621 = vmatpush1.msra.mxu0 0.0
        %4622 = vmatprep.subr.mxu0 0.0
        %4623 = vmatpush1.msra.mxu0 0.0
        %4624 = vmatprep.subr.mxu0 0.0
        %4625 = vmatpush1.msra.mxu0 0.0
        %4626 = vmatprep.subr.mxu0 0.0
        %4627 = vmatpush1.msra.mxu0 0.0
        %4628 = vmatprep.subr.mxu0 0.0
        %4629 = vmatpush1.msra.mxu0 0.0
        %4630 = vmatprep.subr.mxu0 0.0
        %4631 = vmatpush1.msra.mxu0 0.0
        %4632 = vmatprep.subr.mxu0 0.0
        %4633 = vmatpush1.msra.mxu0 0.0
        %4634 = vmatprep.subr.mxu0 0.0
        %4635 = vmatpush1.msra.mxu0 0.0
        %4636 = vmatprep.subr.mxu0 0.0
        %4637 = vmatpush1.msra.mxu0 0.0
        %4638 = vmatprep.subr.mxu0 0.0
        %4639 = vmatpush1.msra.mxu0 0.0
        %4640 = vmatprep.subr.mxu0 0.0
        %4641 = vmatpush1.msra.mxu0 0.0
        %4642 = vmatprep.subr.mxu0 0.0
        %4643 = vmatpush1.msra.mxu0 0.0
        %4644 = vmatprep.mubr.f32.mxu0 0.0
        %4645 = vmatmul.mubr.f32.gmra.mrb[0].mxu0 %v4575
        %v4646 = vpop.f32.mrb[0].mxu0
        %v4647 = vadd.f32 0.0, %v4646
        %v4648 = vpop.f32.mrb[0].mxu0
        %4649 = vmatprep.mubr.f32.mxu0 0.0
        %4650 = vmatmul.mubr.f32.gmra.mrb[0].mxu0 %v4578
        %v4651 = vpop.f32.mrb[0].mxu0
        %v4652 = vadd.f32 0.0, %v4651
        %v4653 = vpop.f32.mrb[0].mxu0
        %4654 = vdwg.mxu0
        %v4655 = vadd.f32 %v4568, %v4647
        %v4656 = vadd.f32 %v4569, %v4652
        %v4657 = vadd.f32 %v4655, %v2769
        %v4658 = vadd.f32 %v4656, %v2774
        %v4659 = vmul.f32 %v4657, 0.33333334
        %v4660 = vmul.f32 %v4658, 0.33333334
        %v4661 = vadd.f32 %v2780, %v4659
        %v4662 = vadd.f32 %v2781, %v4660
        %v4663 = vld [vmem:[%s2 + $0x240] sm:$0xff]
        %v4664 = vld [vmem:[%s2 + $0x248] sm:$0xff]
        %v4665 = vld [vmem:[%s2 + $0x250] sm:$0xff]
        %v4666 = vld [vmem:[%s2 + $0x258] sm:$0xff]
        %v4667 = vld [vmem:[%s2 + $0x260] sm:$0xff]
        %v4668 = vld [vmem:[%s2 + $0x268] sm:$0xff]
        %v4669 = vld [vmem:[%s2 + $0x270] sm:$0xff]
        %v4670 = vld [vmem:[%s2 + $0x278] sm:$0xff]
        %4671 = vmatprep.subr.mxu0 0.0
        %4672 = vmatpush1.msra.mxu0 %v4667
        %4673 = vmatprep.subr.mxu0 0.0
        %4674 = vmatpush1.msra.mxu0 %v4668
        %4675 = vmatprep.subr.mxu0 0.0
        %4676 = vmatpush1.msra.mxu0 %v4669
        %4677 = vmatprep.subr.mxu0 0.0
        %4678 = vmatpush1.msra.mxu0 %v4670
        %4679 = vmatprep.subr.mxu0 0.0
        %4680 = vmatpush1.msra.mxu0 0.0
        %4681 = vmatprep.subr.mxu0 0.0
        %4682 = vmatpush1.msra.mxu0 0.0
        %4683 = vmatprep.subr.mxu0 0.0
        %4684 = vmatpush1.msra.mxu0 0.0
        %4685 = vmatprep.subr.mxu0 0.0
        %4686 = vmatpush1.msra.mxu0 0.0
        %4687 = vmatprep.subr.mxu0 0.0
        %4688 = vmatpush1.msra.mxu0 0.0
        %4689 = vmatprep.subr.mxu0 0.0
        %4690 = vmatpush1.msra.mxu0 0.0
        %4691 = vmatprep.subr.mxu0 0.0
        %4692 = vmatpush1.msra.mxu0 0.0
        %4693 = vmatprep.subr.mxu0 0.0
        %4694 = vmatpush1.msra.mxu0 0.0
        %4695 = vmatprep.subr.mxu0 0.0
        %4696 = vmatpush1.msra.mxu0 0.0
        %4697 = vmatprep.subr.mxu0 0.0
        %4698 = vmatpush1.msra.mxu0 0.0
        %4699 = vmatprep.subr.mxu0 0.0
        %4700 = vmatpush1.msra.mxu0 0.0
        %4701 = vmatprep.subr.mxu0 0.0
        %4702 = vmatpush1.msra.mxu0 0.0
        %4703 = vmatprep.subr.mxu0 0.0
        %4704 = vmatpush1.msra.mxu0 0.0
        %4705 = vmatprep.subr.mxu0 0.0
        %4706 = vmatpush1.msra.mxu0 0.0
        %4707 = vmatprep.subr.mxu0 0.0
        %4708 = vmatpush1.msra.mxu0 0.0
        %4709 = vmatprep.subr.mxu0 0.0
        %4710 = vmatpush1.msra.mxu0 0.0
        %4711 = vmatprep.subr.mxu0 0.0
        %4712 = vmatpush1.msra.mxu0 0.0
        %4713 = vmatprep.subr.mxu0 0.0
        %4714 = vmatpush1.msra.mxu0 0.0
        %4715 = vmatprep.subr.mxu0 0.0
        %4716 = vmatpush1.msra.mxu0 0.0
        %4717 = vmatprep.subr.mxu0 0.0
        %4718 = vmatpush1.msra.mxu0 0.0
        %4719 = vmatprep.subr.mxu0 0.0
        %4720 = vmatpush1.msra.mxu0 0.0
        %4721 = vmatprep.subr.mxu0 0.0
        %4722 = vmatpush1.msra.mxu0 0.0
        %4723 = vmatprep.subr.mxu0 0.0
        %4724 = vmatpush1.msra.mxu0 0.0
        %4725 = vmatprep.subr.mxu0 0.0
        %4726 = vmatpush1.msra.mxu0 0.0
        %4727 = vmatprep.subr.mxu0 0.0
        %4728 = vmatpush1.msra.mxu0 0.0
        %4729 = vmatprep.subr.mxu0 0.0
        %4730 = vmatpush1.msra.mxu0 0.0
        %4731 = vmatprep.subr.mxu0 0.0
        %4732 = vmatpush1.msra.mxu0 0.0
        %4733 = vmatprep.subr.mxu0 0.0
        %4734 = vmatpush1.msra.mxu0 0.0
        %4735 = vmatprep.mubr.f32.mxu0 0.0
        %4736 = vmatmul.mubr.f32.gmra.mrb[0].mxu0 %v718
        %v4737 = vpop.f32.mrb[0].mxu0
        %v4738 = vadd.f32 0.0, %v4737
        %v4739 = vpop.f32.mrb[0].mxu0
        %4740 = vmatprep.mubr.f32.mxu0 0.0
        %4741 = vmatmul.mubr.f32.gmra.mrb[0].mxu0 %v721
        %v4742 = vpop.f32.mrb[0].mxu0
        %v4743 = vadd.f32 0.0, %v4742
        %v4744 = vpop.f32.mrb[0].mxu0
        %4745 = vmatprep.mubr.f32.mxu0 0.0
        %4746 = vmatmul.mubr.f32.gmra.mrb[0].mxu0 %v724
        %v4747 = vpop.f32.mrb[0].mxu0
        %v4748 = vadd.f32 0.0, %v4747
        %v4749 = vpop.f32.mrb[0].mxu0
        %4750 = vmatprep.mubr.f32.mxu0 0.0
        %4751 = vmatmul.mubr.f32.gmra.mrb[0].mxu0 %v727
        %v4752 = vpop.f32.mrb[0].mxu0
        %v4753 = vadd.f32 0.0, %v4752
        %v4754 = vpop.f32.mrb[0].mxu0
        %4755 = vdwg.mxu0
        %4756 = vmatprep.subr.mxu0 0.0
        %4757 = vmatpush1.msra.mxu0 %v4663
        %4758 = vmatprep.subr.mxu0 0.0
        %4759 = vmatpush1.msra.mxu0 %v4664
        %4760 = vmatprep.subr.mxu0 0.0
        %4761 = vmatpush1.msra.mxu0 %v4665
        %4762 = vmatprep.subr.mxu0 0.0
        %4763 = vmatpush1.msra.mxu0 %v4666
        %4764 = vmatprep.subr.mxu0 0.0
        %4765 = vmatpush1.msra.mxu0 0.0
        %4766 = vmatprep.subr.mxu0 0.0
        %4767 = vmatpush1.msra.mxu0 0.0
        %4768 = vmatprep.subr.mxu0 0.0
        %4769 = vmatpush1.msra.mxu0 0.0
        %4770 = vmatprep.subr.mxu0 0.0
        %4771 = vmatpush1.msra.mxu0 0.0
        %4772 = vmatprep.subr.mxu0 0.0
        %4773 = vmatpush1.msra.mxu0 0.0
        %4774 = vmatprep.subr.mxu0 0.0
        %4775 = vmatpush1.msra.mxu0 0.0
        %4776 = vmatprep.subr.mxu0 0.0
        %4777 = vmatpush1.msra.mxu0 0.0
        %4778 = vmatprep.subr.mxu0 0.0
        %4779 = vmatpush1.msra.mxu0 0.0
        %4780 = vmatprep.subr.mxu0 0.0
        %4781 = vmatpush1.msra.mxu0 0.0
        %4782 = vmatprep.subr.mxu0 0.0
        %4783 = vmatpush1.msra.mxu0 0.0
        %4784 = vmatprep.subr.mxu0 0.0
        %4785 = vmatpush1.msra.mxu0 0.0
        %4786 = vmatprep.subr.mxu0 0.0
        %4787 = vmatpush1.msra.mxu0 0.0
        %4788 = vmatprep.subr.mxu0 0.0
        %4789 = vmatpush1.msra.mxu0 0.0
        %4790 = vmatprep.subr.mxu0 0.0
        %4791 = vmatpush1.msra.mxu0 0.0
        %4792 = vmatprep.subr.mxu0 0.0
        %4793 = vmatpush1.msra.mxu0 0.0
        %4794 = vmatprep.subr.mxu0 0.0
        %4795 = vmatpush1.msra.mxu0 0.0
        %4796 = vmatprep.subr.mxu0 0.0
        %4797 = vmatpush1.msra.mxu0 0.0
        %4798 = vmatprep.subr.mxu0 0.0
        %4799 = vmatpush1.msra.mxu0 0.0
        %4800 = vmatprep.subr.mxu0 0.0
        %4801 = vmatpush1.msra.mxu0 0.0
        %4802 = vmatprep.subr.mxu0 0.0
        %4803 = vmatpush1.msra.mxu0 0.0
        %4804 = vmatprep.subr.mxu0 0.0
        %4805 = vmatpush1.msra.mxu0 0.0
        %4806 = vmatprep.subr.mxu0 0.0
        %4807 = vmatpush1.msra.mxu0 0.0
        %4808 = vmatprep.subr.mxu0 0.0
        %4809 = vmatpush1.msra.mxu0 0.0
        %4810 = vmatprep.subr.mxu0 0.0
        %4811 = vmatpush1.msra.mxu0 0.0
        %4812 = vmatprep.subr.mxu0 0.0
        %4813 = vmatpush1.msra.mxu0 0.0
        %4814 = vmatprep.subr.mxu0 0.0
        %4815 = vmatpush1.msra.mxu0 0.0
        %4816 = vmatprep.subr.mxu0 0.0
        %4817 = vmatpush1.msra.mxu0 0.0
        %4818 = vmatprep.subr.mxu0 0.0
        %4819 = vmatpush1.msra.mxu0 0.0
        %4820 = vmatprep.mubr.f32.mxu0 0.0
        %4821 = vmatmul.mubr.f32.gmra.mrb[0].mxu0 %v815
        %v4822 = vpop.f32.mrb[0].mxu0
        %v4823 = vadd.f32 %v4738, %v4822
        %v4824 = vpop.f32.mrb[0].mxu0
        %4825 = vmatprep.mubr.f32.mxu0 0.0
        %4826 = vmatmul.mubr.f32.gmra.mrb[0].mxu0 %v818
        %v4827 = vpop.f32.mrb[0].mxu0
        %v4828 = vadd.f32 %v4743, %v4827
        %v4829 = vpop.f32.mrb[0].mxu0
        %4830 = vmatprep.mubr.f32.mxu0 0.0
        %4831 = vmatmul.mubr.f32.gmra.mrb[0].mxu0 %v821
        %v4832 = vpop.f32.mrb[0].mxu0
        %v4833 = vadd.f32 %v4748, %v4832
        %v4834 = vpop.f32.mrb[0].mxu0
        %4835 = vmatprep.mubr.f32.mxu0 0.0
        %4836 = vmatmul.mubr.f32.gmra.mrb[0].mxu0 %v824
        %v4837 = vpop.f32.mrb[0].mxu0
        %v4838 = vadd.f32 %v4753, %v4837
        %v4839 = vpop.f32.mrb[0].mxu0
        %4840 = vdwg.mxu0
        %v4841 = vld [vmem:[%s2 + $0x280] sm:$0xff]
        %v4842 = vld [vmem:[%s2 + $0x288] sm:$0xff]
        %v4843 = vld [vmem:[%s2 + $0x290] sm:$0xff]
        %v4844 = vld [vmem:[%s2 + $0x298] sm:$0xff]
        %4845 = vmatprep.subr.mxu0 0.0
        %4846 = vmatpush1.msra.mxu0 %v4841
        %4847 = vmatprep.subr.mxu0 0.0
        %4848 = vmatpush1.msra.mxu0 %v4842
        %4849 = vmatprep.subr.mxu0 0.0
        %4850 = vmatpush1.msra.mxu0 %v4843
        %4851 = vmatprep.subr.mxu0 0.0
        %4852 = vmatpush1.msra.mxu0 %v4844
        %4853 = vmatprep.subr.mxu0 0.0
        %4854 = vmatpush1.msra.mxu0 0.0
        %4855 = vmatprep.subr.mxu0 0.0
        %4856 = vmatpush1.msra.mxu0 0.0
        %4857 = vmatprep.subr.mxu0 0.0
        %4858 = vmatpush1.msra.mxu0 0.0
        %4859 = vmatprep.subr.mxu0 0.0
        %4860 = vmatpush1.msra.mxu0 0.0
        %4861 = vmatprep.subr.mxu0 0.0
        %4862 = vmatpush1.msra.mxu0 0.0
        %4863 = vmatprep.subr.mxu0 0.0
        %4864 = vmatpush1.msra.mxu0 0.0
        %4865 = vmatprep.subr.mxu0 0.0
        %4866 = vmatpush1.msra.mxu0 0.0
        %4867 = vmatprep.subr.mxu0 0.0
        %4868 = vmatpush1.msra.mxu0 0.0
        %4869 = vmatprep.subr.mxu0 0.0
        %4870 = vmatpush1.msra.mxu0 0.0
        %4871 = vmatprep.subr.mxu0 0.0
        %4872 = vmatpush1.msra.mxu0 0.0
        %4873 = vmatprep.subr.mxu0 0.0
        %4874 = vmatpush1.msra.mxu0 0.0
        %4875 = vmatprep.subr.mxu0 0.0
        %4876 = vmatpush1.msra.mxu0 0.0
        %4877 = vmatprep.subr.mxu0 0.0
        %4878 = vmatpush1.msra.mxu0 0.0
        %4879 = vmatprep.subr.mxu0 0.0
        %4880 = vmatpush1.msra.mxu0 0.0
        %4881 = vmatprep.subr.mxu0 0.0
        %4882 = vmatpush1.msra.mxu0 0.0
        %4883 = vmatprep.subr.mxu0 0.0
        %4884 = vmatpush1.msra.mxu0 0.0
        %4885 = vmatprep.subr.mxu0 0.0
        %4886 = vmatpush1.msra.mxu0 0.0
        %4887 = vmatprep.subr.mxu0 0.0
        %4888 = vmatpush1.msra.mxu0 0.0
        %4889 = vmatprep.subr.mxu0 0.0
        %4890 = vmatpush1.msra.mxu0 0.0
        %4891 = vmatprep.subr.mxu0 0.0
        %4892 = vmatpush1.msra.mxu0 0.0
        %4893 = vmatprep.subr.mxu0 0.0
        %4894 = vmatpush1.msra.mxu0 0.0
        %4895 = vmatprep.subr.mxu0 0.0
        %4896 = vmatpush1.msra.mxu0 0.0
        %4897 = vmatprep.subr.mxu0 0.0
        %4898 = vmatpush1.msra.mxu0 0.0
        %4899 = vmatprep.subr.mxu0 0.0
        %4900 = vmatpush1.msra.mxu0 0.0
        %4901 = vmatprep.subr.mxu0 0.0
        %4902 = vmatpush1.msra.mxu0 0.0
        %4903 = vmatprep.subr.mxu0 0.0
        %4904 = vmatpush1.msra.mxu0 0.0
        %4905 = vmatprep.subr.mxu0 0.0
        %4906 = vmatpush1.msra.mxu0 0.0
        %4907 = vmatprep.subr.mxu0 0.0
        %4908 = vmatpush1.msra.mxu0 0.0
        %4909 = vmatprep.mubr.f32.mxu0 0.0
        %4910 = vmatmul.mubr.f32.gmra.mrb[0].mxu0 %v916
        %v4911 = vpop.f32.mrb[0].mxu0
        %v4912 = vadd.f32 0.0, %v4911
        %v4913 = vpop.f32.mrb[0].mxu0
        %4914 = vmatprep.mubr.f32.mxu0 0.0
        %4915 = vmatmul.mubr.f32.gmra.mrb[0].mxu0 %v919
        %v4916 = vpop.f32.mrb[0].mxu0
        %v4917 = vadd.f32 0.0, %v4916
        %v4918 = vpop.f32.mrb[0].mxu0
        %4919 = vmatprep.mubr.f32.mxu0 0.0
        %4920 = vmatmul.mubr.f32.gmra.mrb[0].mxu0 %v922
        %v4921 = vpop.f32.mrb[0].mxu0
        %v4922 = vadd.f32 0.0, %v4921
        %v4923 = vpop.f32.mrb[0].mxu0
        %4924 = vmatprep.mubr.f32.mxu0 0.0
        %4925 = vmatmul.mubr.f32.gmra.mrb[0].mxu0 %v925
        %v4926 = vpop.f32.mrb[0].mxu0
        %v4927 = vadd.f32 0.0, %v4926
        %v4928 = vpop.f32.mrb[0].mxu0
        %4929 = vdwg.mxu0
        %v4930 = vadd.f32 %v4823, %v4912
        %v4931 = vadd.f32 %v4828, %v4917
        %v4932 = vadd.f32 %v4833, %v4922
        %v4933 = vadd.f32 %v4838, %v4927
        %v4934 = vld [vmem:[%s2 + $0x2a0] sm:$0xff]
        %v4935 = vld [vmem:[%s2 + $0x2a8] sm:$0xff]
        %v4936 = vld [vmem:[%s2 + $0x2b0] sm:$0xff]
        %v4937 = vld [vmem:[%s2 + $0x2b8] sm:$0xff]
        %4938 = vmatprep.subr.mxu0 0.0
        %4939 = vmatpush1.msra.mxu0 %v4934
        %4940 = vmatprep.subr.mxu0 0.0
        %4941 = vmatpush1.msra.mxu0 %v4935
        %4942 = vmatprep.subr.mxu0 0.0
        %4943 = vmatpush1.msra.mxu0 %v4936
        %4944 = vmatprep.subr.mxu0 0.0
        %4945 = vmatpush1.msra.mxu0 %v4937
        %4946 = vmatprep.subr.mxu0 0.0
        %4947 = vmatpush1.msra.mxu0 0.0
        %4948 = vmatprep.subr.mxu0 0.0
        %4949 = vmatpush1.msra.mxu0 0.0
        %4950 = vmatprep.subr.mxu0 0.0
        %4951 = vmatpush1.msra.mxu0 0.0
        %4952 = vmatprep.subr.mxu0 0.0
        %4953 = vmatpush1.msra.mxu0 0.0
        %4954 = vmatprep.subr.mxu0 0.0
        %4955 = vmatpush1.msra.mxu0 0.0
        %4956 = vmatprep.subr.mxu0 0.0
        %4957 = vmatpush1.msra.mxu0 0.0
        %4958 = vmatprep.subr.mxu0 0.0
        %4959 = vmatpush1.msra.mxu0 0.0
        %4960 = vmatprep.subr.mxu0 0.0
        %4961 = vmatpush1.msra.mxu0 0.0
        %4962 = vmatprep.subr.mxu0 0.0
        %4963 = vmatpush1.msra.mxu0 0.0
        %4964 = vmatprep.subr.mxu0 0.0
        %4965 = vmatpush1.msra.mxu0 0.0
        %4966 = vmatprep.subr.mxu0 0.0
        %4967 = vmatpush1.msra.mxu0 0.0
        %4968 = vmatprep.subr.mxu0 0.0
        %4969 = vmatpush1.msra.mxu0 0.0
        %4970 = vmatprep.subr.mxu0 0.0
        %4971 = vmatpush1.msra.mxu0 0.0
        %4972 = vmatprep.subr.mxu0 0.0
        %4973 = vmatpush1.msra.mxu0 0.0
        %4974 = vmatprep.subr.mxu0 0.0
        %4975 = vmatpush1.msra.mxu0 0.0
        %4976 = vmatprep.subr.mxu0 0.0
        %4977 = vmatpush1.msra.mxu0 0.0
        %4978 = vmatprep.subr.mxu0 0.0
        %4979 = vmatpush1.msra.mxu0 0.0
        %4980 = vmatprep.subr.mxu0 0.0
        %4981 = vmatpush1.msra.mxu0 0.0
        %4982 = vmatprep.subr.mxu0 0.0
        %4983 = vmatpush1.msra.mxu0 0.0
        %4984 = vmatprep.subr.mxu0 0.0
        %4985 = vmatpush1.msra.mxu0 0.0
        %4986 = vmatprep.subr.mxu0 0.0
        %4987 = vmatpush1.msra.mxu0 0.0
        %4988 = vmatprep.subr.mxu0 0.0
        %4989 = vmatpush1.msra.mxu0 0.0
        %4990 = vmatprep.subr.mxu0 0.0
        %4991 = vmatpush1.msra.mxu0 0.0
        %4992 = vmatprep.subr.mxu0 0.0
        %4993 = vmatpush1.msra.mxu0 0.0
        %4994 = vmatprep.subr.mxu0 0.0
        %4995 = vmatpush1.msra.mxu0 0.0
        %4996 = vmatprep.subr.mxu0 0.0
        %4997 = vmatpush1.msra.mxu0 0.0
        %4998 = vmatprep.subr.mxu0 0.0
        %4999 = vmatpush1.msra.mxu0 0.0
        %5000 = vmatprep.subr.mxu0 0.0
        %5001 = vmatpush1.msra.mxu0 0.0
        %5002 = vmatprep.mubr.f32.mxu0 0.0
        %5003 = vmatmul.mubr.f32.gmra.mrb[0].mxu0 %v1021
        %v5004 = vpop.f32.mrb[0].mxu0
        %v5005 = vadd.f32 0.0, %v5004
        %v5006 = vpop.f32.mrb[0].mxu0
        %5007 = vmatprep.mubr.f32.mxu0 0.0
        %5008 = vmatmul.mubr.f32.gmra.mrb[0].mxu0 %v1024
        %v5009 = vpop.f32.mrb[0].mxu0
        %v5010 = vadd.f32 0.0, %v5009
        %v5011 = vpop.f32.mrb[0].mxu0
        %5012 = vmatprep.mubr.f32.mxu0 0.0
        %5013 = vmatmul.mubr.f32.gmra.mrb[0].mxu0 %v1027
        %v5014 = vpop.f32.mrb[0].mxu0
        %v5015 = vadd.f32 0.0, %v5014
        %v5016 = vpop.f32.mrb[0].mxu0
        %5017 = vmatprep.mubr.f32.mxu0 0.0
        %5018 = vmatmul.mubr.f32.gmra.mrb[0].mxu0 %v1030
        %v5019 = vpop.f32.mrb[0].mxu0
        %v5020 = vadd.f32 0.0, %v5019
        %v5021 = vpop.f32.mrb[0].mxu0
        %5022 = vdwg.mxu0
        %v5023 = vadd.f32 %v4930, %v5005
        %v5024 = vadd.f32 %v4931, %v5010
        %v5025 = vadd.f32 %v4932, %v5015
        %v5026 = vadd.f32 %v4933, %v5020
        %v5027 = vld [vmem:[%s2 + $0x2c0] sm:$0xff]
        %v5028 = vld [vmem:[%s2 + $0x2c8] sm:$0xff]
        %v5029 = vld [vmem:[%s2 + $0x2d0] sm:$0xff]
        %v5030 = vld [vmem:[%s2 + $0x2d8] sm:$0xff]
        %5031 = vmatprep.subr.mxu0 0.0
        %5032 = vmatpush1.msra.mxu0 %v5027
        %5033 = vmatprep.subr.mxu0 0.0
        %5034 = vmatpush1.msra.mxu0 %v5028
        %5035 = vmatprep.subr.mxu0 0.0
        %5036 = vmatpush1.msra.mxu0 %v5029
        %5037 = vmatprep.subr.mxu0 0.0
        %5038 = vmatpush1.msra.mxu0 %v5030
        %5039 = vmatprep.subr.mxu0 0.0
        %5040 = vmatpush1.msra.mxu0 0.0
        %5041 = vmatprep.subr.mxu0 0.0
        %5042 = vmatpush1.msra.mxu0 0.0
        %5043 = vmatprep.subr.mxu0 0.0
        %5044 = vmatpush1.msra.mxu0 0.0
        %5045 = vmatprep.subr.mxu0 0.0
        %5046 = vmatpush1.msra.mxu0 0.0
        %5047 = vmatprep.subr.mxu0 0.0
        %5048 = vmatpush1.msra.mxu0 0.0
        %5049 = vmatprep.subr.mxu0 0.0
        %5050 = vmatpush1.msra.mxu0 0.0
        %5051 = vmatprep.subr.mxu0 0.0
        %5052 = vmatpush1.msra.mxu0 0.0
        %5053 = vmatprep.subr.mxu0 0.0
        %5054 = vmatpush1.msra.mxu0 0.0
        %5055 = vmatprep.subr.mxu0 0.0
        %5056 = vmatpush1.msra.mxu0 0.0
        %5057 = vmatprep.subr.mxu0 0.0
        %5058 = vmatpush1.msra.mxu0 0.0
        %5059 = vmatprep.subr.mxu0 0.0
        %5060 = vmatpush1.msra.mxu0 0.0
        %5061 = vmatprep.subr.mxu0 0.0
        %5062 = vmatpush1.msra.mxu0 0.0
        %5063 = vmatprep.subr.mxu0 0.0
        %5064 = vmatpush1.msra.mxu0 0.0
        %5065 = vmatprep.subr.mxu0 0.0
        %5066 = vmatpush1.msra.mxu0 0.0
        %5067 = vmatprep.subr.mxu0 0.0
        %5068 = vmatpush1.msra.mxu0 0.0
        %5069 = vmatprep.subr.mxu0 0.0
        %5070 = vmatpush1.msra.mxu0 0.0
        %5071 = vmatprep.subr.mxu0 0.0
        %5072 = vmatpush1.msra.mxu0 0.0
        %5073 = vmatprep.subr.mxu0 0.0
        %5074 = vmatpush1.msra.mxu0 0.0
        %5075 = vmatprep.subr.mxu0 0.0
        %5076 = vmatpush1.msra.mxu0 0.0
        %5077 = vmatprep.subr.mxu0 0.0
        %5078 = vmatpush1.msra.mxu0 0.0
        %5079 = vmatprep.subr.mxu0 0.0
        %5080 = vmatpush1.msra.mxu0 0.0
        %5081 = vmatprep.subr.mxu0 0.0
        %5082 = vmatpush1.msra.mxu0 0.0
        %5083 = vmatprep.subr.mxu0 0.0
        %5084 = vmatpush1.msra.mxu0 0.0
        %5085 = vmatprep.subr.mxu0 0.0
        %5086 = vmatpush1.msra.mxu0 0.0
        %5087 = vmatprep.subr.mxu0 0.0
        %5088 = vmatpush1.msra.mxu0 0.0
        %5089 = vmatprep.subr.mxu0 0.0
        %5090 = vmatpush1.msra.mxu0 0.0
        %5091 = vmatprep.subr.mxu0 0.0
        %5092 = vmatpush1.msra.mxu0 0.0
        %5093 = vmatprep.subr.mxu0 0.0
        %5094 = vmatpush1.msra.mxu0 0.0
        %5095 = vmatprep.mubr.f32.mxu0 0.0
        %5096 = vmatmul.mubr.f32.gmra.mrb[0].mxu0 %v1126
        %v5097 = vpop.f32.mrb[0].mxu0
        %v5098 = vadd.f32 0.0, %v5097
        %v5099 = vpop.f32.mrb[0].mxu0
        %5100 = vmatprep.mubr.f32.mxu0 0.0
        %5101 = vmatmul.mubr.f32.gmra.mrb[0].mxu0 %v1129
        %v5102 = vpop.f32.mrb[0].mxu0
        %v5103 = vadd.f32 0.0, %v5102
        %v5104 = vpop.f32.mrb[0].mxu0
        %5105 = vmatprep.mubr.f32.mxu0 0.0
        %5106 = vmatmul.mubr.f32.gmra.mrb[0].mxu0 %v1132
        %v5107 = vpop.f32.mrb[0].mxu0
        %v5108 = vadd.f32 0.0, %v5107
        %v5109 = vpop.f32.mrb[0].mxu0
        %5110 = vmatprep.mubr.f32.mxu0 0.0
        %5111 = vmatmul.mubr.f32.gmra.mrb[0].mxu0 %v1135
        %v5112 = vpop.f32.mrb[0].mxu0
        %v5113 = vadd.f32 0.0, %v5112
        %v5114 = vpop.f32.mrb[0].mxu0
        %5115 = vdwg.mxu0
        %v5116 = vadd.f32 %v5023, %v5098
        %v5117 = vadd.f32 %v5024, %v5103
        %v5118 = vadd.f32 %v5025, %v5108
        %v5119 = vadd.f32 %v5026, %v5113
        %v5120 = vld [vmem:[%s2 + $0x2e0] sm:$0xff]
        %v5121 = vld [vmem:[%s2 + $0x2e8] sm:$0xff]
        %v5122 = vld [vmem:[%s2 + $0x2f0] sm:$0xff]
        %v5123 = vld [vmem:[%s2 + $0x2f8] sm:$0xff]
        %5124 = vmatprep.subr.mxu0 0.0
        %5125 = vmatpush1.msra.mxu0 %v5120
        %5126 = vmatprep.subr.mxu0 0.0
        %5127 = vmatpush1.msra.mxu0 %v5121
        %5128 = vmatprep.subr.mxu0 0.0
        %5129 = vmatpush1.msra.mxu0 %v5122
        %5130 = vmatprep.subr.mxu0 0.0
        %5131 = vmatpush1.msra.mxu0 %v5123
        %5132 = vmatprep.subr.mxu0 0.0
        %5133 = vmatpush1.msra.mxu0 0.0
        %5134 = vmatprep.subr.mxu0 0.0
        %5135 = vmatpush1.msra.mxu0 0.0
        %5136 = vmatprep.subr.mxu0 0.0
        %5137 = vmatpush1.msra.mxu0 0.0
        %5138 = vmatprep.subr.mxu0 0.0
        %5139 = vmatpush1.msra.mxu0 0.0
        %5140 = vmatprep.subr.mxu0 0.0
        %5141 = vmatpush1.msra.mxu0 0.0
        %5142 = vmatprep.subr.mxu0 0.0
        %5143 = vmatpush1.msra.mxu0 0.0
        %5144 = vmatprep.subr.mxu0 0.0
        %5145 = vmatpush1.msra.mxu0 0.0
        %5146 = vmatprep.subr.mxu0 0.0
        %5147 = vmatpush1.msra.mxu0 0.0
        %5148 = vmatprep.subr.mxu0 0.0
        %5149 = vmatpush1.msra.mxu0 0.0
        %5150 = vmatprep.subr.mxu0 0.0
        %5151 = vmatpush1.msra.mxu0 0.0
        %5152 = vmatprep.subr.mxu0 0.0
        %5153 = vmatpush1.msra.mxu0 0.0
        %5154 = vmatprep.subr.mxu0 0.0
        %5155 = vmatpush1.msra.mxu0 0.0
        %5156 = vmatprep.subr.mxu0 0.0
        %5157 = vmatpush1.msra.mxu0 0.0
        %5158 = vmatprep.subr.mxu0 0.0
        %5159 = vmatpush1.msra.mxu0 0.0
        %5160 = vmatprep.subr.mxu0 0.0
        %5161 = vmatpush1.msra.mxu0 0.0
        %5162 = vmatprep.subr.mxu0 0.0
        %5163 = vmatpush1.msra.mxu0 0.0
        %5164 = vmatprep.subr.mxu0 0.0
        %5165 = vmatpush1.msra.mxu0 0.0
        %5166 = vmatprep.subr.mxu0 0.0
        %5167 = vmatpush1.msra.mxu0 0.0
        %5168 = vmatprep.subr.mxu0 0.0
        %5169 = vmatpush1.msra.mxu0 0.0
        %5170 = vmatprep.subr.mxu0 0.0
        %5171 = vmatpush1.msra.mxu0 0.0
        %5172 = vmatprep.subr.mxu0 0.0
        %5173 = vmatpush1.msra.mxu0 0.0
        %5174 = vmatprep.subr.mxu0 0.0
        %5175 = vmatpush1.msra.mxu0 0.0
        %5176 = vmatprep.subr.mxu0 0.0
        %5177 = vmatpush1.msra.mxu0 0.0
        %5178 = vmatprep.subr.mxu0 0.0
        %5179 = vmatpush1.msra.mxu0 0.0
        %5180 = vmatprep.subr.mxu0 0.0
        %5181 = vmatpush1.msra.mxu0 0.0
        %5182 = vmatprep.subr.mxu0 0.0
        %5183 = vmatpush1.msra.mxu0 0.0
        %5184 = vmatprep.subr.mxu0 0.0
        %5185 = vmatpush1.msra.mxu0 0.0
        %5186 = vmatprep.subr.mxu0 0.0
        %5187 = vmatpush1.msra.mxu0 0.0
        %5188 = vmatprep.mubr.f32.mxu0 0.0
        %5189 = vmatmul.mubr.f32.gmra.mrb[0].mxu0 %v1231
        %v5190 = vpop.f32.mrb[0].mxu0
        %v5191 = vadd.f32 0.0, %v5190
        %v5192 = vpop.f32.mrb[0].mxu0
        %5193 = vmatprep.mubr.f32.mxu0 0.0
        %5194 = vmatmul.mubr.f32.gmra.mrb[0].mxu0 %v1234
        %v5195 = vpop.f32.mrb[0].mxu0
        %v5196 = vadd.f32 0.0, %v5195
        %v5197 = vpop.f32.mrb[0].mxu0
        %5198 = vmatprep.mubr.f32.mxu0 0.0
        %5199 = vmatmul.mubr.f32.gmra.mrb[0].mxu0 %v1237
        %v5200 = vpop.f32.mrb[0].mxu0
        %v5201 = vadd.f32 0.0, %v5200
        %v5202 = vpop.f32.mrb[0].mxu0
        %5203 = vmatprep.mubr.f32.mxu0 0.0
        %5204 = vmatmul.mubr.f32.gmra.mrb[0].mxu0 %v1240
        %v5205 = vpop.f32.mrb[0].mxu0
        %v5206 = vadd.f32 0.0, %v5205
        %v5207 = vpop.f32.mrb[0].mxu0
        %5208 = vdwg.mxu0
        %v5209 = vadd.f32 %v5116, %v5191
        %v5210 = vadd.f32 %v5117, %v5196
        %v5211 = vadd.f32 %v5118, %v5201
        %v5212 = vadd.f32 %v5119, %v5206
        %v5213 = vld [vmem:[%s2 + $0x300] sm:$0xff]
        %v5214 = vld [vmem:[%s2 + $0x308] sm:$0xff]
        %v5215 = vld [vmem:[%s2 + $0x310] sm:$0xff]
        %v5216 = vld [vmem:[%s2 + $0x318] sm:$0xff]
        %5217 = vmatprep.subr.mxu0 0.0
        %5218 = vmatpush1.msra.mxu0 %v5213
        %5219 = vmatprep.subr.mxu0 0.0
        %5220 = vmatpush1.msra.mxu0 %v5214
        %5221 = vmatprep.subr.mxu0 0.0
        %5222 = vmatpush1.msra.mxu0 %v5215
        %5223 = vmatprep.subr.mxu0 0.0
        %5224 = vmatpush1.msra.mxu0 %v5216
        %5225 = vmatprep.subr.mxu0 0.0
        %5226 = vmatpush1.msra.mxu0 0.0
        %5227 = vmatprep.subr.mxu0 0.0
        %5228 = vmatpush1.msra.mxu0 0.0
        %5229 = vmatprep.subr.mxu0 0.0
        %5230 = vmatpush1.msra.mxu0 0.0
        %5231 = vmatprep.subr.mxu0 0.0
        %5232 = vmatpush1.msra.mxu0 0.0
        %5233 = vmatprep.subr.mxu0 0.0
        %5234 = vmatpush1.msra.mxu0 0.0
        %5235 = vmatprep.subr.mxu0 0.0
        %5236 = vmatpush1.msra.mxu0 0.0
        %5237 = vmatprep.subr.mxu0 0.0
        %5238 = vmatpush1.msra.mxu0 0.0
        %5239 = vmatprep.subr.mxu0 0.0
        %5240 = vmatpush1.msra.mxu0 0.0
        %5241 = vmatprep.subr.mxu0 0.0
        %5242 = vmatpush1.msra.mxu0 0.0
        %5243 = vmatprep.subr.mxu0 0.0
        %5244 = vmatpush1.msra.mxu0 0.0
        %5245 = vmatprep.subr.mxu0 0.0
        %5246 = vmatpush1.msra.mxu0 0.0
        %5247 = vmatprep.subr.mxu0 0.0
        %5248 = vmatpush1.msra.mxu0 0.0
        %5249 = vmatprep.subr.mxu0 0.0
        %5250 = vmatpush1.msra.mxu0 0.0
        %5251 = vmatprep.subr.mxu0 0.0
        %5252 = vmatpush1.msra.mxu0 0.0
        %5253 = vmatprep.subr.mxu0 0.0
        %5254 = vmatpush1.msra.mxu0 0.0
        %5255 = vmatprep.subr.mxu0 0.0
        %5256 = vmatpush1.msra.mxu0 0.0
        %5257 = vmatprep.subr.mxu0 0.0
        %5258 = vmatpush1.msra.mxu0 0.0
        %5259 = vmatprep.subr.mxu0 0.0
        %5260 = vmatpush1.msra.mxu0 0.0
        %5261 = vmatprep.subr.mxu0 0.0
        %5262 = vmatpush1.msra.mxu0 0.0
        %5263 = vmatprep.subr.mxu0 0.0
        %5264 = vmatpush1.msra.mxu0 0.0
        %5265 = vmatprep.subr.mxu0 0.0
        %5266 = vmatpush1.msra.mxu0 0.0
        %5267 = vmatprep.subr.mxu0 0.0
        %5268 = vmatpush1.msra.mxu0 0.0
        %5269 = vmatprep.subr.mxu0 0.0
        %5270 = vmatpush1.msra.mxu0 0.0
        %5271 = vmatprep.subr.mxu0 0.0
        %5272 = vmatpush1.msra.mxu0 0.0
        %5273 = vmatprep.subr.mxu0 0.0
        %5274 = vmatpush1.msra.mxu0 0.0
        %5275 = vmatprep.subr.mxu0 0.0
        %5276 = vmatpush1.msra.mxu0 0.0
        %5277 = vmatprep.subr.mxu0 0.0
        %5278 = vmatpush1.msra.mxu0 0.0
        %5279 = vmatprep.subr.mxu0 0.0
        %5280 = vmatpush1.msra.mxu0 0.0
        %5281 = vmatprep.mubr.f32.mxu0 0.0
        %5282 = vmatmul.mubr.f32.gmra.mrb[0].mxu0 %v1336
        %v5283 = vpop.f32.mrb[0].mxu0
        %v5284 = vadd.f32 0.0, %v5283
        %v5285 = vpop.f32.mrb[0].mxu0
        %5286 = vmatprep.mubr.f32.mxu0 0.0
        %5287 = vmatmul.mubr.f32.gmra.mrb[0].mxu0 %v1339
        %v5288 = vpop.f32.mrb[0].mxu0
        %v5289 = vadd.f32 0.0, %v5288
        %v5290 = vpop.f32.mrb[0].mxu0
        %5291 = vmatprep.mubr.f32.mxu0 0.0
        %5292 = vmatmul.mubr.f32.gmra.mrb[0].mxu0 %v1342
        %v5293 = vpop.f32.mrb[0].mxu0
        %v5294 = vadd.f32 0.0, %v5293
        %v5295 = vpop.f32.mrb[0].mxu0
        %5296 = vmatprep.mubr.f32.mxu0 0.0
        %5297 = vmatmul.mubr.f32.gmra.mrb[0].mxu0 %v1345
        %v5298 = vpop.f32.mrb[0].mxu0
        %v5299 = vadd.f32 0.0, %v5298
        %v5300 = vpop.f32.mrb[0].mxu0
        %5301 = vdwg.mxu0
        %v5302 = vadd.f32 %v5209, %v5284
        %v5303 = vadd.f32 %v5210, %v5289
        %v5304 = vadd.f32 %v5211, %v5294
        %v5305 = vadd.f32 %v5212, %v5299
        %v5306 = vld [vmem:[%s2 + $0x320] sm:$0xff]
        %v5307 = vld [vmem:[%s2 + $0x328] sm:$0xff]
        %v5308 = vld [vmem:[%s2 + $0x330] sm:$0xff]
        %v5309 = vld [vmem:[%s2 + $0x338] sm:$0xff]
        %5310 = vmatprep.subr.mxu0 0.0
        %5311 = vmatpush1.msra.mxu0 %v5306
        %5312 = vmatprep.subr.mxu0 0.0
        %5313 = vmatpush1.msra.mxu0 %v5307
        %5314 = vmatprep.subr.mxu0 0.0
        %5315 = vmatpush1.msra.mxu0 %v5308
        %5316 = vmatprep.subr.mxu0 0.0
        %5317 = vmatpush1.msra.mxu0 %v5309
        %5318 = vmatprep.subr.mxu0 0.0
        %5319 = vmatpush1.msra.mxu0 0.0
        %5320 = vmatprep.subr.mxu0 0.0
        %5321 = vmatpush1.msra.mxu0 0.0
        %5322 = vmatprep.subr.mxu0 0.0
        %5323 = vmatpush1.msra.mxu0 0.0
        %5324 = vmatprep.subr.mxu0 0.0
        %5325 = vmatpush1.msra.mxu0 0.0
        %5326 = vmatprep.subr.mxu0 0.0
        %5327 = vmatpush1.msra.mxu0 0.0
        %5328 = vmatprep.subr.mxu0 0.0
        %5329 = vmatpush1.msra.mxu0 0.0
        %5330 = vmatprep.subr.mxu0 0.0
        %5331 = vmatpush1.msra.mxu0 0.0
        %5332 = vmatprep.subr.mxu0 0.0
        %5333 = vmatpush1.msra.mxu0 0.0
        %5334 = vmatprep.subr.mxu0 0.0
        %5335 = vmatpush1.msra.mxu0 0.0
        %5336 = vmatprep.subr.mxu0 0.0
        %5337 = vmatpush1.msra.mxu0 0.0
        %5338 = vmatprep.subr.mxu0 0.0
        %5339 = vmatpush1.msra.mxu0 0.0
        %5340 = vmatprep.subr.mxu0 0.0
        %5341 = vmatpush1.msra.mxu0 0.0
        %5342 = vmatprep.subr.mxu0 0.0
        %5343 = vmatpush1.msra.mxu0 0.0
        %5344 = vmatprep.subr.mxu0 0.0
        %5345 = vmatpush1.msra.mxu0 0.0
        %5346 = vmatprep.subr.mxu0 0.0
        %5347 = vmatpush1.msra.mxu0 0.0
        %5348 = vmatprep.subr.mxu0 0.0
        %5349 = vmatpush1.msra.mxu0 0.0
        %5350 = vmatprep.subr.mxu0 0.0
        %5351 = vmatpush1.msra.mxu0 0.0
        %5352 = vmatprep.subr.mxu0 0.0
        %5353 = vmatpush1.msra.mxu0 0.0
        %5354 = vmatprep.subr.mxu0 0.0
        %5355 = vmatpush1.msra.mxu0 0.0
        %5356 = vmatprep.subr.mxu0 0.0
        %5357 = vmatpush1.msra.mxu0 0.0
        %5358 = vmatprep.subr.mxu0 0.0
        %5359 = vmatpush1.msra.mxu0 0.0
        %5360 = vmatprep.subr.mxu0 0.0
        %5361 = vmatpush1.msra.mxu0 0.0
        %5362 = vmatprep.subr.mxu0 0.0
        %5363 = vmatpush1.msra.mxu0 0.0
        %5364 = vmatprep.subr.mxu0 0.0
        %5365 = vmatpush1.msra.mxu0 0.0
        %5366 = vmatprep.subr.mxu0 0.0
        %5367 = vmatpush1.msra.mxu0 0.0
        %5368 = vmatprep.subr.mxu0 0.0
        %5369 = vmatpush1.msra.mxu0 0.0
        %5370 = vmatprep.subr.mxu0 0.0
        %5371 = vmatpush1.msra.mxu0 0.0
        %5372 = vmatprep.subr.mxu0 0.0
        %5373 = vmatpush1.msra.mxu0 0.0
        %5374 = vmatprep.mubr.f32.mxu0 0.0
        %5375 = vmatmul.mubr.f32.gmra.mrb[0].mxu0 %v1441
        %v5376 = vpop.f32.mrb[0].mxu0
        %v5377 = vadd.f32 0.0, %v5376
        %v5378 = vpop.f32.mrb[0].mxu0
        %5379 = vmatprep.mubr.f32.mxu0 0.0
        %5380 = vmatmul.mubr.f32.gmra.mrb[0].mxu0 %v1444
        %v5381 = vpop.f32.mrb[0].mxu0
        %v5382 = vadd.f32 0.0, %v5381
        %v5383 = vpop.f32.mrb[0].mxu0
        %5384 = vmatprep.mubr.f32.mxu0 0.0
        %5385 = vmatmul.mubr.f32.gmra.mrb[0].mxu0 %v1447
        %v5386 = vpop.f32.mrb[0].mxu0
        %v5387 = vadd.f32 0.0, %v5386
        %v5388 = vpop.f32.mrb[0].mxu0
        %5389 = vmatprep.mubr.f32.mxu0 0.0
        %5390 = vmatmul.mubr.f32.gmra.mrb[0].mxu0 %v1450
        %v5391 = vpop.f32.mrb[0].mxu0
        %v5392 = vadd.f32 0.0, %v5391
        %v5393 = vpop.f32.mrb[0].mxu0
        %5394 = vdwg.mxu0
        %v5395 = vadd.f32 %v5302, %v5377
        %v5396 = vadd.f32 %v5303, %v5382
        %v5397 = vadd.f32 %v5304, %v5387
        %v5398 = vadd.f32 %v5305, %v5392
        %v5399 = vld [vmem:[%s2 + $0x340] sm:$0xff]
        %v5400 = vld [vmem:[%s2 + $0x348] sm:$0xff]
        %v5401 = vld [vmem:[%s2 + $0x350] sm:$0xff]
        %v5402 = vld [vmem:[%s2 + $0x358] sm:$0xff]
        %5403 = vmatprep.subr.mxu0 0.0
        %5404 = vmatpush1.msra.mxu0 %v5399
        %5405 = vmatprep.subr.mxu0 0.0
        %5406 = vmatpush1.msra.mxu0 %v5400
        %5407 = vmatprep.subr.mxu0 0.0
        %5408 = vmatpush1.msra.mxu0 %v5401
        %5409 = vmatprep.subr.mxu0 0.0
        %5410 = vmatpush1.msra.mxu0 %v5402
        %5411 = vmatprep.subr.mxu0 0.0
        %5412 = vmatpush1.msra.mxu0 0.0
        %5413 = vmatprep.subr.mxu0 0.0
        %5414 = vmatpush1.msra.mxu0 0.0
        %5415 = vmatprep.subr.mxu0 0.0
        %5416 = vmatpush1.msra.mxu0 0.0
        %5417 = vmatprep.subr.mxu0 0.0
        %5418 = vmatpush1.msra.mxu0 0.0
        %5419 = vmatprep.subr.mxu0 0.0
        %5420 = vmatpush1.msra.mxu0 0.0
        %5421 = vmatprep.subr.mxu0 0.0
        %5422 = vmatpush1.msra.mxu0 0.0
        %5423 = vmatprep.subr.mxu0 0.0
        %5424 = vmatpush1.msra.mxu0 0.0
        %5425 = vmatprep.subr.mxu0 0.0
        %5426 = vmatpush1.msra.mxu0 0.0
        %5427 = vmatprep.subr.mxu0 0.0
        %5428 = vmatpush1.msra.mxu0 0.0
        %5429 = vmatprep.subr.mxu0 0.0
        %5430 = vmatpush1.msra.mxu0 0.0
        %5431 = vmatprep.subr.mxu0 0.0
        %5432 = vmatpush1.msra.mxu0 0.0
        %5433 = vmatprep.subr.mxu0 0.0
        %5434 = vmatpush1.msra.mxu0 0.0
        %5435 = vmatprep.subr.mxu0 0.0
        %5436 = vmatpush1.msra.mxu0 0.0
        %5437 = vmatprep.subr.mxu0 0.0
        %5438 = vmatpush1.msra.mxu0 0.0
        %5439 = vmatprep.subr.mxu0 0.0
        %5440 = vmatpush1.msra.mxu0 0.0
        %5441 = vmatprep.subr.mxu0 0.0
        %5442 = vmatpush1.msra.mxu0 0.0
        %5443 = vmatprep.subr.mxu0 0.0
        %5444 = vmatpush1.msra.mxu0 0.0
        %5445 = vmatprep.subr.mxu0 0.0
        %5446 = vmatpush1.msra.mxu0 0.0
        %5447 = vmatprep.subr.mxu0 0.0
        %5448 = vmatpush1.msra.mxu0 0.0
        %5449 = vmatprep.subr.mxu0 0.0
        %5450 = vmatpush1.msra.mxu0 0.0
        %5451 = vmatprep.subr.mxu0 0.0
        %5452 = vmatpush1.msra.mxu0 0.0
        %5453 = vmatprep.subr.mxu0 0.0
        %5454 = vmatpush1.msra.mxu0 0.0
        %5455 = vmatprep.subr.mxu0 0.0
        %5456 = vmatpush1.msra.mxu0 0.0
        %5457 = vmatprep.subr.mxu0 0.0
        %5458 = vmatpush1.msra.mxu0 0.0
        %5459 = vmatprep.subr.mxu0 0.0
        %5460 = vmatpush1.msra.mxu0 0.0
        %5461 = vmatprep.subr.mxu0 0.0
        %5462 = vmatpush1.msra.mxu0 0.0
        %5463 = vmatprep.subr.mxu0 0.0
        %5464 = vmatpush1.msra.mxu0 0.0
        %5465 = vmatprep.subr.mxu0 0.0
        %5466 = vmatpush1.msra.mxu0 0.0
        %5467 = vmatprep.mubr.f32.mxu0 0.0
        %5468 = vmatmul.mubr.f32.gmra.mrb[0].mxu0 %v1546
        %v5469 = vpop.f32.mrb[0].mxu0
        %v5470 = vadd.f32 0.0, %v5469
        %v5471 = vpop.f32.mrb[0].mxu0
        %5472 = vmatprep.mubr.f32.mxu0 0.0
        %5473 = vmatmul.mubr.f32.gmra.mrb[0].mxu0 %v1549
        %v5474 = vpop.f32.mrb[0].mxu0
        %v5475 = vadd.f32 0.0, %v5474
        %v5476 = vpop.f32.mrb[0].mxu0
        %5477 = vmatprep.mubr.f32.mxu0 0.0
        %5478 = vmatmul.mubr.f32.gmra.mrb[0].mxu0 %v1552
        %v5479 = vpop.f32.mrb[0].mxu0
        %v5480 = vadd.f32 0.0, %v5479
        %v5481 = vpop.f32.mrb[0].mxu0
        %5482 = vmatprep.mubr.f32.mxu0 0.0
        %5483 = vmatmul.mubr.f32.gmra.mrb[0].mxu0 %v1555
        %v5484 = vpop.f32.mrb[0].mxu0
        %v5485 = vadd.f32 0.0, %v5484
        %v5486 = vpop.f32.mrb[0].mxu0
        %5487 = vdwg.mxu0
        %v5488 = vadd.f32 %v5395, %v5470
        %v5489 = vadd.f32 %v5396, %v5475
        %v5490 = vadd.f32 %v5397, %v5480
        %v5491 = vadd.f32 %v5398, %v5485
        %v5492 = vadd.f32 %v5488, %v1649
        %v5493 = vadd.f32 %v5489, %v1654
        %v5494 = vadd.f32 %v5490, %v1659
        %v5495 = vadd.f32 %v5491, %v1664
        %v5496 = vmul.f32 %v5492, 0.70710677
        %v5497 = vmul.f32 %v5493, 0.70710677
        %v5498 = vmul.f32 %v5494, 0.70710677
        %v5499 = vmul.f32 %v5495, 0.70710677
        %v5500 = vand.u32 2147483647, %v5496
        %v5501 = vand.u32 2147483647, %v5497
        %v5502 = vand.u32 2147483647, %v5498
        %v5503 = vand.u32 2147483647, %v5499
        %v5504 = vmul.f32 %v5500, 0.3275911
        %v5505 = vmul.f32 %v5501, 0.3275911
        %v5506 = vmul.f32 %v5502, 0.3275911
        %v5507 = vmul.f32 %v5503, 0.3275911
        %v5508 = vadd.f32 %v5504, 1.0
        %v5509 = vadd.f32 %v5505, 1.0
        %v5510 = vadd.f32 %v5506, 1.0
        %v5511 = vadd.f32 %v5507, 1.0
        %v5512 = vrcp.pop %v5508
        %v5513 = vmul.f32 1.0, %v5512
        %v5514 = vrcp.pop %v5509
        %v5515 = vmul.f32 1.0, %v5514
        %v5516 = vrcp.pop %v5510
        %v5517 = vmul.f32 1.0, %v5516
        %v5518 = vrcp.pop %v5511
        %v5519 = vmul.f32 1.0, %v5518
        %v5520 = vmul.f32 %v5513, 1.0614054
        %v5521 = vmul.f32 %v5515, 1.0614054
        %v5522 = vmul.f32 %v5517, 1.0614054
        %v5523 = vmul.f32 %v5519, 1.0614054
        %v5524 = vadd.f32 %v5520, -1.4531521
        %v5525 = vadd.f32 %v5521, -1.4531521
        %v5526 = vadd.f32 %v5522, -1.4531521
        %v5527 = vadd.f32 %v5523, -1.4531521
        %v5528 = vmul.f32 %v5524, %v5513
        %v5529 = vmul.f32 %v5525, %v5515
        %v5530 = vmul.f32 %v5526, %v5517
        %v5531 = vmul.f32 %v5527, %v5519
        %v5532 = vadd.f32 %v5528, 1.4214138
        %v5533 = vadd.f32 %v5529, 1.4214138
        %v5534 = vadd.f32 %v5530, 1.4214138
        %v5535 = vadd.f32 %v5531, 1.4214138
        %v5536 = vmul.f32 %v5532, %v5513
        %v5537 = vmul.f32 %v5533, %v5515
        %v5538 = vmul.f32 %v5534, %v5517
        %v5539 = vmul.f32 %v5535, %v5519
        %v5540 = vadd.f32 %v5536, -0.28449672
        %v5541 = vadd.f32 %v5537, -0.28449672
        %v5542 = vadd.f32 %v5538, -0.28449672
        %v5543 = vadd.f32 %v5539, -0.28449672
        %v5544 = vmul.f32 %v5540, %v5513
        %v5545 = vmul.f32 %v5541, %v5515
        %v5546 = vmul.f32 %v5542, %v5517
        %v5547 = vmul.f32 %v5543, %v5519
        %v5548 = vadd.f32 %v5544, 0.2548296
        %v5549 = vadd.f32 %v5545, 0.2548296
        %v5550 = vadd.f32 %v5546, 0.2548296
        %v5551 = vadd.f32 %v5547, 0.2548296
        %v5552 = vmul.f32 %v5548, %v5513
        %v5553 = vmul.f32 %v5549, %v5515
        %v5554 = vmul.f32 %v5550, %v5517
        %v5555 = vmul.f32 %v5551, %v5519
        %v5556 = vsub.f32 0.0, %v5500
        %v5557 = vsub.f32 0.0, %v5501
        %v5558 = vsub.f32 0.0, %v5502
        %v5559 = vsub.f32 0.0, %v5503
        %v5560 = vmul.f32 %v5556, %v5500
        %v5561 = vmul.f32 %v5557, %v5501
        %v5562 = vmul.f32 %v5558, %v5502
        %v5563 = vmul.f32 %v5559, %v5503
        %v5564 = vmul.f32 %v5560, 1.442695
        %v5565 = vpow.pop %v5564
        %v5566 = vmul.f32 %v5561, 1.442695
        %v5567 = vpow.pop %v5566
        %v5568 = vmul.f32 %v5562, 1.442695
        %v5569 = vpow.pop %v5568
        %v5570 = vmul.f32 %v5563, 1.442695
        %v5571 = vpow.pop %v5570
        %v5572 = vmul.f32 %v5552, %v5565
        %v5573 = vmul.f32 %v5553, %v5567
        %v5574 = vmul.f32 %v5554, %v5569
        %v5575 = vmul.f32 %v5555, %v5571
        %v5576 = vsub.f32 1.0, %v5572
        %v5577 = vsub.f32 1.0, %v5573
        %v5578 = vsub.f32 1.0, %v5574
        %v5579 = vsub.f32 1.0, %v5575
        %vm5580 = vcmp.ge.f32.partialorder %v5496, 0.0
        %vm5581 = vcmp.ge.f32.partialorder %v5497, 0.0
        %vm5582 = vcmp.ge.f32.partialorder %v5498, 0.0
        %vm5583 = vcmp.ge.f32.partialorder %v5499, 0.0
        %v5584 = vsub.f32 0.0, %v5576
        %v5585 = vsub.f32 0.0, %v5577
        %v5586 = vsub.f32 0.0, %v5578
        %v5587 = vsub.f32 0.0, %v5579
        %v5588 = vsel %vm5580, %v5576, %v5584
        %v5589 = vsel %vm5581, %v5577, %v5585
        %v5590 = vsel %vm5582, %v5578, %v5586
        %v5591 = vsel %vm5583, %v5579, %v5587
        %v5592 = vmul.f32 %v5492, 0.5
        %v5593 = vmul.f32 %v5493, 0.5
        %v5594 = vmul.f32 %v5494, 0.5
        %v5595 = vmul.f32 %v5495, 0.5
        %v5596 = vadd.f32 %v5588, 1.0
        %v5597 = vadd.f32 %v5589, 1.0
        %v5598 = vadd.f32 %v5590, 1.0
        %v5599 = vadd.f32 %v5591, 1.0
        %v5600 = vmul.f32 %v5592, %v5596
        %v5601 = vmul.f32 %v5593, %v5597
        %v5602 = vmul.f32 %v5594, %v5598
        %v5603 = vmul.f32 %v5595, %v5599
        %5604 = vmatprep.subr.mxu0 0.0
        %5605 = vmatpush1.msra.mxu0 %v5600
        %5606 = vmatprep.subr.mxu0 0.0
        %5607 = vmatpush1.msra.mxu0 %v5601
        %5608 = vmatprep.subr.mxu0 0.0
        %5609 = vmatpush1.msra.mxu0 %v5602
        %5610 = vmatprep.subr.mxu0 0.0
        %5611 = vmatpush1.msra.mxu0 %v5603
        %5612 = vmatprep.subr.mxu0 0.0
        %5613 = vmatpush1.msra.mxu0 0.0
        %5614 = vmatprep.subr.mxu0 0.0
        %5615 = vmatpush1.msra.mxu0 0.0
        %5616 = vmatprep.subr.mxu0 0.0
        %5617 = vmatpush1.msra.mxu0 0.0
        %5618 = vmatprep.subr.mxu0 0.0
        %5619 = vmatpush1.msra.mxu0 0.0
        %5620 = vmatprep.subr.mxu0 0.0
        %5621 = vmatpush1.msra.mxu0 0.0
        %5622 = vmatprep.subr.mxu0 0.0
        %5623 = vmatpush1.msra.mxu0 0.0
        %5624 = vmatprep.subr.mxu0 0.0
        %5625 = vmatpush1.msra.mxu0 0.0
        %5626 = vmatprep.subr.mxu0 0.0
        %5627 = vmatpush1.msra.mxu0 0.0
        %5628 = vmatprep.subr.mxu0 0.0
        %5629 = vmatpush1.msra.mxu0 0.0
        %5630 = vmatprep.subr.mxu0 0.0
        %5631 = vmatpush1.msra.mxu0 0.0
        %5632 = vmatprep.subr.mxu0 0.0
        %5633 = vmatpush1.msra.mxu0 0.0
        %5634 = vmatprep.subr.mxu0 0.0
        %5635 = vmatpush1.msra.mxu0 0.0
        %5636 = vmatprep.subr.mxu0 0.0
        %5637 = vmatpush1.msra.mxu0 0.0
        %5638 = vmatprep.subr.mxu0 0.0
        %5639 = vmatpush1.msra.mxu0 0.0
        %5640 = vmatprep.subr.mxu0 0.0
        %5641 = vmatpush1.msra.mxu0 0.0
        %5642 = vmatprep.subr.mxu0 0.0
        %5643 = vmatpush1.msra.mxu0 0.0
        %5644 = vmatprep.subr.mxu0 0.0
        %5645 = vmatpush1.msra.mxu0 0.0
        %5646 = vmatprep.subr.mxu0 0.0
        %5647 = vmatpush1.msra.mxu0 0.0
        %5648 = vmatprep.subr.mxu0 0.0
        %5649 = vmatpush1.msra.mxu0 0.0
        %5650 = vmatprep.subr.mxu0 0.0
        %5651 = vmatpush1.msra.mxu0 0.0
        %5652 = vmatprep.subr.mxu0 0.0
        %5653 = vmatpush1.msra.mxu0 0.0
        %5654 = vmatprep.subr.mxu0 0.0
        %5655 = vmatpush1.msra.mxu0 0.0
        %5656 = vmatprep.subr.mxu0 0.0
        %5657 = vmatpush1.msra.mxu0 0.0
        %5658 = vmatprep.subr.mxu0 0.0
        %5659 = vmatpush1.msra.mxu0 0.0
        %5660 = vmatprep.subr.mxu0 0.0
        %5661 = vmatpush1.msra.mxu0 0.0
        %5662 = vmatprep.subr.mxu0 0.0
        %5663 = vmatpush1.msra.mxu0 0.0
        %5664 = vmatprep.subr.mxu0 0.0
        %5665 = vmatpush1.msra.mxu0 0.0
        %5666 = vmatprep.subr.mxu0 0.0
        %5667 = vmatpush1.msra.mxu0 0.0
        %5668 = vmatprep.mubr.f32.mxu0 0.0
        %5669 = vmatmul.mubr.f32.gmra.mrb[0].mxu0 %v1779
        %v5670 = vpop.f32.mrb[0].mxu0
        %v5671 = vadd.f32 0.0, %v5670
        %v5672 = vpop.f32.mrb[0].mxu0
        %5673 = vmatprep.mubr.f32.mxu0 0.0
        %5674 = vmatmul.mubr.f32.gmra.mrb[0].mxu0 %v1782
        %v5675 = vpop.f32.mrb[0].mxu0
        %v5676 = vadd.f32 0.0, %v5675
        %v5677 = vpop.f32.mrb[0].mxu0
        %5678 = vmatprep.mubr.f32.mxu0 0.0
        %5679 = vmatmul.mubr.f32.gmra.mrb[0].mxu0 %v1785
        %v5680 = vpop.f32.mrb[0].mxu0
        %v5681 = vadd.f32 0.0, %v5680
        %v5682 = vpop.f32.mrb[0].mxu0
        %5683 = vmatprep.mubr.f32.mxu0 0.0
        %5684 = vmatmul.mubr.f32.gmra.mrb[0].mxu0 %v1788
        %v5685 = vpop.f32.mrb[0].mxu0
        %v5686 = vadd.f32 0.0, %v5685
        %v5687 = vpop.f32.mrb[0].mxu0
        %5688 = vmatprep.mubr.f32.mxu0 0.0
        %5689 = vmatmul.mubr.f32.gmra.mrb[0].mxu0 %v1791
        %v5690 = vpop.f32.mrb[0].mxu0
        %v5691 = vadd.f32 0.0, %v5690
        %v5692 = vpop.f32.mrb[0].mxu0
        %5693 = vmatprep.mubr.f32.mxu0 0.0
        %5694 = vmatmul.mubr.f32.gmra.mrb[0].mxu0 %v1794
        %v5695 = vpop.f32.mrb[0].mxu0
        %v5696 = vadd.f32 0.0, %v5695
        %v5697 = vpop.f32.mrb[0].mxu0
        %5698 = vmatprep.mubr.f32.mxu0 0.0
        %5699 = vmatmul.mubr.f32.gmra.mrb[0].mxu0 %v1797
        %v5700 = vpop.f32.mrb[0].mxu0
        %v5701 = vadd.f32 0.0, %v5700
        %v5702 = vpop.f32.mrb[0].mxu0
        %5703 = vmatprep.mubr.f32.mxu0 0.0
        %5704 = vmatmul.mubr.f32.gmra.mrb[0].mxu0 %v1800
        %v5705 = vpop.f32.mrb[0].mxu0
        %v5706 = vadd.f32 0.0, %v5705
        %v5707 = vpop.f32.mrb[0].mxu0
        %5708 = vmatprep.mubr.f32.mxu0 0.0
        %5709 = vmatmul.mubr.f32.gmra.mrb[0].mxu0 %v1803
        %v5710 = vpop.f32.mrb[0].mxu0
        %v5711 = vadd.f32 0.0, %v5710
        %v5712 = vpop.f32.mrb[0].mxu0
        %5713 = vmatprep.mubr.f32.mxu0 0.0
        %5714 = vmatmul.mubr.f32.gmra.mrb[0].mxu0 %v1806
        %v5715 = vpop.f32.mrb[0].mxu0
        %v5716 = vadd.f32 0.0, %v5715
        %v5717 = vpop.f32.mrb[0].mxu0
        %5718 = vmatprep.mubr.f32.mxu0 0.0
        %5719 = vmatmul.mubr.f32.gmra.mrb[0].mxu0 %v1809
        %v5720 = vpop.f32.mrb[0].mxu0
        %v5721 = vadd.f32 0.0, %v5720
        %v5722 = vpop.f32.mrb[0].mxu0
        %5723 = vmatprep.mubr.f32.mxu0 0.0
        %5724 = vmatmul.mubr.f32.gmra.mrb[0].mxu0 %v1812
        %v5725 = vpop.f32.mrb[0].mxu0
        %v5726 = vadd.f32 0.0, %v5725
        %v5727 = vpop.f32.mrb[0].mxu0
        %5728 = vmatprep.mubr.f32.mxu0 0.0
        %5729 = vmatmul.mubr.f32.gmra.mrb[0].mxu0 %v1815
        %v5730 = vpop.f32.mrb[0].mxu0
        %v5731 = vadd.f32 0.0, %v5730
        %v5732 = vpop.f32.mrb[0].mxu0
        %5733 = vmatprep.mubr.f32.mxu0 0.0
        %5734 = vmatmul.mubr.f32.gmra.mrb[0].mxu0 %v1818
        %v5735 = vpop.f32.mrb[0].mxu0
        %v5736 = vadd.f32 0.0, %v5735
        %v5737 = vpop.f32.mrb[0].mxu0
        %5738 = vmatprep.mubr.f32.mxu0 0.0
        %5739 = vmatmul.mubr.f32.gmra.mrb[0].mxu0 %v1821
        %v5740 = vpop.f32.mrb[0].mxu0
        %v5741 = vadd.f32 0.0, %v5740
        %v5742 = vpop.f32.mrb[0].mxu0
        %5743 = vmatprep.mubr.f32.mxu0 0.0
        %5744 = vmatmul.mubr.f32.gmra.mrb[0].mxu0 %v1824
        %v5745 = vpop.f32.mrb[0].mxu0
        %v5746 = vadd.f32 0.0, %v5745
        %v5747 = vpop.f32.mrb[0].mxu0
        %5748 = vmatprep.mubr.f32.mxu0 0.0
        %5749 = vmatmul.mubr.f32.gmra.mrb[0].mxu0 %v1827
        %v5750 = vpop.f32.mrb[0].mxu0
        %v5751 = vadd.f32 0.0, %v5750
        %v5752 = vpop.f32.mrb[0].mxu0
        %5753 = vmatprep.mubr.f32.mxu0 0.0
        %5754 = vmatmul.mubr.f32.gmra.mrb[0].mxu0 %v1830
        %v5755 = vpop.f32.mrb[0].mxu0
        %v5756 = vadd.f32 0.0, %v5755
        %v5757 = vpop.f32.mrb[0].mxu0
        %5758 = vdwg.mxu0
        %v5759 = vld [vmem:[#allocation2 + $0x3a8] sm:$0xff]
        %v5760 = vld [vmem:[#allocation2 + $0x3b0] sm:$0xff]
        %v5761 = vld [vmem:[#allocation2 + $0x3b8] sm:$0xff]
        %v5762 = vld [vmem:[#allocation2 + $0x3c0] sm:$0xff]
        %v5763 = vld [vmem:[#allocation2 + $0x3c8] sm:$0xff]
        %v5764 = vld [vmem:[#allocation2 + $0x3d0] sm:$0xff]
        %v5765 = vld [vmem:[#allocation2 + $0x3d8] sm:$0xf]
        %v5766 = vld [vmem:[#allocation2 + $0x3dc] sm:$0xff]
        %v5767 = vld [vmem:[#allocation2 + $0x3e4] sm:$0xff]
        %v5768 = vld [vmem:[#allocation2 + $0x3ec] sm:$0xff]
        %v5769 = vld [vmem:[#allocation2 + $0x3f4] sm:$0xff]
        %v5770 = vld [vmem:[#allocation2 + $0x3fc] sm:$0xff]
        %v5771 = vld [vmem:[#allocation2 + $0x404] sm:$0xff]
        %v5772 = vld [vmem:[#allocation2 + $0x40c] sm:$0xf]
        %vm5773 = vcmask 424960
        %v5775 = vsel %vm5773, %v5681, 0
        %v5778 = vsel %vm5773, %v5686, 0
        %vm5780 = vcmask 1043456
        %v5782 = vsel %vm5780, %v5772, 0
        %5784 = vmatprep.subr.mxu0 0.0
        %5785 = vmatpush1.msra.mxu0 %v5766
        %5786 = vmatprep.subr.mxu0 0.0
        %5787 = vmatpush1.msra.mxu0 %v5767
        %5788 = vmatprep.subr.mxu0 0.0
        %5789 = vmatpush1.msra.mxu0 %v5768
        %5790 = vmatprep.subr.mxu0 0.0
        %5791 = vmatpush1.msra.mxu0 %v5769
        %5792 = vmatprep.subr.mxu0 0.0
        %5793 = vmatpush1.msra.mxu0 %v5770
        %5794 = vmatprep.subr.mxu0 0.0
        %5795 = vmatpush1.msra.mxu0 %v5771
        %5796 = vmatprep.subr.mxu0 0.0
        %5797 = vmatpush1.msra.mxu0 %v5782
        %5798 = vmatprep.subr.mxu0 0.0
        %5799 = vmatpush1.msra.mxu0 0.0
        %5800 = vmatprep.subr.mxu0 0.0
        %5801 = vmatpush1.msra.mxu0 0.0
        %5802 = vmatprep.subr.mxu0 0.0
        %5803 = vmatpush1.msra.mxu0 0.0
        %5804 = vmatprep.subr.mxu0 0.0
        %5805 = vmatpush1.msra.mxu0 0.0
        %5806 = vmatprep.subr.mxu0 0.0
        %5807 = vmatpush1.msra.mxu0 0.0
        %5808 = vmatprep.subr.mxu0 0.0
        %5809 = vmatpush1.msra.mxu0 0.0
        %5810 = vmatprep.subr.mxu0 0.0
        %5811 = vmatpush1.msra.mxu0 0.0
        %5812 = vmatprep.subr.mxu0 0.0
        %5813 = vmatpush1.msra.mxu0 0.0
        %5814 = vmatprep.subr.mxu0 0.0
        %5815 = vmatpush1.msra.mxu0 0.0
        %5816 = vmatprep.subr.mxu0 0.0
        %5817 = vmatpush1.msra.mxu0 0.0
        %5818 = vmatprep.subr.mxu0 0.0
        %5819 = vmatpush1.msra.mxu0 0.0
        %5820 = vmatprep.subr.mxu0 0.0
        %5821 = vmatpush1.msra.mxu0 0.0
        %5822 = vmatprep.subr.mxu0 0.0
        %5823 = vmatpush1.msra.mxu0 0.0
        %5824 = vmatprep.subr.mxu0 0.0
        %5825 = vmatpush1.msra.mxu0 0.0
        %5826 = vmatprep.subr.mxu0 0.0
        %5827 = vmatpush1.msra.mxu0 0.0
        %5828 = vmatprep.subr.mxu0 0.0
        %5829 = vmatpush1.msra.mxu0 0.0
        %5830 = vmatprep.subr.mxu0 0.0
        %5831 = vmatpush1.msra.mxu0 0.0
        %5832 = vmatprep.subr.mxu0 0.0
        %5833 = vmatpush1.msra.mxu0 0.0
        %5834 = vmatprep.subr.mxu0 0.0
        %5835 = vmatpush1.msra.mxu0 0.0
        %5836 = vmatprep.subr.mxu0 0.0
        %5837 = vmatpush1.msra.mxu0 0.0
        %5838 = vmatprep.subr.mxu0 0.0
        %5839 = vmatpush1.msra.mxu0 0.0
        %5840 = vmatprep.subr.mxu0 0.0
        %5841 = vmatpush1.msra.mxu0 0.0
        %5842 = vmatprep.subr.mxu0 0.0
        %5843 = vmatpush1.msra.mxu0 0.0
        %5844 = vmatprep.subr.mxu0 0.0
        %5845 = vmatpush1.msra.mxu0 0.0
        %5846 = vmatprep.subr.mxu0 0.0
        %5847 = vmatpush1.msra.mxu0 0.0
        %5848 = vmatprep.mubr.f32.mxu0 0.0
        %5849 = vmatmul.mubr.f32.gmra.mrb[0].mxu0 %v5775
        %v5850 = vpop.f32.mrb[0].mxu0
        %v5851 = vadd.f32 0.0, %v5850
        %v5852 = vpop.f32.mrb[0].mxu0
        %5853 = vmatprep.mubr.f32.mxu0 0.0
        %5854 = vmatmul.mubr.f32.gmra.mrb[0].mxu0 %v5778
        %v5855 = vpop.f32.mrb[0].mxu0
        %v5856 = vadd.f32 0.0, %v5855
        %v5857 = vpop.f32.mrb[0].mxu0
        %5858 = vdwg.mxu0
        %v5860 = vsel %vm5773, %v5671, 0
        %v5863 = vsel %vm5773, %v5676, 0
        %v5866 = vsel %vm5780, %v5765, 0
        %5868 = vmatprep.subr.mxu0 0.0
        %5869 = vmatpush1.msra.mxu0 %v5759
        %5870 = vmatprep.subr.mxu0 0.0
        %5871 = vmatpush1.msra.mxu0 %v5760
        %5872 = vmatprep.subr.mxu0 0.0
        %5873 = vmatpush1.msra.mxu0 %v5761
        %5874 = vmatprep.subr.mxu0 0.0
        %5875 = vmatpush1.msra.mxu0 %v5762
        %5876 = vmatprep.subr.mxu0 0.0
        %5877 = vmatpush1.msra.mxu0 %v5763
        %5878 = vmatprep.subr.mxu0 0.0
        %5879 = vmatpush1.msra.mxu0 %v5764
        %5880 = vmatprep.subr.mxu0 0.0
        %5881 = vmatpush1.msra.mxu0 %v5866
        %5882 = vmatprep.subr.mxu0 0.0
        %5883 = vmatpush1.msra.mxu0 0.0
        %5884 = vmatprep.subr.mxu0 0.0
        %5885 = vmatpush1.msra.mxu0 0.0
        %5886 = vmatprep.subr.mxu0 0.0
        %5887 = vmatpush1.msra.mxu0 0.0
        %5888 = vmatprep.subr.mxu0 0.0
        %5889 = vmatpush1.msra.mxu0 0.0
        %5890 = vmatprep.subr.mxu0 0.0
        %5891 = vmatpush1.msra.mxu0 0.0
        %5892 = vmatprep.subr.mxu0 0.0
        %5893 = vmatpush1.msra.mxu0 0.0
        %5894 = vmatprep.subr.mxu0 0.0
        %5895 = vmatpush1.msra.mxu0 0.0
        %5896 = vmatprep.subr.mxu0 0.0
        %5897 = vmatpush1.msra.mxu0 0.0
        %5898 = vmatprep.subr.mxu0 0.0
        %5899 = vmatpush1.msra.mxu0 0.0
        %5900 = vmatprep.subr.mxu0 0.0
        %5901 = vmatpush1.msra.mxu0 0.0
        %5902 = vmatprep.subr.mxu0 0.0
        %5903 = vmatpush1.msra.mxu0 0.0
        %5904 = vmatprep.subr.mxu0 0.0
        %5905 = vmatpush1.msra.mxu0 0.0
        %5906 = vmatprep.subr.mxu0 0.0
        %5907 = vmatpush1.msra.mxu0 0.0
        %5908 = vmatprep.subr.mxu0 0.0
        %5909 = vmatpush1.msra.mxu0 0.0
        %5910 = vmatprep.subr.mxu0 0.0
        %5911 = vmatpush1.msra.mxu0 0.0
        %5912 = vmatprep.subr.mxu0 0.0
        %5913 = vmatpush1.msra.mxu0 0.0
        %5914 = vmatprep.subr.mxu0 0.0
        %5915 = vmatpush1.msra.mxu0 0.0
        %5916 = vmatprep.subr.mxu0 0.0
        %5917 = vmatpush1.msra.mxu0 0.0
        %5918 = vmatprep.subr.mxu0 0.0
        %5919 = vmatpush1.msra.mxu0 0.0
        %5920 = vmatprep.subr.mxu0 0.0
        %5921 = vmatpush1.msra.mxu0 0.0
        %5922 = vmatprep.subr.mxu0 0.0
        %5923 = vmatpush1.msra.mxu0 0.0
        %5924 = vmatprep.subr.mxu0 0.0
        %5925 = vmatpush1.msra.mxu0 0.0
        %5926 = vmatprep.subr.mxu0 0.0
        %5927 = vmatpush1.msra.mxu0 0.0
        %5928 = vmatprep.subr.mxu0 0.0
        %5929 = vmatpush1.msra.mxu0 0.0
        %5930 = vmatprep.subr.mxu0 0.0
        %5931 = vmatpush1.msra.mxu0 0.0
        %5932 = vmatprep.mubr.f32.mxu0 0.0
        %5933 = vmatmul.mubr.f32.gmra.mrb[0].mxu0 %v5860
        %v5934 = vpop.f32.mrb[0].mxu0
        %v5935 = vadd.f32 %v5851, %v5934
        %v5936 = vpop.f32.mrb[0].mxu0
        %5937 = vmatprep.mubr.f32.mxu0 0.0
        %5938 = vmatmul.mubr.f32.gmra.mrb[0].mxu0 %v5863
        %v5939 = vpop.f32.mrb[0].mxu0
        %v5940 = vadd.f32 %v5856, %v5939
        %v5941 = vpop.f32.mrb[0].mxu0
        %5942 = vdwg.mxu0
        %v5943 = vld [vmem:[#allocation2 + $0x410] sm:$0xff]
        %v5944 = vld [vmem:[#allocation2 + $0x418] sm:$0xff]
        %v5945 = vld [vmem:[#allocation2 + $0x420] sm:$0xff]
        %v5946 = vld [vmem:[#allocation2 + $0x428] sm:$0xff]
        %v5947 = vld [vmem:[#allocation2 + $0x430] sm:$0xff]
        %v5948 = vld [vmem:[#allocation2 + $0x438] sm:$0xff]
        %v5949 = vld [vmem:[#allocation2 + $0x440] sm:$0xf]
        %v5951 = vsel %vm5773, %v5691, 0
        %v5954 = vsel %vm5773, %v5696, 0
        %v5957 = vsel %vm5780, %v5949, 0
        %5959 = vmatprep.subr.mxu0 0.0
        %5960 = vmatpush1.msra.mxu0 %v5943
        %5961 = vmatprep.subr.mxu0 0.0
        %5962 = vmatpush1.msra.mxu0 %v5944
        %5963 = vmatprep.subr.mxu0 0.0
        %5964 = vmatpush1.msra.mxu0 %v5945
        %5965 = vmatprep.subr.mxu0 0.0
        %5966 = vmatpush1.msra.mxu0 %v5946
        %5967 = vmatprep.subr.mxu0 0.0
        %5968 = vmatpush1.msra.mxu0 %v5947
        %5969 = vmatprep.subr.mxu0 0.0
        %5970 = vmatpush1.msra.mxu0 %v5948
        %5971 = vmatprep.subr.mxu0 0.0
        %5972 = vmatpush1.msra.mxu0 %v5957
        %5973 = vmatprep.subr.mxu0 0.0
        %5974 = vmatpush1.msra.mxu0 0.0
        %5975 = vmatprep.subr.mxu0 0.0
        %5976 = vmatpush1.msra.mxu0 0.0
        %5977 = vmatprep.subr.mxu0 0.0
        %5978 = vmatpush1.msra.mxu0 0.0
        %5979 = vmatprep.subr.mxu0 0.0
        %5980 = vmatpush1.msra.mxu0 0.0
        %5981 = vmatprep.subr.mxu0 0.0
        %5982 = vmatpush1.msra.mxu0 0.0
        %5983 = vmatprep.subr.mxu0 0.0
        %5984 = vmatpush1.msra.mxu0 0.0
        %5985 = vmatprep.subr.mxu0 0.0
        %5986 = vmatpush1.msra.mxu0 0.0
        %5987 = vmatprep.subr.mxu0 0.0
        %5988 = vmatpush1.msra.mxu0 0.0
        %5989 = vmatprep.subr.mxu0 0.0
        %5990 = vmatpush1.msra.mxu0 0.0
        %5991 = vmatprep.subr.mxu0 0.0
        %5992 = vmatpush1.msra.mxu0 0.0
        %5993 = vmatprep.subr.mxu0 0.0
        %5994 = vmatpush1.msra.mxu0 0.0
        %5995 = vmatprep.subr.mxu0 0.0
        %5996 = vmatpush1.msra.mxu0 0.0
        %5997 = vmatprep.subr.mxu0 0.0
        %5998 = vmatpush1.msra.mxu0 0.0
        %5999 = vmatprep.subr.mxu0 0.0
        %6000 = vmatpush1.msra.mxu0 0.0
        %6001 = vmatprep.subr.mxu0 0.0
        %6002 = vmatpush1.msra.mxu0 0.0
        %6003 = vmatprep.subr.mxu0 0.0
        %6004 = vmatpush1.msra.mxu0 0.0
        %6005 = vmatprep.subr.mxu0 0.0
        %6006 = vmatpush1.msra.mxu0 0.0
        %6007 = vmatprep.subr.mxu0 0.0
        %6008 = vmatpush1.msra.mxu0 0.0
        %6009 = vmatprep.subr.mxu0 0.0
        %6010 = vmatpush1.msra.mxu0 0.0
        %6011 = vmatprep.subr.mxu0 0.0
        %6012 = vmatpush1.msra.mxu0 0.0
        %6013 = vmatprep.subr.mxu0 0.0
        %6014 = vmatpush1.msra.mxu0 0.0
        %6015 = vmatprep.subr.mxu0 0.0
        %6016 = vmatpush1.msra.mxu0 0.0
        %6017 = vmatprep.subr.mxu0 0.0
        %6018 = vmatpush1.msra.mxu0 0.0
        %6019 = vmatprep.subr.mxu0 0.0
        %6020 = vmatpush1.msra.mxu0 0.0
        %6021 = vmatprep.subr.mxu0 0.0
        %6022 = vmatpush1.msra.mxu0 0.0
        %6023 = vmatprep.mubr.f32.mxu0 0.0
        %6024 = vmatmul.mubr.f32.gmra.mrb[0].mxu0 %v5951
        %v6025 = vpop.f32.mrb[0].mxu0
        %v6026 = vadd.f32 0.0, %v6025
        %v6027 = vpop.f32.mrb[0].mxu0
        %6028 = vmatprep.mubr.f32.mxu0 0.0
        %6029 = vmatmul.mubr.f32.gmra.mrb[0].mxu0 %v5954
        %v6030 = vpop.f32.mrb[0].mxu0
        %v6031 = vadd.f32 0.0, %v6030
        %v6032 = vpop.f32.mrb[0].mxu0
        %6033 = vdwg.mxu0
        %v6034 = vadd.f32 %v5935, %v6026
        %v6035 = vadd.f32 %v5940, %v6031
        %v6036 = vld [vmem:[#allocation2 + $0x444] sm:$0xff]
        %v6037 = vld [vmem:[#allocation2 + $0x44c] sm:$0xff]
        %v6038 = vld [vmem:[#allocation2 + $0x454] sm:$0xff]
        %v6039 = vld [vmem:[#allocation2 + $0x45c] sm:$0xff]
        %v6040 = vld [vmem:[#allocation2 + $0x464] sm:$0xff]
        %v6041 = vld [vmem:[#allocation2 + $0x46c] sm:$0xff]
        %v6042 = vld [vmem:[#allocation2 + $0x474] sm:$0xf]
        %v6044 = vsel %vm5773, %v5701, 0
        %v6047 = vsel %vm5773, %v5706, 0
        %v6050 = vsel %vm5780, %v6042, 0
        %6052 = vmatprep.subr.mxu0 0.0
        %6053 = vmatpush1.msra.mxu0 %v6036
        %6054 = vmatprep.subr.mxu0 0.0
        %6055 = vmatpush1.msra.mxu0 %v6037
        %6056 = vmatprep.subr.mxu0 0.0
        %6057 = vmatpush1.msra.mxu0 %v6038
        %6058 = vmatprep.subr.mxu0 0.0
        %6059 = vmatpush1.msra.mxu0 %v6039
        %6060 = vmatprep.subr.mxu0 0.0
        %6061 = vmatpush1.msra.mxu0 %v6040
        %6062 = vmatprep.subr.mxu0 0.0
        %6063 = vmatpush1.msra.mxu0 %v6041
        %6064 = vmatprep.subr.mxu0 0.0
        %6065 = vmatpush1.msra.mxu0 %v6050
        %6066 = vmatprep.subr.mxu0 0.0
        %6067 = vmatpush1.msra.mxu0 0.0
        %6068 = vmatprep.subr.mxu0 0.0
        %6069 = vmatpush1.msra.mxu0 0.0
        %6070 = vmatprep.subr.mxu0 0.0
        %6071 = vmatpush1.msra.mxu0 0.0
        %6072 = vmatprep.subr.mxu0 0.0
        %6073 = vmatpush1.msra.mxu0 0.0
        %6074 = vmatprep.subr.mxu0 0.0
        %6075 = vmatpush1.msra.mxu0 0.0
        %6076 = vmatprep.subr.mxu0 0.0
        %6077 = vmatpush1.msra.mxu0 0.0
        %6078 = vmatprep.subr.mxu0 0.0
        %6079 = vmatpush1.msra.mxu0 0.0
        %6080 = vmatprep.subr.mxu0 0.0
        %6081 = vmatpush1.msra.mxu0 0.0
        %6082 = vmatprep.subr.mxu0 0.0
        %6083 = vmatpush1.msra.mxu0 0.0
        %6084 = vmatprep.subr.mxu0 0.0
        %6085 = vmatpush1.msra.mxu0 0.0
        %6086 = vmatprep.subr.mxu0 0.0
        %6087 = vmatpush1.msra.mxu0 0.0
        %6088 = vmatprep.subr.mxu0 0.0
        %6089 = vmatpush1.msra.mxu0 0.0
        %6090 = vmatprep.subr.mxu0 0.0
        %6091 = vmatpush1.msra.mxu0 0.0
        %6092 = vmatprep.subr.mxu0 0.0
        %6093 = vmatpush1.msra.mxu0 0.0
        %6094 = vmatprep.subr.mxu0 0.0
        %6095 = vmatpush1.msra.mxu0 0.0
        %6096 = vmatprep.subr.mxu0 0.0
        %6097 = vmatpush1.msra.mxu0 0.0
        %6098 = vmatprep.subr.mxu0 0.0
        %6099 = vmatpush1.msra.mxu0 0.0
        %6100 = vmatprep.subr.mxu0 0.0
        %6101 = vmatpush1.msra.mxu0 0.0
        %6102 = vmatprep.subr.mxu0 0.0
        %6103 = vmatpush1.msra.mxu0 0.0
        %6104 = vmatprep.subr.mxu0 0.0
        %6105 = vmatpush1.msra.mxu0 0.0
        %6106 = vmatprep.subr.mxu0 0.0
        %6107 = vmatpush1.msra.mxu0 0.0
        %6108 = vmatprep.subr.mxu0 0.0
        %6109 = vmatpush1.msra.mxu0 0.0
        %6110 = vmatprep.subr.mxu0 0.0
        %6111 = vmatpush1.msra.mxu0 0.0
        %6112 = vmatprep.subr.mxu0 0.0
        %6113 = vmatpush1.msra.mxu0 0.0
        %6114 = vmatprep.subr.mxu0 0.0
        %6115 = vmatpush1.msra.mxu0 0.0
        %6116 = vmatprep.mubr.f32.mxu0 0.0
        %6117 = vmatmul.mubr.f32.gmra.mrb[0].mxu0 %v6044
        %v6118 = vpop.f32.mrb[0].mxu0
        %v6119 = vadd.f32 0.0, %v6118
        %v6120 = vpop.f32.mrb[0].mxu0
        %6121 = vmatprep.mubr.f32.mxu0 0.0
        %6122 = vmatmul.mubr.f32.gmra.mrb[0].mxu0 %v6047
        %v6123 = vpop.f32.mrb[0].mxu0
        %v6124 = vadd.f32 0.0, %v6123
        %v6125 = vpop.f32.mrb[0].mxu0
        %6126 = vdwg.mxu0
        %v6127 = vadd.f32 %v6034, %v6119
        %v6128 = vadd.f32 %v6035, %v6124
        %v6129 = vld [vmem:[#allocation2 + $0x478] sm:$0xff]
        %v6130 = vld [vmem:[#allocation2 + $0x480] sm:$0xff]
        %v6131 = vld [vmem:[#allocation2 + $0x488] sm:$0xff]
        %v6132 = vld [vmem:[#allocation2 + $0x490] sm:$0xff]
        %v6133 = vld [vmem:[#allocation2 + $0x498] sm:$0xff]
        %v6134 = vld [vmem:[#allocation2 + $0x4a0] sm:$0xff]
        %v6135 = vld [vmem:[#allocation2 + $0x4a8] sm:$0xf]
        %v6137 = vsel %vm5773, %v5711, 0
        %v6140 = vsel %vm5773, %v5716, 0
        %v6143 = vsel %vm5780, %v6135, 0
        %6145 = vmatprep.subr.mxu0 0.0
        %6146 = vmatpush1.msra.mxu0 %v6129
        %6147 = vmatprep.subr.mxu0 0.0
        %6148 = vmatpush1.msra.mxu0 %v6130
        %6149 = vmatprep.subr.mxu0 0.0
        %6150 = vmatpush1.msra.mxu0 %v6131
        %6151 = vmatprep.subr.mxu0 0.0
        %6152 = vmatpush1.msra.mxu0 %v6132
        %6153 = vmatprep.subr.mxu0 0.0
        %6154 = vmatpush1.msra.mxu0 %v6133
        %6155 = vmatprep.subr.mxu0 0.0
        %6156 = vmatpush1.msra.mxu0 %v6134
        %6157 = vmatprep.subr.mxu0 0.0
        %6158 = vmatpush1.msra.mxu0 %v6143
        %6159 = vmatprep.subr.mxu0 0.0
        %6160 = vmatpush1.msra.mxu0 0.0
        %6161 = vmatprep.subr.mxu0 0.0
        %6162 = vmatpush1.msra.mxu0 0.0
        %6163 = vmatprep.subr.mxu0 0.0
        %6164 = vmatpush1.msra.mxu0 0.0
        %6165 = vmatprep.subr.mxu0 0.0
        %6166 = vmatpush1.msra.mxu0 0.0
        %6167 = vmatprep.subr.mxu0 0.0
        %6168 = vmatpush1.msra.mxu0 0.0
        %6169 = vmatprep.subr.mxu0 0.0
        %6170 = vmatpush1.msra.mxu0 0.0
        %6171 = vmatprep.subr.mxu0 0.0
        %6172 = vmatpush1.msra.mxu0 0.0
        %6173 = vmatprep.subr.mxu0 0.0
        %6174 = vmatpush1.msra.mxu0 0.0
        %6175 = vmatprep.subr.mxu0 0.0
        %6176 = vmatpush1.msra.mxu0 0.0
        %6177 = vmatprep.subr.mxu0 0.0
        %6178 = vmatpush1.msra.mxu0 0.0
        %6179 = vmatprep.subr.mxu0 0.0
        %6180 = vmatpush1.msra.mxu0 0.0
        %6181 = vmatprep.subr.mxu0 0.0
        %6182 = vmatpush1.msra.mxu0 0.0
        %6183 = vmatprep.subr.mxu0 0.0
        %6184 = vmatpush1.msra.mxu0 0.0
        %6185 = vmatprep.subr.mxu0 0.0
        %6186 = vmatpush1.msra.mxu0 0.0
        %6187 = vmatprep.subr.mxu0 0.0
        %6188 = vmatpush1.msra.mxu0 0.0
        %6189 = vmatprep.subr.mxu0 0.0
        %6190 = vmatpush1.msra.mxu0 0.0
        %6191 = vmatprep.subr.mxu0 0.0
        %6192 = vmatpush1.msra.mxu0 0.0
        %6193 = vmatprep.subr.mxu0 0.0
        %6194 = vmatpush1.msra.mxu0 0.0
        %6195 = vmatprep.subr.mxu0 0.0
        %6196 = vmatpush1.msra.mxu0 0.0
        %6197 = vmatprep.subr.mxu0 0.0
        %6198 = vmatpush1.msra.mxu0 0.0
        %6199 = vmatprep.subr.mxu0 0.0
        %6200 = vmatpush1.msra.mxu0 0.0
        %6201 = vmatprep.subr.mxu0 0.0
        %6202 = vmatpush1.msra.mxu0 0.0
        %6203 = vmatprep.subr.mxu0 0.0
        %6204 = vmatpush1.msra.mxu0 0.0
        %6205 = vmatprep.subr.mxu0 0.0
        %6206 = vmatpush1.msra.mxu0 0.0
        %6207 = vmatprep.subr.mxu0 0.0
        %6208 = vmatpush1.msra.mxu0 0.0
        %6209 = vmatprep.mubr.f32.mxu0 0.0
        %6210 = vmatmul.mubr.f32.gmra.mrb[0].mxu0 %v6137
        %v6211 = vpop.f32.mrb[0].mxu0
        %v6212 = vadd.f32 0.0, %v6211
        %v6213 = vpop.f32.mrb[0].mxu0
        %6214 = vmatprep.mubr.f32.mxu0 0.0
        %6215 = vmatmul.mubr.f32.gmra.mrb[0].mxu0 %v6140
        %v6216 = vpop.f32.mrb[0].mxu0
        %v6217 = vadd.f32 0.0, %v6216
        %v6218 = vpop.f32.mrb[0].mxu0
        %6219 = vdwg.mxu0
        %v6220 = vadd.f32 %v6127, %v6212
        %v6221 = vadd.f32 %v6128, %v6217
        %v6222 = vld [vmem:[#allocation2 + $0x4ac] sm:$0xff]
        %v6223 = vld [vmem:[#allocation2 + $0x4b4] sm:$0xff]
        %v6224 = vld [vmem:[#allocation2 + $0x4bc] sm:$0xff]
        %v6225 = vld [vmem:[#allocation2 + $0x4c4] sm:$0xff]
        %v6226 = vld [vmem:[#allocation2 + $0x4cc] sm:$0xff]
        %v6227 = vld [vmem:[#allocation2 + $0x4d4] sm:$0xff]
        %v6228 = vld [vmem:[#allocation2 + $0x4dc] sm:$0xf]
        %v6230 = vsel %vm5773, %v5721, 0
        %v6233 = vsel %vm5773, %v5726, 0
        %v6236 = vsel %vm5780, %v6228, 0
        %6238 = vmatprep.subr.mxu0 0.0
        %6239 = vmatpush1.msra.mxu0 %v6222
        %6240 = vmatprep.subr.mxu0 0.0
        %6241 = vmatpush1.msra.mxu0 %v6223
        %6242 = vmatprep.subr.mxu0 0.0
        %6243 = vmatpush1.msra.mxu0 %v6224
        %6244 = vmatprep.subr.mxu0 0.0
        %6245 = vmatpush1.msra.mxu0 %v6225
        %6246 = vmatprep.subr.mxu0 0.0
        %6247 = vmatpush1.msra.mxu0 %v6226
        %6248 = vmatprep.subr.mxu0 0.0
        %6249 = vmatpush1.msra.mxu0 %v6227
        %6250 = vmatprep.subr.mxu0 0.0
        %6251 = vmatpush1.msra.mxu0 %v6236
        %6252 = vmatprep.subr.mxu0 0.0
        %6253 = vmatpush1.msra.mxu0 0.0
        %6254 = vmatprep.subr.mxu0 0.0
        %6255 = vmatpush1.msra.mxu0 0.0
        %6256 = vmatprep.subr.mxu0 0.0
        %6257 = vmatpush1.msra.mxu0 0.0
        %6258 = vmatprep.subr.mxu0 0.0
        %6259 = vmatpush1.msra.mxu0 0.0
        %6260 = vmatprep.subr.mxu0 0.0
        %6261 = vmatpush1.msra.mxu0 0.0
        %6262 = vmatprep.subr.mxu0 0.0
        %6263 = vmatpush1.msra.mxu0 0.0
        %6264 = vmatprep.subr.mxu0 0.0
        %6265 = vmatpush1.msra.mxu0 0.0
        %6266 = vmatprep.subr.mxu0 0.0
        %6267 = vmatpush1.msra.mxu0 0.0
        %6268 = vmatprep.subr.mxu0 0.0
        %6269 = vmatpush1.msra.mxu0 0.0
        %6270 = vmatprep.subr.mxu0 0.0
        %6271 = vmatpush1.msra.mxu0 0.0
        %6272 = vmatprep.subr.mxu0 0.0
        %6273 = vmatpush1.msra.mxu0 0.0
        %6274 = vmatprep.subr.mxu0 0.0
        %6275 = vmatpush1.msra.mxu0 0.0
        %6276 = vmatprep.subr.mxu0 0.0
        %6277 = vmatpush1.msra.mxu0 0.0
        %6278 = vmatprep.subr.mxu0 0.0
        %6279 = vmatpush1.msra.mxu0 0.0
        %6280 = vmatprep.subr.mxu0 0.0
        %6281 = vmatpush1.msra.mxu0 0.0
        %6282 = vmatprep.subr.mxu0 0.0
        %6283 = vmatpush1.msra.mxu0 0.0
        %6284 = vmatprep.subr.mxu0 0.0
        %6285 = vmatpush1.msra.mxu0 0.0
        %6286 = vmatprep.subr.mxu0 0.0
        %6287 = vmatpush1.msra.mxu0 0.0
        %6288 = vmatprep.subr.mxu0 0.0
        %6289 = vmatpush1.msra.mxu0 0.0
        %6290 = vmatprep.subr.mxu0 0.0
        %6291 = vmatpush1.msra.mxu0 0.0
        %6292 = vmatprep.subr.mxu0 0.0
        %6293 = vmatpush1.msra.mxu0 0.0
        %6294 = vmatprep.subr.mxu0 0.0
        %6295 = vmatpush1.msra.mxu0 0.0
        %6296 = vmatprep.subr.mxu0 0.0
        %6297 = vmatpush1.msra.mxu0 0.0
        %6298 = vmatprep.subr.mxu0 0.0
        %6299 = vmatpush1.msra.mxu0 0.0
        %6300 = vmatprep.subr.mxu0 0.0
        %6301 = vmatpush1.msra.mxu0 0.0
        %6302 = vmatprep.mubr.f32.mxu0 0.0
        %6303 = vmatmul.mubr.f32.gmra.mrb[0].mxu0 %v6230
        %v6304 = vpop.f32.mrb[0].mxu0
        %v6305 = vadd.f32 0.0, %v6304
        %v6306 = vpop.f32.mrb[0].mxu0
        %6307 = vmatprep.mubr.f32.mxu0 0.0
        %6308 = vmatmul.mubr.f32.gmra.mrb[0].mxu0 %v6233
        %v6309 = vpop.f32.mrb[0].mxu0
        %v6310 = vadd.f32 0.0, %v6309
        %v6311 = vpop.f32.mrb[0].mxu0
        %6312 = vdwg.mxu0
        %v6313 = vadd.f32 %v6220, %v6305
        %v6314 = vadd.f32 %v6221, %v6310
        %v6315 = vld [vmem:[#allocation2 + $0x4e0] sm:$0xff]
        %v6316 = vld [vmem:[#allocation2 + $0x4e8] sm:$0xff]
        %v6317 = vld [vmem:[#allocation2 + $0x4f0] sm:$0xff]
        %v6318 = vld [vmem:[#allocation2 + $0x4f8] sm:$0xff]
        %v6319 = vld [vmem:[#allocation2 + $0x500] sm:$0xff]
        %v6320 = vld [vmem:[#allocation2 + $0x508] sm:$0xff]
        %v6321 = vld [vmem:[#allocation2 + $0x510] sm:$0xf]
        %v6323 = vsel %vm5773, %v5731, 0
        %v6326 = vsel %vm5773, %v5736, 0
        %v6329 = vsel %vm5780, %v6321, 0
        %6331 = vmatprep.subr.mxu0 0.0
        %6332 = vmatpush1.msra.mxu0 %v6315
        %6333 = vmatprep.subr.mxu0 0.0
        %6334 = vmatpush1.msra.mxu0 %v6316
        %6335 = vmatprep.subr.mxu0 0.0
        %6336 = vmatpush1.msra.mxu0 %v6317
        %6337 = vmatprep.subr.mxu0 0.0
        %6338 = vmatpush1.msra.mxu0 %v6318
        %6339 = vmatprep.subr.mxu0 0.0
        %6340 = vmatpush1.msra.mxu0 %v6319
        %6341 = vmatprep.subr.mxu0 0.0
        %6342 = vmatpush1.msra.mxu0 %v6320
        %6343 = vmatprep.subr.mxu0 0.0
        %6344 = vmatpush1.msra.mxu0 %v6329
        %6345 = vmatprep.subr.mxu0 0.0
        %6346 = vmatpush1.msra.mxu0 0.0
        %6347 = vmatprep.subr.mxu0 0.0
        %6348 = vmatpush1.msra.mxu0 0.0
        %6349 = vmatprep.subr.mxu0 0.0
        %6350 = vmatpush1.msra.mxu0 0.0
        %6351 = vmatprep.subr.mxu0 0.0
        %6352 = vmatpush1.msra.mxu0 0.0
        %6353 = vmatprep.subr.mxu0 0.0
        %6354 = vmatpush1.msra.mxu0 0.0
        %6355 = vmatprep.subr.mxu0 0.0
        %6356 = vmatpush1.msra.mxu0 0.0
        %6357 = vmatprep.subr.mxu0 0.0
        %6358 = vmatpush1.msra.mxu0 0.0
        %6359 = vmatprep.subr.mxu0 0.0
        %6360 = vmatpush1.msra.mxu0 0.0
        %6361 = vmatprep.subr.mxu0 0.0
        %6362 = vmatpush1.msra.mxu0 0.0
        %6363 = vmatprep.subr.mxu0 0.0
        %6364 = vmatpush1.msra.mxu0 0.0
        %6365 = vmatprep.subr.mxu0 0.0
        %6366 = vmatpush1.msra.mxu0 0.0
        %6367 = vmatprep.subr.mxu0 0.0
        %6368 = vmatpush1.msra.mxu0 0.0
        %6369 = vmatprep.subr.mxu0 0.0
        %6370 = vmatpush1.msra.mxu0 0.0
        %6371 = vmatprep.subr.mxu0 0.0
        %6372 = vmatpush1.msra.mxu0 0.0
        %6373 = vmatprep.subr.mxu0 0.0
        %6374 = vmatpush1.msra.mxu0 0.0
        %6375 = vmatprep.subr.mxu0 0.0
        %6376 = vmatpush1.msra.mxu0 0.0
        %6377 = vmatprep.subr.mxu0 0.0
        %6378 = vmatpush1.msra.mxu0 0.0
        %6379 = vmatprep.subr.mxu0 0.0
        %6380 = vmatpush1.msra.mxu0 0.0
        %6381 = vmatprep.subr.mxu0 0.0
        %6382 = vmatpush1.msra.mxu0 0.0
        %6383 = vmatprep.subr.mxu0 0.0
        %6384 = vmatpush1.msra.mxu0 0.0
        %6385 = vmatprep.subr.mxu0 0.0
        %6386 = vmatpush1.msra.mxu0 0.0
        %6387 = vmatprep.subr.mxu0 0.0
        %6388 = vmatpush1.msra.mxu0 0.0
        %6389 = vmatprep.subr.mxu0 0.0
        %6390 = vmatpush1.msra.mxu0 0.0
        %6391 = vmatprep.subr.mxu0 0.0
        %6392 = vmatpush1.msra.mxu0 0.0
        %6393 = vmatprep.subr.mxu0 0.0
        %6394 = vmatpush1.msra.mxu0 0.0
        %6395 = vmatprep.mubr.f32.mxu0 0.0
        %6396 = vmatmul.mubr.f32.gmra.mrb[0].mxu0 %v6323
        %v6397 = vpop.f32.mrb[0].mxu0
        %v6398 = vadd.f32 0.0, %v6397
        %v6399 = vpop.f32.mrb[0].mxu0
        %6400 = vmatprep.mubr.f32.mxu0 0.0
        %6401 = vmatmul.mubr.f32.gmra.mrb[0].mxu0 %v6326
        %v6402 = vpop.f32.mrb[0].mxu0
        %v6403 = vadd.f32 0.0, %v6402
        %v6404 = vpop.f32.mrb[0].mxu0
        %6405 = vdwg.mxu0
        %v6406 = vadd.f32 %v6313, %v6398
        %v6407 = vadd.f32 %v6314, %v6403
        %v6408 = vld [vmem:[#allocation2 + $0x514] sm:$0xff]
        %v6409 = vld [vmem:[#allocation2 + $0x51c] sm:$0xff]
        %v6410 = vld [vmem:[#allocation2 + $0x524] sm:$0xff]
        %v6411 = vld [vmem:[#allocation2 + $0x52c] sm:$0xff]
        %v6412 = vld [vmem:[#allocation2 + $0x534] sm:$0xff]
        %v6413 = vld [vmem:[#allocation2 + $0x53c] sm:$0xff]
        %v6414 = vld [vmem:[#allocation2 + $0x544] sm:$0xf]
        %v6416 = vsel %vm5773, %v5741, 0
        %v6419 = vsel %vm5773, %v5746, 0
        %v6422 = vsel %vm5780, %v6414, 0
        %6424 = vmatprep.subr.mxu0 0.0
        %6425 = vmatpush1.msra.mxu0 %v6408
        %6426 = vmatprep.subr.mxu0 0.0
        %6427 = vmatpush1.msra.mxu0 %v6409
        %6428 = vmatprep.subr.mxu0 0.0
        %6429 = vmatpush1.msra.mxu0 %v6410
        %6430 = vmatprep.subr.mxu0 0.0
        %6431 = vmatpush1.msra.mxu0 %v6411
        %6432 = vmatprep.subr.mxu0 0.0
        %6433 = vmatpush1.msra.mxu0 %v6412
        %6434 = vmatprep.subr.mxu0 0.0
        %6435 = vmatpush1.msra.mxu0 %v6413
        %6436 = vmatprep.subr.mxu0 0.0
        %6437 = vmatpush1.msra.mxu0 %v6422
        %6438 = vmatprep.subr.mxu0 0.0
        %6439 = vmatpush1.msra.mxu0 0.0
        %6440 = vmatprep.subr.mxu0 0.0
        %6441 = vmatpush1.msra.mxu0 0.0
        %6442 = vmatprep.subr.mxu0 0.0
        %6443 = vmatpush1.msra.mxu0 0.0
        %6444 = vmatprep.subr.mxu0 0.0
        %6445 = vmatpush1.msra.mxu0 0.0
        %6446 = vmatprep.subr.mxu0 0.0
        %6447 = vmatpush1.msra.mxu0 0.0
        %6448 = vmatprep.subr.mxu0 0.0
        %6449 = vmatpush1.msra.mxu0 0.0
        %6450 = vmatprep.subr.mxu0 0.0
        %6451 = vmatpush1.msra.mxu0 0.0
        %6452 = vmatprep.subr.mxu0 0.0
        %6453 = vmatpush1.msra.mxu0 0.0
        %6454 = vmatprep.subr.mxu0 0.0
        %6455 = vmatpush1.msra.mxu0 0.0
        %6456 = vmatprep.subr.mxu0 0.0
        %6457 = vmatpush1.msra.mxu0 0.0
        %6458 = vmatprep.subr.mxu0 0.0
        %6459 = vmatpush1.msra.mxu0 0.0
        %6460 = vmatprep.subr.mxu0 0.0
        %6461 = vmatpush1.msra.mxu0 0.0
        %6462 = vmatprep.subr.mxu0 0.0
        %6463 = vmatpush1.msra.mxu0 0.0
        %6464 = vmatprep.subr.mxu0 0.0
        %6465 = vmatpush1.msra.mxu0 0.0
        %6466 = vmatprep.subr.mxu0 0.0
        %6467 = vmatpush1.msra.mxu0 0.0
        %6468 = vmatprep.subr.mxu0 0.0
        %6469 = vmatpush1.msra.mxu0 0.0
        %6470 = vmatprep.subr.mxu0 0.0
        %6471 = vmatpush1.msra.mxu0 0.0
        %6472 = vmatprep.subr.mxu0 0.0
        %6473 = vmatpush1.msra.mxu0 0.0
        %6474 = vmatprep.subr.mxu0 0.0
        %6475 = vmatpush1.msra.mxu0 0.0
        %6476 = vmatprep.subr.mxu0 0.0
        %6477 = vmatpush1.msra.mxu0 0.0
        %6478 = vmatprep.subr.mxu0 0.0
        %6479 = vmatpush1.msra.mxu0 0.0
        %6480 = vmatprep.subr.mxu0 0.0
        %6481 = vmatpush1.msra.mxu0 0.0
        %6482 = vmatprep.subr.mxu0 0.0
        %6483 = vmatpush1.msra.mxu0 0.0
        %6484 = vmatprep.subr.mxu0 0.0
        %6485 = vmatpush1.msra.mxu0 0.0
        %6486 = vmatprep.subr.mxu0 0.0
        %6487 = vmatpush1.msra.mxu0 0.0
        %6488 = vmatprep.mubr.f32.mxu0 0.0
        %6489 = vmatmul.mubr.f32.gmra.mrb[0].mxu0 %v6416
        %v6490 = vpop.f32.mrb[0].mxu0
        %v6491 = vadd.f32 0.0, %v6490
        %v6492 = vpop.f32.mrb[0].mxu0
        %6493 = vmatprep.mubr.f32.mxu0 0.0
        %6494 = vmatmul.mubr.f32.gmra.mrb[0].mxu0 %v6419
        %v6495 = vpop.f32.mrb[0].mxu0
        %v6496 = vadd.f32 0.0, %v6495
        %v6497 = vpop.f32.mrb[0].mxu0
        %6498 = vdwg.mxu0
        %v6499 = vadd.f32 %v6406, %v6491
        %v6500 = vadd.f32 %v6407, %v6496
        %v6501 = vld [vmem:[#allocation2 + $0x548] sm:$0xff]
        %v6502 = vld [vmem:[#allocation2 + $0x550] sm:$0xff]
        %v6503 = vld [vmem:[#allocation2 + $0x558] sm:$0xff]
        %v6504 = vld [vmem:[#allocation2 + $0x560] sm:$0xff]
        %v6505 = vld [vmem:[#allocation2 + $0x568] sm:$0xff]
        %v6506 = vld [vmem:[#allocation2 + $0x570] sm:$0xff]
        %v6507 = vld [vmem:[#allocation2 + $0x578] sm:$0xf]
        %v6509 = vsel %vm5773, %v5751, 0
        %v6512 = vsel %vm5773, %v5756, 0
        %v6515 = vsel %vm5780, %v6507, 0
        %6517 = vmatprep.subr.mxu0 0.0
        %6518 = vmatpush1.msra.mxu0 %v6501
        %6519 = vmatprep.subr.mxu0 0.0
        %6520 = vmatpush1.msra.mxu0 %v6502
        %6521 = vmatprep.subr.mxu0 0.0
        %6522 = vmatpush1.msra.mxu0 %v6503
        %6523 = vmatprep.subr.mxu0 0.0
        %6524 = vmatpush1.msra.mxu0 %v6504
        %6525 = vmatprep.subr.mxu0 0.0
        %6526 = vmatpush1.msra.mxu0 %v6505
        %6527 = vmatprep.subr.mxu0 0.0
        %6528 = vmatpush1.msra.mxu0 %v6506
        %6529 = vmatprep.subr.mxu0 0.0
        %6530 = vmatpush1.msra.mxu0 %v6515
        %6531 = vmatprep.subr.mxu0 0.0
        %6532 = vmatpush1.msra.mxu0 0.0
        %6533 = vmatprep.subr.mxu0 0.0
        %6534 = vmatpush1.msra.mxu0 0.0
        %6535 = vmatprep.subr.mxu0 0.0
        %6536 = vmatpush1.msra.mxu0 0.0
        %6537 = vmatprep.subr.mxu0 0.0
        %6538 = vmatpush1.msra.mxu0 0.0
        %6539 = vmatprep.subr.mxu0 0.0
        %6540 = vmatpush1.msra.mxu0 0.0
        %6541 = vmatprep.subr.mxu0 0.0
        %6542 = vmatpush1.msra.mxu0 0.0
        %6543 = vmatprep.subr.mxu0 0.0
        %6544 = vmatpush1.msra.mxu0 0.0
        %6545 = vmatprep.subr.mxu0 0.0
        %6546 = vmatpush1.msra.mxu0 0.0
        %6547 = vmatprep.subr.mxu0 0.0
        %6548 = vmatpush1.msra.mxu0 0.0
        %6549 = vmatprep.subr.mxu0 0.0
        %6550 = vmatpush1.msra.mxu0 0.0
        %6551 = vmatprep.subr.mxu0 0.0
        %6552 = vmatpush1.msra.mxu0 0.0
        %6553 = vmatprep.subr.mxu0 0.0
        %6554 = vmatpush1.msra.mxu0 0.0
        %6555 = vmatprep.subr.mxu0 0.0
        %6556 = vmatpush1.msra.mxu0 0.0
        %6557 = vmatprep.subr.mxu0 0.0
        %6558 = vmatpush1.msra.mxu0 0.0
        %6559 = vmatprep.subr.mxu0 0.0
        %6560 = vmatpush1.msra.mxu0 0.0
        %6561 = vmatprep.subr.mxu0 0.0
        %6562 = vmatpush1.msra.mxu0 0.0
        %6563 = vmatprep.subr.mxu0 0.0
        %6564 = vmatpush1.msra.mxu0 0.0
        %6565 = vmatprep.subr.mxu0 0.0
        %6566 = vmatpush1.msra.mxu0 0.0
        %6567 = vmatprep.subr.mxu0 0.0
        %6568 = vmatpush1.msra.mxu0 0.0
        %6569 = vmatprep.subr.mxu0 0.0
        %6570 = vmatpush1.msra.mxu0 0.0
        %6571 = vmatprep.subr.mxu0 0.0
        %6572 = vmatpush1.msra.mxu0 0.0
        %6573 = vmatprep.subr.mxu0 0.0
        %6574 = vmatpush1.msra.mxu0 0.0
        %6575 = vmatprep.subr.mxu0 0.0
        %6576 = vmatpush1.msra.mxu0 0.0
        %6577 = vmatprep.subr.mxu0 0.0
        %6578 = vmatpush1.msra.mxu0 0.0
        %6579 = vmatprep.subr.mxu0 0.0
        %6580 = vmatpush1.msra.mxu0 0.0
        %6581 = vmatprep.mubr.f32.mxu0 0.0
        %6582 = vmatmul.mubr.f32.gmra.mrb[0].mxu0 %v6509
        %v6583 = vpop.f32.mrb[0].mxu0
        %v6584 = vadd.f32 0.0, %v6583
        %v6585 = vpop.f32.mrb[0].mxu0
        %6586 = vmatprep.mubr.f32.mxu0 0.0
        %6587 = vmatmul.mubr.f32.gmra.mrb[0].mxu0 %v6512
        %v6588 = vpop.f32.mrb[0].mxu0
        %v6589 = vadd.f32 0.0, %v6588
        %v6590 = vpop.f32.mrb[0].mxu0
        %6591 = vdwg.mxu0
        %v6592 = vadd.f32 %v6499, %v6584
        %v6593 = vadd.f32 %v6500, %v6589
        %v6594 = vadd.f32 %v6592, %v2769
        %v6595 = vadd.f32 %v6593, %v2774
        %v6596 = vmul.f32 %v6594, 0.33333334
        %v6597 = vmul.f32 %v6595, 0.33333334
        %v6598 = vadd.f32 %v4661, %v6596
        %v6599 = vadd.f32 %v4662, %v6597
        %v6600 = vld [vmem:[%s4] sm:$0xff]
        %v6601 = vld [vmem:[%s4 + $0x8] sm:$0xff]
        %v6602 = vld [vmem:[%s4 + $0x10] sm:$0xff]
        %v6603 = vld [vmem:[%s4 + $0x18] sm:$0xff]
        %v6604 = vld [vmem:[%s4 + $0x40] sm:$0xff]
        %v6605 = vld [vmem:[%s4 + $0x48] sm:$0xff]
        %v6606 = vld [vmem:[%s4 + $0x50] sm:$0xff]
        %v6607 = vld [vmem:[%s4 + $0x58] sm:$0xff]
        %v6609 = vsel %vm716, %v6598, 0
        %v6612 = vsel %vm716, %v6599, 0
        %6614 = vmatprep.subr.mxu0 0.0
        %6615 = vmatpush1.msra.mxu0 %v6604
        %6616 = vmatprep.subr.mxu0 0.0
        %6617 = vmatpush1.msra.mxu0 %v6605
        %6618 = vmatprep.subr.mxu0 0.0
        %6619 = vmatpush1.msra.mxu0 %v6606
        %6620 = vmatprep.subr.mxu0 0.0
        %6621 = vmatpush1.msra.mxu0 %v6607
        %6622 = vmatprep.subr.mxu0 0.0
        %6623 = vmatpush1.msra.mxu0 0.0
        %6624 = vmatprep.subr.mxu0 0.0
        %6625 = vmatpush1.msra.mxu0 0.0
        %6626 = vmatprep.subr.mxu0 0.0
        %6627 = vmatpush1.msra.mxu0 0.0
        %6628 = vmatprep.subr.mxu0 0.0
        %6629 = vmatpush1.msra.mxu0 0.0
        %6630 = vmatprep.subr.mxu0 0.0
        %6631 = vmatpush1.msra.mxu0 0.0
        %6632 = vmatprep.subr.mxu0 0.0
        %6633 = vmatpush1.msra.mxu0 0.0
        %6634 = vmatprep.subr.mxu0 0.0
        %6635 = vmatpush1.msra.mxu0 0.0
        %6636 = vmatprep.subr.mxu0 0.0
        %6637 = vmatpush1.msra.mxu0 0.0
        %6638 = vmatprep.subr.mxu0 0.0
        %6639 = vmatpush1.msra.mxu0 0.0
        %6640 = vmatprep.subr.mxu0 0.0
        %6641 = vmatpush1.msra.mxu0 0.0
        %6642 = vmatprep.subr.mxu0 0.0
        %6643 = vmatpush1.msra.mxu0 0.0
        %6644 = vmatprep.subr.mxu0 0.0
        %6645 = vmatpush1.msra.mxu0 0.0
        %6646 = vmatprep.subr.mxu0 0.0
        %6647 = vmatpush1.msra.mxu0 0.0
        %6648 = vmatprep.subr.mxu0 0.0
        %6649 = vmatpush1.msra.mxu0 0.0
        %6650 = vmatprep.subr.mxu0 0.0
        %6651 = vmatpush1.msra.mxu0 0.0
        %6652 = vmatprep.subr.mxu0 0.0
        %6653 = vmatpush1.msra.mxu0 0.0
        %6654 = vmatprep.subr.mxu0 0.0
        %6655 = vmatpush1.msra.mxu0 0.0
        %6656 = vmatprep.subr.mxu0 0.0
        %6657 = vmatpush1.msra.mxu0 0.0
        %6658 = vmatprep.subr.mxu0 0.0
        %6659 = vmatpush1.msra.mxu0 0.0
        %6660 = vmatprep.subr.mxu0 0.0
        %6661 = vmatpush1.msra.mxu0 0.0
        %6662 = vmatprep.subr.mxu0 0.0
        %6663 = vmatpush1.msra.mxu0 0.0
        %6664 = vmatprep.subr.mxu0 0.0
        %6665 = vmatpush1.msra.mxu0 0.0
        %6666 = vmatprep.subr.mxu0 0.0
        %6667 = vmatpush1.msra.mxu0 0.0
        %6668 = vmatprep.subr.mxu0 0.0
        %6669 = vmatpush1.msra.mxu0 0.0
        %6670 = vmatprep.subr.mxu0 0.0
        %6671 = vmatpush1.msra.mxu0 0.0
        %6672 = vmatprep.subr.mxu0 0.0
        %6673 = vmatpush1.msra.mxu0 0.0
        %6674 = vmatprep.subr.mxu0 0.0
        %6675 = vmatpush1.msra.mxu0 0.0
        %6676 = vmatprep.subr.mxu0 0.0
        %6677 = vmatpush1.msra.mxu0 0.0
        %6678 = vmatprep.mubr.f32.mxu0 0.0
        %6679 = vmatmul.mubr.f32.gmra.mrb[0].mxu0 %v6609
        %v6680 = vpop.f32.mrb[0].mxu0
        %v6681 = vadd.f32 0.0, %v6680
        %v6682 = vpop.f32.mrb[0].mxu0
        %6683 = vmatprep.mubr.f32.mxu0 0.0
        %6684 = vmatmul.mubr.f32.gmra.mrb[0].mxu0 %v6612
        %v6685 = vpop.f32.mrb[0].mxu0
        %v6686 = vadd.f32 0.0, %v6685
        %v6687 = vpop.f32.mrb[0].mxu0
        %6688 = vdwg.mxu0
        %v6689 = vld [vmem:[%s4 + $0x20] sm:$0xff]
        %v6690 = vld [vmem:[%s4 + $0x28] sm:$0xff]
        %v6691 = vld [vmem:[%s4 + $0x30] sm:$0xff]
        %v6692 = vld [vmem:[%s4 + $0x38] sm:$0xff]
        %v6693 = vld [vmem:[%s4 + $0x60] sm:$0xff]
        %v6694 = vld [vmem:[%s4 + $0x68] sm:$0xff]
        %v6695 = vld [vmem:[%s4 + $0x70] sm:$0xff]
        %v6696 = vld [vmem:[%s4 + $0x78] sm:$0xff]
        %6697 = vmatprep.subr.mxu0 0.0
        %6698 = vmatpush1.msra.mxu0 %v6693
        %6699 = vmatprep.subr.mxu0 0.0
        %6700 = vmatpush1.msra.mxu0 %v6694
        %6701 = vmatprep.subr.mxu0 0.0
        %6702 = vmatpush1.msra.mxu0 %v6695
        %6703 = vmatprep.subr.mxu0 0.0
        %6704 = vmatpush1.msra.mxu0 %v6696
        %6705 = vmatprep.subr.mxu0 0.0
        %6706 = vmatpush1.msra.mxu0 0.0
        %6707 = vmatprep.subr.mxu0 0.0
        %6708 = vmatpush1.msra.mxu0 0.0
        %6709 = vmatprep.subr.mxu0 0.0
        %6710 = vmatpush1.msra.mxu0 0.0
        %6711 = vmatprep.subr.mxu0 0.0
        %6712 = vmatpush1.msra.mxu0 0.0
        %6713 = vmatprep.subr.mxu0 0.0
        %6714 = vmatpush1.msra.mxu0 0.0
        %6715 = vmatprep.subr.mxu0 0.0
        %6716 = vmatpush1.msra.mxu0 0.0
        %6717 = vmatprep.subr.mxu0 0.0
        %6718 = vmatpush1.msra.mxu0 0.0
        %6719 = vmatprep.subr.mxu0 0.0
        %6720 = vmatpush1.msra.mxu0 0.0
        %6721 = vmatprep.subr.mxu0 0.0
        %6722 = vmatpush1.msra.mxu0 0.0
        %6723 = vmatprep.subr.mxu0 0.0
        %6724 = vmatpush1.msra.mxu0 0.0
        %6725 = vmatprep.subr.mxu0 0.0
        %6726 = vmatpush1.msra.mxu0 0.0
        %6727 = vmatprep.subr.mxu0 0.0
        %6728 = vmatpush1.msra.mxu0 0.0
        %6729 = vmatprep.subr.mxu0 0.0
        %6730 = vmatpush1.msra.mxu0 0.0
        %6731 = vmatprep.subr.mxu0 0.0
        %6732 = vmatpush1.msra.mxu0 0.0
        %6733 = vmatprep.subr.mxu0 0.0
        %6734 = vmatpush1.msra.mxu0 0.0
        %6735 = vmatprep.subr.mxu0 0.0
        %6736 = vmatpush1.msra.mxu0 0.0
        %6737 = vmatprep.subr.mxu0 0.0
        %6738 = vmatpush1.msra.mxu0 0.0
        %6739 = vmatprep.subr.mxu0 0.0
        %6740 = vmatpush1.msra.mxu0 0.0
        %6741 = vmatprep.subr.mxu0 0.0
        %6742 = vmatpush1.msra.mxu0 0.0
        %6743 = vmatprep.subr.mxu0 0.0
        %6744 = vmatpush1.msra.mxu0 0.0
        %6745 = vmatprep.subr.mxu0 0.0
        %6746 = vmatpush1.msra.mxu0 0.0
        %6747 = vmatprep.subr.mxu0 0.0
        %6748 = vmatpush1.msra.mxu0 0.0
        %6749 = vmatprep.subr.mxu0 0.0
        %6750 = vmatpush1.msra.mxu0 0.0
        %6751 = vmatprep.subr.mxu0 0.0
        %6752 = vmatpush1.msra.mxu0 0.0
        %6753 = vmatprep.subr.mxu0 0.0
        %6754 = vmatpush1.msra.mxu0 0.0
        %6755 = vmatprep.subr.mxu0 0.0
        %6756 = vmatpush1.msra.mxu0 0.0
        %6757 = vmatprep.subr.mxu0 0.0
        %6758 = vmatpush1.msra.mxu0 0.0
        %6759 = vmatprep.subr.mxu0 0.0
        %6760 = vmatpush1.msra.mxu0 0.0
        %6761 = vmatprep.mubr.f32.mxu0 0.0
        %6762 = vmatmul.mubr.f32.gmra.mrb[0].mxu0 %v6609
        %v6763 = vpop.f32.mrb[0].mxu0
        %v6764 = vadd.f32 0.0, %v6763
        %v6765 = vpop.f32.mrb[0].mxu0
        %6766 = vmatprep.mubr.f32.mxu0 0.0
        %6767 = vmatmul.mubr.f32.gmra.mrb[0].mxu0 %v6612
        %v6768 = vpop.f32.mrb[0].mxu0
        %v6769 = vadd.f32 0.0, %v6768
        %v6770 = vpop.f32.mrb[0].mxu0
        %6771 = vdwg.mxu0
        %v6773 = vsel %vm354, %v6689, 0
        %v6776 = vsel %vm354, %v6690, 0
        %v6779 = vsel %vm354, %v6691, 0
        %v6782 = vsel %vm354, %v6692, 0
        %6784 = vmatprep.subr.mxu0 0.0
        %6785 = vmatpush1.msra.mxu0 %v6764
        %6786 = vmatprep.subr.mxu0 0.0
        %6787 = vmatpush1.msra.mxu0 %v6769
        %6788 = vmatprep.subr.mxu0 0.0
        %6789 = vmatpush1.msra.mxu0 0.0
        %6790 = vmatprep.subr.mxu0 0.0
        %6791 = vmatpush1.msra.mxu0 0.0
        %6792 = vmatprep.subr.mxu0 0.0
        %6793 = vmatpush1.msra.mxu0 0.0
        %6794 = vmatprep.subr.mxu0 0.0
        %6795 = vmatpush1.msra.mxu0 0.0
        %6796 = vmatprep.subr.mxu0 0.0
        %6797 = vmatpush1.msra.mxu0 0.0
        %6798 = vmatprep.subr.mxu0 0.0
        %6799 = vmatpush1.msra.mxu0 0.0
        %6800 = vmatprep.subr.mxu0 0.0
        %6801 = vmatpush1.msra.mxu0 0.0
        %6802 = vmatprep.subr.mxu0 0.0
        %6803 = vmatpush1.msra.mxu0 0.0
        %6804 = vmatprep.subr.mxu0 0.0
        %6805 = vmatpush1.msra.mxu0 0.0
        %6806 = vmatprep.subr.mxu0 0.0
        %6807 = vmatpush1.msra.mxu0 0.0
        %6808 = vmatprep.subr.mxu0 0.0
        %6809 = vmatpush1.msra.mxu0 0.0
        %6810 = vmatprep.subr.mxu0 0.0
        %6811 = vmatpush1.msra.mxu0 0.0
        %6812 = vmatprep.subr.mxu0 0.0
        %6813 = vmatpush1.msra.mxu0 0.0
        %6814 = vmatprep.subr.mxu0 0.0
        %6815 = vmatpush1.msra.mxu0 0.0
        %6816 = vmatprep.subr.mxu0 0.0
        %6817 = vmatpush1.msra.mxu0 0.0
        %6818 = vmatprep.subr.mxu0 0.0
        %6819 = vmatpush1.msra.mxu0 0.0
        %6820 = vmatprep.subr.mxu0 0.0
        %6821 = vmatpush1.msra.mxu0 0.0
        %6822 = vmatprep.subr.mxu0 0.0
        %6823 = vmatpush1.msra.mxu0 0.0
        %6824 = vmatprep.subr.mxu0 0.0
        %6825 = vmatpush1.msra.mxu0 0.0
        %6826 = vmatprep.subr.mxu0 0.0
        %6827 = vmatpush1.msra.mxu0 0.0
        %6828 = vmatprep.subr.mxu0 0.0
        %6829 = vmatpush1.msra.mxu0 0.0
        %6830 = vmatprep.subr.mxu0 0.0
        %6831 = vmatpush1.msra.mxu0 0.0
        %6832 = vmatprep.subr.mxu0 0.0
        %6833 = vmatpush1.msra.mxu0 0.0
        %6834 = vmatprep.subr.mxu0 0.0
        %6835 = vmatpush1.msra.mxu0 0.0
        %6836 = vmatprep.subr.mxu0 0.0
        %6837 = vmatpush1.msra.mxu0 0.0
        %6838 = vmatprep.subr.mxu0 0.0
        %6839 = vmatpush1.msra.mxu0 0.0
        %6840 = vmatprep.subr.mxu0 0.0
        %6841 = vmatpush1.msra.mxu0 0.0
        %6842 = vmatprep.subr.mxu0 0.0
        %6843 = vmatpush1.msra.mxu0 0.0
        %6844 = vmatprep.subr.mxu0 0.0
        %6845 = vmatpush1.msra.mxu0 0.0
        %6846 = vmatprep.subr.mxu0 0.0
        %6847 = vmatpush1.msra.mxu0 0.0
        %6848 = vmatprep.mubr.f32.mxu0 0.0
        %6849 = vmatmul.mubr.f32.gmra.mrb[0].mxu0 %v6773
        %v6850 = vpop.f32.mrb[0].mxu0
        %v6851 = vadd.f32 0.0, %v6850
        %v6852 = vpop.f32.mrb[0].mxu0
        %6853 = vmatprep.mubr.f32.mxu0 0.0
        %6854 = vmatmul.mubr.f32.gmra.mrb[0].mxu0 %v6776
        %v6855 = vpop.f32.mrb[0].mxu0
        %v6856 = vadd.f32 0.0, %v6855
        %v6857 = vpop.f32.mrb[0].mxu0
        %6858 = vmatprep.mubr.f32.mxu0 0.0
        %6859 = vmatmul.mubr.f32.gmra.mrb[0].mxu0 %v6779
        %v6860 = vpop.f32.mrb[0].mxu0
        %v6861 = vadd.f32 0.0, %v6860
        %v6862 = vpop.f32.mrb[0].mxu0
        %6863 = vmatprep.mubr.f32.mxu0 0.0
        %6864 = vmatmul.mubr.f32.gmra.mrb[0].mxu0 %v6782
        %v6865 = vpop.f32.mrb[0].mxu0
        %v6866 = vadd.f32 0.0, %v6865
        %v6867 = vpop.f32.mrb[0].mxu0
        %6868 = vdwg.mxu0
        %v6870 = vsel %vm354, %v6600, 0
        %v6873 = vsel %vm354, %v6601, 0
        %v6876 = vsel %vm354, %v6602, 0
        %v6879 = vsel %vm354, %v6603, 0
        %6881 = vmatprep.subr.mxu0 0.0
        %6882 = vmatpush1.msra.mxu0 %v6681
        %6883 = vmatprep.subr.mxu0 0.0
        %6884 = vmatpush1.msra.mxu0 %v6686
        %6885 = vmatprep.subr.mxu0 0.0
        %6886 = vmatpush1.msra.mxu0 0.0
        %6887 = vmatprep.subr.mxu0 0.0
        %6888 = vmatpush1.msra.mxu0 0.0
        %6889 = vmatprep.subr.mxu0 0.0
        %6890 = vmatpush1.msra.mxu0 0.0
        %6891 = vmatprep.subr.mxu0 0.0
        %6892 = vmatpush1.msra.mxu0 0.0
        %6893 = vmatprep.subr.mxu0 0.0
        %6894 = vmatpush1.msra.mxu0 0.0
        %6895 = vmatprep.subr.mxu0 0.0
        %6896 = vmatpush1.msra.mxu0 0.0
        %6897 = vmatprep.subr.mxu0 0.0
        %6898 = vmatpush1.msra.mxu0 0.0
        %6899 = vmatprep.subr.mxu0 0.0
        %6900 = vmatpush1.msra.mxu0 0.0
        %6901 = vmatprep.subr.mxu0 0.0
        %6902 = vmatpush1.msra.mxu0 0.0
        %6903 = vmatprep.subr.mxu0 0.0
        %6904 = vmatpush1.msra.mxu0 0.0
        %6905 = vmatprep.subr.mxu0 0.0
        %6906 = vmatpush1.msra.mxu0 0.0
        %6907 = vmatprep.subr.mxu0 0.0
        %6908 = vmatpush1.msra.mxu0 0.0
        %6909 = vmatprep.subr.mxu0 0.0
        %6910 = vmatpush1.msra.mxu0 0.0
        %6911 = vmatprep.subr.mxu0 0.0
        %6912 = vmatpush1.msra.mxu0 0.0
        %6913 = vmatprep.subr.mxu0 0.0
        %6914 = vmatpush1.msra.mxu0 0.0
        %6915 = vmatprep.subr.mxu0 0.0
        %6916 = vmatpush1.msra.mxu0 0.0
        %6917 = vmatprep.subr.mxu0 0.0
        %6918 = vmatpush1.msra.mxu0 0.0
        %6919 = vmatprep.subr.mxu0 0.0
        %6920 = vmatpush1.msra.mxu0 0.0
        %6921 = vmatprep.subr.mxu0 0.0
        %6922 = vmatpush1.msra.mxu0 0.0
        %6923 = vmatprep.subr.mxu0 0.0
        %6924 = vmatpush1.msra.mxu0 0.0
        %6925 = vmatprep.subr.mxu0 0.0
        %6926 = vmatpush1.msra.mxu0 0.0
        %6927 = vmatprep.subr.mxu0 0.0
        %6928 = vmatpush1.msra.mxu0 0.0
        %6929 = vmatprep.subr.mxu0 0.0
        %6930 = vmatpush1.msra.mxu0 0.0
        %6931 = vmatprep.subr.mxu0 0.0
        %6932 = vmatpush1.msra.mxu0 0.0
        %6933 = vmatprep.subr.mxu0 0.0
        %6934 = vmatpush1.msra.mxu0 0.0
        %6935 = vmatprep.subr.mxu0 0.0
        %6936 = vmatpush1.msra.mxu0 0.0
        %6937 = vmatprep.subr.mxu0 0.0
        %6938 = vmatpush1.msra.mxu0 0.0
        %6939 = vmatprep.subr.mxu0 0.0
        %6940 = vmatpush1.msra.mxu0 0.0
        %6941 = vmatprep.subr.mxu0 0.0
        %6942 = vmatpush1.msra.mxu0 0.0
        %6943 = vmatprep.subr.mxu0 0.0
        %6944 = vmatpush1.msra.mxu0 0.0
        %6945 = vmatprep.mubr.f32.mxu0 0.0
        %6946 = vmatmul.mubr.f32.gmra.mrb[0].mxu0 %v6870
        %v6947 = vpop.f32.mrb[0].mxu0
        %v6948 = vadd.f32 %v6851, %v6947
        %v6949 = vpop.f32.mrb[0].mxu0
        %6950 = vmatprep.mubr.f32.mxu0 0.0
        %6951 = vmatmul.mubr.f32.gmra.mrb[0].mxu0 %v6873
        %v6952 = vpop.f32.mrb[0].mxu0
        %v6953 = vadd.f32 %v6856, %v6952
        %v6954 = vpop.f32.mrb[0].mxu0
        %6955 = vmatprep.mubr.f32.mxu0 0.0
        %6956 = vmatmul.mubr.f32.gmra.mrb[0].mxu0 %v6876
        %v6957 = vpop.f32.mrb[0].mxu0
        %v6958 = vadd.f32 %v6861, %v6957
        %v6959 = vpop.f32.mrb[0].mxu0
        %6960 = vmatprep.mubr.f32.mxu0 0.0
        %6961 = vmatmul.mubr.f32.gmra.mrb[0].mxu0 %v6879
        %v6962 = vpop.f32.mrb[0].mxu0
        %v6963 = vadd.f32 %v6866, %v6962
        %v6964 = vpop.f32.mrb[0].mxu0
        %6965 = vdwg.mxu0
        %v6966 = vld [vmem:[%s5] sm:$0xff]
        %v6967 = vld [vmem:[%s5 + $0x8] sm:$0xff]
        %v6968 = vld [vmem:[%s5 + $0x10] sm:$0xff]
        %v6969 = vld [vmem:[%s5 + $0x18] sm:$0xff]
        %v6970 = vld [vmem:[%s5 + $0x20] sm:$0xff]
        %v6971 = vld [vmem:[%s5 + $0x28] sm:$0xff]
        %v6972 = vld [vmem:[%s5 + $0x30] sm:$0xff]
        %v6973 = vld [vmem:[%s5 + $0x38] sm:$0xff]
        %v6974 = vld [vmem:[%s5 + $0x40] sm:$0xff]
        %v6975 = vld [vmem:[%s5 + $0x48] sm:$0xff]
        %v6976 = vld [vmem:[%s5 + $0x50] sm:$0xff]
        %v6977 = vld [vmem:[%s5 + $0x58] sm:$0xff]
        %v6978 = vld [vmem:[%s5 + $0x60] sm:$0xff]
        %v6979 = vld [vmem:[%s5 + $0x68] sm:$0xff]
        %v6980 = vld [vmem:[%s5 + $0x70] sm:$0x1]
        %v6981 = vld [vmem:[%s5 + $0x71] sm:$0x1]
        %v6982 = vld [vmem:[%s5 + $0x72] sm:$0x1]
        %v6983 = vld [vmem:[%s5 + $0x73] sm:$0x1]
        %v6984 = vld [vmem:[%s5 + $0x74] sm:$0x1]
        %v6985 = vld [vmem:[%s5 + $0x75] sm:$0x1]
        %v6986 = vld [vmem:[%s5 + $0x76] sm:$0x1]
        %v6987 = vld [vmem:[%s5 + $0x77] sm:$0x1]
        %v6988 = vld [vmem:[%s5 + $0x78] sm:$0x1]
        %v6989 = vld [vmem:[%s5 + $0x79] sm:$0x1]
        %v6990 = vld [vmem:[%s5 + $0x7c] sm:$0xff]
        %v6991 = vld [vmem:[%s5 + $0x84] sm:$0xff]
        %v6992 = vld [vmem:[%s5 + $0x8c] sm:$0xff]
        %v6993 = vld [vmem:[%s5 + $0x94] sm:$0xff]
        %v6994 = vld [vmem:[%s5 + $0x9c] sm:$0xff]
        %v6995 = vld [vmem:[%s5 + $0xa4] sm:$0xff]
        %v6996 = vld [vmem:[%s5 + $0xac] sm:$0xff]
        %v6997 = vld [vmem:[%s5 + $0xb4] sm:$0xff]
        %v6998 = vlaneseq
        %v6999 = vshrl.u32 %v6998, 7
        %v7000 = vsub.s32 0, %v6999
        %v7001 = vrot.slane %v6980, %v7000
        %v7003 = vsel %vm354, %v6948, 0
        %v7006 = vsel %vm354, %v6953, 0
        %v7009 = vsel %vm354, %v6958, 0
        %v7012 = vsel %vm354, %v6963, 0
        %7014 = vmatprep.subr.mxu0 0.0
        %7015 = vmatpush1.msra.mxu0 %v6966
        %7016 = vmatprep.subr.mxu0 0.0
        %7017 = vmatpush1.msra.mxu0 %v6967
        %7018 = vmatprep.subr.mxu0 0.0
        %7019 = vmatpush1.msra.mxu0 0.0
        %7020 = vmatprep.subr.mxu0 0.0
        %7021 = vmatpush1.msra.mxu0 0.0
        %7022 = vmatprep.subr.mxu0 0.0
        %7023 = vmatpush1.msra.mxu0 0.0
        %7024 = vmatprep.subr.mxu0 0.0
        %7025 = vmatpush1.msra.mxu0 0.0
        %7026 = vmatprep.subr.mxu0 0.0
        %7027 = vmatpush1.msra.mxu0 0.0
        %7028 = vmatprep.subr.mxu0 0.0
        %7029 = vmatpush1.msra.mxu0 0.0
        %7030 = vmatprep.subr.mxu0 0.0
        %7031 = vmatpush1.msra.mxu0 0.0
        %7032 = vmatprep.subr.mxu0 0.0
        %7033 = vmatpush1.msra.mxu0 0.0
        %7034 = vmatprep.subr.mxu0 0.0
        %7035 = vmatpush1.msra.mxu0 0.0
        %7036 = vmatprep.subr.mxu0 0.0
        %7037 = vmatpush1.msra.mxu0 0.0
        %7038 = vmatprep.subr.mxu0 0.0
        %7039 = vmatpush1.msra.mxu0 0.0
        %7040 = vmatprep.subr.mxu0 0.0
        %7041 = vmatpush1.msra.mxu0 0.0
        %7042 = vmatprep.subr.mxu0 0.0
        %7043 = vmatpush1.msra.mxu0 0.0
        %7044 = vmatprep.subr.mxu0 0.0
        %7045 = vmatpush1.msra.mxu0 0.0
        %7046 = vmatprep.subr.mxu0 0.0
        %7047 = vmatpush1.msra.mxu0 0.0
        %7048 = vmatprep.subr.mxu0 0.0
        %7049 = vmatpush1.msra.mxu0 0.0
        %7050 = vmatprep.subr.mxu0 0.0
        %7051 = vmatpush1.msra.mxu0 0.0
        %7052 = vmatprep.subr.mxu0 0.0
        %7053 = vmatpush1.msra.mxu0 0.0
        %7054 = vmatprep.subr.mxu0 0.0
        %7055 = vmatpush1.msra.mxu0 0.0
        %7056 = vmatprep.subr.mxu0 0.0
        %7057 = vmatpush1.msra.mxu0 0.0
        %7058 = vmatprep.subr.mxu0 0.0
        %7059 = vmatpush1.msra.mxu0 0.0
        %7060 = vmatprep.subr.mxu0 0.0
        %7061 = vmatpush1.msra.mxu0 0.0
        %7062 = vmatprep.subr.mxu0 0.0
        %7063 = vmatpush1.msra.mxu0 0.0
        %7064 = vmatprep.subr.mxu0 0.0
        %7065 = vmatpush1.msra.mxu0 0.0
        %7066 = vmatprep.subr.mxu0 0.0
        %7067 = vmatpush1.msra.mxu0 0.0
        %7068 = vmatprep.subr.mxu0 0.0
        %7069 = vmatpush1.msra.mxu0 0.0
        %7070 = vmatprep.subr.mxu0 0.0
        %7071 = vmatpush1.msra.mxu0 0.0
        %7072 = vmatprep.subr.mxu0 0.0
        %7073 = vmatpush1.msra.mxu0 0.0
        %7074 = vmatprep.subr.mxu0 0.0
        %7075 = vmatpush1.msra.mxu0 0.0
        %7076 = vmatprep.subr.mxu0 0.0
        %7077 = vmatpush1.msra.mxu0 0.0
        %7078 = vmatprep.mubr.f32.mxu0 0.0
        %7079 = vmatmul.mubr.f32.gmra.mrb[0].mxu0 %v7003
        %v7080 = vpop.f32.mrb[0].mxu0
        %v7081 = vadd.f32 %v7001, %v7080
        %v7082 = vpop.f32.mrb[0].mxu0
        %7083 = vmatprep.mubr.f32.mxu0 0.0
        %7084 = vmatmul.mubr.f32.gmra.mrb[0].mxu0 %v7006
        %v7085 = vpop.f32.mrb[0].mxu0
        %v7086 = vadd.f32 %v7001, %v7085
        %v7087 = vpop.f32.mrb[0].mxu0
        %7088 = vmatprep.mubr.f32.mxu0 0.0
        %7089 = vmatmul.mubr.f32.gmra.mrb[0].mxu0 %v7009
        %v7090 = vpop.f32.mrb[0].mxu0
        %v7091 = vadd.f32 %v7001, %v7090
        %v7092 = vpop.f32.mrb[0].mxu0
        %7093 = vmatprep.mubr.f32.mxu0 0.0
        %7094 = vmatmul.mubr.f32.gmra.mrb[0].mxu0 %v7012
        %v7095 = vpop.f32.mrb[0].mxu0
        %v7096 = vadd.f32 %v7001, %v7095
        %v7097 = vpop.f32.mrb[0].mxu0
        %7098 = vdwg.mxu0
        %v7099 = vlaneseq
        %v7100 = vshrl.u32 %v7099, 7
        %v7101 = vsub.s32 0, %v7100
        %v7102 = vrot.slane %v6981, %v7101
        %7103 = vmatprep.subr.mxu0 0.0
        %7104 = vmatpush1.msra.mxu0 %v6968
        %7105 = vmatprep.subr.mxu0 0.0
        %7106 = vmatpush1.msra.mxu0 %v6969
        %7107 = vmatprep.subr.mxu0 0.0
        %7108 = vmatpush1.msra.mxu0 0.0
        %7109 = vmatprep.subr.mxu0 0.0
        %7110 = vmatpush1.msra.mxu0 0.0
        %7111 = vmatprep.subr.mxu0 0.0
        %7112 = vmatpush1.msra.mxu0 0.0
        %7113 = vmatprep.subr.mxu0 0.0
        %7114 = vmatpush1.msra.mxu0 0.0
        %7115 = vmatprep.subr.mxu0 0.0
        %7116 = vmatpush1.msra.mxu0 0.0
        %7117 = vmatprep.subr.mxu0 0.0
        %7118 = vmatpush1.msra.mxu0 0.0
        %7119 = vmatprep.subr.mxu0 0.0
        %7120 = vmatpush1.msra.mxu0 0.0
        %7121 = vmatprep.subr.mxu0 0.0
        %7122 = vmatpush1.msra.mxu0 0.0
        %7123 = vmatprep.subr.mxu0 0.0
        %7124 = vmatpush1.msra.mxu0 0.0
        %7125 = vmatprep.subr.mxu0 0.0
        %7126 = vmatpush1.msra.mxu0 0.0
        %7127 = vmatprep.subr.mxu0 0.0
        %7128 = vmatpush1.msra.mxu0 0.0
        %7129 = vmatprep.subr.mxu0 0.0
        %7130 = vmatpush1.msra.mxu0 0.0
        %7131 = vmatprep.subr.mxu0 0.0
        %7132 = vmatpush1.msra.mxu0 0.0
        %7133 = vmatprep.subr.mxu0 0.0
        %7134 = vmatpush1.msra.mxu0 0.0
        %7135 = vmatprep.subr.mxu0 0.0
        %7136 = vmatpush1.msra.mxu0 0.0
        %7137 = vmatprep.subr.mxu0 0.0
        %7138 = vmatpush1.msra.mxu0 0.0
        %7139 = vmatprep.subr.mxu0 0.0
        %7140 = vmatpush1.msra.mxu0 0.0
        %7141 = vmatprep.subr.mxu0 0.0
        %7142 = vmatpush1.msra.mxu0 0.0
        %7143 = vmatprep.subr.mxu0 0.0
        %7144 = vmatpush1.msra.mxu0 0.0
        %7145 = vmatprep.subr.mxu0 0.0
        %7146 = vmatpush1.msra.mxu0 0.0
        %7147 = vmatprep.subr.mxu0 0.0
        %7148 = vmatpush1.msra.mxu0 0.0
        %7149 = vmatprep.subr.mxu0 0.0
        %7150 = vmatpush1.msra.mxu0 0.0
        %7151 = vmatprep.subr.mxu0 0.0
        %7152 = vmatpush1.msra.mxu0 0.0
        %7153 = vmatprep.subr.mxu0 0.0
        %7154 = vmatpush1.msra.mxu0 0.0
        %7155 = vmatprep.subr.mxu0 0.0
        %7156 = vmatpush1.msra.mxu0 0.0
        %7157 = vmatprep.subr.mxu0 0.0
        %7158 = vmatpush1.msra.mxu0 0.0
        %7159 = vmatprep.subr.mxu0 0.0
        %7160 = vmatpush1.msra.mxu0 0.0
        %7161 = vmatprep.subr.mxu0 0.0
        %7162 = vmatpush1.msra.mxu0 0.0
        %7163 = vmatprep.subr.mxu0 0.0
        %7164 = vmatpush1.msra.mxu0 0.0
        %7165 = vmatprep.subr.mxu0 0.0
        %7166 = vmatpush1.msra.mxu0 0.0
        %7167 = vmatprep.mubr.f32.mxu0 0.0
        %7168 = vmatmul.mubr.f32.gmra.mrb[0].mxu0 %v7003
        %v7169 = vpop.f32.mrb[0].mxu0
        %v7170 = vadd.f32 %v7102, %v7169
        %v7171 = vpop.f32.mrb[0].mxu0
        %7172 = vmatprep.mubr.f32.mxu0 0.0
        %7173 = vmatmul.mubr.f32.gmra.mrb[0].mxu0 %v7006
        %v7174 = vpop.f32.mrb[0].mxu0
        %v7175 = vadd.f32 %v7102, %v7174
        %v7176 = vpop.f32.mrb[0].mxu0
        %7177 = vmatprep.mubr.f32.mxu0 0.0
        %7178 = vmatmul.mubr.f32.gmra.mrb[0].mxu0 %v7009
        %v7179 = vpop.f32.mrb[0].mxu0
        %v7180 = vadd.f32 %v7102, %v7179
        %v7181 = vpop.f32.mrb[0].mxu0
        %7182 = vmatprep.mubr.f32.mxu0 0.0
        %7183 = vmatmul.mubr.f32.gmra.mrb[0].mxu0 %v7012
        %v7184 = vpop.f32.mrb[0].mxu0
        %v7185 = vadd.f32 %v7102, %v7184
        %v7186 = vpop.f32.mrb[0].mxu0
        %7187 = vdwg.mxu0
        %v7188 = vlaneseq
        %v7189 = vshrl.u32 %v7188, 7
        %v7190 = vsub.s32 0, %v7189
        %v7191 = vrot.slane %v6982, %v7190
        %7192 = vmatprep.subr.mxu0 0.0
        %7193 = vmatpush1.msra.mxu0 %v6970
        %7194 = vmatprep.subr.mxu0 0.0
        %7195 = vmatpush1.msra.mxu0 %v6971
        %7196 = vmatprep.subr.mxu0 0.0
        %7197 = vmatpush1.msra.mxu0 0.0
        %7198 = vmatprep.subr.mxu0 0.0
        %7199 = vmatpush1.msra.mxu0 0.0
        %7200 = vmatprep.subr.mxu0 0.0
        %7201 = vmatpush1.msra.mxu0 0.0
        %7202 = vmatprep.subr.mxu0 0.0
        %7203 = vmatpush1.msra.mxu0 0.0
        %7204 = vmatprep.subr.mxu0 0.0
        %7205 = vmatpush1.msra.mxu0 0.0
        %7206 = vmatprep.subr.mxu0 0.0
        %7207 = vmatpush1.msra.mxu0 0.0
        %7208 = vmatprep.subr.mxu0 0.0
        %7209 = vmatpush1.msra.mxu0 0.0
        %7210 = vmatprep.subr.mxu0 0.0
        %7211 = vmatpush1.msra.mxu0 0.0
        %7212 = vmatprep.subr.mxu0 0.0
        %7213 = vmatpush1.msra.mxu0 0.0
        %7214 = vmatprep.subr.mxu0 0.0
        %7215 = vmatpush1.msra.mxu0 0.0
        %7216 = vmatprep.subr.mxu0 0.0
        %7217 = vmatpush1.msra.mxu0 0.0
        %7218 = vmatprep.subr.mxu0 0.0
        %7219 = vmatpush1.msra.mxu0 0.0
        %7220 = vmatprep.subr.mxu0 0.0
        %7221 = vmatpush1.msra.mxu0 0.0
        %7222 = vmatprep.subr.mxu0 0.0
        %7223 = vmatpush1.msra.mxu0 0.0
        %7224 = vmatprep.subr.mxu0 0.0
        %7225 = vmatpush1.msra.mxu0 0.0
        %7226 = vmatprep.subr.mxu0 0.0
        %7227 = vmatpush1.msra.mxu0 0.0
        %7228 = vmatprep.subr.mxu0 0.0
        %7229 = vmatpush1.msra.mxu0 0.0
        %7230 = vmatprep.subr.mxu0 0.0
        %7231 = vmatpush1.msra.mxu0 0.0
        %7232 = vmatprep.subr.mxu0 0.0
        %7233 = vmatpush1.msra.mxu0 0.0
        %7234 = vmatprep.subr.mxu0 0.0
        %7235 = vmatpush1.msra.mxu0 0.0
        %7236 = vmatprep.subr.mxu0 0.0
        %7237 = vmatpush1.msra.mxu0 0.0
        %7238 = vmatprep.subr.mxu0 0.0
        %7239 = vmatpush1.msra.mxu0 0.0
        %7240 = vmatprep.subr.mxu0 0.0
        %7241 = vmatpush1.msra.mxu0 0.0
        %7242 = vmatprep.subr.mxu0 0.0
        %7243 = vmatpush1.msra.mxu0 0.0
        %7244 = vmatprep.subr.mxu0 0.0
        %7245 = vmatpush1.msra.mxu0 0.0
        %7246 = vmatprep.subr.mxu0 0.0
        %7247 = vmatpush1.msra.mxu0 0.0
        %7248 = vmatprep.subr.mxu0 0.0
        %7249 = vmatpush1.msra.mxu0 0.0
        %7250 = vmatprep.subr.mxu0 0.0
        %7251 = vmatpush1.msra.mxu0 0.0
        %7252 = vmatprep.subr.mxu0 0.0
        %7253 = vmatpush1.msra.mxu0 0.0
        %7254 = vmatprep.subr.mxu0 0.0
        %7255 = vmatpush1.msra.mxu0 0.0
        %7256 = vmatprep.mubr.f32.mxu0 0.0
        %7257 = vmatmul.mubr.f32.gmra.mrb[0].mxu0 %v7003
        %v7258 = vpop.f32.mrb[0].mxu0
        %v7259 = vadd.f32 %v7191, %v7258
        %v7260 = vpop.f32.mrb[0].mxu0
        %7261 = vmatprep.mubr.f32.mxu0 0.0
        %7262 = vmatmul.mubr.f32.gmra.mrb[0].mxu0 %v7006
        %v7263 = vpop.f32.mrb[0].mxu0
        %v7264 = vadd.f32 %v7191, %v7263
        %v7265 = vpop.f32.mrb[0].mxu0
        %7266 = vmatprep.mubr.f32.mxu0 0.0
        %7267 = vmatmul.mubr.f32.gmra.mrb[0].mxu0 %v7009
        %v7268 = vpop.f32.mrb[0].mxu0
        %v7269 = vadd.f32 %v7191, %v7268
        %v7270 = vpop.f32.mrb[0].mxu0
        %7271 = vmatprep.mubr.f32.mxu0 0.0
        %7272 = vmatmul.mubr.f32.gmra.mrb[0].mxu0 %v7012
        %v7273 = vpop.f32.mrb[0].mxu0
        %v7274 = vadd.f32 %v7191, %v7273
        %v7275 = vpop.f32.mrb[0].mxu0
        %7276 = vdwg.mxu0
        %v7278 = vsel %vm716, %v6990, 0
        %v7281 = vsel %vm716, %v6991, 0
        %v7284 = vsel %vm716, %v6992, 0
        %v7287 = vsel %vm716, %v6993, 0
        %7289 = vmatprep.subr.mxu0 0.0
        %7290 = vmatpush1.msra.mxu0 %v7259
        %7291 = vmatprep.subr.mxu0 0.0
        %7292 = vmatpush1.msra.mxu0 %v7264
        %7293 = vmatprep.subr.mxu0 0.0
        %7294 = vmatpush1.msra.mxu0 %v7269
        %7295 = vmatprep.subr.mxu0 0.0
        %7296 = vmatpush1.msra.mxu0 %v7274
        %7297 = vmatprep.subr.mxu0 0.0
        %7298 = vmatpush1.msra.mxu0 0.0
        %7299 = vmatprep.subr.mxu0 0.0
        %7300 = vmatpush1.msra.mxu0 0.0
        %7301 = vmatprep.subr.mxu0 0.0
        %7302 = vmatpush1.msra.mxu0 0.0
        %7303 = vmatprep.subr.mxu0 0.0
        %7304 = vmatpush1.msra.mxu0 0.0
        %7305 = vmatprep.subr.mxu0 0.0
        %7306 = vmatpush1.msra.mxu0 0.0
        %7307 = vmatprep.subr.mxu0 0.0
        %7308 = vmatpush1.msra.mxu0 0.0
        %7309 = vmatprep.subr.mxu0 0.0
        %7310 = vmatpush1.msra.mxu0 0.0
        %7311 = vmatprep.subr.mxu0 0.0
        %7312 = vmatpush1.msra.mxu0 0.0
        %7313 = vmatprep.subr.mxu0 0.0
        %7314 = vmatpush1.msra.mxu0 0.0
        %7315 = vmatprep.subr.mxu0 0.0
        %7316 = vmatpush1.msra.mxu0 0.0
        %7317 = vmatprep.subr.mxu0 0.0
        %7318 = vmatpush1.msra.mxu0 0.0
        %7319 = vmatprep.subr.mxu0 0.0
        %7320 = vmatpush1.msra.mxu0 0.0
        %7321 = vmatprep.subr.mxu0 0.0
        %7322 = vmatpush1.msra.mxu0 0.0
        %7323 = vmatprep.subr.mxu0 0.0
        %7324 = vmatpush1.msra.mxu0 0.0
        %7325 = vmatprep.subr.mxu0 0.0
        %7326 = vmatpush1.msra.mxu0 0.0
        %7327 = vmatprep.subr.mxu0 0.0
        %7328 = vmatpush1.msra.mxu0 0.0
        %7329 = vmatprep.subr.mxu0 0.0
        %7330 = vmatpush1.msra.mxu0 0.0
        %7331 = vmatprep.subr.mxu0 0.0
        %7332 = vmatpush1.msra.mxu0 0.0
        %7333 = vmatprep.subr.mxu0 0.0
        %7334 = vmatpush1.msra.mxu0 0.0
        %7335 = vmatprep.subr.mxu0 0.0
        %7336 = vmatpush1.msra.mxu0 0.0
        %7337 = vmatprep.subr.mxu0 0.0
        %7338 = vmatpush1.msra.mxu0 0.0
        %7339 = vmatprep.subr.mxu0 0.0
        %7340 = vmatpush1.msra.mxu0 0.0
        %7341 = vmatprep.subr.mxu0 0.0
        %7342 = vmatpush1.msra.mxu0 0.0
        %7343 = vmatprep.subr.mxu0 0.0
        %7344 = vmatpush1.msra.mxu0 0.0
        %7345 = vmatprep.subr.mxu0 0.0
        %7346 = vmatpush1.msra.mxu0 0.0
        %7347 = vmatprep.subr.mxu0 0.0
        %7348 = vmatpush1.msra.mxu0 0.0
        %7349 = vmatprep.subr.mxu0 0.0
        %7350 = vmatpush1.msra.mxu0 0.0
        %7351 = vmatprep.subr.mxu0 0.0
        %7352 = vmatpush1.msra.mxu0 0.0
        %7353 = vmatprep.mubr.f32.mxu0 0.0
        %7354 = vmatmul.mubr.f32.gmra.mrb[0].mxu0 %v7278
        %v7355 = vpop.f32.mrb[0].mxu0
        %v7356 = vadd.f32 0.0, %v7355
        %v7357 = vpop.f32.mrb[0].mxu0
        %7358 = vmatprep.mubr.f32.mxu0 0.0
        %7359 = vmatmul.mubr.f32.gmra.mrb[0].mxu0 %v7281
        %v7360 = vpop.f32.mrb[0].mxu0
        %v7361 = vadd.f32 0.0, %v7360
        %v7362 = vpop.f32.mrb[0].mxu0
        %7363 = vmatprep.mubr.f32.mxu0 0.0
        %7364 = vmatmul.mubr.f32.gmra.mrb[0].mxu0 %v7284
        %v7365 = vpop.f32.mrb[0].mxu0
        %v7366 = vadd.f32 0.0, %v7365
        %v7367 = vpop.f32.mrb[0].mxu0
        %7368 = vmatprep.mubr.f32.mxu0 0.0
        %7369 = vmatmul.mubr.f32.gmra.mrb[0].mxu0 %v7287
        %v7370 = vpop.f32.mrb[0].mxu0
        %v7371 = vadd.f32 0.0, %v7370
        %v7372 = vpop.f32.mrb[0].mxu0
        %7373 = vdwg.mxu0
        %v7374 = vld [vmem:[%s5 + $0x7a] sm:$0x1]
        %v7375 = vlaneseq
        %v7376 = vshrl.u32 %v7375, 7
        %v7377 = vsub.s32 0, %v7376
        %v7378 = vrot.slane %v7374, %v7377
        %v7379 = vmul.f32 %v7170, %v7378
        %v7380 = vmul.f32 %v7175, %v7378
        %v7381 = vmul.f32 %v7180, %v7378
        %v7382 = vmul.f32 %v7185, %v7378
        %v7384 = vsel %vm354, %v7081, 0
        %v7387 = vsel %vm354, %v7086, 0
        %v7390 = vsel %vm354, %v7091, 0
        %v7393 = vsel %vm354, %v7096, 0
        %v7396 = vsel %vm354, %v7379, 0
        %v7399 = vsel %vm354, %v7380, 0
        %v7402 = vsel %vm354, %v7381, 0
        %v7405 = vsel %vm354, %v7382, 0
        %7407 = vmatprep.subr.mxu0 0.0
        %7408 = vmatpush1.xpose.msra.mxu0 %v7396
        %7409 = vmatprep.subr.mxu0 0.0
        %7410 = vmatpush1.xpose.msra.mxu0 %v7399
        %7411 = vmatprep.subr.mxu0 0.0
        %7412 = vmatpush1.xpose.msra.mxu0 %v7402
        %7413 = vmatprep.subr.mxu0 0.0
        %7414 = vmatpush1.xpose.msra.mxu0 %v7405
        %7415 = vmatprep.subr.mxu0 0.0
        %7416 = vmatpush1.xpose.msra.mxu0 0.0
        %7417 = vmatprep.subr.mxu0 0.0
        %7418 = vmatpush1.xpose.msra.mxu0 0.0
        %7419 = vmatprep.subr.mxu0 0.0
        %7420 = vmatpush1.xpose.msra.mxu0 0.0
        %7421 = vmatprep.subr.mxu0 0.0
        %7422 = vmatpush1.xpose.msra.mxu0 0.0
        %7423 = vmatprep.subr.mxu0 0.0
        %7424 = vmatpush1.xpose.msra.mxu0 0.0
        %7425 = vmatprep.subr.mxu0 0.0
        %7426 = vmatpush1.xpose.msra.mxu0 0.0
        %7427 = vmatprep.subr.mxu0 0.0
        %7428 = vmatpush1.xpose.msra.mxu0 0.0
        %7429 = vmatprep.subr.mxu0 0.0
        %7430 = vmatpush1.xpose.msra.mxu0 0.0
        %7431 = vmatprep.subr.mxu0 0.0
        %7432 = vmatpush1.xpose.msra.mxu0 0.0
        %7433 = vmatprep.subr.mxu0 0.0
        %7434 = vmatpush1.xpose.msra.mxu0 0.0
        %7435 = vmatprep.subr.mxu0 0.0
        %7436 = vmatpush1.xpose.msra.mxu0 0.0
        %7437 = vmatprep.subr.mxu0 0.0
        %7438 = vmatpush1.xpose.msra.mxu0 0.0
        %7439 = vmatprep.subr.mxu0 0.0
        %7440 = vmatpush1.xpose.msra.mxu0 0.0
        %7441 = vmatprep.subr.mxu0 0.0
        %7442 = vmatpush1.xpose.msra.mxu0 0.0
        %7443 = vmatprep.subr.mxu0 0.0
        %7444 = vmatpush1.xpose.msra.mxu0 0.0
        %7445 = vmatprep.subr.mxu0 0.0
        %7446 = vmatpush1.xpose.msra.mxu0 0.0
        %7447 = vmatprep.subr.mxu0 0.0
        %7448 = vmatpush1.xpose.msra.mxu0 0.0
        %7449 = vmatprep.subr.mxu0 0.0
        %7450 = vmatpush1.xpose.msra.mxu0 0.0
        %7451 = vmatprep.subr.mxu0 0.0
        %7452 = vmatpush1.xpose.msra.mxu0 0.0
        %7453 = vmatprep.subr.mxu0 0.0
        %7454 = vmatpush1.xpose.msra.mxu0 0.0
        %7455 = vmatprep.subr.mxu0 0.0
        %7456 = vmatpush1.xpose.msra.mxu0 0.0
        %7457 = vmatprep.subr.mxu0 0.0
        %7458 = vmatpush1.xpose.msra.mxu0 0.0
        %7459 = vmatprep.subr.mxu0 0.0
        %7460 = vmatpush1.xpose.msra.mxu0 0.0
        %7461 = vmatprep.subr.mxu0 0.0
        %7462 = vmatpush1.xpose.msra.mxu0 0.0
        %7463 = vmatprep.subr.mxu0 0.0
        %7464 = vmatpush1.xpose.msra.mxu0 0.0
        %7465 = vmatprep.subr.mxu0 0.0
        %7466 = vmatpush1.xpose.msra.mxu0 0.0
        %7467 = vmatprep.subr.mxu0 0.0
        %7468 = vmatpush1.xpose.msra.mxu0 0.0
        %7469 = vmatprep.subr.mxu0 0.0
        %7470 = vmatpush1.xpose.msra.mxu0 0.0
        %7471 = vmatprep.mubr.f32.mxu0 0.0
        %7472 = vmatmul.mubr.f32.gmra.mrb[0].mxu0 %v7384
        %v7473 = vpop.f32.mrb[0].mxu0
        %v7474 = vadd.f32 0.0, %v7473
        %v7475 = vpop.f32.mrb[0].mxu0
        %7476 = vmatprep.mubr.f32.mxu0 0.0
        %7477 = vmatmul.mubr.f32.gmra.mrb[0].mxu0 %v7387
        %v7478 = vpop.f32.mrb[0].mxu0
        %v7479 = vadd.f32 0.0, %v7478
        %v7480 = vpop.f32.mrb[0].mxu0
        %7481 = vmatprep.mubr.f32.mxu0 0.0
        %7482 = vmatmul.mubr.f32.gmra.mrb[0].mxu0 %v7390
        %v7483 = vpop.f32.mrb[0].mxu0
        %v7484 = vadd.f32 0.0, %v7483
        %v7485 = vpop.f32.mrb[0].mxu0
        %7486 = vmatprep.mubr.f32.mxu0 0.0
        %7487 = vmatmul.mubr.f32.gmra.mrb[0].mxu0 %v7393
        %v7488 = vpop.f32.mrb[0].mxu0
        %v7489 = vadd.f32 0.0, %v7488
        %v7490 = vpop.f32.mrb[0].mxu0
        %7491 = vdwg.mxu0
        %v7492 = vmul.f32 %v7474, 0.35355338
        %v7493 = vmul.f32 %v7479, 0.35355338
        %v7494 = vmul.f32 %v7484, 0.35355338
        %v7495 = vmul.f32 %v7489, 0.35355338
        %v7496 = vadd.f32 %v7492, %v6994
        %v7497 = vadd.f32 %v7493, %v6995
        %v7498 = vadd.f32 %v7494, %v6996
        %v7499 = vadd.f32 %v7495, %v6997
        %v7500 = vsel %vm716, %v7496, -inf
        %7501 = vmax.xlane.f32.xlu0 %v7500
        %v7502 = vpop.xlane.xlu0 %7501
        %v7503 = vsel %vm716, %v7497, -inf
        %7504 = vmax.xlane.f32.xlu0 %v7503
        %v7505 = vpop.xlane.xlu0 %7504
        %v7506 = vsel %vm716, %v7498, -inf
        %7507 = vmax.xlane.f32.xlu0 %v7506
        %v7508 = vpop.xlane.xlu0 %7507
        %v7509 = vsel %vm716, %v7499, -inf
        %7510 = vmax.xlane.f32.xlu0 %v7509
        %v7511 = vpop.xlane.xlu0 %7510
        %v7512 = vsub.f32 %v7496, %v7502
        %v7513 = vsub.f32 %v7497, %v7505
        %v7514 = vsub.f32 %v7498, %v7508
        %v7515 = vsub.f32 %v7499, %v7511
        %v7516 = vmul.f32 %v7512, 1.442695
        %v7517 = vpow.pop %v7516
        %v7518 = vmul.f32 %v7513, 1.442695
        %v7519 = vpow.pop %v7518
        %v7520 = vmul.f32 %v7514, 1.442695
        %v7521 = vpow.pop %v7520
        %v7522 = vmul.f32 %v7515, 1.442695
        %v7523 = vpow.pop %v7522
        %v7524 = vsel %vm716, %v7517, 0.0
        %7525 = vadd.xlane.f32.xlu0 %v7524
        %v7526 = vpop.xlane.xlu0 %7525
        %v7527 = vsel %vm716, %v7519, 0.0
        %7528 = vadd.xlane.f32.xlu0 %v7527
        %v7529 = vpop.xlane.xlu0 %7528
        %v7530 = vsel %vm716, %v7521, 0.0
        %7531 = vadd.xlane.f32.xlu0 %v7530
        %v7532 = vpop.xlane.xlu0 %7531
        %v7533 = vsel %vm716, %v7523, 0.0
        %7534 = vadd.xlane.f32.xlu0 %v7533
        %v7535 = vpop.xlane.xlu0 %7534
        %v7536 = vrcp.pop %v7526
        %v7537 = vrcp.pop %v7529
        %v7538 = vrcp.pop %v7532
        %v7539 = vrcp.pop %v7535
        %v7540 = vmul.f32 %v7517, %v7536
        %v7541 = vmul.f32 %v7519, %v7537
        %v7542 = vmul.f32 %v7521, %v7538
        %v7543 = vmul.f32 %v7523, %v7539
        %v7544 = vmul.f32 %v7356, %v7378
        %v7545 = vmul.f32 %v7361, %v7378
        %v7546 = vmul.f32 %v7366, %v7378
        %v7547 = vmul.f32 %v7371, %v7378
        %v7548 = vld [vmem:[%s5 + $0x7b] sm:$0x1]
        %v7549 = vlaneseq
        %v7550 = vshrl.u32 %v7549, 7
        %v7551 = vsub.s32 0, %v7550
        %v7552 = vrot.slane %v7548, %v7551
        %v7553 = vmul.f32 %v7170, %v7552
        %v7554 = vmul.f32 %v7175, %v7552
        %v7555 = vmul.f32 %v7180, %v7552
        %v7556 = vmul.f32 %v7185, %v7552
        %v7558 = vsel %vm354, %v7553, 0
        %v7561 = vsel %vm354, %v7554, 0
        %v7564 = vsel %vm354, %v7555, 0
        %v7567 = vsel %vm354, %v7556, 0
        %7569 = vmatprep.subr.mxu0 0.0
        %7570 = vmatpush1.xpose.msra.mxu0 %v7558
        %7571 = vmatprep.subr.mxu0 0.0
        %7572 = vmatpush1.xpose.msra.mxu0 %v7561
        %7573 = vmatprep.subr.mxu0 0.0
        %7574 = vmatpush1.xpose.msra.mxu0 %v7564
        %7575 = vmatprep.subr.mxu0 0.0
        %7576 = vmatpush1.xpose.msra.mxu0 %v7567
        %7577 = vmatprep.subr.mxu0 0.0
        %7578 = vmatpush1.xpose.msra.mxu0 0.0
        %7579 = vmatprep.subr.mxu0 0.0
        %7580 = vmatpush1.xpose.msra.mxu0 0.0
        %7581 = vmatprep.subr.mxu0 0.0
        %7582 = vmatpush1.xpose.msra.mxu0 0.0
        %7583 = vmatprep.subr.mxu0 0.0
        %7584 = vmatpush1.xpose.msra.mxu0 0.0
        %7585 = vmatprep.subr.mxu0 0.0
        %7586 = vmatpush1.xpose.msra.mxu0 0.0
        %7587 = vmatprep.subr.mxu0 0.0
        %7588 = vmatpush1.xpose.msra.mxu0 0.0
        %7589 = vmatprep.subr.mxu0 0.0
        %7590 = vmatpush1.xpose.msra.mxu0 0.0
        %7591 = vmatprep.subr.mxu0 0.0
        %7592 = vmatpush1.xpose.msra.mxu0 0.0
        %7593 = vmatprep.subr.mxu0 0.0
        %7594 = vmatpush1.xpose.msra.mxu0 0.0
        %7595 = vmatprep.subr.mxu0 0.0
        %7596 = vmatpush1.xpose.msra.mxu0 0.0
        %7597 = vmatprep.subr.mxu0 0.0
        %7598 = vmatpush1.xpose.msra.mxu0 0.0
        %7599 = vmatprep.subr.mxu0 0.0
        %7600 = vmatpush1.xpose.msra.mxu0 0.0
        %7601 = vmatprep.subr.mxu0 0.0
        %7602 = vmatpush1.xpose.msra.mxu0 0.0
        %7603 = vmatprep.subr.mxu0 0.0
        %7604 = vmatpush1.xpose.msra.mxu0 0.0
        %7605 = vmatprep.subr.mxu0 0.0
        %7606 = vmatpush1.xpose.msra.mxu0 0.0
        %7607 = vmatprep.subr.mxu0 0.0
        %7608 = vmatpush1.xpose.msra.mxu0 0.0
        %7609 = vmatprep.subr.mxu0 0.0
        %7610 = vmatpush1.xpose.msra.mxu0 0.0
        %7611 = vmatprep.subr.mxu0 0.0
        %7612 = vmatpush1.xpose.msra.mxu0 0.0
        %7613 = vmatprep.subr.mxu0 0.0
        %7614 = vmatpush1.xpose.msra.mxu0 0.0
        %7615 = vmatprep.subr.mxu0 0.0
        %7616 = vmatpush1.xpose.msra.mxu0 0.0
        %7617 = vmatprep.subr.mxu0 0.0
        %7618 = vmatpush1.xpose.msra.mxu0 0.0
        %7619 = vmatprep.subr.mxu0 0.0
        %7620 = vmatpush1.xpose.msra.mxu0 0.0
        %7621 = vmatprep.subr.mxu0 0.0
        %7622 = vmatpush1.xpose.msra.mxu0 0.0
        %7623 = vmatprep.subr.mxu0 0.0
        %7624 = vmatpush1.xpose.msra.mxu0 0.0
        %7625 = vmatprep.subr.mxu0 0.0
        %7626 = vmatpush1.xpose.msra.mxu0 0.0
        %7627 = vmatprep.subr.mxu0 0.0
        %7628 = vmatpush1.xpose.msra.mxu0 0.0
        %7629 = vmatprep.subr.mxu0 0.0
        %7630 = vmatpush1.xpose.msra.mxu0 0.0
        %7631 = vmatprep.subr.mxu0 0.0
        %7632 = vmatpush1.xpose.msra.mxu0 0.0
        %7633 = vmatprep.mubr.f32.mxu0 0.0
        %7634 = vmatmul.mubr.f32.gmra.mrb[0].mxu0 %v7384
        %v7635 = vpop.f32.mrb[0].mxu0
        %v7636 = vadd.f32 0.0, %v7635
        %v7637 = vpop.f32.mrb[0].mxu0
        %7638 = vmatprep.mubr.f32.mxu0 0.0
        %7639 = vmatmul.mubr.f32.gmra.mrb[0].mxu0 %v7387
        %v7640 = vpop.f32.mrb[0].mxu0
        %v7641 = vadd.f32 0.0, %v7640
        %v7642 = vpop.f32.mrb[0].mxu0
        %7643 = vmatprep.mubr.f32.mxu0 0.0
        %7644 = vmatmul.mubr.f32.gmra.mrb[0].mxu0 %v7390
        %v7645 = vpop.f32.mrb[0].mxu0
        %v7646 = vadd.f32 0.0, %v7645
        %v7647 = vpop.f32.mrb[0].mxu0
        %7648 = vmatprep.mubr.f32.mxu0 0.0
        %7649 = vmatmul.mubr.f32.gmra.mrb[0].mxu0 %v7393
        %v7650 = vpop.f32.mrb[0].mxu0
        %v7651 = vadd.f32 0.0, %v7650
        %v7652 = vpop.f32.mrb[0].mxu0
        %7653 = vdwg.mxu0
        %v7654 = vmul.f32 %v7636, 0.35355338
        %v7655 = vmul.f32 %v7641, 0.35355338
        %v7656 = vmul.f32 %v7646, 0.35355338
        %v7657 = vmul.f32 %v7651, 0.35355338
        %v7658 = vadd.f32 %v7654, %v6994
        %v7659 = vadd.f32 %v7655, %v6995
        %v7660 = vadd.f32 %v7656, %v6996
        %v7661 = vadd.f32 %v7657, %v6997
        %v7662 = vsel %vm716, %v7658, -inf
        %7663 = vmax.xlane.f32.xlu0 %v7662
        %v7664 = vpop.xlane.xlu0 %7663
        %v7665 = vsel %vm716, %v7659, -inf
        %7666 = vmax.xlane.f32.xlu0 %v7665
        %v7667 = vpop.xlane.xlu0 %7666
        %v7668 = vsel %vm716, %v7660, -inf
        %7669 = vmax.xlane.f32.xlu0 %v7668
        %v7670 = vpop.xlane.xlu0 %7669
        %v7671 = vsel %vm716, %v7661, -inf
        %7672 = vmax.xlane.f32.xlu0 %v7671
        %v7673 = vpop.xlane.xlu0 %7672
        %v7674 = vsub.f32 %v7658, %v7664
        %v7675 = vsub.f32 %v7659, %v7667
        %v7676 = vsub.f32 %v7660, %v7670
        %v7677 = vsub.f32 %v7661, %v7673
        %v7678 = vmul.f32 %v7674, 1.442695
        %v7679 = vpow.pop %v7678
        %v7680 = vmul.f32 %v7675, 1.442695
        %v7681 = vpow.pop %v7680
        %v7682 = vmul.f32 %v7676, 1.442695
        %v7683 = vpow.pop %v7682
        %v7684 = vmul.f32 %v7677, 1.442695
        %v7685 = vpow.pop %v7684
        %v7686 = vsel %vm716, %v7679, 0.0
        %7687 = vadd.xlane.f32.xlu0 %v7686
        %v7688 = vpop.xlane.xlu0 %7687
        %v7689 = vsel %vm716, %v7681, 0.0
        %7690 = vadd.xlane.f32.xlu0 %v7689
        %v7691 = vpop.xlane.xlu0 %7690
        %v7692 = vsel %vm716, %v7683, 0.0
        %7693 = vadd.xlane.f32.xlu0 %v7692
        %v7694 = vpop.xlane.xlu0 %7693
        %v7695 = vsel %vm716, %v7685, 0.0
        %7696 = vadd.xlane.f32.xlu0 %v7695
        %v7697 = vpop.xlane.xlu0 %7696
        %v7698 = vrcp.pop %v7688
        %v7699 = vrcp.pop %v7691
        %v7700 = vrcp.pop %v7694
        %v7701 = vrcp.pop %v7697
        %v7702 = vmul.f32 %v7679, %v7698
        %v7703 = vmul.f32 %v7681, %v7699
        %v7704 = vmul.f32 %v7683, %v7700
        %v7705 = vmul.f32 %v7685, %v7701
        %v7706 = vmul.f32 %v7356, %v7552
        %v7707 = vmul.f32 %v7361, %v7552
        %v7708 = vmul.f32 %v7366, %v7552
        %v7709 = vmul.f32 %v7371, %v7552
        %v7711 = vsel %vm716, %v7702, 0
        %v7714 = vsel %vm716, %v7703, 0
        %v7717 = vsel %vm716, %v7704, 0
        %v7720 = vsel %vm716, %v7705, 0
        %7722 = vmatprep.subr.mxu0 0.0
        %7723 = vmatpush1.msra.mxu0 %v7706
        %7724 = vmatprep.subr.mxu0 0.0
        %7725 = vmatpush1.msra.mxu0 %v7707
        %7726 = vmatprep.subr.mxu0 0.0
        %7727 = vmatpush1.msra.mxu0 %v7708
        %7728 = vmatprep.subr.mxu0 0.0
        %7729 = vmatpush1.msra.mxu0 %v7709
        %7730 = vmatprep.subr.mxu0 0.0
        %7731 = vmatpush1.msra.mxu0 0.0
        %7732 = vmatprep.subr.mxu0 0.0
        %7733 = vmatpush1.msra.mxu0 0.0
        %7734 = vmatprep.subr.mxu0 0.0
        %7735 = vmatpush1.msra.mxu0 0.0
        %7736 = vmatprep.subr.mxu0 0.0
        %7737 = vmatpush1.msra.mxu0 0.0
        %7738 = vmatprep.subr.mxu0 0.0
        %7739 = vmatpush1.msra.mxu0 0.0
        %7740 = vmatprep.subr.mxu0 0.0
        %7741 = vmatpush1.msra.mxu0 0.0
        %7742 = vmatprep.subr.mxu0 0.0
        %7743 = vmatpush1.msra.mxu0 0.0
        %7744 = vmatprep.subr.mxu0 0.0
        %7745 = vmatpush1.msra.mxu0 0.0
        %7746 = vmatprep.subr.mxu0 0.0
        %7747 = vmatpush1.msra.mxu0 0.0
        %7748 = vmatprep.subr.mxu0 0.0
        %7749 = vmatpush1.msra.mxu0 0.0
        %7750 = vmatprep.subr.mxu0 0.0
        %7751 = vmatpush1.msra.mxu0 0.0
        %7752 = vmatprep.subr.mxu0 0.0
        %7753 = vmatpush1.msra.mxu0 0.0
        %7754 = vmatprep.subr.mxu0 0.0
        %7755 = vmatpush1.msra.mxu0 0.0
        %7756 = vmatprep.subr.mxu0 0.0
        %7757 = vmatpush1.msra.mxu0 0.0
        %7758 = vmatprep.subr.mxu0 0.0
        %7759 = vmatpush1.msra.mxu0 0.0
        %7760 = vmatprep.subr.mxu0 0.0
        %7761 = vmatpush1.msra.mxu0 0.0
        %7762 = vmatprep.subr.mxu0 0.0
        %7763 = vmatpush1.msra.mxu0 0.0
        %7764 = vmatprep.subr.mxu0 0.0
        %7765 = vmatpush1.msra.mxu0 0.0
        %7766 = vmatprep.subr.mxu0 0.0
        %7767 = vmatpush1.msra.mxu0 0.0
        %7768 = vmatprep.subr.mxu0 0.0
        %7769 = vmatpush1.msra.mxu0 0.0
        %7770 = vmatprep.subr.mxu0 0.0
        %7771 = vmatpush1.msra.mxu0 0.0
        %7772 = vmatprep.subr.mxu0 0.0
        %7773 = vmatpush1.msra.mxu0 0.0
        %7774 = vmatprep.subr.mxu0 0.0
        %7775 = vmatpush1.msra.mxu0 0.0
        %7776 = vmatprep.subr.mxu0 0.0
        %7777 = vmatpush1.msra.mxu0 0.0
        %7778 = vmatprep.subr.mxu0 0.0
        %7779 = vmatpush1.msra.mxu0 0.0
        %7780 = vmatprep.subr.mxu0 0.0
        %7781 = vmatpush1.msra.mxu0 0.0
        %7782 = vmatprep.subr.mxu0 0.0
        %7783 = vmatpush1.msra.mxu0 0.0
        %7784 = vmatprep.subr.mxu0 0.0
        %7785 = vmatpush1.msra.mxu0 0.0
        %7786 = vmatprep.mubr.f32.mxu0 0.0
        %7787 = vmatmul.mubr.f32.gmra.mrb[0].mxu0 %v7711
        %v7788 = vpop.f32.mrb[0].mxu0
        %v7789 = vadd.f32 0.0, %v7788
        %v7790 = vpop.f32.mrb[0].mxu0
        %7791 = vmatprep.mubr.f32.mxu0 0.0
        %7792 = vmatmul.mubr.f32.gmra.mrb[0].mxu0 %v7714
        %v7793 = vpop.f32.mrb[0].mxu0
        %v7794 = vadd.f32 0.0, %v7793
        %v7795 = vpop.f32.mrb[0].mxu0
        %7796 = vmatprep.mubr.f32.mxu0 0.0
        %7797 = vmatmul.mubr.f32.gmra.mrb[0].mxu0 %v7717
        %v7798 = vpop.f32.mrb[0].mxu0
        %v7799 = vadd.f32 0.0, %v7798
        %v7800 = vpop.f32.mrb[0].mxu0
        %7801 = vmatprep.mubr.f32.mxu0 0.0
        %7802 = vmatmul.mubr.f32.gmra.mrb[0].mxu0 %v7720
        %v7803 = vpop.f32.mrb[0].mxu0
        %v7804 = vadd.f32 0.0, %v7803
        %v7805 = vpop.f32.mrb[0].mxu0
        %7806 = vdwg.mxu0
        %v7808 = vsel %vm716, %v7540, 0
        %v7811 = vsel %vm716, %v7541, 0
        %v7814 = vsel %vm716, %v7542, 0
        %v7817 = vsel %vm716, %v7543, 0
        %7819 = vmatprep.subr.mxu0 0.0
        %7820 = vmatpush1.msra.mxu0 %v7544
        %7821 = vmatprep.subr.mxu0 0.0
        %7822 = vmatpush1.msra.mxu0 %v7545
        %7823 = vmatprep.subr.mxu0 0.0
        %7824 = vmatpush1.msra.mxu0 %v7546
        %7825 = vmatprep.subr.mxu0 0.0
        %7826 = vmatpush1.msra.mxu0 %v7547
        %7827 = vmatprep.subr.mxu0 0.0
        %7828 = vmatpush1.msra.mxu0 0.0
        %7829 = vmatprep.subr.mxu0 0.0
        %7830 = vmatpush1.msra.mxu0 0.0
        %7831 = vmatprep.subr.mxu0 0.0
        %7832 = vmatpush1.msra.mxu0 0.0
        %7833 = vmatprep.subr.mxu0 0.0
        %7834 = vmatpush1.msra.mxu0 0.0
        %7835 = vmatprep.subr.mxu0 0.0
        %7836 = vmatpush1.msra.mxu0 0.0
        %7837 = vmatprep.subr.mxu0 0.0
        %7838 = vmatpush1.msra.mxu0 0.0
        %7839 = vmatprep.subr.mxu0 0.0
        %7840 = vmatpush1.msra.mxu0 0.0
        %7841 = vmatprep.subr.mxu0 0.0
        %7842 = vmatpush1.msra.mxu0 0.0
        %7843 = vmatprep.subr.mxu0 0.0
        %7844 = vmatpush1.msra.mxu0 0.0
        %7845 = vmatprep.subr.mxu0 0.0
        %7846 = vmatpush1.msra.mxu0 0.0
        %7847 = vmatprep.subr.mxu0 0.0
        %7848 = vmatpush1.msra.mxu0 0.0
        %7849 = vmatprep.subr.mxu0 0.0
        %7850 = vmatpush1.msra.mxu0 0.0
        %7851 = vmatprep.subr.mxu0 0.0
        %7852 = vmatpush1.msra.mxu0 0.0
        %7853 = vmatprep.subr.mxu0 0.0
        %7854 = vmatpush1.msra.mxu0 0.0
        %7855 = vmatprep.subr.mxu0 0.0
        %7856 = vmatpush1.msra.mxu0 0.0
        %7857 = vmatprep.subr.mxu0 0.0
        %7858 = vmatpush1.msra.mxu0 0.0
        %7859 = vmatprep.subr.mxu0 0.0
        %7860 = vmatpush1.msra.mxu0 0.0
        %7861 = vmatprep.subr.mxu0 0.0
        %7862 = vmatpush1.msra.mxu0 0.0
        %7863 = vmatprep.subr.mxu0 0.0
        %7864 = vmatpush1.msra.mxu0 0.0
        %7865 = vmatprep.subr.mxu0 0.0
        %7866 = vmatpush1.msra.mxu0 0.0
        %7867 = vmatprep.subr.mxu0 0.0
        %7868 = vmatpush1.msra.mxu0 0.0
        %7869 = vmatprep.subr.mxu0 0.0
        %7870 = vmatpush1.msra.mxu0 0.0
        %7871 = vmatprep.subr.mxu0 0.0
        %7872 = vmatpush1.msra.mxu0 0.0
        %7873 = vmatprep.subr.mxu0 0.0
        %7874 = vmatpush1.msra.mxu0 0.0
        %7875 = vmatprep.subr.mxu0 0.0
        %7876 = vmatpush1.msra.mxu0 0.0
        %7877 = vmatprep.subr.mxu0 0.0
        %7878 = vmatpush1.msra.mxu0 0.0
        %7879 = vmatprep.subr.mxu0 0.0
        %7880 = vmatpush1.msra.mxu0 0.0
        %7881 = vmatprep.subr.mxu0 0.0
        %7882 = vmatpush1.msra.mxu0 0.0
        %7883 = vmatprep.mubr.f32.mxu0 0.0
        %7884 = vmatmul.mubr.f32.gmra.mrb[0].mxu0 %v7808
        %v7885 = vpop.f32.mrb[0].mxu0
        %v7886 = vadd.f32 %v7789, %v7885
        %v7887 = vpop.f32.mrb[0].mxu0
        %7888 = vmatprep.mubr.f32.mxu0 0.0
        %7889 = vmatmul.mubr.f32.gmra.mrb[0].mxu0 %v7811
        %v7890 = vpop.f32.mrb[0].mxu0
        %v7891 = vadd.f32 %v7794, %v7890
        %v7892 = vpop.f32.mrb[0].mxu0
        %7893 = vmatprep.mubr.f32.mxu0 0.0
        %7894 = vmatmul.mubr.f32.gmra.mrb[0].mxu0 %v7814
        %v7895 = vpop.f32.mrb[0].mxu0
        %v7896 = vadd.f32 %v7799, %v7895
        %v7897 = vpop.f32.mrb[0].mxu0
        %7898 = vmatprep.mubr.f32.mxu0 0.0
        %7899 = vmatmul.mubr.f32.gmra.mrb[0].mxu0 %v7817
        %v7900 = vpop.f32.mrb[0].mxu0
        %v7901 = vadd.f32 %v7804, %v7900
        %v7902 = vpop.f32.mrb[0].mxu0
        %7903 = vdwg.mxu0
        %v7904 = vlaneseq
        %v7905 = vshrl.u32 %v7904, 7
        %v7906 = vsub.s32 0, %v7905
        %v7907 = vrot.slane %v6983, %v7906
        %v7909 = vsel %vm354, %v7886, 0
        %v7912 = vsel %vm354, %v7891, 0
        %v7915 = vsel %vm354, %v7896, 0
        %v7918 = vsel %vm354, %v7901, 0
        %7920 = vmatprep.subr.mxu0 0.0
        %7921 = vmatpush1.msra.mxu0 %v6972
        %7922 = vmatprep.subr.mxu0 0.0
        %7923 = vmatpush1.msra.mxu0 %v6973
        %7924 = vmatprep.subr.mxu0 0.0
        %7925 = vmatpush1.msra.mxu0 0.0
        %7926 = vmatprep.subr.mxu0 0.0
        %7927 = vmatpush1.msra.mxu0 0.0
        %7928 = vmatprep.subr.mxu0 0.0
        %7929 = vmatpush1.msra.mxu0 0.0
        %7930 = vmatprep.subr.mxu0 0.0
        %7931 = vmatpush1.msra.mxu0 0.0
        %7932 = vmatprep.subr.mxu0 0.0
        %7933 = vmatpush1.msra.mxu0 0.0
        %7934 = vmatprep.subr.mxu0 0.0
        %7935 = vmatpush1.msra.mxu0 0.0
        %7936 = vmatprep.subr.mxu0 0.0
        %7937 = vmatpush1.msra.mxu0 0.0
        %7938 = vmatprep.subr.mxu0 0.0
        %7939 = vmatpush1.msra.mxu0 0.0
        %7940 = vmatprep.subr.mxu0 0.0
        %7941 = vmatpush1.msra.mxu0 0.0
        %7942 = vmatprep.subr.mxu0 0.0
        %7943 = vmatpush1.msra.mxu0 0.0
        %7944 = vmatprep.subr.mxu0 0.0
        %7945 = vmatpush1.msra.mxu0 0.0
        %7946 = vmatprep.subr.mxu0 0.0
        %7947 = vmatpush1.msra.mxu0 0.0
        %7948 = vmatprep.subr.mxu0 0.0
        %7949 = vmatpush1.msra.mxu0 0.0
        %7950 = vmatprep.subr.mxu0 0.0
        %7951 = vmatpush1.msra.mxu0 0.0
        %7952 = vmatprep.subr.mxu0 0.0
        %7953 = vmatpush1.msra.mxu0 0.0
        %7954 = vmatprep.subr.mxu0 0.0
        %7955 = vmatpush1.msra.mxu0 0.0
        %7956 = vmatprep.subr.mxu0 0.0
        %7957 = vmatpush1.msra.mxu0 0.0
        %7958 = vmatprep.subr.mxu0 0.0
        %7959 = vmatpush1.msra.mxu0 0.0
        %7960 = vmatprep.subr.mxu0 0.0
        %7961 = vmatpush1.msra.mxu0 0.0
        %7962 = vmatprep.subr.mxu0 0.0
        %7963 = vmatpush1.msra.mxu0 0.0
        %7964 = vmatprep.subr.mxu0 0.0
        %7965 = vmatpush1.msra.mxu0 0.0
        %7966 = vmatprep.subr.mxu0 0.0
        %7967 = vmatpush1.msra.mxu0 0.0
        %7968 = vmatprep.subr.mxu0 0.0
        %7969 = vmatpush1.msra.mxu0 0.0
        %7970 = vmatprep.subr.mxu0 0.0
        %7971 = vmatpush1.msra.mxu0 0.0
        %7972 = vmatprep.subr.mxu0 0.0
        %7973 = vmatpush1.msra.mxu0 0.0
        %7974 = vmatprep.subr.mxu0 0.0
        %7975 = vmatpush1.msra.mxu0 0.0
        %7976 = vmatprep.subr.mxu0 0.0
        %7977 = vmatpush1.msra.mxu0 0.0
        %7978 = vmatprep.subr.mxu0 0.0
        %7979 = vmatpush1.msra.mxu0 0.0
        %7980 = vmatprep.subr.mxu0 0.0
        %7981 = vmatpush1.msra.mxu0 0.0
        %7982 = vmatprep.subr.mxu0 0.0
        %7983 = vmatpush1.msra.mxu0 0.0
        %7984 = vmatprep.mubr.f32.mxu0 0.0
        %7985 = vmatmul.mubr.f32.gmra.mrb[0].mxu0 %v7909
        %v7986 = vpop.f32.mrb[0].mxu0
        %v7987 = vadd.f32 %v7907, %v7986
        %v7988 = vpop.f32.mrb[0].mxu0
        %7989 = vmatprep.mubr.f32.mxu0 0.0
        %7990 = vmatmul.mubr.f32.gmra.mrb[0].mxu0 %v7912
        %v7991 = vpop.f32.mrb[0].mxu0
        %v7992 = vadd.f32 %v7907, %v7991
        %v7993 = vpop.f32.mrb[0].mxu0
        %7994 = vmatprep.mubr.f32.mxu0 0.0
        %7995 = vmatmul.mubr.f32.gmra.mrb[0].mxu0 %v7915
        %v7996 = vpop.f32.mrb[0].mxu0
        %v7997 = vadd.f32 %v7907, %v7996
        %v7998 = vpop.f32.mrb[0].mxu0
        %7999 = vmatprep.mubr.f32.mxu0 0.0
        %8000 = vmatmul.mubr.f32.gmra.mrb[0].mxu0 %v7918
        %v8001 = vpop.f32.mrb[0].mxu0
        %v8002 = vadd.f32 %v7907, %v8001
        %v8003 = vpop.f32.mrb[0].mxu0
        %8004 = vdwg.mxu0
        %v8005 = vadd.f32 %v6948, %v7987
        %v8006 = vadd.f32 %v6953, %v7992
        %v8007 = vadd.f32 %v6958, %v7997
        %v8008 = vadd.f32 %v6963, %v8002
        %v8009 = vsel %vm354, %v8005, 0.0
        %8010 = vadd.xlane.f32.xlu0 %v8009
        %v8011 = vpop.xlane.xlu0 %8010
        %v8012 = vsel %vm354, %v8006, 0.0
        %8013 = vadd.xlane.f32.xlu0 %v8012
        %v8014 = vpop.xlane.xlu0 %8013
        %v8015 = vsel %vm354, %v8007, 0.0
        %8016 = vadd.xlane.f32.xlu0 %v8015
        %v8017 = vpop.xlane.xlu0 %8016
        %v8018 = vsel %vm354, %v8008, 0.0
        %8019 = vadd.xlane.f32.xlu0 %v8018
        %v8020 = vpop.xlane.xlu0 %8019
        %v8021 = vrcp.pop 16.0
        %v8022 = vmul.f32 %v8011, %v8021
        %v8023 = vmul.f32 %v8014, %v8021
        %v8024 = vmul.f32 %v8017, %v8021
        %v8025 = vmul.f32 %v8020, %v8021
        %v8026 = vsub.f32 %v8005, %v8022
        %v8027 = vsub.f32 %v8006, %v8023
        %v8028 = vsub.f32 %v8007, %v8024
        %v8029 = vsub.f32 %v8008, %v8025
        %v8030 = vmul.f32 %v8026, %v8026
        %v8031 = vmul.f32 %v8027, %v8027
        %v8032 = vmul.f32 %v8028, %v8028
        %v8033 = vmul.f32 %v8029, %v8029
        %v8034 = vsel %vm354, %v8030, 0.0
        %8035 = vadd.xlane.f32.xlu0 %v8034
        %v8036 = vpop.xlane.xlu0 %8035
        %v8037 = vsel %vm354, %v8031, 0.0
        %8038 = vadd.xlane.f32.xlu0 %v8037
        %v8039 = vpop.xlane.xlu0 %8038
        %v8040 = vsel %vm354, %v8032, 0.0
        %8041 = vadd.xlane.f32.xlu0 %v8040
        %v8042 = vpop.xlane.xlu0 %8041
        %v8043 = vsel %vm354, %v8033, 0.0
        %8044 = vadd.xlane.f32.xlu0 %v8043
        %v8045 = vpop.xlane.xlu0 %8044
        %v8046 = vmul.f32 %v8036, %v8021
        %v8047 = vmul.f32 %v8039, %v8021
        %v8048 = vmul.f32 %v8042, %v8021
        %v8049 = vmul.f32 %v8045, %v8021
        %v8050 = vadd.f32 %v8046, 1e-05
        %v8051 = vadd.f32 %v8047, 1e-05
        %v8052 = vadd.f32 %v8048, 1e-05
        %v8053 = vadd.f32 %v8049, 1e-05
        %v8054 = vrsqrt.pop %v8050
        %v8055 = vrsqrt.pop %v8051
        %v8056 = vrsqrt.pop %v8052
        %v8057 = vrsqrt.pop %v8053
        %v8058 = vmul.f32 %v8026, %v8054
        %v8059 = vmul.f32 %v8027, %v8055
        %v8060 = vmul.f32 %v8028, %v8056
        %v8061 = vmul.f32 %v8029, %v8057
        %v8062 = vlaneseq
        %v8063 = vshrl.u32 %v8062, 7
        %v8064 = vsub.s32 0, %v8063
        %v8065 = vrot.slane %v6986, %v8064
        %v8066 = vmul.f32 %v8058, %v8065
        %v8067 = vmul.f32 %v8059, %v8065
        %v8068 = vmul.f32 %v8060, %v8065
        %v8069 = vmul.f32 %v8061, %v8065
        %v8070 = vlaneseq
        %v8071 = vshrl.u32 %v8070, 7
        %v8072 = vsub.s32 0, %v8071
        %v8073 = vrot.slane %v6987, %v8072
        %v8074 = vadd.f32 %v8066, %v8073
        %v8075 = vadd.f32 %v8067, %v8073
        %v8076 = vadd.f32 %v8068, %v8073
        %v8077 = vadd.f32 %v8069, %v8073
        %v8078 = vlaneseq
        %v8079 = vshrl.u32 %v8078, 7
        %v8080 = vsub.s32 0, %v8079
        %v8081 = vrot.slane %v6984, %v8080
        %v8083 = vsel %vm354, %v8074, 0
        %v8086 = vsel %vm354, %v8075, 0
        %v8089 = vsel %vm354, %v8076, 0
        %v8092 = vsel %vm354, %v8077, 0
        %8094 = vmatprep.subr.mxu0 0.0
        %8095 = vmatpush1.msra.mxu0 %v6974
        %8096 = vmatprep.subr.mxu0 0.0
        %8097 = vmatpush1.msra.mxu0 %v6975
        %8098 = vmatprep.subr.mxu0 0.0
        %8099 = vmatpush1.msra.mxu0 0.0
        %8100 = vmatprep.subr.mxu0 0.0
        %8101 = vmatpush1.msra.mxu0 0.0
        %8102 = vmatprep.subr.mxu0 0.0
        %8103 = vmatpush1.msra.mxu0 0.0
        %8104 = vmatprep.subr.mxu0 0.0
        %8105 = vmatpush1.msra.mxu0 0.0
        %8106 = vmatprep.subr.mxu0 0.0
        %8107 = vmatpush1.msra.mxu0 0.0
        %8108 = vmatprep.subr.mxu0 0.0
        %8109 = vmatpush1.msra.mxu0 0.0
        %8110 = vmatprep.subr.mxu0 0.0
        %8111 = vmatpush1.msra.mxu0 0.0
        %8112 = vmatprep.subr.mxu0 0.0
        %8113 = vmatpush1.msra.mxu0 0.0
        %8114 = vmatprep.subr.mxu0 0.0
        %8115 = vmatpush1.msra.mxu0 0.0
        %8116 = vmatprep.subr.mxu0 0.0
        %8117 = vmatpush1.msra.mxu0 0.0
        %8118 = vmatprep.subr.mxu0 0.0
        %8119 = vmatpush1.msra.mxu0 0.0
        %8120 = vmatprep.subr.mxu0 0.0
        %8121 = vmatpush1.msra.mxu0 0.0
        %8122 = vmatprep.subr.mxu0 0.0
        %8123 = vmatpush1.msra.mxu0 0.0
        %8124 = vmatprep.subr.mxu0 0.0
        %8125 = vmatpush1.msra.mxu0 0.0
        %8126 = vmatprep.subr.mxu0 0.0
        %8127 = vmatpush1.msra.mxu0 0.0
        %8128 = vmatprep.subr.mxu0 0.0
        %8129 = vmatpush1.msra.mxu0 0.0
        %8130 = vmatprep.subr.mxu0 0.0
        %8131 = vmatpush1.msra.mxu0 0.0
        %8132 = vmatprep.subr.mxu0 0.0
        %8133 = vmatpush1.msra.mxu0 0.0
        %8134 = vmatprep.subr.mxu0 0.0
        %8135 = vmatpush1.msra.mxu0 0.0
        %8136 = vmatprep.subr.mxu0 0.0
        %8137 = vmatpush1.msra.mxu0 0.0
        %8138 = vmatprep.subr.mxu0 0.0
        %8139 = vmatpush1.msra.mxu0 0.0
        %8140 = vmatprep.subr.mxu0 0.0
        %8141 = vmatpush1.msra.mxu0 0.0
        %8142 = vmatprep.subr.mxu0 0.0
        %8143 = vmatpush1.msra.mxu0 0.0
        %8144 = vmatprep.subr.mxu0 0.0
        %8145 = vmatpush1.msra.mxu0 0.0
        %8146 = vmatprep.subr.mxu0 0.0
        %8147 = vmatpush1.msra.mxu0 0.0
        %8148 = vmatprep.subr.mxu0 0.0
        %8149 = vmatpush1.msra.mxu0 0.0
        %8150 = vmatprep.subr.mxu0 0.0
        %8151 = vmatpush1.msra.mxu0 0.0
        %8152 = vmatprep.subr.mxu0 0.0
        %8153 = vmatpush1.msra.mxu0 0.0
        %8154 = vmatprep.subr.mxu0 0.0
        %8155 = vmatpush1.msra.mxu0 0.0
        %8156 = vmatprep.subr.mxu0 0.0
        %8157 = vmatpush1.msra.mxu0 0.0
        %8158 = vmatprep.mubr.f32.mxu0 0.0
        %8159 = vmatmul.mubr.f32.gmra.mrb[0].mxu0 %v8083
        %v8160 = vpop.f32.mrb[0].mxu0
        %v8161 = vadd.f32 %v8081, %v8160
        %v8162 = vpop.f32.mrb[0].mxu0
        %8163 = vmatprep.mubr.f32.mxu0 0.0
        %8164 = vmatmul.mubr.f32.gmra.mrb[0].mxu0 %v8086
        %v8165 = vpop.f32.mrb[0].mxu0
        %v8166 = vadd.f32 %v8081, %v8165
        %v8167 = vpop.f32.mrb[0].mxu0
        %8168 = vmatprep.mubr.f32.mxu0 0.0
        %8169 = vmatmul.mubr.f32.gmra.mrb[0].mxu0 %v8089
        %v8170 = vpop.f32.mrb[0].mxu0
        %v8171 = vadd.f32 %v8081, %v8170
        %v8172 = vpop.f32.mrb[0].mxu0
        %8173 = vmatprep.mubr.f32.mxu0 0.0
        %8174 = vmatmul.mubr.f32.gmra.mrb[0].mxu0 %v8092
        %v8175 = vpop.f32.mrb[0].mxu0
        %v8176 = vadd.f32 %v8081, %v8175
        %v8177 = vpop.f32.mrb[0].mxu0
        %8178 = vdwg.mxu0
        %v8179 = vmax.f32 %v8161, 0.0
        %v8180 = vmax.f32 %v8166, 0.0
        %v8181 = vmax.f32 %v8171, 0.0
        %v8182 = vmax.f32 %v8176, 0.0
        %v8184 = vsel %vm716, %v8179, 0
        %v8187 = vsel %vm716, %v8180, 0
        %v8190 = vsel %vm716, %v8181, 0
        %v8193 = vsel %vm716, %v8182, 0
        %8195 = vmatprep.subr.mxu0 0.0
        %8196 = vmatpush1.msra.mxu0 %v6976
        %8197 = vmatprep.subr.mxu0 0.0
        %8198 = vmatpush1.msra.mxu0 %v6977
        %8199 = vmatprep.subr.mxu0 0.0
        %8200 = vmatpush1.msra.mxu0 %v6978
        %8201 = vmatprep.subr.mxu0 0.0
        %8202 = vmatpush1.msra.mxu0 %v6979
        %8203 = vmatprep.subr.mxu0 0.0
        %8204 = vmatpush1.msra.mxu0 0.0
        %8205 = vmatprep.subr.mxu0 0.0
        %8206 = vmatpush1.msra.mxu0 0.0
        %8207 = vmatprep.subr.mxu0 0.0
        %8208 = vmatpush1.msra.mxu0 0.0
        %8209 = vmatprep.subr.mxu0 0.0
        %8210 = vmatpush1.msra.mxu0 0.0
        %8211 = vmatprep.subr.mxu0 0.0
        %8212 = vmatpush1.msra.mxu0 0.0
        %8213 = vmatprep.subr.mxu0 0.0
        %8214 = vmatpush1.msra.mxu0 0.0
        %8215 = vmatprep.subr.mxu0 0.0
        %8216 = vmatpush1.msra.mxu0 0.0
        %8217 = vmatprep.subr.mxu0 0.0
        %8218 = vmatpush1.msra.mxu0 0.0
        %8219 = vmatprep.subr.mxu0 0.0
        %8220 = vmatpush1.msra.mxu0 0.0
        %8221 = vmatprep.subr.mxu0 0.0
        %8222 = vmatpush1.msra.mxu0 0.0
        %8223 = vmatprep.subr.mxu0 0.0
        %8224 = vmatpush1.msra.mxu0 0.0
        %8225 = vmatprep.subr.mxu0 0.0
        %8226 = vmatpush1.msra.mxu0 0.0
        %8227 = vmatprep.subr.mxu0 0.0
        %8228 = vmatpush1.msra.mxu0 0.0
        %8229 = vmatprep.subr.mxu0 0.0
        %8230 = vmatpush1.msra.mxu0 0.0
        %8231 = vmatprep.subr.mxu0 0.0
        %8232 = vmatpush1.msra.mxu0 0.0
        %8233 = vmatprep.subr.mxu0 0.0
        %8234 = vmatpush1.msra.mxu0 0.0
        %8235 = vmatprep.subr.mxu0 0.0
        %8236 = vmatpush1.msra.mxu0 0.0
        %8237 = vmatprep.subr.mxu0 0.0
        %8238 = vmatpush1.msra.mxu0 0.0
        %8239 = vmatprep.subr.mxu0 0.0
        %8240 = vmatpush1.msra.mxu0 0.0
        %8241 = vmatprep.subr.mxu0 0.0
        %8242 = vmatpush1.msra.mxu0 0.0
        %8243 = vmatprep.subr.mxu0 0.0
        %8244 = vmatpush1.msra.mxu0 0.0
        %8245 = vmatprep.subr.mxu0 0.0
        %8246 = vmatpush1.msra.mxu0 0.0
        %8247 = vmatprep.subr.mxu0 0.0
        %8248 = vmatpush1.msra.mxu0 0.0
        %8249 = vmatprep.subr.mxu0 0.0
        %8250 = vmatpush1.msra.mxu0 0.0
        %8251 = vmatprep.subr.mxu0 0.0
        %8252 = vmatpush1.msra.mxu0 0.0
        %8253 = vmatprep.subr.mxu0 0.0
        %8254 = vmatpush1.msra.mxu0 0.0
        %8255 = vmatprep.subr.mxu0 0.0
        %8256 = vmatpush1.msra.mxu0 0.0
        %8257 = vmatprep.subr.mxu0 0.0
        %8258 = vmatpush1.msra.mxu0 0.0
        %8259 = vmatprep.mubr.f32.mxu0 0.0
        %8260 = vmatmul.mubr.f32.gmra.mrb[0].mxu0 %v8184
        %v8261 = vpop.f32.mrb[0].mxu0
        %v8262 = vadd.f32 0.0, %v8261
        %v8263 = vpop.f32.mrb[0].mxu0
        %8264 = vmatprep.mubr.f32.mxu0 0.0
        %8265 = vmatmul.mubr.f32.gmra.mrb[0].mxu0 %v8187
        %v8266 = vpop.f32.mrb[0].mxu0
        %v8267 = vadd.f32 0.0, %v8266
        %v8268 = vpop.f32.mrb[0].mxu0
        %8269 = vmatprep.mubr.f32.mxu0 0.0
        %8270 = vmatmul.mubr.f32.gmra.mrb[0].mxu0 %v8190
        %v8271 = vpop.f32.mrb[0].mxu0
        %v8272 = vadd.f32 0.0, %v8271
        %v8273 = vpop.f32.mrb[0].mxu0
        %8274 = vmatprep.mubr.f32.mxu0 0.0
        %8275 = vmatmul.mubr.f32.gmra.mrb[0].mxu0 %v8193
        %v8276 = vpop.f32.mrb[0].mxu0
        %v8277 = vadd.f32 0.0, %v8276
        %v8278 = vpop.f32.mrb[0].mxu0
        %8279 = vdwg.mxu0
        %v8280 = vadd.f32 %v8074, %v8262
        %v8281 = vadd.f32 %v8075, %v8267
        %v8282 = vadd.f32 %v8076, %v8272
        %v8283 = vadd.f32 %v8077, %v8277
        %v8284 = vlaneseq
        %v8285 = vshrl.u32 %v8284, 7
        %v8286 = vsub.s32 0, %v8285
        %v8287 = vrot.slane %v6985, %v8286
        %v8288 = vadd.f32 %v8280, %v8287
        %v8289 = vadd.f32 %v8281, %v8287
        %v8290 = vadd.f32 %v8282, %v8287
        %v8291 = vadd.f32 %v8283, %v8287
        %v8292 = vsel %vm354, %v8288, 0.0
        %8293 = vadd.xlane.f32.xlu0 %v8292
        %v8294 = vpop.xlane.xlu0 %8293
        %v8295 = vsel %vm354, %v8289, 0.0
        %8296 = vadd.xlane.f32.xlu0 %v8295
        %v8297 = vpop.xlane.xlu0 %8296
        %v8298 = vsel %vm354, %v8290, 0.0
        %8299 = vadd.xlane.f32.xlu0 %v8298
        %v8300 = vpop.xlane.xlu0 %8299
        %v8301 = vsel %vm354, %v8291, 0.0
        %8302 = vadd.xlane.f32.xlu0 %v8301
        %v8303 = vpop.xlane.xlu0 %8302
        %v8304 = vmul.f32 %v8294, %v8021
        %v8305 = vmul.f32 %v8297, %v8021
        %v8306 = vmul.f32 %v8300, %v8021
        %v8307 = vmul.f32 %v8303, %v8021
        %v8308 = vsub.f32 %v8288, %v8304
        %v8309 = vsub.f32 %v8289, %v8305
        %v8310 = vsub.f32 %v8290, %v8306
        %v8311 = vsub.f32 %v8291, %v8307
        %v8312 = vmul.f32 %v8308, %v8308
        %v8313 = vmul.f32 %v8309, %v8309
        %v8314 = vmul.f32 %v8310, %v8310
        %v8315 = vmul.f32 %v8311, %v8311
        %v8316 = vsel %vm354, %v8312, 0.0
        %8317 = vadd.xlane.f32.xlu0 %v8316
        %v8318 = vpop.xlane.xlu0 %8317
        %v8319 = vsel %vm354, %v8313, 0.0
        %8320 = vadd.xlane.f32.xlu0 %v8319
        %v8321 = vpop.xlane.xlu0 %8320
        %v8322 = vsel %vm354, %v8314, 0.0
        %8323 = vadd.xlane.f32.xlu0 %v8322
        %v8324 = vpop.xlane.xlu0 %8323
        %v8325 = vsel %vm354, %v8315, 0.0
        %8326 = vadd.xlane.f32.xlu0 %v8325
        %v8327 = vpop.xlane.xlu0 %8326
        %v8328 = vmul.f32 %v8318, %v8021
        %v8329 = vmul.f32 %v8321, %v8021
        %v8330 = vmul.f32 %v8324, %v8021
        %v8331 = vmul.f32 %v8327, %v8021
        %v8332 = vadd.f32 %v8328, 1e-05
        %v8333 = vadd.f32 %v8329, 1e-05
        %v8334 = vadd.f32 %v8330, 1e-05
        %v8335 = vadd.f32 %v8331, 1e-05
        %v8336 = vrsqrt.pop %v8332
        %v8337 = vrsqrt.pop %v8333
        %v8338 = vrsqrt.pop %v8334
        %v8339 = vrsqrt.pop %v8335
        %v8340 = vmul.f32 %v8308, %v8336
        %v8341 = vmul.f32 %v8309, %v8337
        %v8342 = vmul.f32 %v8310, %v8338
        %v8343 = vmul.f32 %v8311, %v8339
        %v8344 = vlaneseq
        %v8345 = vshrl.u32 %v8344, 7
        %v8346 = vsub.s32 0, %v8345
        %v8347 = vrot.slane %v6988, %v8346
        %v8348 = vmul.f32 %v8340, %v8347
        %v8349 = vmul.f32 %v8341, %v8347
        %v8350 = vmul.f32 %v8342, %v8347
        %v8351 = vmul.f32 %v8343, %v8347
        %v8352 = vlaneseq
        %v8353 = vshrl.u32 %v8352, 7
        %v8354 = vsub.s32 0, %v8353
        %v8355 = vrot.slane %v6989, %v8354
        %v8356 = vadd.f32 %v8348, %v8355
        %v8357 = vadd.f32 %v8349, %v8355
        %v8358 = vadd.f32 %v8350, %v8355
        %v8359 = vadd.f32 %v8351, %v8355
        %v8360 = vld [vmem:[%s6] sm:$0xff]
        %v8361 = vld [vmem:[%s6 + $0x8] sm:$0xff]
        %v8362 = vld [vmem:[%s6 + $0x10] sm:$0xff]
        %v8363 = vld [vmem:[%s6 + $0x18] sm:$0xff]
        %v8364 = vld [vmem:[%s6 + $0x20] sm:$0xff]
        %v8365 = vld [vmem:[%s6 + $0x28] sm:$0xff]
        %v8366 = vld [vmem:[%s6 + $0x30] sm:$0xf]
        %v8368 = vsel %vm354, %v8356, 0
        %v8371 = vsel %vm354, %v8357, 0
        %v8374 = vsel %vm354, %v8358, 0
        %v8377 = vsel %vm354, %v8359, 0
        %8379 = vmatprep.subr.mxu0 0.0
        %8380 = vmatpush1.msra.mxu0 %v8360
        %8381 = vmatprep.subr.mxu0 0.0
        %8382 = vmatpush1.msra.mxu0 %v8361
        %8383 = vmatprep.subr.mxu0 0.0
        %8384 = vmatpush1.msra.mxu0 0.0
        %8385 = vmatprep.subr.mxu0 0.0
        %8386 = vmatpush1.msra.mxu0 0.0
        %8387 = vmatprep.subr.mxu0 0.0
        %8388 = vmatpush1.msra.mxu0 0.0
        %8389 = vmatprep.subr.mxu0 0.0
        %8390 = vmatpush1.msra.mxu0 0.0
        %8391 = vmatprep.subr.mxu0 0.0
        %8392 = vmatpush1.msra.mxu0 0.0
        %8393 = vmatprep.subr.mxu0 0.0
        %8394 = vmatpush1.msra.mxu0 0.0
        %8395 = vmatprep.subr.mxu0 0.0
        %8396 = vmatpush1.msra.mxu0 0.0
        %8397 = vmatprep.subr.mxu0 0.0
        %8398 = vmatpush1.msra.mxu0 0.0
        %8399 = vmatprep.subr.mxu0 0.0
        %8400 = vmatpush1.msra.mxu0 0.0
        %8401 = vmatprep.subr.mxu0 0.0
        %8402 = vmatpush1.msra.mxu0 0.0
        %8403 = vmatprep.subr.mxu0 0.0
        %8404 = vmatpush1.msra.mxu0 0.0
        %8405 = vmatprep.subr.mxu0 0.0
        %8406 = vmatpush1.msra.mxu0 0.0
        %8407 = vmatprep.subr.mxu0 0.0
        %8408 = vmatpush1.msra.mxu0 0.0
        %8409 = vmatprep.subr.mxu0 0.0
        %8410 = vmatpush1.msra.mxu0 0.0
        %8411 = vmatprep.subr.mxu0 0.0
        %8412 = vmatpush1.msra.mxu0 0.0
        %8413 = vmatprep.subr.mxu0 0.0
        %8414 = vmatpush1.msra.mxu0 0.0
        %8415 = vmatprep.subr.mxu0 0.0
        %8416 = vmatpush1.msra.mxu0 0.0
        %8417 = vmatprep.subr.mxu0 0.0
        %8418 = vmatpush1.msra.mxu0 0.0
        %8419 = vmatprep.subr.mxu0 0.0
        %8420 = vmatpush1.msra.mxu0 0.0
        %8421 = vmatprep.subr.mxu0 0.0
        %8422 = vmatpush1.msra.mxu0 0.0
        %8423 = vmatprep.subr.mxu0 0.0
        %8424 = vmatpush1.msra.mxu0 0.0
        %8425 = vmatprep.subr.mxu0 0.0
        %8426 = vmatpush1.msra.mxu0 0.0
        %8427 = vmatprep.subr.mxu0 0.0
        %8428 = vmatpush1.msra.mxu0 0.0
        %8429 = vmatprep.subr.mxu0 0.0
        %8430 = vmatpush1.msra.mxu0 0.0
        %8431 = vmatprep.subr.mxu0 0.0
        %8432 = vmatpush1.msra.mxu0 0.0
        %8433 = vmatprep.subr.mxu0 0.0
        %8434 = vmatpush1.msra.mxu0 0.0
        %8435 = vmatprep.subr.mxu0 0.0
        %8436 = vmatpush1.msra.mxu0 0.0
        %8437 = vmatprep.subr.mxu0 0.0
        %8438 = vmatpush1.msra.mxu0 0.0
        %8439 = vmatprep.subr.mxu0 0.0
        %8440 = vmatpush1.msra.mxu0 0.0
        %8441 = vmatprep.subr.mxu0 0.0
        %8442 = vmatpush1.msra.mxu0 0.0
        %8443 = vmatprep.mubr.f32.mxu0 0.0
        %8444 = vmatmul.mubr.f32.gmra.mrb[0].mxu0 %v8368
        %v8445 = vpop.f32.mrb[0].mxu0
        %v8446 = vadd.f32 0.0, %v8445
        %v8447 = vpop.f32.mrb[0].mxu0
        %8448 = vmatprep.mubr.f32.mxu0 0.0
        %8449 = vmatmul.mubr.f32.gmra.mrb[0].mxu0 %v8371
        %v8450 = vpop.f32.mrb[0].mxu0
        %v8451 = vadd.f32 0.0, %v8450
        %v8452 = vpop.f32.mrb[0].mxu0
        %8453 = vmatprep.mubr.f32.mxu0 0.0
        %8454 = vmatmul.mubr.f32.gmra.mrb[0].mxu0 %v8374
        %v8455 = vpop.f32.mrb[0].mxu0
        %v8456 = vadd.f32 0.0, %v8455
        %v8457 = vpop.f32.mrb[0].mxu0
        %8458 = vmatprep.mubr.f32.mxu0 0.0
        %8459 = vmatmul.mubr.f32.gmra.mrb[0].mxu0 %v8377
        %v8460 = vpop.f32.mrb[0].mxu0
        %v8461 = vadd.f32 0.0, %v8460
        %v8462 = vpop.f32.mrb[0].mxu0
        %8463 = vdwg.mxu0
        %v8464 = vmul.f32 %v8446, %v8362
        %v8465 = vmul.f32 %v8451, %v8363
        %v8466 = vmul.f32 %v8456, %v8364
        %v8467 = vmul.f32 %v8461, %v8365
        %v8469 = vsel %vm716, %v8366, 0
        %8471 = vmatprep.subr.mxu0 0.0
        %8472 = vmatpush1.msra.mxu0 %v8464
        %8473 = vmatprep.subr.mxu0 0.0
        %8474 = vmatpush1.msra.mxu0 %v8465
        %8475 = vmatprep.subr.mxu0 0.0
        %8476 = vmatpush1.msra.mxu0 %v8466
        %8477 = vmatprep.subr.mxu0 0.0
        %8478 = vmatpush1.msra.mxu0 %v8467
        %8479 = vmatprep.subr.mxu0 0.0
        %8480 = vmatpush1.msra.mxu0 0.0
        %8481 = vmatprep.subr.mxu0 0.0
        %8482 = vmatpush1.msra.mxu0 0.0
        %8483 = vmatprep.subr.mxu0 0.0
        %8484 = vmatpush1.msra.mxu0 0.0
        %8485 = vmatprep.subr.mxu0 0.0
        %8486 = vmatpush1.msra.mxu0 0.0
        %8487 = vmatprep.subr.mxu0 0.0
        %8488 = vmatpush1.msra.mxu0 0.0
        %8489 = vmatprep.subr.mxu0 0.0
        %8490 = vmatpush1.msra.mxu0 0.0
        %8491 = vmatprep.subr.mxu0 0.0
        %8492 = vmatpush1.msra.mxu0 0.0
        %8493 = vmatprep.subr.mxu0 0.0
        %8494 = vmatpush1.msra.mxu0 0.0
        %8495 = vmatprep.subr.mxu0 0.0
        %8496 = vmatpush1.msra.mxu0 0.0
        %8497 = vmatprep.subr.mxu0 0.0
        %8498 = vmatpush1.msra.mxu0 0.0
        %8499 = vmatprep.subr.mxu0 0.0
        %8500 = vmatpush1.msra.mxu0 0.0
        %8501 = vmatprep.subr.mxu0 0.0
        %8502 = vmatpush1.msra.mxu0 0.0
        %8503 = vmatprep.subr.mxu0 0.0
        %8504 = vmatpush1.msra.mxu0 0.0
        %8505 = vmatprep.subr.mxu0 0.0
        %8506 = vmatpush1.msra.mxu0 0.0
        %8507 = vmatprep.subr.mxu0 0.0
        %8508 = vmatpush1.msra.mxu0 0.0
        %8509 = vmatprep.subr.mxu0 0.0
        %8510 = vmatpush1.msra.mxu0 0.0
        %8511 = vmatprep.subr.mxu0 0.0
        %8512 = vmatpush1.msra.mxu0 0.0
        %8513 = vmatprep.subr.mxu0 0.0
        %8514 = vmatpush1.msra.mxu0 0.0
        %8515 = vmatprep.subr.mxu0 0.0
        %8516 = vmatpush1.msra.mxu0 0.0
        %8517 = vmatprep.subr.mxu0 0.0
        %8518 = vmatpush1.msra.mxu0 0.0
        %8519 = vmatprep.subr.mxu0 0.0
        %8520 = vmatpush1.msra.mxu0 0.0
        %8521 = vmatprep.subr.mxu0 0.0
        %8522 = vmatpush1.msra.mxu0 0.0
        %8523 = vmatprep.subr.mxu0 0.0
        %8524 = vmatpush1.msra.mxu0 0.0
        %8525 = vmatprep.subr.mxu0 0.0
        %8526 = vmatpush1.msra.mxu0 0.0
        %8527 = vmatprep.subr.mxu0 0.0
        %8528 = vmatpush1.msra.mxu0 0.0
        %8529 = vmatprep.subr.mxu0 0.0
        %8530 = vmatpush1.msra.mxu0 0.0
        %8531 = vmatprep.subr.mxu0 0.0
        %8532 = vmatpush1.msra.mxu0 0.0
        %8533 = vmatprep.subr.mxu0 0.0
        %8534 = vmatpush1.msra.mxu0 0.0
        %8535 = vmatprep.mubr.f32.mxu0 0.0
        %8536 = vmatmul.mubr.f32.gmra.mrb[0].mxu0 %v8469
        %v8537 = vpop.f32.mrb[0].mxu0
        %v8538 = vadd.f32 0.0, %v8537
        %v8539 = vpop.f32.mrb[0].mxu0
        %8540 = vdwg.mxu0
        %8541 = vst [vmem:[%s291] sm:$0xf] %v8538
        %p8542 = scmp.lt.s32.totalorder %s19, 1
        %s8543 = scalar_select %p8542, %s19, 1
        %s8544 = smul.addr %s8543, 4
        %s8545 = scalar_lea.vmem %s7, %s8544
        // Predicated region
        $region53: #{_lambda_.1} parent=47 // pred_check
          %p8546 = pneg %p189
        $region54: #{_lambda_.1} parent=47 // pred_check_branch
          %8548 = sbr.rel (%p8546) target = $region56
        $region55: #{_lambda_.1} parent=47 // pred_region
          _
        $region56: #{_lambda_.1} parent=47 // pred_fallthru
          _
      $region48: #{_lambda_.1} parent=5 // pred_fallthru
        _
      %p8549 = scmp.le.s32.totalorder 2, %s14
      // Predicated region
      $region57: #{_lambda_.1} parent=5 // pred_check
        %p8550 = pneg %p8549
      $region58: #{_lambda_.1} parent=5 // pred_check_branch
        %8552 = sbr.rel (%p8550) target = $region60
      $region59: #{_lambda_.1} parent=5 // pred_region
        %s8553 = ssub.s32 %s14, 2
        // Predicated region
        $region61: #{_lambda_.1} parent=59 // pred_check
          %p8554 = pneg %p195
        $region62: #{_lambda_.1} parent=59 // pred_check_branch
          %8556 = sbr.rel (%p8554) target = $region64
        $region63: #{_lambda_.1} parent=59 // pred_region
          %p8557 = scmp.lt.s32.totalorder %s20, 1
          %s8558 = scalar_select %p8557, %s20, 1
          %s8559 = smul.addr %s8558, 4
          %s8560 = scalar_lea.vmem %s7, %s8559
        $region64: #{_lambda_.1} parent=59 // pred_fallthru
          _
      $region60: #{_lambda_.1} parent=5 // pred_fallthru
        _
    $region6: #{_lambda_.1} parent=1 // loop_footer
      %s18 = sadd.s32 1, %s14
    $region7: #{_lambda_.1} parent=1 // loop_footer_branch
      %13 = sbr.rel target = $region3
    $region8: #{_lambda_.1} parent=1 // loop_exit
      _
    %8561 = vsyncpa [#allocation3], 1
    %s8562 = scalar_lea.sflag [#allocation3], 1
    %8563 = vsyncpa %s8562, 1

</llo_original>
